<compile_context>
chip_gen: v7x
topology: tpu7x:2x2x1
jax: 0.10.0
libtpu: 0.0.40
codegen_flags: <defaults>
</compile_context>

<pallas_src>
import functools

import jax
import jax.numpy as jnp
from jax.experimental import pallas as pl
from jax.experimental.pallas import tpu as pltpu

# Static "args" flags of the PyTorch module (deterministic, in-script).
RESNET = True        # args.resnet
NORM_INPUT = True    # args.norm_input
# TODO(synk): Beholder == nn.Dropout(p=args.dropout); treated as identity
# (eval / p=0) -- stateful torch dropout has no deterministic Pallas mirror.

_LANES = 128     # vreg lane width; batch tiles are multiples of this
_SUBLANES = 8    # output slab sublane height (keeps (8, 128)-aligned blocks)
_TB_CAP = 512    # batch-tile cap (VMEM-safe on v5e/v6e/v7x, see wrapper)


def _round_up(x, m):
    return ((x + m - 1) // m) * m


def _c1_loss_kernel(src_ref, trg_ref, ws_t_ref, wt_t_ref, o_ref, *,
                    n_batch, tb, conf, d):
    """One grid step = one tile of `tb` batch elements.

    src_ref/trg_ref : (tb, conf, d) f32
    ws_t_ref/wt_t_ref : (d, d) f32, already transposed (i.e. W.T) so the
                        mapping is a plain x @ W_T matmul.
    o_ref           : (1, 8, tb)  per-batch losses of this tile, lane-dense in
                      sublane 0; the other 7 sublanes are zero.
    """
    i = pl.program_id(0)

    # Fold (tb, conf) into the matmul M dimension (layout-trivial reshape:
    # conf == 8 matches the sublane tile).
    src = src_ref[...].reshape(tb * conf, d)
    trg = trg_ref[...].reshape(tb * conf, d)

    # Plain (M, K) @ (K, N) MXU dots (weights arrive pre-transposed).
    src_map = jnp.dot(src, ws_t_ref[...], preferred_element_type=jnp.float32)
    trg_map = jnp.dot(trg, wt_t_ref[...], preferred_element_type=jnp.float32)

    if RESNET:
        src_mid = src + src_map
        trg_mid = trg + trg_map
    else:
        src_mid = src_map
        trg_mid = trg_map

    if NORM_INPUT:
        src_nrm = jnp.sqrt(jnp.sum(src_mid * src_mid, axis=-1, keepdims=True))
        trg_nrm = jnp.sqrt(jnp.sum(trg_mid * trg_mid, axis=-1, keepdims=True))
        src_mid = src_mid / (src_nrm + 1e-9)
        trg_mid = trg_mid / (trg_nrm + 1e-9)

    # Back to (tb, conf, d) for the per-batch anchor logic.
    src_mid = src_mid.reshape(tb, conf, d)
    trg_mid = trg_mid.reshape(tb, conf, d)

    src_anchor = src_mid[:, 0:1, :]          # (tb, 1, d)
    trg_anchor = trg_mid[:, 0:1, :]          # (tb, 1, d)

    sum_1 = jnp.sum(src_mid * trg_anchor, axis=-1)   # (tb, conf)
    sum_2 = jnp.sum(trg_mid * src_anchor, axis=-1)   # (tb, conf)

    # One XLU transpose each: everything downstream (exp / sums / log) then
    # runs on dense (conf, tb) vregs instead of 8/128 lane-padded (tb, conf).
    s1 = jnp.transpose(sum_1)                # (conf, tb)
    s2 = jnp.transpose(sum_2)                # (conf, tb)

    e1 = jnp.exp(s1)
    e2 = jnp.exp(s2)

    # loss_b = -log( exp(sum_2[b,0]) / (sum_c e2[b,c] + sum_{c>0} e1[b,c]) )
    denom = (jnp.sum(e1, axis=0, keepdims=True)
             + jnp.sum(e2, axis=0, keepdims=True)
             - e1[0:1, :])                           # (1, tb)
    loss = jnp.log(denom) - s2[0:1, :]               # (1, tb), lane-dense

    # Zero out padded batch rows (when B was padded up to a tile multiple).
    col = jax.lax.broadcasted_iota(jnp.int32, (1, tb), 1) + i * tb
    loss = jnp.where(col < n_batch, loss, 0.0)

    # Lane-dense write: loss row into sublane 0 of the (8, tb) output slab.
    sub = jax.lax.broadcasted_iota(jnp.int32, (_SUBLANES, tb), 0)
    o_ref[0] = jnp.where(sub == 0, loss, 0.0)


def c1_loss_pallas(src, trg, w_s, w_t):
    """src/trg: (B, C, D) f32;  w_s/w_t: (D, D) torch-style Linear weights."""
    B, C, D = src.shape

    # Batch tile: a multiple of 128 (lane-dense loss rows / output stores),
    # big enough to amortize the ~0.35 us per-step overhead, capped at 512 so
    # that the lane-padded (D=32 -> 128) double-buffered input blocks
    # (2 inputs x 2 buffers x tb*8*128*4 B) plus compiler temporaries stay
    # within the raised 32 MiB scoped-VMEM limit on every chip.  Always at
    # least 2 tiles so the "parallel" axis shards across both v7x TensorCores.
    tb = min(_TB_CAP, max(_LANES, _round_up(pl.cdiv(B, 2), _LANES)))
    num_tiles = max(2, pl.cdiv(B, tb))
    b_pad = num_tiles * tb
    if b_pad != B:
        pad = b_pad - B
        src = jnp.pad(src, ((0, pad), (0, 0), (0, 0)))
        trg = jnp.pad(trg, ((0, pad), (0, 0), (0, 0)))

    # One-time (4 KiB) weight transposes so the kernel does plain x @ W_T.
    ws_t = jnp.transpose(w_s)
    wt_t = jnp.transpose(w_t)

    kernel = functools.partial(_c1_loss_kernel,
                               n_batch=B, tb=tb, conf=C, d=D)
    per_tile = pl.pallas_call(
        kernel,
        out_shape=jax.ShapeDtypeStruct((num_tiles, _SUBLANES, tb),
                                       jnp.float32),
        grid=(num_tiles,),
        in_specs=[
            pl.BlockSpec((tb, C, D), lambda i: (i, 0, 0)),
            pl.BlockSpec((tb, C, D), lambda i: (i, 0, 0)),
            pl.BlockSpec((D, D), lambda i: (0, 0)),
            pl.BlockSpec((D, D), lambda i: (0, 0)),
        ],
        out_specs=pl.BlockSpec((1, _SUBLANES, tb), lambda i: (i, 0, 0)),
        compiler_params=pltpu.CompilerParams(
            dimension_semantics=("parallel",),
            vmem_limit_bytes=32 * 1024 * 1024),
    )(src, trg, ws_t, wt_t)

    # Only the valid per-batch losses are non-zero; mean over the batch.
    return jnp.sum(per_tile) / B


def c1_loss_reference(src, trg, w_s, w_t):
    """Pure-JAX mirror of forward_sup (mode='train') for verification."""
    src_map = src @ w_s.T
    trg_map = trg @ w_t.T
    src_mid = src + src_map if RESNET else src_map
    trg_mid = trg + trg_map if RESNET else trg_map
    if NORM_INPUT:
        src_mid = src_mid / (jnp.linalg.norm(src_mid, axis=-1, keepdims=True) + 1e-9)
        trg_mid = trg_mid / (jnp.linalg.norm(trg_mid, axis=-1, keepdims=True) + 1e-9)
    src_anchor = src_mid[:, 0:1, :]
    trg_anchor = trg_mid[:, 0:1, :]
    sum_1 = jnp.sum(src_mid * trg_anchor, axis=-1)
    sum_2 = jnp.sum(trg_mid * src_anchor, axis=-1)
    sum_3 = jnp.exp(jnp.concatenate([sum_2, sum_1[:, 1:]], axis=-1))
    return -jnp.mean(jnp.log(sum_3[:, 0] / jnp.sum(sum_3, axis=1)))


if __name__ == "__main__":
    B, C, D = 2, 8, 32   # mini_batch_size, conf_size, D_emb

    key = jax.random.PRNGKey(0)
    k_src, k_trg, k_ws, k_wt = jax.random.split(key, 4)

    src = jax.random.normal(k_src, (B, C, D), dtype=jnp.float32)
    trg = jax.random.normal(k_trg, (B, C, D), dtype=jnp.float32)

    # Deterministic nn.Linear(D, D, bias=False) init (U(-1/sqrt(D), 1/sqrt(D))).
    bound = 1.0 / (D ** 0.5)
    w_s = jax.random.uniform(k_ws, (D, D), jnp.float32, -bound, bound)
    w_t = jax.random.uniform(k_wt, (D, D), jnp.float32, -bound, bound)

    loss = jax.block_until_ready(c1_loss_pallas(src, trg, w_s, w_t))
    ref = jax.block_until_ready(c1_loss_reference(src, trg, w_s, w_t))

    assert jnp.allclose(loss, ref, rtol=1e-5, atol=1e-5), (loss, ref)
    print("KERNEL_OK")
</pallas_src>

<mosaic_0001>
module attributes {stable_mosaic.version = 11 : i64} {
  func.func @_c1_loss_kernel(%arg0: i32, %arg1: memref<128x8x32xf32, #tpu.memory_space<vmem>>, %arg2: memref<128x8x32xf32, #tpu.memory_space<vmem>>, %arg3: memref<32x32xf32, #tpu.memory_space<vmem>>, %arg4: memref<32x32xf32, #tpu.memory_space<vmem>>, %arg5: memref<1x8x128xf32, #tpu.memory_space<vmem>>) attributes {dimension_semantics = [#tpu.dimension_semantics<parallel>], iteration_bounds = array<i64: 2>, scalar_prefetch = 0 : i64, scratch_operands = 0 : i64, tpu.core_type = #tpu.core_type<tc>, window_params = [{transform_indices = @transform_0, window_bounds = array<i64: 128, 8, 32>}, {transform_indices = @transform_1, window_bounds = array<i64: 128, 8, 32>}, {pipeline_mode = #tpu.pipeline_mode<synchronous>, transform_indices = @transform_2, window_bounds = array<i64: 32, 32>}, {pipeline_mode = #tpu.pipeline_mode<synchronous>, transform_indices = @transform_3, window_bounds = array<i64: 32, 32>}, {transform_indices = @transform_4, window_bounds = array<i64: 1, 8, 128>}]} {
    %c0 = arith.constant 0 : index
    %c0_0 = arith.constant 0 : index
    %c0_1 = arith.constant 0 : index
    %0 = vector.load %arg1[%c0, %c0_0, %c0_1] : memref<128x8x32xf32, #tpu.memory_space<vmem>>, vector<128x8x32xf32>
    %1 = vector.shape_cast %0 : vector<128x8x32xf32> to vector<1024x32xf32>
    %c0_2 = arith.constant 0 : index
    %c0_3 = arith.constant 0 : index
    %c0_4 = arith.constant 0 : index
    %2 = vector.load %arg2[%c0_2, %c0_3, %c0_4] : memref<128x8x32xf32, #tpu.memory_space<vmem>>, vector<128x8x32xf32>
    %3 = vector.shape_cast %2 : vector<128x8x32xf32> to vector<1024x32xf32>
    %c0_5 = arith.constant 0 : index
    %c0_6 = arith.constant 0 : index
    %4 = vector.load %arg3[%c0_5, %c0_6] : memref<32x32xf32, #tpu.memory_space<vmem>>, vector<32x32xf32>
    %cst = arith.constant dense<0.000000e+00> : vector<1024x32xf32>
    %5 = tpu.matmul %1, %4, %cst {dimension_numbers = #tpu.dot_dimension_numbers<[1], [0], [0], [1], [0, 0, 1, 1], [], []>} : vector<1024x32xf32>, vector<32x32xf32>, vector<1024x32xf32> -> vector<1024x32xf32>
    %c0_7 = arith.constant 0 : index
    %c0_8 = arith.constant 0 : index
    %6 = vector.load %arg4[%c0_7, %c0_8] : memref<32x32xf32, #tpu.memory_space<vmem>>, vector<32x32xf32>
    %cst_9 = arith.constant dense<0.000000e+00> : vector<1024x32xf32>
    %7 = tpu.matmul %3, %6, %cst_9 {dimension_numbers = #tpu.dot_dimension_numbers<[1], [0], [0], [1], [0, 0, 1, 1], [], []>} : vector<1024x32xf32>, vector<32x32xf32>, vector<1024x32xf32> -> vector<1024x32xf32>
    %8 = arith.addf %1, %5 : vector<1024x32xf32>
    %9 = arith.addf %3, %7 : vector<1024x32xf32>
    %10 = arith.mulf %8, %8 : vector<1024x32xf32>
    %cst_10 = arith.constant dense<0.000000e+00> : vector<1024xf32>
    %11 = vector.multi_reduction <add>, %10, %cst_10 [1] : vector<1024x32xf32> to vector<1024xf32>
    %12 = vector.shape_cast %11 : vector<1024xf32> to vector<1024x1xf32>
    %13 = math.sqrt %12 : vector<1024x1xf32>
    %14 = arith.mulf %9, %9 : vector<1024x32xf32>
    %cst_11 = arith.constant dense<0.000000e+00> : vector<1024xf32>
    %15 = vector.multi_reduction <add>, %14, %cst_11 [1] : vector<1024x32xf32> to vector<1024xf32>
    %16 = vector.shape_cast %15 : vector<1024xf32> to vector<1024x1xf32>
    %17 = math.sqrt %16 : vector<1024x1xf32>
    %cst_12 = arith.constant 9.99999971E-10 : f32
    %18 = vector.broadcast %cst_12 : f32 to vector<1024x1xf32>
    %19 = arith.addf %13, %18 : vector<1024x1xf32>
    %20 = vector.broadcast %19 : vector<1024x1xf32> to vector<1024x32xf32>
    %21 = arith.divf %8, %20 : vector<1024x32xf32>
    %cst_13 = arith.constant 9.99999971E-10 : f32
    %22 = vector.broadcast %cst_13 : f32 to vector<1024x1xf32>
    %23 = arith.addf %17, %22 : vector<1024x1xf32>
    %24 = vector.broadcast %23 : vector<1024x1xf32> to vector<1024x32xf32>
    %25 = arith.divf %9, %24 : vector<1024x32xf32>
    %26 = vector.shape_cast %21 : vector<1024x32xf32> to vector<128x8x32xf32>
    %27 = vector.shape_cast %25 : vector<1024x32xf32> to vector<128x8x32xf32>
    %28 = vector.extract_strided_slice %26 {offsets = [0, 0, 0], sizes = [128, 1, 32], strides = [1, 1, 1]} : vector<128x8x32xf32> to vector<128x1x32xf32>
    %29 = vector.extract_strided_slice %27 {offsets = [0, 0, 0], sizes = [128, 1, 32], strides = [1, 1, 1]} : vector<128x8x32xf32> to vector<128x1x32xf32>
    %30 = vector.broadcast %29 : vector<128x1x32xf32> to vector<128x8x32xf32>
    %31 = arith.mulf %26, %30 : vector<128x8x32xf32>
    %cst_14 = arith.constant dense<0.000000e+00> : vector<128x8xf32>
    %32 = vector.multi_reduction <add>, %31, %cst_14 [2] : vector<128x8x32xf32> to vector<128x8xf32>
    %33 = vector.broadcast %28 : vector<128x1x32xf32> to vector<128x8x32xf32>
    %34 = arith.mulf %27, %33 : vector<128x8x32xf32>
    %cst_15 = arith.constant dense<0.000000e+00> : vector<128x8xf32>
    %35 = vector.multi_reduction <add>, %34, %cst_15 [2] : vector<128x8x32xf32> to vector<128x8xf32>
    %36 = tpu.transpose %32, [1, 0] : vector<128x8xf32> -> vector<8x128xf32>
    %37 = tpu.transpose %35, [1, 0] : vector<128x8xf32> -> vector<8x128xf32>
    %38 = math.exp %36 : vector<8x128xf32>
    %39 = math.exp %37 : vector<8x128xf32>
    %cst_16 = arith.constant dense<0.000000e+00> : vector<128xf32>
    %40 = vector.multi_reduction <add>, %38, %cst_16 [0] : vector<8x128xf32> to vector<128xf32>
    %41 = vector.shape_cast %40 : vector<128xf32> to vector<1x128xf32>
    %cst_17 = arith.constant dense<0.000000e+00> : vector<128xf32>
    %42 = vector.multi_reduction <add>, %39, %cst_17 [0] : vector<8x128xf32> to vector<128xf32>
    %43 = vector.shape_cast %42 : vector<128xf32> to vector<1x128xf32>
    %44 = arith.addf %41, %43 : vector<1x128xf32>
    %45 = vector.extract_strided_slice %38 {offsets = [0, 0], sizes = [1, 128], strides = [1, 1]} : vector<8x128xf32> to vector<1x128xf32>
    %46 = arith.subf %44, %45 : vector<1x128xf32>
    %47 = math.log %46 : vector<1x128xf32>
    %48 = vector.extract_strided_slice %37 {offsets = [0, 0], sizes = [1, 128], strides = [1, 1]} : vector<8x128xf32> to vector<1x128xf32>
    %49 = arith.subf %47, %48 : vector<1x128xf32>
    %50 = tpu.iota {dimensions = array<i32: 1>} : vector<1x128xi32>
    %c128_i32 = arith.constant 128 : i32
    %51 = arith.muli %arg0, %c128_i32 : i32
    %52 = vector.broadcast %51 : i32 to vector<1x128xi32>
    %53 = arith.addi %50, %52 : vector<1x128xi32>
    %c2_i32 = arith.constant 2 : i32
    %54 = vector.broadcast %c2_i32 : i32 to vector<1x128xi32>
    %55 = arith.cmpi slt, %53, %54 : vector<1x128xi32>
    %cst_18 = arith.constant 0.000000e+00 : f32
    %56 = vector.broadcast %cst_18 : f32 to vector<1x128xf32>
    %57 = arith.select %55, %49, %56 : vector<1x128xi1>, vector<1x128xf32>
    %58 = tpu.iota {dimensions = array<i32: 0>} : vector<8x128xi32>
    %c0_i32 = arith.constant 0 : i32
    %59 = vector.broadcast %c0_i32 : i32 to vector<8x128xi32>
    %60 = arith.cmpi eq, %58, %59 : vector<8x128xi32>
    %cst_19 = arith.constant 0.000000e+00 : f32
    %61 = vector.shape_cast %57 : vector<1x128xf32> to vector<1x128xf32>
    %62 = vector.broadcast %61 : vector<1x128xf32> to vector<8x128xf32>
    %63 = vector.broadcast %cst_19 : f32 to vector<8x128xf32>
    %64 = arith.select %60, %62, %63 : vector<8x128xi1>, vector<8x128xf32>
    %c0_20 = arith.constant 0 : index
    %c0_21 = arith.constant 0 : index
    %c0_22 = arith.constant 0 : index
    %65 = vector.load %arg5[%c0_20, %c0_21, %c0_22] : memref<1x8x128xf32, #tpu.memory_space<vmem>>, vector<1x8x128xf32>
    %66 = vector.shape_cast %65 : vector<1x8x128xf32> to vector<8x128xf32>
    %67 = vector.shape_cast %64 : vector<8x128xf32> to vector<1x8x128xf32>
    tpu.vector_store %arg5[%c0_20, %c0_21, %c0_22], %67 {strides = array<i32>} : memref<1x8x128xf32, #tpu.memory_space<vmem>>, vector<1x8x128xf32>,
    return
  }
  func.func @transform_0(%arg0: i32) -> (i32, i32, i32) {
    %c0_i32 = arith.constant 0 : i32
    %c0_i32_0 = arith.constant 0 : i32
    %c0_i32_1 = arith.constant 0 : i32
    return %arg0, %c0_i32, %c0_i32_0 : i32, i32, i32
  }
  func.func @transform_1(%arg0: i32) -> (i32, i32, i32) {
    %c0_i32 = arith.constant 0 : i32
    %c0_i32_0 = arith.constant 0 : i32
    %c0_i32_1 = arith.constant 0 : i32
    return %arg0, %c0_i32, %c0_i32_0 : i32, i32, i32
  }
  func.func @transform_2(%arg0: i32) -> (i32, i32) {
    %c0_i32 = arith.constant 0 : i32
    %c0_i32_0 = arith.constant 0 : i32
    %c0_i32_1 = arith.constant 0 : i32
    return %c0_i32, %c0_i32_0 : i32, i32
  }
  func.func @transform_3(%arg0: i32) -> (i32, i32) {
    %c0_i32 = arith.constant 0 : i32
    %c0_i32_0 = arith.constant 0 : i32
    %c0_i32_1 = arith.constant 0 : i32
    return %c0_i32, %c0_i32_0 : i32, i32
  }
  func.func @transform_4(%arg0: i32) -> (i32, i32, i32) {
    %c0_i32 = arith.constant 0 : i32
    %c0_i32_0 = arith.constant 0 : i32
    %c0_i32_1 = arith.constant 0 : i32
    return %arg0, %c0_i32, %c0_i32_0 : i32, i32, i32
  }
}

</mosaic_0001>

<llo_original>
// kernel: tpu_custom_call.1
$region0: #{tpu_custom_call.1}
  #allocation0 [shape = 'u32[]', space=smem, size = 0x4, offset = 0x4, fixed_abs, tag = 'smem constant byte address 0x4 - core index']
  #allocation1 [shape = 'u32[144,128]{1,0:T(1,128)}', space=vmem, size = 0x12000, scoped, tag = 'internal scratch']
  %s0 = inlined_call_operand.vmem [shape: f32[256,8,32], index: 0, kind: input, shape index: {}]
  %s1 = inlined_call_operand.vmem [shape: f32[256,8,32], index: 1, kind: input, shape index: {}]
  %s2 = inlined_call_operand.vmem [shape: f32[32,32], index: 2, kind: input, shape index: {}]
  %s3 = inlined_call_operand.vmem [shape: f32[32,32], index: 3, kind: input, shape index: {}]
  %s4 = inlined_call_operand.hbm [shape: f32[2,8,128], index: 4, kind: output, shape index: {}]
  %s5 = sld [smem:[#allocation0]]
  $region49: #{tpu_custom_call.1} parent=0
    _
  %s7 = ssub.s32 1, %s5
  %s8 = scalar_select 0, %s7, %s5
  $region1: #{tpu_custom_call.1} parent=0
    #allocation2 [shape = 'u8[8192]{0}', space=vmem, size = 0x2000, scoped, tag = 'output window, operand 0']
    #allocation3 [shape = 's32[2]{0}', space=sflag, size = 0x8, scoped, tag = 'scoped memory for tpu_custom_call.1']
    %9 = vsyncpa [#allocation3], 0
    %s10 = scalar_lea.sflag [#allocation3], 1
    %11 = vsyncpa %s10, 0
    loop: start=0, step=1, limit=4
    $region2: #{tpu_custom_call.1} parent=1 // loop_pre_header
      _
    $region3: #{tpu_custom_call.1} parent=1 // loop_header
      %s13 = sphi 0, %s17
      %p14 = scmp.ge.s32.totalorder %s13, 4
      %s23 = sphi 0, %s25
      %s26 = sphi 0, %s23
      %s27 = sphi 0, %s26
      %s43 = sphi 0, %s27
      %s49 = sphi 0, %s51
      %s52 = sphi 0, %s49
      %s53 = sphi 0, %s52
      %s69 = sphi 0, %s53
      %s73 = sphi 0, %s73
      %s75 = sphi 0, %s73
      %s76 = sphi 0, %s75
      %s90 = sphi 0, %s76
      %s94 = sphi 0, %s94
      %s96 = sphi 0, %s94
      %s97 = sphi 0, %s96
      %s111 = sphi 0, %s97
      %s117 = sphi 0, %s119
      %s120 = sphi 0, %s117
      %s121 = sphi 0, %s120
      %s137 = sphi 0, %s121
    $region4: #{tpu_custom_call.1} parent=1 // loop_header_branch
      %16 = sbr.rel (%p14) target = $region8
    $region5: #{tpu_custom_call.1} parent=1 // loop_body
      %s18 = ssub.s32 %s13, 1
      %s19 = ssub.s32 %s13, 2
      %s20 = sadd.s32 %s13, 1
      %s21 = ssub.s32 %s13, %s20
      %p22 = scmp.eq.s32.totalorder %s21, 0
      %s24 = sadd.s32 %s23, 1
      %s25 = scalar_select %p22, %s23, %s24
      %p28 = pneg %p22
      %p29 = scmp.eq.s32.totalorder %s13, 1
      %p30 = por %p28, %p29
      %p31 = scmp.ne.s32.totalorder %s23, %s26
      %p32 = scmp.eq.s32.totalorder %s13, 0
      %p33 = por %p31, %p32
      %p34 = scmp.ne.s32.totalorder %s23, %s26
      %p35 = scmp.eq.s32.totalorder %s18, 1
      %p36 = por %p34, %p35
      %p37 = scmp.ne.s32.totalorder %s26, %s27
      %p38 = scmp.eq.s32.totalorder %s18, 0
      %p39 = por %p37, %p38
      %p40 = scmp.ne.s32.totalorder %s26, %s27
      %p41 = scmp.eq.s32.totalorder %s19, 1
      %p42 = por %p40, %p41
      %p44 = scmp.ne.s32.totalorder %s27, %s43
      %p45 = scmp.eq.s32.totalorder %s19, 0
      %p46 = por %p44, %p45
      %s47 = ssub.s32 %s13, %s20
      %p48 = scmp.eq.s32.totalorder %s47, 0
      %s50 = sadd.s32 %s49, 1
      %s51 = scalar_select %p48, %s49, %s50
      %p54 = pneg %p48
      %p55 = scmp.eq.s32.totalorder %s13, 1
      %p56 = por %p54, %p55
      %p57 = scmp.ne.s32.totalorder %s49, %s52
      %p58 = scmp.eq.s32.totalorder %s13, 0
      %p59 = por %p57, %p58
      %p60 = scmp.ne.s32.totalorder %s49, %s52
      %p61 = scmp.eq.s32.totalorder %s18, 1
      %p62 = por %p60, %p61
      %p63 = scmp.ne.s32.totalorder %s52, %s53
      %p64 = scmp.eq.s32.totalorder %s18, 0
      %p65 = por %p63, %p64
      %p66 = scmp.ne.s32.totalorder %s52, %s53
      %p67 = scmp.eq.s32.totalorder %s19, 1
      %p68 = por %p66, %p67
      %p70 = scmp.ne.s32.totalorder %s53, %s69
      %p71 = scmp.eq.s32.totalorder %s19, 0
      %p72 = por %p70, %p71
      %s74 = sadd.s32 %s73, 1
      %p77 = scmp.eq.s32.totalorder %s13, 1
      %p78 = scmp.ne.s32.totalorder %s73, %s75
      %p79 = scmp.eq.s32.totalorder %s13, 0
      %p80 = por %p78, %p79
      %p81 = scmp.ne.s32.totalorder %s73, %s75
      %p82 = scmp.eq.s32.totalorder %s18, 1
      %p83 = por %p81, %p82
      %p84 = scmp.ne.s32.totalorder %s75, %s76
      %p85 = scmp.eq.s32.totalorder %s18, 0
      %p86 = por %p84, %p85
      %p87 = scmp.ne.s32.totalorder %s75, %s76
      %p88 = scmp.eq.s32.totalorder %s19, 1
      %p89 = por %p87, %p88
      %p91 = scmp.ne.s32.totalorder %s76, %s90
      %p92 = scmp.eq.s32.totalorder %s19, 0
      %p93 = por %p91, %p92
      %s95 = sadd.s32 %s94, 1
      %p98 = scmp.eq.s32.totalorder %s13, 1
      %p99 = scmp.ne.s32.totalorder %s94, %s96
      %p100 = scmp.eq.s32.totalorder %s13, 0
      %p101 = por %p99, %p100
      %p102 = scmp.ne.s32.totalorder %s94, %s96
      %p103 = scmp.eq.s32.totalorder %s18, 1
      %p104 = por %p102, %p103
      %p105 = scmp.ne.s32.totalorder %s96, %s97
      %p106 = scmp.eq.s32.totalorder %s18, 0
      %p107 = por %p105, %p106
      %p108 = scmp.ne.s32.totalorder %s96, %s97
      %p109 = scmp.eq.s32.totalorder %s19, 1
      %p110 = por %p108, %p109
      %p112 = scmp.ne.s32.totalorder %s97, %s111
      %p113 = scmp.eq.s32.totalorder %s19, 0
      %p114 = por %p112, %p113
      %s115 = ssub.s32 %s13, %s20
      %p116 = scmp.eq.s32.totalorder %s115, 0
      %s118 = sadd.s32 %s117, 1
      %s119 = scalar_select %p116, %s117, %s118
      %p122 = pneg %p116
      %p123 = scmp.eq.s32.totalorder %s13, 1
      %p124 = por %p122, %p123
      %p125 = scmp.ne.s32.totalorder %s117, %s120
      %p126 = scmp.eq.s32.totalorder %s13, 0
      %p127 = por %p125, %p126
      %p128 = scmp.ne.s32.totalorder %s117, %s120
      %p129 = scmp.eq.s32.totalorder %s18, 1
      %p130 = por %p128, %p129
      %p131 = scmp.ne.s32.totalorder %s120, %s121
      %p132 = scmp.eq.s32.totalorder %s18, 0
      %p133 = por %p131, %p132
      %p134 = scmp.ne.s32.totalorder %s120, %s121
      %p135 = scmp.eq.s32.totalorder %s19, 1
      %p136 = por %p134, %p135
      %p138 = scmp.ne.s32.totalorder %s121, %s137
      %p139 = scmp.eq.s32.totalorder %s19, 0
      %p140 = por %p138, %p139
      %p141 = scmp.le.s32.totalorder 1, %s13
      %p142 = scmp.lt.s32.totalorder %s13, 3
      %p143 = pnand %p141, %p142
      %p144 = pneg %p143
      // Predicated region
      $region9: #{tpu_custom_call.1} parent=5 // pred_check
        _
      $region10: #{tpu_custom_call.1} parent=5 // pred_check_branch
        %146 = sbr.rel (%p143) target = $region12
      $region11: #{tpu_custom_call.1} parent=5 // pred_region
        %s147 = ssub.s32 %s13, 1
        // Predicated region
        $region13: #{tpu_custom_call.1} parent=11 // pred_check
          %p148 = pneg %p86
        $region14: #{tpu_custom_call.1} parent=11 // pred_check_branch
          %150 = sbr.rel (%p148) target = $region16
        $region15: #{tpu_custom_call.1} parent=11 // pred_region
          _
        $region16: #{tpu_custom_call.1} parent=11 // pred_fallthru
          _
        // Predicated region
        $region17: #{tpu_custom_call.1} parent=11 // pred_check
          %p151 = pneg %p107
        $region18: #{tpu_custom_call.1} parent=11 // pred_check_branch
          %153 = sbr.rel (%p151) target = $region20
        $region19: #{tpu_custom_call.1} parent=11 // pred_region
          _
        $region20: #{tpu_custom_call.1} parent=11 // pred_fallthru
          _
      $region12: #{tpu_custom_call.1} parent=5 // pred_fallthru
        _
      %p154 = scmp.lt.s32.totalorder %s13, 2
      // Predicated region
      $region21: #{tpu_custom_call.1} parent=5 // pred_check
        %p155 = pneg %p154
      $region22: #{tpu_custom_call.1} parent=5 // pred_check_branch
        %157 = sbr.rel (%p155) target = $region24
      $region23: #{tpu_custom_call.1} parent=5 // pred_region
        // Predicated region
        $region25: #{tpu_custom_call.1} parent=23 // pred_check
          %p158 = pneg %p33
        $region26: #{tpu_custom_call.1} parent=23 // pred_check_branch
          %160 = sbr.rel (%p158) target = $region28
        $region27: #{tpu_custom_call.1} parent=23 // pred_region
          %s161 = smul.u32 128, %s13
          %p162 = scmp.lt.s32.totalorder %s161, 255
          %s163 = scalar_select %p162, %s161, 255
          %s164 = smul.addr %s163, 8
          %s165 = scalar_lea.vmem %s0, %s164
          %s166 = smul.u32 128, %s13
        $region28: #{tpu_custom_call.1} parent=23 // pred_fallthru
          _
        // Predicated region
        $region29: #{tpu_custom_call.1} parent=23 // pred_check
          %p167 = pneg %p59
        $region30: #{tpu_custom_call.1} parent=23 // pred_check_branch
          %169 = sbr.rel (%p167) target = $region32
        $region31: #{tpu_custom_call.1} parent=23 // pred_region
          %s170 = smul.u32 128, %s13
          %p171 = scmp.lt.s32.totalorder %s170, 255
          %s172 = scalar_select %p171, %s170, 255
          %s173 = smul.addr %s172, 8
          %s174 = scalar_lea.vmem %s1, %s173
          %s175 = smul.u32 128, %s13
        $region32: #{tpu_custom_call.1} parent=23 // pred_fallthru
          _
      $region24: #{tpu_custom_call.1} parent=5 // pred_fallthru
        _
      %p176 = scmp.le.s32.totalorder 1, %s13
      %p177 = scmp.lt.s32.totalorder %s13, 3
      %p178 = pnand %p176, %p177
      %p179 = pneg %p178
      // Predicated region
      $region33: #{tpu_custom_call.1} parent=5 // pred_check
        _
      $region34: #{tpu_custom_call.1} parent=5 // pred_check_branch
        %181 = sbr.rel (%p178) target = $region36
      $region35: #{tpu_custom_call.1} parent=5 // pred_region
        %s182 = ssub.s32 %s13, 1
        %s183 = smul.u32 128, %s18
        %p184 = scmp.lt.s32.totalorder %s183, 255
        %s185 = scalar_select %p184, %s183, 255
        %s186 = smul.addr %s185, 8
        %s187 = scalar_lea.vmem %s0, %s186
        %p188 = pneg %p39
        %p189 = pneg %p36
        %s190 = smul.u32 128, %s18
        %p191 = scmp.lt.s32.totalorder %s190, 255
        %s192 = scalar_select %p191, %s190, 255
        %s193 = smul.addr %s192, 8
        %s194 = scalar_lea.vmem %s1, %s193
        %p195 = pneg %p65
        %p196 = pneg %p62
        %p197 = pneg %p86
        %p198 = pneg %p83
        %p199 = pneg %p107
        %p200 = pneg %p104
        %p201 = pneg %p133
        %p202 = pneg %p130
        %s203 = sand.u32 %s120, 1
        %s204 = scalar_lea.sflag [#allocation3], %s203
        %s205 = sand.u32 %s120, 1
        %s206 = smul.addr %s205, 8
        %s207 = scalar_lea.vmem [#allocation2], %s206
        %s208 = smul.u32 128, %s18
        %p209 = scmp.lt.s32.totalorder %s208, 255
        %s210 = scalar_select %p209, %s208, 255
        %s211 = smul.addr %s210, 8
        %s212 = scalar_lea.vmem %s0, %s211
        %s213 = smul.u32 128, %s18
        %s214 = smul.u32 128, %s18
        %p215 = scmp.lt.s32.totalorder %s214, 255
        %s216 = scalar_select %p215, %s214, 255
        %s217 = smul.addr %s216, 8
        %s218 = scalar_lea.vmem %s1, %s217
        %s219 = smul.u32 128, %s18
        %v220 = vld [vmem:[%s212] sm:$0xff]
        %v221 = vld [vmem:[%s212 + $0x8] sm:$0xff]
        %v222 = vld [vmem:[%s212 + $0x10] sm:$0xff]
        %v223 = vld [vmem:[%s212 + $0x18] sm:$0xff]
        %v224 = vld [vmem:[%s212 + $0x20] sm:$0xff]
        %v225 = vld [vmem:[%s212 + $0x28] sm:$0xff]
        %v226 = vld [vmem:[%s212 + $0x30] sm:$0xff]
        %v227 = vld [vmem:[%s212 + $0x38] sm:$0xff]
        %v228 = vld [vmem:[%s212 + $0x40] sm:$0xff]
        %v229 = vld [vmem:[%s212 + $0x48] sm:$0xff]
        %v230 = vld [vmem:[%s212 + $0x50] sm:$0xff]
        %v231 = vld [vmem:[%s212 + $0x58] sm:$0xff]
        %v232 = vld [vmem:[%s212 + $0x60] sm:$0xff]
        %v233 = vld [vmem:[%s212 + $0x68] sm:$0xff]
        %v234 = vld [vmem:[%s212 + $0x70] sm:$0xff]
        %v235 = vld [vmem:[%s212 + $0x78] sm:$0xff]
        %v236 = vld [vmem:[%s212 + $0x80] sm:$0xff]
        %v237 = vld [vmem:[%s212 + $0x88] sm:$0xff]
        %v238 = vld [vmem:[%s212 + $0x90] sm:$0xff]
        %v239 = vld [vmem:[%s212 + $0x98] sm:$0xff]
        %v240 = vld [vmem:[%s212 + $0xa0] sm:$0xff]
        %v241 = vld [vmem:[%s212 + $0xa8] sm:$0xff]
        %v242 = vld [vmem:[%s212 + $0xb0] sm:$0xff]
        %v243 = vld [vmem:[%s212 + $0xb8] sm:$0xff]
        %v244 = vld [vmem:[%s212 + $0xc0] sm:$0xff]
        %v245 = vld [vmem:[%s212 + $0xc8] sm:$0xff]
        %v246 = vld [vmem:[%s212 + $0xd0] sm:$0xff]
        %v247 = vld [vmem:[%s212 + $0xd8] sm:$0xff]
        %v248 = vld [vmem:[%s212 + $0xe0] sm:$0xff]
        %v249 = vld [vmem:[%s212 + $0xe8] sm:$0xff]
        %v250 = vld [vmem:[%s212 + $0xf0] sm:$0xff]
        %v251 = vld [vmem:[%s212 + $0xf8] sm:$0xff]
        %v252 = vld [vmem:[%s212 + $0x100] sm:$0xff]
        %v253 = vld [vmem:[%s212 + $0x108] sm:$0xff]
        %v254 = vld [vmem:[%s212 + $0x110] sm:$0xff]
        %v255 = vld [vmem:[%s212 + $0x118] sm:$0xff]
        %v256 = vld [vmem:[%s212 + $0x120] sm:$0xff]
        %v257 = vld [vmem:[%s212 + $0x128] sm:$0xff]
        %v258 = vld [vmem:[%s212 + $0x130] sm:$0xff]
        %v259 = vld [vmem:[%s212 + $0x138] sm:$0xff]
        %v260 = vld [vmem:[%s212 + $0x140] sm:$0xff]
        %v261 = vld [vmem:[%s212 + $0x148] sm:$0xff]
        %v262 = vld [vmem:[%s212 + $0x150] sm:$0xff]
        %v263 = vld [vmem:[%s212 + $0x158] sm:$0xff]
        %v264 = vld [vmem:[%s212 + $0x160] sm:$0xff]
        %v265 = vld [vmem:[%s212 + $0x168] sm:$0xff]
        %v266 = vld [vmem:[%s212 + $0x170] sm:$0xff]
        %v267 = vld [vmem:[%s212 + $0x178] sm:$0xff]
        %v268 = vld [vmem:[%s212 + $0x180] sm:$0xff]
        %v269 = vld [vmem:[%s212 + $0x188] sm:$0xff]
        %v270 = vld [vmem:[%s212 + $0x190] sm:$0xff]
        %v271 = vld [vmem:[%s212 + $0x198] sm:$0xff]
        %v272 = vld [vmem:[%s212 + $0x1a0] sm:$0xff]
        %v273 = vld [vmem:[%s212 + $0x1a8] sm:$0xff]
        %v274 = vld [vmem:[%s212 + $0x1b0] sm:$0xff]
        %v275 = vld [vmem:[%s212 + $0x1b8] sm:$0xff]
        %v276 = vld [vmem:[%s212 + $0x1c0] sm:$0xff]
        %v277 = vld [vmem:[%s212 + $0x1c8] sm:$0xff]
        %v278 = vld [vmem:[%s212 + $0x1d0] sm:$0xff]
        %v279 = vld [vmem:[%s212 + $0x1d8] sm:$0xff]
        %v280 = vld [vmem:[%s212 + $0x1e0] sm:$0xff]
        %v281 = vld [vmem:[%s212 + $0x1e8] sm:$0xff]
        %v282 = vld [vmem:[%s212 + $0x1f0] sm:$0xff]
        %v283 = vld [vmem:[%s212 + $0x1f8] sm:$0xff]
        %v284 = vld [vmem:[%s212 + $0x200] sm:$0xff]
        %v285 = vld [vmem:[%s212 + $0x208] sm:$0xff]
        %v286 = vld [vmem:[%s212 + $0x210] sm:$0xff]
        %v287 = vld [vmem:[%s212 + $0x218] sm:$0xff]
        %v288 = vld [vmem:[%s212 + $0x220] sm:$0xff]
        %v289 = vld [vmem:[%s212 + $0x228] sm:$0xff]
        %v290 = vld [vmem:[%s212 + $0x230] sm:$0xff]
        %v291 = vld [vmem:[%s212 + $0x238] sm:$0xff]
        %v292 = vld [vmem:[%s212 + $0x240] sm:$0xff]
        %v293 = vld [vmem:[%s212 + $0x248] sm:$0xff]
        %v294 = vld [vmem:[%s212 + $0x250] sm:$0xff]
        %v295 = vld [vmem:[%s212 + $0x258] sm:$0xff]
        %v296 = vld [vmem:[%s212 + $0x260] sm:$0xff]
        %v297 = vld [vmem:[%s212 + $0x268] sm:$0xff]
        %v298 = vld [vmem:[%s212 + $0x270] sm:$0xff]
        %v299 = vld [vmem:[%s212 + $0x278] sm:$0xff]
        %v300 = vld [vmem:[%s212 + $0x280] sm:$0xff]
        %v301 = vld [vmem:[%s212 + $0x288] sm:$0xff]
        %v302 = vld [vmem:[%s212 + $0x290] sm:$0xff]
        %v303 = vld [vmem:[%s212 + $0x298] sm:$0xff]
        %v304 = vld [vmem:[%s212 + $0x2a0] sm:$0xff]
        %v305 = vld [vmem:[%s212 + $0x2a8] sm:$0xff]
        %v306 = vld [vmem:[%s212 + $0x2b0] sm:$0xff]
        %v307 = vld [vmem:[%s212 + $0x2b8] sm:$0xff]
        %v308 = vld [vmem:[%s212 + $0x2c0] sm:$0xff]
        %v309 = vld [vmem:[%s212 + $0x2c8] sm:$0xff]
        %v310 = vld [vmem:[%s212 + $0x2d0] sm:$0xff]
        %v311 = vld [vmem:[%s212 + $0x2d8] sm:$0xff]
        %v312 = vld [vmem:[%s212 + $0x2e0] sm:$0xff]
        %v313 = vld [vmem:[%s212 + $0x2e8] sm:$0xff]
        %v314 = vld [vmem:[%s212 + $0x2f0] sm:$0xff]
        %v315 = vld [vmem:[%s212 + $0x2f8] sm:$0xff]
        %v316 = vld [vmem:[%s212 + $0x300] sm:$0xff]
        %v317 = vld [vmem:[%s212 + $0x308] sm:$0xff]
        %v318 = vld [vmem:[%s212 + $0x310] sm:$0xff]
        %v319 = vld [vmem:[%s212 + $0x318] sm:$0xff]
        %v320 = vld [vmem:[%s212 + $0x320] sm:$0xff]
        %v321 = vld [vmem:[%s212 + $0x328] sm:$0xff]
        %v322 = vld [vmem:[%s212 + $0x330] sm:$0xff]
        %v323 = vld [vmem:[%s212 + $0x338] sm:$0xff]
        %v324 = vld [vmem:[%s212 + $0x340] sm:$0xff]
        %v325 = vld [vmem:[%s212 + $0x348] sm:$0xff]
        %v326 = vld [vmem:[%s212 + $0x350] sm:$0xff]
        %v327 = vld [vmem:[%s212 + $0x358] sm:$0xff]
        %v328 = vld [vmem:[%s212 + $0x360] sm:$0xff]
        %v329 = vld [vmem:[%s212 + $0x368] sm:$0xff]
        %v330 = vld [vmem:[%s212 + $0x370] sm:$0xff]
        %v331 = vld [vmem:[%s212 + $0x378] sm:$0xff]
        %v332 = vld [vmem:[%s212 + $0x380] sm:$0xff]
        %v333 = vld [vmem:[%s212 + $0x388] sm:$0xff]
        %v334 = vld [vmem:[%s212 + $0x390] sm:$0xff]
        %v335 = vld [vmem:[%s212 + $0x398] sm:$0xff]
        %v336 = vld [vmem:[%s212 + $0x3a0] sm:$0xff]
        %v337 = vld [vmem:[%s212 + $0x3a8] sm:$0xff]
        %v338 = vld [vmem:[%s212 + $0x3b0] sm:$0xff]
        %v339 = vld [vmem:[%s212 + $0x3b8] sm:$0xff]
        %v340 = vld [vmem:[%s212 + $0x3c0] sm:$0xff]
        %v341 = vld [vmem:[%s212 + $0x3c8] sm:$0xff]
        %v342 = vld [vmem:[%s212 + $0x3d0] sm:$0xff]
        %v343 = vld [vmem:[%s212 + $0x3d8] sm:$0xff]
        %v344 = vld [vmem:[%s212 + $0x3e0] sm:$0xff]
        %v345 = vld [vmem:[%s212 + $0x3e8] sm:$0xff]
        %v346 = vld [vmem:[%s212 + $0x3f0] sm:$0xff]
        %v347 = vld [vmem:[%s212 + $0x3f8] sm:$0xff]
        %v348 = vld [vmem:[%s218] sm:$0xff]
        %v349 = vld [vmem:[%s218 + $0x8] sm:$0xff]
        %v350 = vld [vmem:[%s218 + $0x10] sm:$0xff]
        %v351 = vld [vmem:[%s218 + $0x18] sm:$0xff]
        %v352 = vld [vmem:[%s218 + $0x20] sm:$0xff]
        %v353 = vld [vmem:[%s218 + $0x28] sm:$0xff]
        %v354 = vld [vmem:[%s218 + $0x30] sm:$0xff]
        %v355 = vld [vmem:[%s218 + $0x38] sm:$0xff]
        %v356 = vld [vmem:[%s218 + $0x40] sm:$0xff]
        %v357 = vld [vmem:[%s218 + $0x48] sm:$0xff]
        %v358 = vld [vmem:[%s218 + $0x50] sm:$0xff]
        %v359 = vld [vmem:[%s218 + $0x58] sm:$0xff]
        %v360 = vld [vmem:[%s218 + $0x60] sm:$0xff]
        %v361 = vld [vmem:[%s218 + $0x68] sm:$0xff]
        %v362 = vld [vmem:[%s218 + $0x70] sm:$0xff]
        %v363 = vld [vmem:[%s218 + $0x78] sm:$0xff]
        %v364 = vld [vmem:[%s218 + $0x80] sm:$0xff]
        %v365 = vld [vmem:[%s218 + $0x88] sm:$0xff]
        %v366 = vld [vmem:[%s218 + $0x90] sm:$0xff]
        %v367 = vld [vmem:[%s218 + $0x98] sm:$0xff]
        %v368 = vld [vmem:[%s218 + $0xa0] sm:$0xff]
        %v369 = vld [vmem:[%s218 + $0xa8] sm:$0xff]
        %v370 = vld [vmem:[%s218 + $0xb0] sm:$0xff]
        %v371 = vld [vmem:[%s218 + $0xb8] sm:$0xff]
        %v372 = vld [vmem:[%s218 + $0xc0] sm:$0xff]
        %v373 = vld [vmem:[%s218 + $0xc8] sm:$0xff]
        %v374 = vld [vmem:[%s218 + $0xd0] sm:$0xff]
        %v375 = vld [vmem:[%s218 + $0xd8] sm:$0xff]
        %v376 = vld [vmem:[%s218 + $0xe0] sm:$0xff]
        %v377 = vld [vmem:[%s218 + $0xe8] sm:$0xff]
        %v378 = vld [vmem:[%s218 + $0xf0] sm:$0xff]
        %v379 = vld [vmem:[%s218 + $0xf8] sm:$0xff]
        %v380 = vld [vmem:[%s218 + $0x100] sm:$0xff]
        %v381 = vld [vmem:[%s218 + $0x108] sm:$0xff]
        %v382 = vld [vmem:[%s218 + $0x110] sm:$0xff]
        %v383 = vld [vmem:[%s218 + $0x118] sm:$0xff]
        %v384 = vld [vmem:[%s218 + $0x120] sm:$0xff]
        %v385 = vld [vmem:[%s218 + $0x128] sm:$0xff]
        %v386 = vld [vmem:[%s218 + $0x130] sm:$0xff]
        %v387 = vld [vmem:[%s218 + $0x138] sm:$0xff]
        %v388 = vld [vmem:[%s218 + $0x140] sm:$0xff]
        %v389 = vld [vmem:[%s218 + $0x148] sm:$0xff]
        %v390 = vld [vmem:[%s218 + $0x150] sm:$0xff]
        %v391 = vld [vmem:[%s218 + $0x158] sm:$0xff]
        %v392 = vld [vmem:[%s218 + $0x160] sm:$0xff]
        %v393 = vld [vmem:[%s218 + $0x168] sm:$0xff]
        %v394 = vld [vmem:[%s218 + $0x170] sm:$0xff]
        %v395 = vld [vmem:[%s218 + $0x178] sm:$0xff]
        %v396 = vld [vmem:[%s218 + $0x180] sm:$0xff]
        %v397 = vld [vmem:[%s218 + $0x188] sm:$0xff]
        %v398 = vld [vmem:[%s218 + $0x190] sm:$0xff]
        %v399 = vld [vmem:[%s218 + $0x198] sm:$0xff]
        %v400 = vld [vmem:[%s218 + $0x1a0] sm:$0xff]
        %v401 = vld [vmem:[%s218 + $0x1a8] sm:$0xff]
        %v402 = vld [vmem:[%s218 + $0x1b0] sm:$0xff]
        %v403 = vld [vmem:[%s218 + $0x1b8] sm:$0xff]
        %v404 = vld [vmem:[%s218 + $0x1c0] sm:$0xff]
        %v405 = vld [vmem:[%s218 + $0x1c8] sm:$0xff]
        %v406 = vld [vmem:[%s218 + $0x1d0] sm:$0xff]
        %v407 = vld [vmem:[%s218 + $0x1d8] sm:$0xff]
        %v408 = vld [vmem:[%s218 + $0x1e0] sm:$0xff]
        %v409 = vld [vmem:[%s218 + $0x1e8] sm:$0xff]
        %v410 = vld [vmem:[%s218 + $0x1f0] sm:$0xff]
        %v411 = vld [vmem:[%s218 + $0x1f8] sm:$0xff]
        %v412 = vld [vmem:[%s218 + $0x200] sm:$0xff]
        %v413 = vld [vmem:[%s218 + $0x208] sm:$0xff]
        %v414 = vld [vmem:[%s218 + $0x210] sm:$0xff]
        %v415 = vld [vmem:[%s218 + $0x218] sm:$0xff]
        %v416 = vld [vmem:[%s218 + $0x220] sm:$0xff]
        %v417 = vld [vmem:[%s218 + $0x228] sm:$0xff]
        %v418 = vld [vmem:[%s218 + $0x230] sm:$0xff]
        %v419 = vld [vmem:[%s218 + $0x238] sm:$0xff]
        %v420 = vld [vmem:[%s218 + $0x240] sm:$0xff]
        %v421 = vld [vmem:[%s218 + $0x248] sm:$0xff]
        %v422 = vld [vmem:[%s218 + $0x250] sm:$0xff]
        %v423 = vld [vmem:[%s218 + $0x258] sm:$0xff]
        %v424 = vld [vmem:[%s218 + $0x260] sm:$0xff]
        %v425 = vld [vmem:[%s218 + $0x268] sm:$0xff]
        %v426 = vld [vmem:[%s218 + $0x270] sm:$0xff]
        %v427 = vld [vmem:[%s218 + $0x278] sm:$0xff]
        %v428 = vld [vmem:[%s218 + $0x280] sm:$0xff]
        %v429 = vld [vmem:[%s218 + $0x288] sm:$0xff]
        %v430 = vld [vmem:[%s218 + $0x290] sm:$0xff]
        %v431 = vld [vmem:[%s218 + $0x298] sm:$0xff]
        %v432 = vld [vmem:[%s218 + $0x2a0] sm:$0xff]
        %v433 = vld [vmem:[%s218 + $0x2a8] sm:$0xff]
        %v434 = vld [vmem:[%s218 + $0x2b0] sm:$0xff]
        %v435 = vld [vmem:[%s218 + $0x2b8] sm:$0xff]
        %v436 = vld [vmem:[%s218 + $0x2c0] sm:$0xff]
        %v437 = vld [vmem:[%s218 + $0x2c8] sm:$0xff]
        %v438 = vld [vmem:[%s218 + $0x2d0] sm:$0xff]
        %v439 = vld [vmem:[%s218 + $0x2d8] sm:$0xff]
        %v440 = vld [vmem:[%s218 + $0x2e0] sm:$0xff]
        %v441 = vld [vmem:[%s218 + $0x2e8] sm:$0xff]
        %v442 = vld [vmem:[%s218 + $0x2f0] sm:$0xff]
        %v443 = vld [vmem:[%s218 + $0x2f8] sm:$0xff]
        %v444 = vld [vmem:[%s218 + $0x300] sm:$0xff]
        %v445 = vld [vmem:[%s218 + $0x308] sm:$0xff]
        %v446 = vld [vmem:[%s218 + $0x310] sm:$0xff]
        %v447 = vld [vmem:[%s218 + $0x318] sm:$0xff]
        %v448 = vld [vmem:[%s218 + $0x320] sm:$0xff]
        %v449 = vld [vmem:[%s218 + $0x328] sm:$0xff]
        %v450 = vld [vmem:[%s218 + $0x330] sm:$0xff]
        %v451 = vld [vmem:[%s218 + $0x338] sm:$0xff]
        %v452 = vld [vmem:[%s218 + $0x340] sm:$0xff]
        %v453 = vld [vmem:[%s218 + $0x348] sm:$0xff]
        %v454 = vld [vmem:[%s218 + $0x350] sm:$0xff]
        %v455 = vld [vmem:[%s218 + $0x358] sm:$0xff]
        %v456 = vld [vmem:[%s218 + $0x360] sm:$0xff]
        %v457 = vld [vmem:[%s218 + $0x368] sm:$0xff]
        %v458 = vld [vmem:[%s218 + $0x370] sm:$0xff]
        %v459 = vld [vmem:[%s218 + $0x378] sm:$0xff]
        %v460 = vld [vmem:[%s218 + $0x380] sm:$0xff]
        %v461 = vld [vmem:[%s218 + $0x388] sm:$0xff]
        %v462 = vld [vmem:[%s218 + $0x390] sm:$0xff]
        %v463 = vld [vmem:[%s218 + $0x398] sm:$0xff]
        %v464 = vld [vmem:[%s218 + $0x3a0] sm:$0xff]
        %v465 = vld [vmem:[%s218 + $0x3a8] sm:$0xff]
        %v466 = vld [vmem:[%s218 + $0x3b0] sm:$0xff]
        %v467 = vld [vmem:[%s218 + $0x3b8] sm:$0xff]
        %v468 = vld [vmem:[%s218 + $0x3c0] sm:$0xff]
        %v469 = vld [vmem:[%s218 + $0x3c8] sm:$0xff]
        %v470 = vld [vmem:[%s218 + $0x3d0] sm:$0xff]
        %v471 = vld [vmem:[%s218 + $0x3d8] sm:$0xff]
        %v472 = vld [vmem:[%s218 + $0x3e0] sm:$0xff]
        %v473 = vld [vmem:[%s218 + $0x3e8] sm:$0xff]
        %v474 = vld [vmem:[%s218 + $0x3f0] sm:$0xff]
        %v475 = vld [vmem:[%s218 + $0x3f8] sm:$0xff]
        %v476 = vld [vmem:[%s2] sm:$0xff]
        %v477 = vld [vmem:[%s2 + $0x8] sm:$0xff]
        %v478 = vld [vmem:[%s2 + $0x10] sm:$0xff]
        %v479 = vld [vmem:[%s2 + $0x18] sm:$0xff]
        %vm480 = vcmask 261120
        %v482 = vsel %vm480, %v220, 0
        %v485 = vsel %vm480, %v221, 0
        %v488 = vsel %vm480, %v222, 0
        %v491 = vsel %vm480, %v223, 0
        %v494 = vsel %vm480, %v224, 0
        %v497 = vsel %vm480, %v225, 0
        %v500 = vsel %vm480, %v226, 0
        %v503 = vsel %vm480, %v227, 0
        %v506 = vsel %vm480, %v228, 0
        %v509 = vsel %vm480, %v229, 0
        %v512 = vsel %vm480, %v230, 0
        %v515 = vsel %vm480, %v231, 0
        %v518 = vsel %vm480, %v232, 0
        %v521 = vsel %vm480, %v233, 0
        %v524 = vsel %vm480, %v234, 0
        %v527 = vsel %vm480, %v235, 0
        %v530 = vsel %vm480, %v236, 0
        %v533 = vsel %vm480, %v237, 0
        %v536 = vsel %vm480, %v238, 0
        %v539 = vsel %vm480, %v239, 0
        %v542 = vsel %vm480, %v240, 0
        %v545 = vsel %vm480, %v241, 0
        %v548 = vsel %vm480, %v242, 0
        %v551 = vsel %vm480, %v243, 0
        %v554 = vsel %vm480, %v244, 0
        %v557 = vsel %vm480, %v245, 0
        %v560 = vsel %vm480, %v246, 0
        %v563 = vsel %vm480, %v247, 0
        %v566 = vsel %vm480, %v248, 0
        %v569 = vsel %vm480, %v249, 0
        %v572 = vsel %vm480, %v250, 0
        %v575 = vsel %vm480, %v251, 0
        %v578 = vsel %vm480, %v252, 0
        %v581 = vsel %vm480, %v253, 0
        %v584 = vsel %vm480, %v254, 0
        %v587 = vsel %vm480, %v255, 0
        %v590 = vsel %vm480, %v256, 0
        %v593 = vsel %vm480, %v257, 0
        %v596 = vsel %vm480, %v258, 0
        %v599 = vsel %vm480, %v259, 0
        %v602 = vsel %vm480, %v260, 0
        %v605 = vsel %vm480, %v261, 0
        %v608 = vsel %vm480, %v262, 0
        %v611 = vsel %vm480, %v263, 0
        %v614 = vsel %vm480, %v264, 0
        %v617 = vsel %vm480, %v265, 0
        %v620 = vsel %vm480, %v266, 0
        %v623 = vsel %vm480, %v267, 0
        %v626 = vsel %vm480, %v268, 0
        %v629 = vsel %vm480, %v269, 0
        %v632 = vsel %vm480, %v270, 0
        %v635 = vsel %vm480, %v271, 0
        %v638 = vsel %vm480, %v272, 0
        %v641 = vsel %vm480, %v273, 0
        %v644 = vsel %vm480, %v274, 0
        %v647 = vsel %vm480, %v275, 0
        %v650 = vsel %vm480, %v276, 0
        %v653 = vsel %vm480, %v277, 0
        %v656 = vsel %vm480, %v278, 0
        %v659 = vsel %vm480, %v279, 0
        %v662 = vsel %vm480, %v280, 0
        %v665 = vsel %vm480, %v281, 0
        %v668 = vsel %vm480, %v282, 0
        %v671 = vsel %vm480, %v283, 0
        %v674 = vsel %vm480, %v284, 0
        %v677 = vsel %vm480, %v285, 0
        %v680 = vsel %vm480, %v286, 0
        %v683 = vsel %vm480, %v287, 0
        %v686 = vsel %vm480, %v288, 0
        %v689 = vsel %vm480, %v289, 0
        %v692 = vsel %vm480, %v290, 0
        %v695 = vsel %vm480, %v291, 0
        %v698 = vsel %vm480, %v292, 0
        %v701 = vsel %vm480, %v293, 0
        %v704 = vsel %vm480, %v294, 0
        %v707 = vsel %vm480, %v295, 0
        %v710 = vsel %vm480, %v296, 0
        %v713 = vsel %vm480, %v297, 0
        %v716 = vsel %vm480, %v298, 0
        %v719 = vsel %vm480, %v299, 0
        %v722 = vsel %vm480, %v300, 0
        %v725 = vsel %vm480, %v301, 0
        %v728 = vsel %vm480, %v302, 0
        %v731 = vsel %vm480, %v303, 0
        %v734 = vsel %vm480, %v304, 0
        %v737 = vsel %vm480, %v305, 0
        %v740 = vsel %vm480, %v306, 0
        %v743 = vsel %vm480, %v307, 0
        %v746 = vsel %vm480, %v308, 0
        %v749 = vsel %vm480, %v309, 0
        %v752 = vsel %vm480, %v310, 0
        %v755 = vsel %vm480, %v311, 0
        %v758 = vsel %vm480, %v312, 0
        %v761 = vsel %vm480, %v313, 0
        %v764 = vsel %vm480, %v314, 0
        %v767 = vsel %vm480, %v315, 0
        %v770 = vsel %vm480, %v316, 0
        %v773 = vsel %vm480, %v317, 0
        %v776 = vsel %vm480, %v318, 0
        %v779 = vsel %vm480, %v319, 0
        %v782 = vsel %vm480, %v320, 0
        %v785 = vsel %vm480, %v321, 0
        %v788 = vsel %vm480, %v322, 0
        %v791 = vsel %vm480, %v323, 0
        %v794 = vsel %vm480, %v324, 0
        %v797 = vsel %vm480, %v325, 0
        %v800 = vsel %vm480, %v326, 0
        %v803 = vsel %vm480, %v327, 0
        %v806 = vsel %vm480, %v328, 0
        %v809 = vsel %vm480, %v329, 0
        %v812 = vsel %vm480, %v330, 0
        %v815 = vsel %vm480, %v331, 0
        %v818 = vsel %vm480, %v332, 0
        %v821 = vsel %vm480, %v333, 0
        %v824 = vsel %vm480, %v334, 0
        %v827 = vsel %vm480, %v335, 0
        %v830 = vsel %vm480, %v336, 0
        %v833 = vsel %vm480, %v337, 0
        %v836 = vsel %vm480, %v338, 0
        %v839 = vsel %vm480, %v339, 0
        %v842 = vsel %vm480, %v340, 0
        %v845 = vsel %vm480, %v341, 0
        %v848 = vsel %vm480, %v342, 0
        %v851 = vsel %vm480, %v343, 0
        %v854 = vsel %vm480, %v344, 0
        %v857 = vsel %vm480, %v345, 0
        %v860 = vsel %vm480, %v346, 0
        %v863 = vsel %vm480, %v347, 0
        %865 = vmatprep.subr.mxu0 0.0
        %866 = vmatpush1.msra.mxu0 %v476
        %867 = vmatprep.subr.mxu0 0.0
        %868 = vmatpush1.msra.mxu0 %v477
        %869 = vmatprep.subr.mxu0 0.0
        %870 = vmatpush1.msra.mxu0 %v478
        %871 = vmatprep.subr.mxu0 0.0
        %872 = vmatpush1.msra.mxu0 %v479
        %873 = vmatprep.subr.mxu0 0.0
        %874 = vmatpush1.msra.mxu0 0.0
        %875 = vmatprep.subr.mxu0 0.0
        %876 = vmatpush1.msra.mxu0 0.0
        %877 = vmatprep.subr.mxu0 0.0
        %878 = vmatpush1.msra.mxu0 0.0
        %879 = vmatprep.subr.mxu0 0.0
        %880 = vmatpush1.msra.mxu0 0.0
        %881 = vmatprep.subr.mxu0 0.0
        %882 = vmatpush1.msra.mxu0 0.0
        %883 = vmatprep.subr.mxu0 0.0
        %884 = vmatpush1.msra.mxu0 0.0
        %885 = vmatprep.subr.mxu0 0.0
        %886 = vmatpush1.msra.mxu0 0.0
        %887 = vmatprep.subr.mxu0 0.0
        %888 = vmatpush1.msra.mxu0 0.0
        %889 = vmatprep.subr.mxu0 0.0
        %890 = vmatpush1.msra.mxu0 0.0
        %891 = vmatprep.subr.mxu0 0.0
        %892 = vmatpush1.msra.mxu0 0.0
        %893 = vmatprep.subr.mxu0 0.0
        %894 = vmatpush1.msra.mxu0 0.0
        %895 = vmatprep.subr.mxu0 0.0
        %896 = vmatpush1.msra.mxu0 0.0
        %897 = vmatprep.subr.mxu0 0.0
        %898 = vmatpush1.msra.mxu0 0.0
        %899 = vmatprep.subr.mxu0 0.0
        %900 = vmatpush1.msra.mxu0 0.0
        %901 = vmatprep.subr.mxu0 0.0
        %902 = vmatpush1.msra.mxu0 0.0
        %903 = vmatprep.subr.mxu0 0.0
        %904 = vmatpush1.msra.mxu0 0.0
        %905 = vmatprep.subr.mxu0 0.0
        %906 = vmatpush1.msra.mxu0 0.0
        %907 = vmatprep.subr.mxu0 0.0
        %908 = vmatpush1.msra.mxu0 0.0
        %909 = vmatprep.subr.mxu0 0.0
        %910 = vmatpush1.msra.mxu0 0.0
        %911 = vmatprep.subr.mxu0 0.0
        %912 = vmatpush1.msra.mxu0 0.0
        %913 = vmatprep.subr.mxu0 0.0
        %914 = vmatpush1.msra.mxu0 0.0
        %915 = vmatprep.subr.mxu0 0.0
        %916 = vmatpush1.msra.mxu0 0.0
        %917 = vmatprep.subr.mxu0 0.0
        %918 = vmatpush1.msra.mxu0 0.0
        %919 = vmatprep.subr.mxu0 0.0
        %920 = vmatpush1.msra.mxu0 0.0
        %921 = vmatprep.subr.mxu0 0.0
        %922 = vmatpush1.msra.mxu0 0.0
        %923 = vmatprep.subr.mxu0 0.0
        %924 = vmatpush1.msra.mxu0 0.0
        %925 = vmatprep.subr.mxu0 0.0
        %926 = vmatpush1.msra.mxu0 0.0
        %927 = vmatprep.subr.mxu0 0.0
        %928 = vmatpush1.msra.mxu0 0.0
        %929 = vmatprep.mubr.f32.mxu0 0.0
        %930 = vmatmul.mubr.f32.gmra.mrb[0].mxu0 %v482
        %v931 = vpop.f32.mrb[0].mxu0
        %v932 = vadd.f32 0.0, %v931
        %v933 = vpop.f32.mrb[0].mxu0
        %934 = vmatprep.mubr.f32.mxu0 0.0
        %935 = vmatmul.mubr.f32.gmra.mrb[0].mxu0 %v485
        %v936 = vpop.f32.mrb[0].mxu0
        %v937 = vadd.f32 0.0, %v936
        %v938 = vpop.f32.mrb[0].mxu0
        %939 = vmatprep.mubr.f32.mxu0 0.0
        %940 = vmatmul.mubr.f32.gmra.mrb[0].mxu0 %v488
        %v941 = vpop.f32.mrb[0].mxu0
        %v942 = vadd.f32 0.0, %v941
        %v943 = vpop.f32.mrb[0].mxu0
        %944 = vmatprep.mubr.f32.mxu0 0.0
        %945 = vmatmul.mubr.f32.gmra.mrb[0].mxu0 %v491
        %v946 = vpop.f32.mrb[0].mxu0
        %v947 = vadd.f32 0.0, %v946
        %v948 = vpop.f32.mrb[0].mxu0
        %949 = vmatprep.mubr.f32.mxu0 0.0
        %950 = vmatmul.mubr.f32.gmra.mrb[0].mxu0 %v494
        %v951 = vpop.f32.mrb[0].mxu0
        %v952 = vadd.f32 0.0, %v951
        %v953 = vpop.f32.mrb[0].mxu0
        %954 = vmatprep.mubr.f32.mxu0 0.0
        %955 = vmatmul.mubr.f32.gmra.mrb[0].mxu0 %v497
        %v956 = vpop.f32.mrb[0].mxu0
        %v957 = vadd.f32 0.0, %v956
        %v958 = vpop.f32.mrb[0].mxu0
        %959 = vmatprep.mubr.f32.mxu0 0.0
        %960 = vmatmul.mubr.f32.gmra.mrb[0].mxu0 %v500
        %v961 = vpop.f32.mrb[0].mxu0
        %v962 = vadd.f32 0.0, %v961
        %v963 = vpop.f32.mrb[0].mxu0
        %964 = vmatprep.mubr.f32.mxu0 0.0
        %965 = vmatmul.mubr.f32.gmra.mrb[0].mxu0 %v503
        %v966 = vpop.f32.mrb[0].mxu0
        %v967 = vadd.f32 0.0, %v966
        %v968 = vpop.f32.mrb[0].mxu0
        %969 = vmatprep.mubr.f32.mxu0 0.0
        %970 = vmatmul.mubr.f32.gmra.mrb[0].mxu0 %v506
        %v971 = vpop.f32.mrb[0].mxu0
        %v972 = vadd.f32 0.0, %v971
        %v973 = vpop.f32.mrb[0].mxu0
        %974 = vmatprep.mubr.f32.mxu0 0.0
        %975 = vmatmul.mubr.f32.gmra.mrb[0].mxu0 %v509
        %v976 = vpop.f32.mrb[0].mxu0
        %v977 = vadd.f32 0.0, %v976
        %v978 = vpop.f32.mrb[0].mxu0
        %979 = vmatprep.mubr.f32.mxu0 0.0
        %980 = vmatmul.mubr.f32.gmra.mrb[0].mxu0 %v512
        %v981 = vpop.f32.mrb[0].mxu0
        %v982 = vadd.f32 0.0, %v981
        %v983 = vpop.f32.mrb[0].mxu0
        %984 = vmatprep.mubr.f32.mxu0 0.0
        %985 = vmatmul.mubr.f32.gmra.mrb[0].mxu0 %v515
        %v986 = vpop.f32.mrb[0].mxu0
        %v987 = vadd.f32 0.0, %v986
        %v988 = vpop.f32.mrb[0].mxu0
        %989 = vmatprep.mubr.f32.mxu0 0.0
        %990 = vmatmul.mubr.f32.gmra.mrb[0].mxu0 %v518
        %v991 = vpop.f32.mrb[0].mxu0
        %v992 = vadd.f32 0.0, %v991
        %v993 = vpop.f32.mrb[0].mxu0
        %994 = vmatprep.mubr.f32.mxu0 0.0
        %995 = vmatmul.mubr.f32.gmra.mrb[0].mxu0 %v521
        %v996 = vpop.f32.mrb[0].mxu0
        %v997 = vadd.f32 0.0, %v996
        %v998 = vpop.f32.mrb[0].mxu0
        %999 = vmatprep.mubr.f32.mxu0 0.0
        %1000 = vmatmul.mubr.f32.gmra.mrb[0].mxu0 %v524
        %v1001 = vpop.f32.mrb[0].mxu0
        %v1002 = vadd.f32 0.0, %v1001
        %v1003 = vpop.f32.mrb[0].mxu0
        %1004 = vmatprep.mubr.f32.mxu0 0.0
        %1005 = vmatmul.mubr.f32.gmra.mrb[0].mxu0 %v527
        %v1006 = vpop.f32.mrb[0].mxu0
        %v1007 = vadd.f32 0.0, %v1006
        %v1008 = vpop.f32.mrb[0].mxu0
        %1009 = vmatprep.mubr.f32.mxu0 0.0
        %1010 = vmatmul.mubr.f32.gmra.mrb[0].mxu0 %v530
        %v1011 = vpop.f32.mrb[0].mxu0
        %v1012 = vadd.f32 0.0, %v1011
        %v1013 = vpop.f32.mrb[0].mxu0
        %1014 = vmatprep.mubr.f32.mxu0 0.0
        %1015 = vmatmul.mubr.f32.gmra.mrb[0].mxu0 %v533
        %v1016 = vpop.f32.mrb[0].mxu0
        %v1017 = vadd.f32 0.0, %v1016
        %v1018 = vpop.f32.mrb[0].mxu0
        %1019 = vmatprep.mubr.f32.mxu0 0.0
        %1020 = vmatmul.mubr.f32.gmra.mrb[0].mxu0 %v536
        %v1021 = vpop.f32.mrb[0].mxu0
        %v1022 = vadd.f32 0.0, %v1021
        %v1023 = vpop.f32.mrb[0].mxu0
        %1024 = vmatprep.mubr.f32.mxu0 0.0
        %1025 = vmatmul.mubr.f32.gmra.mrb[0].mxu0 %v539
        %v1026 = vpop.f32.mrb[0].mxu0
        %v1027 = vadd.f32 0.0, %v1026
        %v1028 = vpop.f32.mrb[0].mxu0
        %1029 = vmatprep.mubr.f32.mxu0 0.0
        %1030 = vmatmul.mubr.f32.gmra.mrb[0].mxu0 %v542
        %v1031 = vpop.f32.mrb[0].mxu0
        %v1032 = vadd.f32 0.0, %v1031
        %v1033 = vpop.f32.mrb[0].mxu0
        %1034 = vmatprep.mubr.f32.mxu0 0.0
        %1035 = vmatmul.mubr.f32.gmra.mrb[0].mxu0 %v545
        %v1036 = vpop.f32.mrb[0].mxu0
        %v1037 = vadd.f32 0.0, %v1036
        %v1038 = vpop.f32.mrb[0].mxu0
        %1039 = vmatprep.mubr.f32.mxu0 0.0
        %1040 = vmatmul.mubr.f32.gmra.mrb[0].mxu0 %v548
        %v1041 = vpop.f32.mrb[0].mxu0
        %v1042 = vadd.f32 0.0, %v1041
        %v1043 = vpop.f32.mrb[0].mxu0
        %1044 = vmatprep.mubr.f32.mxu0 0.0
        %1045 = vmatmul.mubr.f32.gmra.mrb[0].mxu0 %v551
        %v1046 = vpop.f32.mrb[0].mxu0
        %v1047 = vadd.f32 0.0, %v1046
        %v1048 = vpop.f32.mrb[0].mxu0
        %1049 = vmatprep.mubr.f32.mxu0 0.0
        %1050 = vmatmul.mubr.f32.gmra.mrb[0].mxu0 %v554
        %v1051 = vpop.f32.mrb[0].mxu0
        %v1052 = vadd.f32 0.0, %v1051
        %v1053 = vpop.f32.mrb[0].mxu0
        %1054 = vmatprep.mubr.f32.mxu0 0.0
        %1055 = vmatmul.mubr.f32.gmra.mrb[0].mxu0 %v557
        %v1056 = vpop.f32.mrb[0].mxu0
        %v1057 = vadd.f32 0.0, %v1056
        %v1058 = vpop.f32.mrb[0].mxu0
        %1059 = vmatprep.mubr.f32.mxu0 0.0
        %1060 = vmatmul.mubr.f32.gmra.mrb[0].mxu0 %v560
        %v1061 = vpop.f32.mrb[0].mxu0
        %v1062 = vadd.f32 0.0, %v1061
        %v1063 = vpop.f32.mrb[0].mxu0
        %1064 = vmatprep.mubr.f32.mxu0 0.0
        %1065 = vmatmul.mubr.f32.gmra.mrb[0].mxu0 %v563
        %v1066 = vpop.f32.mrb[0].mxu0
        %v1067 = vadd.f32 0.0, %v1066
        %v1068 = vpop.f32.mrb[0].mxu0
        %1069 = vmatprep.mubr.f32.mxu0 0.0
        %1070 = vmatmul.mubr.f32.gmra.mrb[0].mxu0 %v566
        %v1071 = vpop.f32.mrb[0].mxu0
        %v1072 = vadd.f32 0.0, %v1071
        %v1073 = vpop.f32.mrb[0].mxu0
        %1074 = vmatprep.mubr.f32.mxu0 0.0
        %1075 = vmatmul.mubr.f32.gmra.mrb[0].mxu0 %v569
        %v1076 = vpop.f32.mrb[0].mxu0
        %v1077 = vadd.f32 0.0, %v1076
        %v1078 = vpop.f32.mrb[0].mxu0
        %1079 = vmatprep.mubr.f32.mxu0 0.0
        %1080 = vmatmul.mubr.f32.gmra.mrb[0].mxu0 %v572
        %v1081 = vpop.f32.mrb[0].mxu0
        %v1082 = vadd.f32 0.0, %v1081
        %v1083 = vpop.f32.mrb[0].mxu0
        %1084 = vmatprep.mubr.f32.mxu0 0.0
        %1085 = vmatmul.mubr.f32.gmra.mrb[0].mxu0 %v575
        %v1086 = vpop.f32.mrb[0].mxu0
        %v1087 = vadd.f32 0.0, %v1086
        %v1088 = vpop.f32.mrb[0].mxu0
        %1089 = vmatprep.mubr.f32.mxu0 0.0
        %1090 = vmatmul.mubr.f32.gmra.mrb[0].mxu0 %v578
        %v1091 = vpop.f32.mrb[0].mxu0
        %v1092 = vadd.f32 0.0, %v1091
        %v1093 = vpop.f32.mrb[0].mxu0
        %1094 = vmatprep.mubr.f32.mxu0 0.0
        %1095 = vmatmul.mubr.f32.gmra.mrb[0].mxu0 %v581
        %v1096 = vpop.f32.mrb[0].mxu0
        %v1097 = vadd.f32 0.0, %v1096
        %v1098 = vpop.f32.mrb[0].mxu0
        %1099 = vmatprep.mubr.f32.mxu0 0.0
        %1100 = vmatmul.mubr.f32.gmra.mrb[0].mxu0 %v584
        %v1101 = vpop.f32.mrb[0].mxu0
        %v1102 = vadd.f32 0.0, %v1101
        %v1103 = vpop.f32.mrb[0].mxu0
        %1104 = vmatprep.mubr.f32.mxu0 0.0
        %1105 = vmatmul.mubr.f32.gmra.mrb[0].mxu0 %v587
        %v1106 = vpop.f32.mrb[0].mxu0
        %v1107 = vadd.f32 0.0, %v1106
        %v1108 = vpop.f32.mrb[0].mxu0
        %1109 = vmatprep.mubr.f32.mxu0 0.0
        %1110 = vmatmul.mubr.f32.gmra.mrb[0].mxu0 %v590
        %v1111 = vpop.f32.mrb[0].mxu0
        %v1112 = vadd.f32 0.0, %v1111
        %v1113 = vpop.f32.mrb[0].mxu0
        %1114 = vmatprep.mubr.f32.mxu0 0.0
        %1115 = vmatmul.mubr.f32.gmra.mrb[0].mxu0 %v593
        %v1116 = vpop.f32.mrb[0].mxu0
        %v1117 = vadd.f32 0.0, %v1116
        %v1118 = vpop.f32.mrb[0].mxu0
        %1119 = vmatprep.mubr.f32.mxu0 0.0
        %1120 = vmatmul.mubr.f32.gmra.mrb[0].mxu0 %v596
        %v1121 = vpop.f32.mrb[0].mxu0
        %v1122 = vadd.f32 0.0, %v1121
        %v1123 = vpop.f32.mrb[0].mxu0
        %1124 = vmatprep.mubr.f32.mxu0 0.0
        %1125 = vmatmul.mubr.f32.gmra.mrb[0].mxu0 %v599
        %v1126 = vpop.f32.mrb[0].mxu0
        %v1127 = vadd.f32 0.0, %v1126
        %v1128 = vpop.f32.mrb[0].mxu0
        %1129 = vmatprep.mubr.f32.mxu0 0.0
        %1130 = vmatmul.mubr.f32.gmra.mrb[0].mxu0 %v602
        %v1131 = vpop.f32.mrb[0].mxu0
        %v1132 = vadd.f32 0.0, %v1131
        %v1133 = vpop.f32.mrb[0].mxu0
        %1134 = vmatprep.mubr.f32.mxu0 0.0
        %1135 = vmatmul.mubr.f32.gmra.mrb[0].mxu0 %v605
        %v1136 = vpop.f32.mrb[0].mxu0
        %v1137 = vadd.f32 0.0, %v1136
        %v1138 = vpop.f32.mrb[0].mxu0
        %1139 = vmatprep.mubr.f32.mxu0 0.0
        %1140 = vmatmul.mubr.f32.gmra.mrb[0].mxu0 %v608
        %v1141 = vpop.f32.mrb[0].mxu0
        %v1142 = vadd.f32 0.0, %v1141
        %v1143 = vpop.f32.mrb[0].mxu0
        %1144 = vmatprep.mubr.f32.mxu0 0.0
        %1145 = vmatmul.mubr.f32.gmra.mrb[0].mxu0 %v611
        %v1146 = vpop.f32.mrb[0].mxu0
        %v1147 = vadd.f32 0.0, %v1146
        %v1148 = vpop.f32.mrb[0].mxu0
        %1149 = vmatprep.mubr.f32.mxu0 0.0
        %1150 = vmatmul.mubr.f32.gmra.mrb[0].mxu0 %v614
        %v1151 = vpop.f32.mrb[0].mxu0
        %v1152 = vadd.f32 0.0, %v1151
        %v1153 = vpop.f32.mrb[0].mxu0
        %1154 = vmatprep.mubr.f32.mxu0 0.0
        %1155 = vmatmul.mubr.f32.gmra.mrb[0].mxu0 %v617
        %v1156 = vpop.f32.mrb[0].mxu0
        %v1157 = vadd.f32 0.0, %v1156
        %v1158 = vpop.f32.mrb[0].mxu0
        %1159 = vmatprep.mubr.f32.mxu0 0.0
        %1160 = vmatmul.mubr.f32.gmra.mrb[0].mxu0 %v620
        %v1161 = vpop.f32.mrb[0].mxu0
        %v1162 = vadd.f32 0.0, %v1161
        %v1163 = vpop.f32.mrb[0].mxu0
        %1164 = vmatprep.mubr.f32.mxu0 0.0
        %1165 = vmatmul.mubr.f32.gmra.mrb[0].mxu0 %v623
        %v1166 = vpop.f32.mrb[0].mxu0
        %v1167 = vadd.f32 0.0, %v1166
        %v1168 = vpop.f32.mrb[0].mxu0
        %1169 = vmatprep.mubr.f32.mxu0 0.0
        %1170 = vmatmul.mubr.f32.gmra.mrb[0].mxu0 %v626
        %v1171 = vpop.f32.mrb[0].mxu0
        %v1172 = vadd.f32 0.0, %v1171
        %v1173 = vpop.f32.mrb[0].mxu0
        %1174 = vmatprep.mubr.f32.mxu0 0.0
        %1175 = vmatmul.mubr.f32.gmra.mrb[0].mxu0 %v629
        %v1176 = vpop.f32.mrb[0].mxu0
        %v1177 = vadd.f32 0.0, %v1176
        %v1178 = vpop.f32.mrb[0].mxu0
        %1179 = vmatprep.mubr.f32.mxu0 0.0
        %1180 = vmatmul.mubr.f32.gmra.mrb[0].mxu0 %v632
        %v1181 = vpop.f32.mrb[0].mxu0
        %v1182 = vadd.f32 0.0, %v1181
        %v1183 = vpop.f32.mrb[0].mxu0
        %1184 = vmatprep.mubr.f32.mxu0 0.0
        %1185 = vmatmul.mubr.f32.gmra.mrb[0].mxu0 %v635
        %v1186 = vpop.f32.mrb[0].mxu0
        %v1187 = vadd.f32 0.0, %v1186
        %v1188 = vpop.f32.mrb[0].mxu0
        %1189 = vmatprep.mubr.f32.mxu0 0.0
        %1190 = vmatmul.mubr.f32.gmra.mrb[0].mxu0 %v638
        %v1191 = vpop.f32.mrb[0].mxu0
        %v1192 = vadd.f32 0.0, %v1191
        %v1193 = vpop.f32.mrb[0].mxu0
        %1194 = vmatprep.mubr.f32.mxu0 0.0
        %1195 = vmatmul.mubr.f32.gmra.mrb[0].mxu0 %v641
        %v1196 = vpop.f32.mrb[0].mxu0
        %v1197 = vadd.f32 0.0, %v1196
        %v1198 = vpop.f32.mrb[0].mxu0
        %1199 = vmatprep.mubr.f32.mxu0 0.0
        %1200 = vmatmul.mubr.f32.gmra.mrb[0].mxu0 %v644
        %v1201 = vpop.f32.mrb[0].mxu0
        %v1202 = vadd.f32 0.0, %v1201
        %v1203 = vpop.f32.mrb[0].mxu0
        %1204 = vmatprep.mubr.f32.mxu0 0.0
        %1205 = vmatmul.mubr.f32.gmra.mrb[0].mxu0 %v647
        %v1206 = vpop.f32.mrb[0].mxu0
        %v1207 = vadd.f32 0.0, %v1206
        %v1208 = vpop.f32.mrb[0].mxu0
        %1209 = vmatprep.mubr.f32.mxu0 0.0
        %1210 = vmatmul.mubr.f32.gmra.mrb[0].mxu0 %v650
        %v1211 = vpop.f32.mrb[0].mxu0
        %v1212 = vadd.f32 0.0, %v1211
        %v1213 = vpop.f32.mrb[0].mxu0
        %1214 = vmatprep.mubr.f32.mxu0 0.0
        %1215 = vmatmul.mubr.f32.gmra.mrb[0].mxu0 %v653
        %v1216 = vpop.f32.mrb[0].mxu0
        %v1217 = vadd.f32 0.0, %v1216
        %v1218 = vpop.f32.mrb[0].mxu0
        %1219 = vmatprep.mubr.f32.mxu0 0.0
        %1220 = vmatmul.mubr.f32.gmra.mrb[0].mxu0 %v656
        %v1221 = vpop.f32.mrb[0].mxu0
        %v1222 = vadd.f32 0.0, %v1221
        %v1223 = vpop.f32.mrb[0].mxu0
        %1224 = vmatprep.mubr.f32.mxu0 0.0
        %1225 = vmatmul.mubr.f32.gmra.mrb[0].mxu0 %v659
        %v1226 = vpop.f32.mrb[0].mxu0
        %v1227 = vadd.f32 0.0, %v1226
        %v1228 = vpop.f32.mrb[0].mxu0
        %1229 = vmatprep.mubr.f32.mxu0 0.0
        %1230 = vmatmul.mubr.f32.gmra.mrb[0].mxu0 %v662
        %v1231 = vpop.f32.mrb[0].mxu0
        %v1232 = vadd.f32 0.0, %v1231
        %v1233 = vpop.f32.mrb[0].mxu0
        %1234 = vmatprep.mubr.f32.mxu0 0.0
        %1235 = vmatmul.mubr.f32.gmra.mrb[0].mxu0 %v665
        %v1236 = vpop.f32.mrb[0].mxu0
        %v1237 = vadd.f32 0.0, %v1236
        %v1238 = vpop.f32.mrb[0].mxu0
        %1239 = vmatprep.mubr.f32.mxu0 0.0
        %1240 = vmatmul.mubr.f32.gmra.mrb[0].mxu0 %v668
        %v1241 = vpop.f32.mrb[0].mxu0
        %v1242 = vadd.f32 0.0, %v1241
        %v1243 = vpop.f32.mrb[0].mxu0
        %1244 = vmatprep.mubr.f32.mxu0 0.0
        %1245 = vmatmul.mubr.f32.gmra.mrb[0].mxu0 %v671
        %v1246 = vpop.f32.mrb[0].mxu0
        %v1247 = vadd.f32 0.0, %v1246
        %v1248 = vpop.f32.mrb[0].mxu0
        %1249 = vmatprep.mubr.f32.mxu0 0.0
        %1250 = vmatmul.mubr.f32.gmra.mrb[0].mxu0 %v674
        %v1251 = vpop.f32.mrb[0].mxu0
        %v1252 = vadd.f32 0.0, %v1251
        %v1253 = vpop.f32.mrb[0].mxu0
        %1254 = vmatprep.mubr.f32.mxu0 0.0
        %1255 = vmatmul.mubr.f32.gmra.mrb[0].mxu0 %v677
        %v1256 = vpop.f32.mrb[0].mxu0
        %v1257 = vadd.f32 0.0, %v1256
        %v1258 = vpop.f32.mrb[0].mxu0
        %1259 = vmatprep.mubr.f32.mxu0 0.0
        %1260 = vmatmul.mubr.f32.gmra.mrb[0].mxu0 %v680
        %v1261 = vpop.f32.mrb[0].mxu0
        %v1262 = vadd.f32 0.0, %v1261
        %v1263 = vpop.f32.mrb[0].mxu0
        %1264 = vmatprep.mubr.f32.mxu0 0.0
        %1265 = vmatmul.mubr.f32.gmra.mrb[0].mxu0 %v683
        %v1266 = vpop.f32.mrb[0].mxu0
        %v1267 = vadd.f32 0.0, %v1266
        %v1268 = vpop.f32.mrb[0].mxu0
        %1269 = vmatprep.mubr.f32.mxu0 0.0
        %1270 = vmatmul.mubr.f32.gmra.mrb[0].mxu0 %v686
        %v1271 = vpop.f32.mrb[0].mxu0
        %v1272 = vadd.f32 0.0, %v1271
        %v1273 = vpop.f32.mrb[0].mxu0
        %1274 = vmatprep.mubr.f32.mxu0 0.0
        %1275 = vmatmul.mubr.f32.gmra.mrb[0].mxu0 %v689
        %v1276 = vpop.f32.mrb[0].mxu0
        %v1277 = vadd.f32 0.0, %v1276
        %v1278 = vpop.f32.mrb[0].mxu0
        %1279 = vmatprep.mubr.f32.mxu0 0.0
        %1280 = vmatmul.mubr.f32.gmra.mrb[0].mxu0 %v692
        %v1281 = vpop.f32.mrb[0].mxu0
        %v1282 = vadd.f32 0.0, %v1281
        %v1283 = vpop.f32.mrb[0].mxu0
        %1284 = vmatprep.mubr.f32.mxu0 0.0
        %1285 = vmatmul.mubr.f32.gmra.mrb[0].mxu0 %v695
        %v1286 = vpop.f32.mrb[0].mxu0
        %v1287 = vadd.f32 0.0, %v1286
        %v1288 = vpop.f32.mrb[0].mxu0
        %1289 = vmatprep.mubr.f32.mxu0 0.0
        %1290 = vmatmul.mubr.f32.gmra.mrb[0].mxu0 %v698
        %v1291 = vpop.f32.mrb[0].mxu0
        %v1292 = vadd.f32 0.0, %v1291
        %v1293 = vpop.f32.mrb[0].mxu0
        %1294 = vmatprep.mubr.f32.mxu0 0.0
        %1295 = vmatmul.mubr.f32.gmra.mrb[0].mxu0 %v701
        %v1296 = vpop.f32.mrb[0].mxu0
        %v1297 = vadd.f32 0.0, %v1296
        %v1298 = vpop.f32.mrb[0].mxu0
        %1299 = vmatprep.mubr.f32.mxu0 0.0
        %1300 = vmatmul.mubr.f32.gmra.mrb[0].mxu0 %v704
        %v1301 = vpop.f32.mrb[0].mxu0
        %v1302 = vadd.f32 0.0, %v1301
        %v1303 = vpop.f32.mrb[0].mxu0
        %1304 = vmatprep.mubr.f32.mxu0 0.0
        %1305 = vmatmul.mubr.f32.gmra.mrb[0].mxu0 %v707
        %v1306 = vpop.f32.mrb[0].mxu0
        %v1307 = vadd.f32 0.0, %v1306
        %v1308 = vpop.f32.mrb[0].mxu0
        %1309 = vmatprep.mubr.f32.mxu0 0.0
        %1310 = vmatmul.mubr.f32.gmra.mrb[0].mxu0 %v710
        %v1311 = vpop.f32.mrb[0].mxu0
        %v1312 = vadd.f32 0.0, %v1311
        %v1313 = vpop.f32.mrb[0].mxu0
        %1314 = vmatprep.mubr.f32.mxu0 0.0
        %1315 = vmatmul.mubr.f32.gmra.mrb[0].mxu0 %v713
        %v1316 = vpop.f32.mrb[0].mxu0
        %v1317 = vadd.f32 0.0, %v1316
        %v1318 = vpop.f32.mrb[0].mxu0
        %1319 = vmatprep.mubr.f32.mxu0 0.0
        %1320 = vmatmul.mubr.f32.gmra.mrb[0].mxu0 %v716
        %v1321 = vpop.f32.mrb[0].mxu0
        %v1322 = vadd.f32 0.0, %v1321
        %v1323 = vpop.f32.mrb[0].mxu0
        %1324 = vmatprep.mubr.f32.mxu0 0.0
        %1325 = vmatmul.mubr.f32.gmra.mrb[0].mxu0 %v719
        %v1326 = vpop.f32.mrb[0].mxu0
        %v1327 = vadd.f32 0.0, %v1326
        %v1328 = vpop.f32.mrb[0].mxu0
        %1329 = vmatprep.mubr.f32.mxu0 0.0
        %1330 = vmatmul.mubr.f32.gmra.mrb[0].mxu0 %v722
        %v1331 = vpop.f32.mrb[0].mxu0
        %v1332 = vadd.f32 0.0, %v1331
        %v1333 = vpop.f32.mrb[0].mxu0
        %1334 = vmatprep.mubr.f32.mxu0 0.0
        %1335 = vmatmul.mubr.f32.gmra.mrb[0].mxu0 %v725
        %v1336 = vpop.f32.mrb[0].mxu0
        %v1337 = vadd.f32 0.0, %v1336
        %v1338 = vpop.f32.mrb[0].mxu0
        %1339 = vmatprep.mubr.f32.mxu0 0.0
        %1340 = vmatmul.mubr.f32.gmra.mrb[0].mxu0 %v728
        %v1341 = vpop.f32.mrb[0].mxu0
        %v1342 = vadd.f32 0.0, %v1341
        %v1343 = vpop.f32.mrb[0].mxu0
        %1344 = vmatprep.mubr.f32.mxu0 0.0
        %1345 = vmatmul.mubr.f32.gmra.mrb[0].mxu0 %v731
        %v1346 = vpop.f32.mrb[0].mxu0
        %v1347 = vadd.f32 0.0, %v1346
        %v1348 = vpop.f32.mrb[0].mxu0
        %1349 = vmatprep.mubr.f32.mxu0 0.0
        %1350 = vmatmul.mubr.f32.gmra.mrb[0].mxu0 %v734
        %v1351 = vpop.f32.mrb[0].mxu0
        %v1352 = vadd.f32 0.0, %v1351
        %v1353 = vpop.f32.mrb[0].mxu0
        %1354 = vmatprep.mubr.f32.mxu0 0.0
        %1355 = vmatmul.mubr.f32.gmra.mrb[0].mxu0 %v737
        %v1356 = vpop.f32.mrb[0].mxu0
        %v1357 = vadd.f32 0.0, %v1356
        %v1358 = vpop.f32.mrb[0].mxu0
        %1359 = vmatprep.mubr.f32.mxu0 0.0
        %1360 = vmatmul.mubr.f32.gmra.mrb[0].mxu0 %v740
        %v1361 = vpop.f32.mrb[0].mxu0
        %v1362 = vadd.f32 0.0, %v1361
        %v1363 = vpop.f32.mrb[0].mxu0
        %1364 = vmatprep.mubr.f32.mxu0 0.0
        %1365 = vmatmul.mubr.f32.gmra.mrb[0].mxu0 %v743
        %v1366 = vpop.f32.mrb[0].mxu0
        %v1367 = vadd.f32 0.0, %v1366
        %v1368 = vpop.f32.mrb[0].mxu0
        %1369 = vmatprep.mubr.f32.mxu0 0.0
        %1370 = vmatmul.mubr.f32.gmra.mrb[0].mxu0 %v746
        %v1371 = vpop.f32.mrb[0].mxu0
        %v1372 = vadd.f32 0.0, %v1371
        %v1373 = vpop.f32.mrb[0].mxu0
        %1374 = vmatprep.mubr.f32.mxu0 0.0
        %1375 = vmatmul.mubr.f32.gmra.mrb[0].mxu0 %v749
        %v1376 = vpop.f32.mrb[0].mxu0
        %v1377 = vadd.f32 0.0, %v1376
        %v1378 = vpop.f32.mrb[0].mxu0
        %1379 = vmatprep.mubr.f32.mxu0 0.0
        %1380 = vmatmul.mubr.f32.gmra.mrb[0].mxu0 %v752
        %v1381 = vpop.f32.mrb[0].mxu0
        %v1382 = vadd.f32 0.0, %v1381
        %v1383 = vpop.f32.mrb[0].mxu0
        %1384 = vmatprep.mubr.f32.mxu0 0.0
        %1385 = vmatmul.mubr.f32.gmra.mrb[0].mxu0 %v755
        %v1386 = vpop.f32.mrb[0].mxu0
        %v1387 = vadd.f32 0.0, %v1386
        %v1388 = vpop.f32.mrb[0].mxu0
        %1389 = vmatprep.mubr.f32.mxu0 0.0
        %1390 = vmatmul.mubr.f32.gmra.mrb[0].mxu0 %v758
        %v1391 = vpop.f32.mrb[0].mxu0
        %v1392 = vadd.f32 0.0, %v1391
        %v1393 = vpop.f32.mrb[0].mxu0
        %1394 = vmatprep.mubr.f32.mxu0 0.0
        %1395 = vmatmul.mubr.f32.gmra.mrb[0].mxu0 %v761
        %v1396 = vpop.f32.mrb[0].mxu0
        %v1397 = vadd.f32 0.0, %v1396
        %v1398 = vpop.f32.mrb[0].mxu0
        %1399 = vmatprep.mubr.f32.mxu0 0.0
        %1400 = vmatmul.mubr.f32.gmra.mrb[0].mxu0 %v764
        %v1401 = vpop.f32.mrb[0].mxu0
        %v1402 = vadd.f32 0.0, %v1401
        %v1403 = vpop.f32.mrb[0].mxu0
        %1404 = vmatprep.mubr.f32.mxu0 0.0
        %1405 = vmatmul.mubr.f32.gmra.mrb[0].mxu0 %v767
        %v1406 = vpop.f32.mrb[0].mxu0
        %v1407 = vadd.f32 0.0, %v1406
        %v1408 = vpop.f32.mrb[0].mxu0
        %1409 = vmatprep.mubr.f32.mxu0 0.0
        %1410 = vmatmul.mubr.f32.gmra.mrb[0].mxu0 %v770
        %v1411 = vpop.f32.mrb[0].mxu0
        %v1412 = vadd.f32 0.0, %v1411
        %v1413 = vpop.f32.mrb[0].mxu0
        %1414 = vmatprep.mubr.f32.mxu0 0.0
        %1415 = vmatmul.mubr.f32.gmra.mrb[0].mxu0 %v773
        %v1416 = vpop.f32.mrb[0].mxu0
        %v1417 = vadd.f32 0.0, %v1416
        %v1418 = vpop.f32.mrb[0].mxu0
        %1419 = vmatprep.mubr.f32.mxu0 0.0
        %1420 = vmatmul.mubr.f32.gmra.mrb[0].mxu0 %v776
        %v1421 = vpop.f32.mrb[0].mxu0
        %v1422 = vadd.f32 0.0, %v1421
        %v1423 = vpop.f32.mrb[0].mxu0
        %1424 = vmatprep.mubr.f32.mxu0 0.0
        %1425 = vmatmul.mubr.f32.gmra.mrb[0].mxu0 %v779
        %v1426 = vpop.f32.mrb[0].mxu0
        %v1427 = vadd.f32 0.0, %v1426
        %v1428 = vpop.f32.mrb[0].mxu0
        %1429 = vmatprep.mubr.f32.mxu0 0.0
        %1430 = vmatmul.mubr.f32.gmra.mrb[0].mxu0 %v782
        %v1431 = vpop.f32.mrb[0].mxu0
        %v1432 = vadd.f32 0.0, %v1431
        %v1433 = vpop.f32.mrb[0].mxu0
        %1434 = vmatprep.mubr.f32.mxu0 0.0
        %1435 = vmatmul.mubr.f32.gmra.mrb[0].mxu0 %v785
        %v1436 = vpop.f32.mrb[0].mxu0
        %v1437 = vadd.f32 0.0, %v1436
        %v1438 = vpop.f32.mrb[0].mxu0
        %1439 = vmatprep.mubr.f32.mxu0 0.0
        %1440 = vmatmul.mubr.f32.gmra.mrb[0].mxu0 %v788
        %v1441 = vpop.f32.mrb[0].mxu0
        %v1442 = vadd.f32 0.0, %v1441
        %v1443 = vpop.f32.mrb[0].mxu0
        %1444 = vmatprep.mubr.f32.mxu0 0.0
        %1445 = vmatmul.mubr.f32.gmra.mrb[0].mxu0 %v791
        %v1446 = vpop.f32.mrb[0].mxu0
        %v1447 = vadd.f32 0.0, %v1446
        %v1448 = vpop.f32.mrb[0].mxu0
        %1449 = vmatprep.mubr.f32.mxu0 0.0
        %1450 = vmatmul.mubr.f32.gmra.mrb[0].mxu0 %v794
        %v1451 = vpop.f32.mrb[0].mxu0
        %v1452 = vadd.f32 0.0, %v1451
        %v1453 = vpop.f32.mrb[0].mxu0
        %1454 = vmatprep.mubr.f32.mxu0 0.0
        %1455 = vmatmul.mubr.f32.gmra.mrb[0].mxu0 %v797
        %v1456 = vpop.f32.mrb[0].mxu0
        %v1457 = vadd.f32 0.0, %v1456
        %v1458 = vpop.f32.mrb[0].mxu0
        %1459 = vmatprep.mubr.f32.mxu0 0.0
        %1460 = vmatmul.mubr.f32.gmra.mrb[0].mxu0 %v800
        %v1461 = vpop.f32.mrb[0].mxu0
        %v1462 = vadd.f32 0.0, %v1461
        %v1463 = vpop.f32.mrb[0].mxu0
        %1464 = vmatprep.mubr.f32.mxu0 0.0
        %1465 = vmatmul.mubr.f32.gmra.mrb[0].mxu0 %v803
        %v1466 = vpop.f32.mrb[0].mxu0
        %v1467 = vadd.f32 0.0, %v1466
        %v1468 = vpop.f32.mrb[0].mxu0
        %1469 = vmatprep.mubr.f32.mxu0 0.0
        %1470 = vmatmul.mubr.f32.gmra.mrb[0].mxu0 %v806
        %v1471 = vpop.f32.mrb[0].mxu0
        %v1472 = vadd.f32 0.0, %v1471
        %v1473 = vpop.f32.mrb[0].mxu0
        %1474 = vmatprep.mubr.f32.mxu0 0.0
        %1475 = vmatmul.mubr.f32.gmra.mrb[0].mxu0 %v809
        %v1476 = vpop.f32.mrb[0].mxu0
        %v1477 = vadd.f32 0.0, %v1476
        %v1478 = vpop.f32.mrb[0].mxu0
        %1479 = vmatprep.mubr.f32.mxu0 0.0
        %1480 = vmatmul.mubr.f32.gmra.mrb[0].mxu0 %v812
        %v1481 = vpop.f32.mrb[0].mxu0
        %v1482 = vadd.f32 0.0, %v1481
        %v1483 = vpop.f32.mrb[0].mxu0
        %1484 = vmatprep.mubr.f32.mxu0 0.0
        %1485 = vmatmul.mubr.f32.gmra.mrb[0].mxu0 %v815
        %v1486 = vpop.f32.mrb[0].mxu0
        %v1487 = vadd.f32 0.0, %v1486
        %v1488 = vpop.f32.mrb[0].mxu0
        %1489 = vmatprep.mubr.f32.mxu0 0.0
        %1490 = vmatmul.mubr.f32.gmra.mrb[0].mxu0 %v818
        %v1491 = vpop.f32.mrb[0].mxu0
        %v1492 = vadd.f32 0.0, %v1491
        %v1493 = vpop.f32.mrb[0].mxu0
        %1494 = vmatprep.mubr.f32.mxu0 0.0
        %1495 = vmatmul.mubr.f32.gmra.mrb[0].mxu0 %v821
        %v1496 = vpop.f32.mrb[0].mxu0
        %v1497 = vadd.f32 0.0, %v1496
        %v1498 = vpop.f32.mrb[0].mxu0
        %1499 = vmatprep.mubr.f32.mxu0 0.0
        %1500 = vmatmul.mubr.f32.gmra.mrb[0].mxu0 %v824
        %v1501 = vpop.f32.mrb[0].mxu0
        %v1502 = vadd.f32 0.0, %v1501
        %v1503 = vpop.f32.mrb[0].mxu0
        %1504 = vmatprep.mubr.f32.mxu0 0.0
        %1505 = vmatmul.mubr.f32.gmra.mrb[0].mxu0 %v827
        %v1506 = vpop.f32.mrb[0].mxu0
        %v1507 = vadd.f32 0.0, %v1506
        %v1508 = vpop.f32.mrb[0].mxu0
        %1509 = vmatprep.mubr.f32.mxu0 0.0
        %1510 = vmatmul.mubr.f32.gmra.mrb[0].mxu0 %v830
        %v1511 = vpop.f32.mrb[0].mxu0
        %v1512 = vadd.f32 0.0, %v1511
        %v1513 = vpop.f32.mrb[0].mxu0
        %1514 = vmatprep.mubr.f32.mxu0 0.0
        %1515 = vmatmul.mubr.f32.gmra.mrb[0].mxu0 %v833
        %v1516 = vpop.f32.mrb[0].mxu0
        %v1517 = vadd.f32 0.0, %v1516
        %v1518 = vpop.f32.mrb[0].mxu0
        %1519 = vmatprep.mubr.f32.mxu0 0.0
        %1520 = vmatmul.mubr.f32.gmra.mrb[0].mxu0 %v836
        %v1521 = vpop.f32.mrb[0].mxu0
        %v1522 = vadd.f32 0.0, %v1521
        %v1523 = vpop.f32.mrb[0].mxu0
        %1524 = vmatprep.mubr.f32.mxu0 0.0
        %1525 = vmatmul.mubr.f32.gmra.mrb[0].mxu0 %v839
        %v1526 = vpop.f32.mrb[0].mxu0
        %v1527 = vadd.f32 0.0, %v1526
        %v1528 = vpop.f32.mrb[0].mxu0
        %1529 = vmatprep.mubr.f32.mxu0 0.0
        %1530 = vmatmul.mubr.f32.gmra.mrb[0].mxu0 %v842
        %v1531 = vpop.f32.mrb[0].mxu0
        %v1532 = vadd.f32 0.0, %v1531
        %v1533 = vpop.f32.mrb[0].mxu0
        %1534 = vmatprep.mubr.f32.mxu0 0.0
        %1535 = vmatmul.mubr.f32.gmra.mrb[0].mxu0 %v845
        %v1536 = vpop.f32.mrb[0].mxu0
        %v1537 = vadd.f32 0.0, %v1536
        %v1538 = vpop.f32.mrb[0].mxu0
        %1539 = vmatprep.mubr.f32.mxu0 0.0
        %1540 = vmatmul.mubr.f32.gmra.mrb[0].mxu0 %v848
        %v1541 = vpop.f32.mrb[0].mxu0
        %v1542 = vadd.f32 0.0, %v1541
        %v1543 = vpop.f32.mrb[0].mxu0
        %1544 = vmatprep.mubr.f32.mxu0 0.0
        %1545 = vmatmul.mubr.f32.gmra.mrb[0].mxu0 %v851
        %v1546 = vpop.f32.mrb[0].mxu0
        %v1547 = vadd.f32 0.0, %v1546
        %v1548 = vpop.f32.mrb[0].mxu0
        %1549 = vmatprep.mubr.f32.mxu0 0.0
        %1550 = vmatmul.mubr.f32.gmra.mrb[0].mxu0 %v854
        %v1551 = vpop.f32.mrb[0].mxu0
        %v1552 = vadd.f32 0.0, %v1551
        %v1553 = vpop.f32.mrb[0].mxu0
        %1554 = vmatprep.mubr.f32.mxu0 0.0
        %1555 = vmatmul.mubr.f32.gmra.mrb[0].mxu0 %v857
        %v1556 = vpop.f32.mrb[0].mxu0
        %v1557 = vadd.f32 0.0, %v1556
        %v1558 = vpop.f32.mrb[0].mxu0
        %1559 = vmatprep.mubr.f32.mxu0 0.0
        %1560 = vmatmul.mubr.f32.gmra.mrb[0].mxu0 %v860
        %v1561 = vpop.f32.mrb[0].mxu0
        %v1562 = vadd.f32 0.0, %v1561
        %v1563 = vpop.f32.mrb[0].mxu0
        %1564 = vmatprep.mubr.f32.mxu0 0.0
        %1565 = vmatmul.mubr.f32.gmra.mrb[0].mxu0 %v863
        %v1566 = vpop.f32.mrb[0].mxu0
        %v1567 = vadd.f32 0.0, %v1566
        %v1568 = vpop.f32.mrb[0].mxu0
        %1569 = vdwg.mxu0
        %v1570 = vld [vmem:[%s3] sm:$0xff]
        %v1571 = vld [vmem:[%s3 + $0x8] sm:$0xff]
        %v1572 = vld [vmem:[%s3 + $0x10] sm:$0xff]
        %v1573 = vld [vmem:[%s3 + $0x18] sm:$0xff]
        %v1575 = vsel %vm480, %v348, 0
        %v1578 = vsel %vm480, %v349, 0
        %v1581 = vsel %vm480, %v350, 0
        %v1584 = vsel %vm480, %v351, 0
        %v1587 = vsel %vm480, %v352, 0
        %v1590 = vsel %vm480, %v353, 0
        %v1593 = vsel %vm480, %v354, 0
        %v1596 = vsel %vm480, %v355, 0
        %v1599 = vsel %vm480, %v356, 0
        %v1602 = vsel %vm480, %v357, 0
        %v1605 = vsel %vm480, %v358, 0
        %v1608 = vsel %vm480, %v359, 0
        %v1611 = vsel %vm480, %v360, 0
        %v1614 = vsel %vm480, %v361, 0
        %v1617 = vsel %vm480, %v362, 0
        %v1620 = vsel %vm480, %v363, 0
        %v1623 = vsel %vm480, %v364, 0
        %v1626 = vsel %vm480, %v365, 0
        %v1629 = vsel %vm480, %v366, 0
        %v1632 = vsel %vm480, %v367, 0
        %v1635 = vsel %vm480, %v368, 0
        %v1638 = vsel %vm480, %v369, 0
        %v1641 = vsel %vm480, %v370, 0
        %v1644 = vsel %vm480, %v371, 0
        %v1647 = vsel %vm480, %v372, 0
        %v1650 = vsel %vm480, %v373, 0
        %v1653 = vsel %vm480, %v374, 0
        %v1656 = vsel %vm480, %v375, 0
        %v1659 = vsel %vm480, %v376, 0
        %v1662 = vsel %vm480, %v377, 0
        %v1665 = vsel %vm480, %v378, 0
        %v1668 = vsel %vm480, %v379, 0
        %v1671 = vsel %vm480, %v380, 0
        %v1674 = vsel %vm480, %v381, 0
        %v1677 = vsel %vm480, %v382, 0
        %v1680 = vsel %vm480, %v383, 0
        %v1683 = vsel %vm480, %v384, 0
        %v1686 = vsel %vm480, %v385, 0
        %v1689 = vsel %vm480, %v386, 0
        %v1692 = vsel %vm480, %v387, 0
        %v1695 = vsel %vm480, %v388, 0
        %v1698 = vsel %vm480, %v389, 0
        %v1701 = vsel %vm480, %v390, 0
        %v1704 = vsel %vm480, %v391, 0
        %v1707 = vsel %vm480, %v392, 0
        %v1710 = vsel %vm480, %v393, 0
        %v1713 = vsel %vm480, %v394, 0
        %v1716 = vsel %vm480, %v395, 0
        %v1719 = vsel %vm480, %v396, 0
        %v1722 = vsel %vm480, %v397, 0
        %v1725 = vsel %vm480, %v398, 0
        %v1728 = vsel %vm480, %v399, 0
        %v1731 = vsel %vm480, %v400, 0
        %v1734 = vsel %vm480, %v401, 0
        %v1737 = vsel %vm480, %v402, 0
        %v1740 = vsel %vm480, %v403, 0
        %v1743 = vsel %vm480, %v404, 0
        %v1746 = vsel %vm480, %v405, 0
        %v1749 = vsel %vm480, %v406, 0
        %v1752 = vsel %vm480, %v407, 0
        %v1755 = vsel %vm480, %v408, 0
        %v1758 = vsel %vm480, %v409, 0
        %v1761 = vsel %vm480, %v410, 0
        %v1764 = vsel %vm480, %v411, 0
        %v1767 = vsel %vm480, %v412, 0
        %v1770 = vsel %vm480, %v413, 0
        %v1773 = vsel %vm480, %v414, 0
        %v1776 = vsel %vm480, %v415, 0
        %v1779 = vsel %vm480, %v416, 0
        %v1782 = vsel %vm480, %v417, 0
        %v1785 = vsel %vm480, %v418, 0
        %v1788 = vsel %vm480, %v419, 0
        %v1791 = vsel %vm480, %v420, 0
        %v1794 = vsel %vm480, %v421, 0
        %v1797 = vsel %vm480, %v422, 0
        %v1800 = vsel %vm480, %v423, 0
        %v1803 = vsel %vm480, %v424, 0
        %v1806 = vsel %vm480, %v425, 0
        %v1809 = vsel %vm480, %v426, 0
        %v1812 = vsel %vm480, %v427, 0
        %v1815 = vsel %vm480, %v428, 0
        %v1818 = vsel %vm480, %v429, 0
        %v1821 = vsel %vm480, %v430, 0
        %v1824 = vsel %vm480, %v431, 0
        %v1827 = vsel %vm480, %v432, 0
        %v1830 = vsel %vm480, %v433, 0
        %v1833 = vsel %vm480, %v434, 0
        %v1836 = vsel %vm480, %v435, 0
        %v1839 = vsel %vm480, %v436, 0
        %v1842 = vsel %vm480, %v437, 0
        %v1845 = vsel %vm480, %v438, 0
        %v1848 = vsel %vm480, %v439, 0
        %v1851 = vsel %vm480, %v440, 0
        %v1854 = vsel %vm480, %v441, 0
        %v1857 = vsel %vm480, %v442, 0
        %v1860 = vsel %vm480, %v443, 0
        %v1863 = vsel %vm480, %v444, 0
        %v1866 = vsel %vm480, %v445, 0
        %v1869 = vsel %vm480, %v446, 0
        %v1872 = vsel %vm480, %v447, 0
        %v1875 = vsel %vm480, %v448, 0
        %v1878 = vsel %vm480, %v449, 0
        %v1881 = vsel %vm480, %v450, 0
        %v1884 = vsel %vm480, %v451, 0
        %v1887 = vsel %vm480, %v452, 0
        %v1890 = vsel %vm480, %v453, 0
        %v1893 = vsel %vm480, %v454, 0
        %v1896 = vsel %vm480, %v455, 0
        %v1899 = vsel %vm480, %v456, 0
        %v1902 = vsel %vm480, %v457, 0
        %v1905 = vsel %vm480, %v458, 0
        %v1908 = vsel %vm480, %v459, 0
        %v1911 = vsel %vm480, %v460, 0
        %v1914 = vsel %vm480, %v461, 0
        %v1917 = vsel %vm480, %v462, 0
        %v1920 = vsel %vm480, %v463, 0
        %v1923 = vsel %vm480, %v464, 0
        %v1926 = vsel %vm480, %v465, 0
        %v1929 = vsel %vm480, %v466, 0
        %v1932 = vsel %vm480, %v467, 0
        %v1935 = vsel %vm480, %v468, 0
        %v1938 = vsel %vm480, %v469, 0
        %v1941 = vsel %vm480, %v470, 0
        %v1944 = vsel %vm480, %v471, 0
        %v1947 = vsel %vm480, %v472, 0
        %v1950 = vsel %vm480, %v473, 0
        %v1953 = vsel %vm480, %v474, 0
        %v1956 = vsel %vm480, %v475, 0
        %1958 = vmatprep.subr.mxu0 0.0
        %1959 = vmatpush1.msra.mxu0 %v1570
        %1960 = vmatprep.subr.mxu0 0.0
        %1961 = vmatpush1.msra.mxu0 %v1571
        %1962 = vmatprep.subr.mxu0 0.0
        %1963 = vmatpush1.msra.mxu0 %v1572
        %1964 = vmatprep.subr.mxu0 0.0
        %1965 = vmatpush1.msra.mxu0 %v1573
        %1966 = vmatprep.subr.mxu0 0.0
        %1967 = vmatpush1.msra.mxu0 0.0
        %1968 = vmatprep.subr.mxu0 0.0
        %1969 = vmatpush1.msra.mxu0 0.0
        %1970 = vmatprep.subr.mxu0 0.0
        %1971 = vmatpush1.msra.mxu0 0.0
        %1972 = vmatprep.subr.mxu0 0.0
        %1973 = vmatpush1.msra.mxu0 0.0
        %1974 = vmatprep.subr.mxu0 0.0
        %1975 = vmatpush1.msra.mxu0 0.0
        %1976 = vmatprep.subr.mxu0 0.0
        %1977 = vmatpush1.msra.mxu0 0.0
        %1978 = vmatprep.subr.mxu0 0.0
        %1979 = vmatpush1.msra.mxu0 0.0
        %1980 = vmatprep.subr.mxu0 0.0
        %1981 = vmatpush1.msra.mxu0 0.0
        %1982 = vmatprep.subr.mxu0 0.0
        %1983 = vmatpush1.msra.mxu0 0.0
        %1984 = vmatprep.subr.mxu0 0.0
        %1985 = vmatpush1.msra.mxu0 0.0
        %1986 = vmatprep.subr.mxu0 0.0
        %1987 = vmatpush1.msra.mxu0 0.0
        %1988 = vmatprep.subr.mxu0 0.0
        %1989 = vmatpush1.msra.mxu0 0.0
        %1990 = vmatprep.subr.mxu0 0.0
        %1991 = vmatpush1.msra.mxu0 0.0
        %1992 = vmatprep.subr.mxu0 0.0
        %1993 = vmatpush1.msra.mxu0 0.0
        %1994 = vmatprep.subr.mxu0 0.0
        %1995 = vmatpush1.msra.mxu0 0.0
        %1996 = vmatprep.subr.mxu0 0.0
        %1997 = vmatpush1.msra.mxu0 0.0
        %1998 = vmatprep.subr.mxu0 0.0
        %1999 = vmatpush1.msra.mxu0 0.0
        %2000 = vmatprep.subr.mxu0 0.0
        %2001 = vmatpush1.msra.mxu0 0.0
        %2002 = vmatprep.subr.mxu0 0.0
        %2003 = vmatpush1.msra.mxu0 0.0
        %2004 = vmatprep.subr.mxu0 0.0
        %2005 = vmatpush1.msra.mxu0 0.0
        %2006 = vmatprep.subr.mxu0 0.0
        %2007 = vmatpush1.msra.mxu0 0.0
        %2008 = vmatprep.subr.mxu0 0.0
        %2009 = vmatpush1.msra.mxu0 0.0
        %2010 = vmatprep.subr.mxu0 0.0
        %2011 = vmatpush1.msra.mxu0 0.0
        %2012 = vmatprep.subr.mxu0 0.0
        %2013 = vmatpush1.msra.mxu0 0.0
        %2014 = vmatprep.subr.mxu0 0.0
        %2015 = vmatpush1.msra.mxu0 0.0
        %2016 = vmatprep.subr.mxu0 0.0
        %2017 = vmatpush1.msra.mxu0 0.0
        %2018 = vmatprep.subr.mxu0 0.0
        %2019 = vmatpush1.msra.mxu0 0.0
        %2020 = vmatprep.subr.mxu0 0.0
        %2021 = vmatpush1.msra.mxu0 0.0
        %2022 = vmatprep.mubr.f32.mxu0 0.0
        %2023 = vmatmul.mubr.f32.gmra.mrb[0].mxu0 %v1575
        %v2024 = vpop.f32.mrb[0].mxu0
        %v2025 = vadd.f32 0.0, %v2024
        %v2026 = vpop.f32.mrb[0].mxu0
        %2027 = vmatprep.mubr.f32.mxu0 0.0
        %2028 = vmatmul.mubr.f32.gmra.mrb[0].mxu0 %v1578
        %v2029 = vpop.f32.mrb[0].mxu0
        %v2030 = vadd.f32 0.0, %v2029
        %v2031 = vpop.f32.mrb[0].mxu0
        %2032 = vmatprep.mubr.f32.mxu0 0.0
        %2033 = vmatmul.mubr.f32.gmra.mrb[0].mxu0 %v1581
        %v2034 = vpop.f32.mrb[0].mxu0
        %v2035 = vadd.f32 0.0, %v2034
        %v2036 = vpop.f32.mrb[0].mxu0
        %2037 = vmatprep.mubr.f32.mxu0 0.0
        %2038 = vmatmul.mubr.f32.gmra.mrb[0].mxu0 %v1584
        %v2039 = vpop.f32.mrb[0].mxu0
        %v2040 = vadd.f32 0.0, %v2039
        %v2041 = vpop.f32.mrb[0].mxu0
        %2042 = vmatprep.mubr.f32.mxu0 0.0
        %2043 = vmatmul.mubr.f32.gmra.mrb[0].mxu0 %v1587
        %v2044 = vpop.f32.mrb[0].mxu0
        %v2045 = vadd.f32 0.0, %v2044
        %v2046 = vpop.f32.mrb[0].mxu0
        %2047 = vmatprep.mubr.f32.mxu0 0.0
        %2048 = vmatmul.mubr.f32.gmra.mrb[0].mxu0 %v1590
        %v2049 = vpop.f32.mrb[0].mxu0
        %v2050 = vadd.f32 0.0, %v2049
        %v2051 = vpop.f32.mrb[0].mxu0
        %2052 = vmatprep.mubr.f32.mxu0 0.0
        %2053 = vmatmul.mubr.f32.gmra.mrb[0].mxu0 %v1593
        %v2054 = vpop.f32.mrb[0].mxu0
        %v2055 = vadd.f32 0.0, %v2054
        %v2056 = vpop.f32.mrb[0].mxu0
        %2057 = vmatprep.mubr.f32.mxu0 0.0
        %2058 = vmatmul.mubr.f32.gmra.mrb[0].mxu0 %v1596
        %v2059 = vpop.f32.mrb[0].mxu0
        %v2060 = vadd.f32 0.0, %v2059
        %v2061 = vpop.f32.mrb[0].mxu0
        %2062 = vmatprep.mubr.f32.mxu0 0.0
        %2063 = vmatmul.mubr.f32.gmra.mrb[0].mxu0 %v1599
        %v2064 = vpop.f32.mrb[0].mxu0
        %v2065 = vadd.f32 0.0, %v2064
        %v2066 = vpop.f32.mrb[0].mxu0
        %2067 = vmatprep.mubr.f32.mxu0 0.0
        %2068 = vmatmul.mubr.f32.gmra.mrb[0].mxu0 %v1602
        %v2069 = vpop.f32.mrb[0].mxu0
        %v2070 = vadd.f32 0.0, %v2069
        %v2071 = vpop.f32.mrb[0].mxu0
        %2072 = vmatprep.mubr.f32.mxu0 0.0
        %2073 = vmatmul.mubr.f32.gmra.mrb[0].mxu0 %v1605
        %v2074 = vpop.f32.mrb[0].mxu0
        %v2075 = vadd.f32 0.0, %v2074
        %v2076 = vpop.f32.mrb[0].mxu0
        %2077 = vmatprep.mubr.f32.mxu0 0.0
        %2078 = vmatmul.mubr.f32.gmra.mrb[0].mxu0 %v1608
        %v2079 = vpop.f32.mrb[0].mxu0
        %v2080 = vadd.f32 0.0, %v2079
        %v2081 = vpop.f32.mrb[0].mxu0
        %2082 = vmatprep.mubr.f32.mxu0 0.0
        %2083 = vmatmul.mubr.f32.gmra.mrb[0].mxu0 %v1611
        %v2084 = vpop.f32.mrb[0].mxu0
        %v2085 = vadd.f32 0.0, %v2084
        %v2086 = vpop.f32.mrb[0].mxu0
        %2087 = vmatprep.mubr.f32.mxu0 0.0
        %2088 = vmatmul.mubr.f32.gmra.mrb[0].mxu0 %v1614
        %v2089 = vpop.f32.mrb[0].mxu0
        %v2090 = vadd.f32 0.0, %v2089
        %v2091 = vpop.f32.mrb[0].mxu0
        %2092 = vmatprep.mubr.f32.mxu0 0.0
        %2093 = vmatmul.mubr.f32.gmra.mrb[0].mxu0 %v1617
        %v2094 = vpop.f32.mrb[0].mxu0
        %v2095 = vadd.f32 0.0, %v2094
        %v2096 = vpop.f32.mrb[0].mxu0
        %2097 = vmatprep.mubr.f32.mxu0 0.0
        %2098 = vmatmul.mubr.f32.gmra.mrb[0].mxu0 %v1620
        %v2099 = vpop.f32.mrb[0].mxu0
        %v2100 = vadd.f32 0.0, %v2099
        %v2101 = vpop.f32.mrb[0].mxu0
        %2102 = vmatprep.mubr.f32.mxu0 0.0
        %2103 = vmatmul.mubr.f32.gmra.mrb[0].mxu0 %v1623
        %v2104 = vpop.f32.mrb[0].mxu0
        %v2105 = vadd.f32 0.0, %v2104
        %v2106 = vpop.f32.mrb[0].mxu0
        %2107 = vmatprep.mubr.f32.mxu0 0.0
        %2108 = vmatmul.mubr.f32.gmra.mrb[0].mxu0 %v1626
        %v2109 = vpop.f32.mrb[0].mxu0
        %v2110 = vadd.f32 0.0, %v2109
        %v2111 = vpop.f32.mrb[0].mxu0
        %2112 = vmatprep.mubr.f32.mxu0 0.0
        %2113 = vmatmul.mubr.f32.gmra.mrb[0].mxu0 %v1629
        %v2114 = vpop.f32.mrb[0].mxu0
        %v2115 = vadd.f32 0.0, %v2114
        %v2116 = vpop.f32.mrb[0].mxu0
        %2117 = vmatprep.mubr.f32.mxu0 0.0
        %2118 = vmatmul.mubr.f32.gmra.mrb[0].mxu0 %v1632
        %v2119 = vpop.f32.mrb[0].mxu0
        %v2120 = vadd.f32 0.0, %v2119
        %v2121 = vpop.f32.mrb[0].mxu0
        %2122 = vmatprep.mubr.f32.mxu0 0.0
        %2123 = vmatmul.mubr.f32.gmra.mrb[0].mxu0 %v1635
        %v2124 = vpop.f32.mrb[0].mxu0
        %v2125 = vadd.f32 0.0, %v2124
        %v2126 = vpop.f32.mrb[0].mxu0
        %2127 = vmatprep.mubr.f32.mxu0 0.0
        %2128 = vmatmul.mubr.f32.gmra.mrb[0].mxu0 %v1638
        %v2129 = vpop.f32.mrb[0].mxu0
        %v2130 = vadd.f32 0.0, %v2129
        %v2131 = vpop.f32.mrb[0].mxu0
        %2132 = vmatprep.mubr.f32.mxu0 0.0
        %2133 = vmatmul.mubr.f32.gmra.mrb[0].mxu0 %v1641
        %v2134 = vpop.f32.mrb[0].mxu0
        %v2135 = vadd.f32 0.0, %v2134
        %v2136 = vpop.f32.mrb[0].mxu0
        %2137 = vmatprep.mubr.f32.mxu0 0.0
        %2138 = vmatmul.mubr.f32.gmra.mrb[0].mxu0 %v1644
        %v2139 = vpop.f32.mrb[0].mxu0
        %v2140 = vadd.f32 0.0, %v2139
        %v2141 = vpop.f32.mrb[0].mxu0
        %2142 = vmatprep.mubr.f32.mxu0 0.0
        %2143 = vmatmul.mubr.f32.gmra.mrb[0].mxu0 %v1647
        %v2144 = vpop.f32.mrb[0].mxu0
        %v2145 = vadd.f32 0.0, %v2144
        %v2146 = vpop.f32.mrb[0].mxu0
        %2147 = vmatprep.mubr.f32.mxu0 0.0
        %2148 = vmatmul.mubr.f32.gmra.mrb[0].mxu0 %v1650
        %v2149 = vpop.f32.mrb[0].mxu0
        %v2150 = vadd.f32 0.0, %v2149
        %v2151 = vpop.f32.mrb[0].mxu0
        %2152 = vmatprep.mubr.f32.mxu0 0.0
        %2153 = vmatmul.mubr.f32.gmra.mrb[0].mxu0 %v1653
        %v2154 = vpop.f32.mrb[0].mxu0
        %v2155 = vadd.f32 0.0, %v2154
        %v2156 = vpop.f32.mrb[0].mxu0
        %2157 = vmatprep.mubr.f32.mxu0 0.0
        %2158 = vmatmul.mubr.f32.gmra.mrb[0].mxu0 %v1656
        %v2159 = vpop.f32.mrb[0].mxu0
        %v2160 = vadd.f32 0.0, %v2159
        %v2161 = vpop.f32.mrb[0].mxu0
        %2162 = vmatprep.mubr.f32.mxu0 0.0
        %2163 = vmatmul.mubr.f32.gmra.mrb[0].mxu0 %v1659
        %v2164 = vpop.f32.mrb[0].mxu0
        %v2165 = vadd.f32 0.0, %v2164
        %v2166 = vpop.f32.mrb[0].mxu0
        %2167 = vmatprep.mubr.f32.mxu0 0.0
        %2168 = vmatmul.mubr.f32.gmra.mrb[0].mxu0 %v1662
        %v2169 = vpop.f32.mrb[0].mxu0
        %v2170 = vadd.f32 0.0, %v2169
        %v2171 = vpop.f32.mrb[0].mxu0
        %2172 = vmatprep.mubr.f32.mxu0 0.0
        %2173 = vmatmul.mubr.f32.gmra.mrb[0].mxu0 %v1665
        %v2174 = vpop.f32.mrb[0].mxu0
        %v2175 = vadd.f32 0.0, %v2174
        %v2176 = vpop.f32.mrb[0].mxu0
        %2177 = vmatprep.mubr.f32.mxu0 0.0
        %2178 = vmatmul.mubr.f32.gmra.mrb[0].mxu0 %v1668
        %v2179 = vpop.f32.mrb[0].mxu0
        %v2180 = vadd.f32 0.0, %v2179
        %v2181 = vpop.f32.mrb[0].mxu0
        %2182 = vmatprep.mubr.f32.mxu0 0.0
        %2183 = vmatmul.mubr.f32.gmra.mrb[0].mxu0 %v1671
        %v2184 = vpop.f32.mrb[0].mxu0
        %v2185 = vadd.f32 0.0, %v2184
        %v2186 = vpop.f32.mrb[0].mxu0
        %2187 = vmatprep.mubr.f32.mxu0 0.0
        %2188 = vmatmul.mubr.f32.gmra.mrb[0].mxu0 %v1674
        %v2189 = vpop.f32.mrb[0].mxu0
        %v2190 = vadd.f32 0.0, %v2189
        %v2191 = vpop.f32.mrb[0].mxu0
        %2192 = vmatprep.mubr.f32.mxu0 0.0
        %2193 = vmatmul.mubr.f32.gmra.mrb[0].mxu0 %v1677
        %v2194 = vpop.f32.mrb[0].mxu0
        %v2195 = vadd.f32 0.0, %v2194
        %v2196 = vpop.f32.mrb[0].mxu0
        %2197 = vmatprep.mubr.f32.mxu0 0.0
        %2198 = vmatmul.mubr.f32.gmra.mrb[0].mxu0 %v1680
        %v2199 = vpop.f32.mrb[0].mxu0
        %v2200 = vadd.f32 0.0, %v2199
        %v2201 = vpop.f32.mrb[0].mxu0
        %2202 = vmatprep.mubr.f32.mxu0 0.0
        %2203 = vmatmul.mubr.f32.gmra.mrb[0].mxu0 %v1683
        %v2204 = vpop.f32.mrb[0].mxu0
        %v2205 = vadd.f32 0.0, %v2204
        %v2206 = vpop.f32.mrb[0].mxu0
        %2207 = vmatprep.mubr.f32.mxu0 0.0
        %2208 = vmatmul.mubr.f32.gmra.mrb[0].mxu0 %v1686
        %v2209 = vpop.f32.mrb[0].mxu0
        %v2210 = vadd.f32 0.0, %v2209
        %v2211 = vpop.f32.mrb[0].mxu0
        %2212 = vmatprep.mubr.f32.mxu0 0.0
        %2213 = vmatmul.mubr.f32.gmra.mrb[0].mxu0 %v1689
        %v2214 = vpop.f32.mrb[0].mxu0
        %v2215 = vadd.f32 0.0, %v2214
        %v2216 = vpop.f32.mrb[0].mxu0
        %2217 = vmatprep.mubr.f32.mxu0 0.0
        %2218 = vmatmul.mubr.f32.gmra.mrb[0].mxu0 %v1692
        %v2219 = vpop.f32.mrb[0].mxu0
        %v2220 = vadd.f32 0.0, %v2219
        %v2221 = vpop.f32.mrb[0].mxu0
        %2222 = vmatprep.mubr.f32.mxu0 0.0
        %2223 = vmatmul.mubr.f32.gmra.mrb[0].mxu0 %v1695
        %v2224 = vpop.f32.mrb[0].mxu0
        %v2225 = vadd.f32 0.0, %v2224
        %v2226 = vpop.f32.mrb[0].mxu0
        %2227 = vmatprep.mubr.f32.mxu0 0.0
        %2228 = vmatmul.mubr.f32.gmra.mrb[0].mxu0 %v1698
        %v2229 = vpop.f32.mrb[0].mxu0
        %v2230 = vadd.f32 0.0, %v2229
        %v2231 = vpop.f32.mrb[0].mxu0
        %2232 = vmatprep.mubr.f32.mxu0 0.0
        %2233 = vmatmul.mubr.f32.gmra.mrb[0].mxu0 %v1701
        %v2234 = vpop.f32.mrb[0].mxu0
        %v2235 = vadd.f32 0.0, %v2234
        %v2236 = vpop.f32.mrb[0].mxu0
        %2237 = vmatprep.mubr.f32.mxu0 0.0
        %2238 = vmatmul.mubr.f32.gmra.mrb[0].mxu0 %v1704
        %v2239 = vpop.f32.mrb[0].mxu0
        %v2240 = vadd.f32 0.0, %v2239
        %v2241 = vpop.f32.mrb[0].mxu0
        %2242 = vmatprep.mubr.f32.mxu0 0.0
        %2243 = vmatmul.mubr.f32.gmra.mrb[0].mxu0 %v1707
        %v2244 = vpop.f32.mrb[0].mxu0
        %v2245 = vadd.f32 0.0, %v2244
        %v2246 = vpop.f32.mrb[0].mxu0
        %2247 = vmatprep.mubr.f32.mxu0 0.0
        %2248 = vmatmul.mubr.f32.gmra.mrb[0].mxu0 %v1710
        %v2249 = vpop.f32.mrb[0].mxu0
        %v2250 = vadd.f32 0.0, %v2249
        %v2251 = vpop.f32.mrb[0].mxu0
        %2252 = vmatprep.mubr.f32.mxu0 0.0
        %2253 = vmatmul.mubr.f32.gmra.mrb[0].mxu0 %v1713
        %v2254 = vpop.f32.mrb[0].mxu0
        %v2255 = vadd.f32 0.0, %v2254
        %v2256 = vpop.f32.mrb[0].mxu0
        %2257 = vmatprep.mubr.f32.mxu0 0.0
        %2258 = vmatmul.mubr.f32.gmra.mrb[0].mxu0 %v1716
        %v2259 = vpop.f32.mrb[0].mxu0
        %v2260 = vadd.f32 0.0, %v2259
        %v2261 = vpop.f32.mrb[0].mxu0
        %2262 = vmatprep.mubr.f32.mxu0 0.0
        %2263 = vmatmul.mubr.f32.gmra.mrb[0].mxu0 %v1719
        %v2264 = vpop.f32.mrb[0].mxu0
        %v2265 = vadd.f32 0.0, %v2264
        %v2266 = vpop.f32.mrb[0].mxu0
        %2267 = vmatprep.mubr.f32.mxu0 0.0
        %2268 = vmatmul.mubr.f32.gmra.mrb[0].mxu0 %v1722
        %v2269 = vpop.f32.mrb[0].mxu0
        %v2270 = vadd.f32 0.0, %v2269
        %v2271 = vpop.f32.mrb[0].mxu0
        %2272 = vmatprep.mubr.f32.mxu0 0.0
        %2273 = vmatmul.mubr.f32.gmra.mrb[0].mxu0 %v1725
        %v2274 = vpop.f32.mrb[0].mxu0
        %v2275 = vadd.f32 0.0, %v2274
        %v2276 = vpop.f32.mrb[0].mxu0
        %2277 = vmatprep.mubr.f32.mxu0 0.0
        %2278 = vmatmul.mubr.f32.gmra.mrb[0].mxu0 %v1728
        %v2279 = vpop.f32.mrb[0].mxu0
        %v2280 = vadd.f32 0.0, %v2279
        %v2281 = vpop.f32.mrb[0].mxu0
        %2282 = vmatprep.mubr.f32.mxu0 0.0
        %2283 = vmatmul.mubr.f32.gmra.mrb[0].mxu0 %v1731
        %v2284 = vpop.f32.mrb[0].mxu0
        %v2285 = vadd.f32 0.0, %v2284
        %v2286 = vpop.f32.mrb[0].mxu0
        %2287 = vmatprep.mubr.f32.mxu0 0.0
        %2288 = vmatmul.mubr.f32.gmra.mrb[0].mxu0 %v1734
        %v2289 = vpop.f32.mrb[0].mxu0
        %v2290 = vadd.f32 0.0, %v2289
        %v2291 = vpop.f32.mrb[0].mxu0
        %2292 = vmatprep.mubr.f32.mxu0 0.0
        %2293 = vmatmul.mubr.f32.gmra.mrb[0].mxu0 %v1737
        %v2294 = vpop.f32.mrb[0].mxu0
        %v2295 = vadd.f32 0.0, %v2294
        %v2296 = vpop.f32.mrb[0].mxu0
        %2297 = vmatprep.mubr.f32.mxu0 0.0
        %2298 = vmatmul.mubr.f32.gmra.mrb[0].mxu0 %v1740
        %v2299 = vpop.f32.mrb[0].mxu0
        %v2300 = vadd.f32 0.0, %v2299
        %v2301 = vpop.f32.mrb[0].mxu0
        %2302 = vmatprep.mubr.f32.mxu0 0.0
        %2303 = vmatmul.mubr.f32.gmra.mrb[0].mxu0 %v1743
        %v2304 = vpop.f32.mrb[0].mxu0
        %v2305 = vadd.f32 0.0, %v2304
        %v2306 = vpop.f32.mrb[0].mxu0
        %2307 = vmatprep.mubr.f32.mxu0 0.0
        %2308 = vmatmul.mubr.f32.gmra.mrb[0].mxu0 %v1746
        %v2309 = vpop.f32.mrb[0].mxu0
        %v2310 = vadd.f32 0.0, %v2309
        %v2311 = vpop.f32.mrb[0].mxu0
        %2312 = vmatprep.mubr.f32.mxu0 0.0
        %2313 = vmatmul.mubr.f32.gmra.mrb[0].mxu0 %v1749
        %v2314 = vpop.f32.mrb[0].mxu0
        %v2315 = vadd.f32 0.0, %v2314
        %v2316 = vpop.f32.mrb[0].mxu0
        %2317 = vmatprep.mubr.f32.mxu0 0.0
        %2318 = vmatmul.mubr.f32.gmra.mrb[0].mxu0 %v1752
        %v2319 = vpop.f32.mrb[0].mxu0
        %v2320 = vadd.f32 0.0, %v2319
        %v2321 = vpop.f32.mrb[0].mxu0
        %2322 = vmatprep.mubr.f32.mxu0 0.0
        %2323 = vmatmul.mubr.f32.gmra.mrb[0].mxu0 %v1755
        %v2324 = vpop.f32.mrb[0].mxu0
        %v2325 = vadd.f32 0.0, %v2324
        %v2326 = vpop.f32.mrb[0].mxu0
        %2327 = vmatprep.mubr.f32.mxu0 0.0
        %2328 = vmatmul.mubr.f32.gmra.mrb[0].mxu0 %v1758
        %v2329 = vpop.f32.mrb[0].mxu0
        %v2330 = vadd.f32 0.0, %v2329
        %v2331 = vpop.f32.mrb[0].mxu0
        %2332 = vmatprep.mubr.f32.mxu0 0.0
        %2333 = vmatmul.mubr.f32.gmra.mrb[0].mxu0 %v1761
        %v2334 = vpop.f32.mrb[0].mxu0
        %v2335 = vadd.f32 0.0, %v2334
        %v2336 = vpop.f32.mrb[0].mxu0
        %2337 = vmatprep.mubr.f32.mxu0 0.0
        %2338 = vmatmul.mubr.f32.gmra.mrb[0].mxu0 %v1764
        %v2339 = vpop.f32.mrb[0].mxu0
        %v2340 = vadd.f32 0.0, %v2339
        %v2341 = vpop.f32.mrb[0].mxu0
        %2342 = vmatprep.mubr.f32.mxu0 0.0
        %2343 = vmatmul.mubr.f32.gmra.mrb[0].mxu0 %v1767
        %v2344 = vpop.f32.mrb[0].mxu0
        %v2345 = vadd.f32 0.0, %v2344
        %v2346 = vpop.f32.mrb[0].mxu0
        %2347 = vmatprep.mubr.f32.mxu0 0.0
        %2348 = vmatmul.mubr.f32.gmra.mrb[0].mxu0 %v1770
        %v2349 = vpop.f32.mrb[0].mxu0
        %v2350 = vadd.f32 0.0, %v2349
        %v2351 = vpop.f32.mrb[0].mxu0
        %2352 = vmatprep.mubr.f32.mxu0 0.0
        %2353 = vmatmul.mubr.f32.gmra.mrb[0].mxu0 %v1773
        %v2354 = vpop.f32.mrb[0].mxu0
        %v2355 = vadd.f32 0.0, %v2354
        %v2356 = vpop.f32.mrb[0].mxu0
        %2357 = vmatprep.mubr.f32.mxu0 0.0
        %2358 = vmatmul.mubr.f32.gmra.mrb[0].mxu0 %v1776
        %v2359 = vpop.f32.mrb[0].mxu0
        %v2360 = vadd.f32 0.0, %v2359
        %v2361 = vpop.f32.mrb[0].mxu0
        %2362 = vmatprep.mubr.f32.mxu0 0.0
        %2363 = vmatmul.mubr.f32.gmra.mrb[0].mxu0 %v1779
        %v2364 = vpop.f32.mrb[0].mxu0
        %v2365 = vadd.f32 0.0, %v2364
        %v2366 = vpop.f32.mrb[0].mxu0
        %2367 = vmatprep.mubr.f32.mxu0 0.0
        %2368 = vmatmul.mubr.f32.gmra.mrb[0].mxu0 %v1782
        %v2369 = vpop.f32.mrb[0].mxu0
        %v2370 = vadd.f32 0.0, %v2369
        %v2371 = vpop.f32.mrb[0].mxu0
        %2372 = vmatprep.mubr.f32.mxu0 0.0
        %2373 = vmatmul.mubr.f32.gmra.mrb[0].mxu0 %v1785
        %v2374 = vpop.f32.mrb[0].mxu0
        %v2375 = vadd.f32 0.0, %v2374
        %v2376 = vpop.f32.mrb[0].mxu0
        %2377 = vmatprep.mubr.f32.mxu0 0.0
        %2378 = vmatmul.mubr.f32.gmra.mrb[0].mxu0 %v1788
        %v2379 = vpop.f32.mrb[0].mxu0
        %v2380 = vadd.f32 0.0, %v2379
        %v2381 = vpop.f32.mrb[0].mxu0
        %2382 = vmatprep.mubr.f32.mxu0 0.0
        %2383 = vmatmul.mubr.f32.gmra.mrb[0].mxu0 %v1791
        %v2384 = vpop.f32.mrb[0].mxu0
        %v2385 = vadd.f32 0.0, %v2384
        %v2386 = vpop.f32.mrb[0].mxu0
        %2387 = vmatprep.mubr.f32.mxu0 0.0
        %2388 = vmatmul.mubr.f32.gmra.mrb[0].mxu0 %v1794
        %v2389 = vpop.f32.mrb[0].mxu0
        %v2390 = vadd.f32 0.0, %v2389
        %v2391 = vpop.f32.mrb[0].mxu0
        %2392 = vmatprep.mubr.f32.mxu0 0.0
        %2393 = vmatmul.mubr.f32.gmra.mrb[0].mxu0 %v1797
        %v2394 = vpop.f32.mrb[0].mxu0
        %v2395 = vadd.f32 0.0, %v2394
        %v2396 = vpop.f32.mrb[0].mxu0
        %2397 = vmatprep.mubr.f32.mxu0 0.0
        %2398 = vmatmul.mubr.f32.gmra.mrb[0].mxu0 %v1800
        %v2399 = vpop.f32.mrb[0].mxu0
        %v2400 = vadd.f32 0.0, %v2399
        %v2401 = vpop.f32.mrb[0].mxu0
        %2402 = vmatprep.mubr.f32.mxu0 0.0
        %2403 = vmatmul.mubr.f32.gmra.mrb[0].mxu0 %v1803
        %v2404 = vpop.f32.mrb[0].mxu0
        %v2405 = vadd.f32 0.0, %v2404
        %v2406 = vpop.f32.mrb[0].mxu0
        %2407 = vmatprep.mubr.f32.mxu0 0.0
        %2408 = vmatmul.mubr.f32.gmra.mrb[0].mxu0 %v1806
        %v2409 = vpop.f32.mrb[0].mxu0
        %v2410 = vadd.f32 0.0, %v2409
        %v2411 = vpop.f32.mrb[0].mxu0
        %2412 = vmatprep.mubr.f32.mxu0 0.0
        %2413 = vmatmul.mubr.f32.gmra.mrb[0].mxu0 %v1809
        %v2414 = vpop.f32.mrb[0].mxu0
        %v2415 = vadd.f32 0.0, %v2414
        %v2416 = vpop.f32.mrb[0].mxu0
        %2417 = vmatprep.mubr.f32.mxu0 0.0
        %2418 = vmatmul.mubr.f32.gmra.mrb[0].mxu0 %v1812
        %v2419 = vpop.f32.mrb[0].mxu0
        %v2420 = vadd.f32 0.0, %v2419
        %v2421 = vpop.f32.mrb[0].mxu0
        %2422 = vmatprep.mubr.f32.mxu0 0.0
        %2423 = vmatmul.mubr.f32.gmra.mrb[0].mxu0 %v1815
        %v2424 = vpop.f32.mrb[0].mxu0
        %v2425 = vadd.f32 0.0, %v2424
        %v2426 = vpop.f32.mrb[0].mxu0
        %2427 = vmatprep.mubr.f32.mxu0 0.0
        %2428 = vmatmul.mubr.f32.gmra.mrb[0].mxu0 %v1818
        %v2429 = vpop.f32.mrb[0].mxu0
        %v2430 = vadd.f32 0.0, %v2429
        %v2431 = vpop.f32.mrb[0].mxu0
        %2432 = vmatprep.mubr.f32.mxu0 0.0
        %2433 = vmatmul.mubr.f32.gmra.mrb[0].mxu0 %v1821
        %v2434 = vpop.f32.mrb[0].mxu0
        %v2435 = vadd.f32 0.0, %v2434
        %v2436 = vpop.f32.mrb[0].mxu0
        %2437 = vmatprep.mubr.f32.mxu0 0.0
        %2438 = vmatmul.mubr.f32.gmra.mrb[0].mxu0 %v1824
        %v2439 = vpop.f32.mrb[0].mxu0
        %v2440 = vadd.f32 0.0, %v2439
        %v2441 = vpop.f32.mrb[0].mxu0
        %2442 = vmatprep.mubr.f32.mxu0 0.0
        %2443 = vmatmul.mubr.f32.gmra.mrb[0].mxu0 %v1827
        %v2444 = vpop.f32.mrb[0].mxu0
        %v2445 = vadd.f32 0.0, %v2444
        %v2446 = vpop.f32.mrb[0].mxu0
        %2447 = vmatprep.mubr.f32.mxu0 0.0
        %2448 = vmatmul.mubr.f32.gmra.mrb[0].mxu0 %v1830
        %v2449 = vpop.f32.mrb[0].mxu0
        %v2450 = vadd.f32 0.0, %v2449
        %v2451 = vpop.f32.mrb[0].mxu0
        %2452 = vmatprep.mubr.f32.mxu0 0.0
        %2453 = vmatmul.mubr.f32.gmra.mrb[0].mxu0 %v1833
        %v2454 = vpop.f32.mrb[0].mxu0
        %v2455 = vadd.f32 0.0, %v2454
        %v2456 = vpop.f32.mrb[0].mxu0
        %2457 = vmatprep.mubr.f32.mxu0 0.0
        %2458 = vmatmul.mubr.f32.gmra.mrb[0].mxu0 %v1836
        %v2459 = vpop.f32.mrb[0].mxu0
        %v2460 = vadd.f32 0.0, %v2459
        %v2461 = vpop.f32.mrb[0].mxu0
        %2462 = vmatprep.mubr.f32.mxu0 0.0
        %2463 = vmatmul.mubr.f32.gmra.mrb[0].mxu0 %v1839
        %v2464 = vpop.f32.mrb[0].mxu0
        %v2465 = vadd.f32 0.0, %v2464
        %v2466 = vpop.f32.mrb[0].mxu0
        %2467 = vmatprep.mubr.f32.mxu0 0.0
        %2468 = vmatmul.mubr.f32.gmra.mrb[0].mxu0 %v1842
        %v2469 = vpop.f32.mrb[0].mxu0
        %v2470 = vadd.f32 0.0, %v2469
        %v2471 = vpop.f32.mrb[0].mxu0
        %2472 = vmatprep.mubr.f32.mxu0 0.0
        %2473 = vmatmul.mubr.f32.gmra.mrb[0].mxu0 %v1845
        %v2474 = vpop.f32.mrb[0].mxu0
        %v2475 = vadd.f32 0.0, %v2474
        %v2476 = vpop.f32.mrb[0].mxu0
        %2477 = vmatprep.mubr.f32.mxu0 0.0
        %2478 = vmatmul.mubr.f32.gmra.mrb[0].mxu0 %v1848
        %v2479 = vpop.f32.mrb[0].mxu0
        %v2480 = vadd.f32 0.0, %v2479
        %v2481 = vpop.f32.mrb[0].mxu0
        %2482 = vmatprep.mubr.f32.mxu0 0.0
        %2483 = vmatmul.mubr.f32.gmra.mrb[0].mxu0 %v1851
        %v2484 = vpop.f32.mrb[0].mxu0
        %v2485 = vadd.f32 0.0, %v2484
        %v2486 = vpop.f32.mrb[0].mxu0
        %2487 = vmatprep.mubr.f32.mxu0 0.0
        %2488 = vmatmul.mubr.f32.gmra.mrb[0].mxu0 %v1854
        %v2489 = vpop.f32.mrb[0].mxu0
        %v2490 = vadd.f32 0.0, %v2489
        %v2491 = vpop.f32.mrb[0].mxu0
        %2492 = vmatprep.mubr.f32.mxu0 0.0
        %2493 = vmatmul.mubr.f32.gmra.mrb[0].mxu0 %v1857
        %v2494 = vpop.f32.mrb[0].mxu0
        %v2495 = vadd.f32 0.0, %v2494
        %v2496 = vpop.f32.mrb[0].mxu0
        %2497 = vmatprep.mubr.f32.mxu0 0.0
        %2498 = vmatmul.mubr.f32.gmra.mrb[0].mxu0 %v1860
        %v2499 = vpop.f32.mrb[0].mxu0
        %v2500 = vadd.f32 0.0, %v2499
        %v2501 = vpop.f32.mrb[0].mxu0
        %2502 = vmatprep.mubr.f32.mxu0 0.0
        %2503 = vmatmul.mubr.f32.gmra.mrb[0].mxu0 %v1863
        %v2504 = vpop.f32.mrb[0].mxu0
        %v2505 = vadd.f32 0.0, %v2504
        %v2506 = vpop.f32.mrb[0].mxu0
        %2507 = vmatprep.mubr.f32.mxu0 0.0
        %2508 = vmatmul.mubr.f32.gmra.mrb[0].mxu0 %v1866
        %v2509 = vpop.f32.mrb[0].mxu0
        %v2510 = vadd.f32 0.0, %v2509
        %v2511 = vpop.f32.mrb[0].mxu0
        %2512 = vmatprep.mubr.f32.mxu0 0.0
        %2513 = vmatmul.mubr.f32.gmra.mrb[0].mxu0 %v1869
        %v2514 = vpop.f32.mrb[0].mxu0
        %v2515 = vadd.f32 0.0, %v2514
        %v2516 = vpop.f32.mrb[0].mxu0
        %2517 = vmatprep.mubr.f32.mxu0 0.0
        %2518 = vmatmul.mubr.f32.gmra.mrb[0].mxu0 %v1872
        %v2519 = vpop.f32.mrb[0].mxu0
        %v2520 = vadd.f32 0.0, %v2519
        %v2521 = vpop.f32.mrb[0].mxu0
        %2522 = vmatprep.mubr.f32.mxu0 0.0
        %2523 = vmatmul.mubr.f32.gmra.mrb[0].mxu0 %v1875
        %v2524 = vpop.f32.mrb[0].mxu0
        %v2525 = vadd.f32 0.0, %v2524
        %v2526 = vpop.f32.mrb[0].mxu0
        %2527 = vmatprep.mubr.f32.mxu0 0.0
        %2528 = vmatmul.mubr.f32.gmra.mrb[0].mxu0 %v1878
        %v2529 = vpop.f32.mrb[0].mxu0
        %v2530 = vadd.f32 0.0, %v2529
        %v2531 = vpop.f32.mrb[0].mxu0
        %2532 = vmatprep.mubr.f32.mxu0 0.0
        %2533 = vmatmul.mubr.f32.gmra.mrb[0].mxu0 %v1881
        %v2534 = vpop.f32.mrb[0].mxu0
        %v2535 = vadd.f32 0.0, %v2534
        %v2536 = vpop.f32.mrb[0].mxu0
        %2537 = vmatprep.mubr.f32.mxu0 0.0
        %2538 = vmatmul.mubr.f32.gmra.mrb[0].mxu0 %v1884
        %v2539 = vpop.f32.mrb[0].mxu0
        %v2540 = vadd.f32 0.0, %v2539
        %v2541 = vpop.f32.mrb[0].mxu0
        %2542 = vmatprep.mubr.f32.mxu0 0.0
        %2543 = vmatmul.mubr.f32.gmra.mrb[0].mxu0 %v1887
        %v2544 = vpop.f32.mrb[0].mxu0
        %v2545 = vadd.f32 0.0, %v2544
        %v2546 = vpop.f32.mrb[0].mxu0
        %2547 = vmatprep.mubr.f32.mxu0 0.0
        %2548 = vmatmul.mubr.f32.gmra.mrb[0].mxu0 %v1890
        %v2549 = vpop.f32.mrb[0].mxu0
        %v2550 = vadd.f32 0.0, %v2549
        %v2551 = vpop.f32.mrb[0].mxu0
        %2552 = vmatprep.mubr.f32.mxu0 0.0
        %2553 = vmatmul.mubr.f32.gmra.mrb[0].mxu0 %v1893
        %v2554 = vpop.f32.mrb[0].mxu0
        %v2555 = vadd.f32 0.0, %v2554
        %v2556 = vpop.f32.mrb[0].mxu0
        %2557 = vmatprep.mubr.f32.mxu0 0.0
        %2558 = vmatmul.mubr.f32.gmra.mrb[0].mxu0 %v1896
        %v2559 = vpop.f32.mrb[0].mxu0
        %v2560 = vadd.f32 0.0, %v2559
        %v2561 = vpop.f32.mrb[0].mxu0
        %2562 = vmatprep.mubr.f32.mxu0 0.0
        %2563 = vmatmul.mubr.f32.gmra.mrb[0].mxu0 %v1899
        %v2564 = vpop.f32.mrb[0].mxu0
        %v2565 = vadd.f32 0.0, %v2564
        %v2566 = vpop.f32.mrb[0].mxu0
        %2567 = vmatprep.mubr.f32.mxu0 0.0
        %2568 = vmatmul.mubr.f32.gmra.mrb[0].mxu0 %v1902
        %v2569 = vpop.f32.mrb[0].mxu0
        %v2570 = vadd.f32 0.0, %v2569
        %v2571 = vpop.f32.mrb[0].mxu0
        %2572 = vmatprep.mubr.f32.mxu0 0.0
        %2573 = vmatmul.mubr.f32.gmra.mrb[0].mxu0 %v1905
        %v2574 = vpop.f32.mrb[0].mxu0
        %v2575 = vadd.f32 0.0, %v2574
        %v2576 = vpop.f32.mrb[0].mxu0
        %2577 = vmatprep.mubr.f32.mxu0 0.0
        %2578 = vmatmul.mubr.f32.gmra.mrb[0].mxu0 %v1908
        %v2579 = vpop.f32.mrb[0].mxu0
        %v2580 = vadd.f32 0.0, %v2579
        %v2581 = vpop.f32.mrb[0].mxu0
        %2582 = vmatprep.mubr.f32.mxu0 0.0
        %2583 = vmatmul.mubr.f32.gmra.mrb[0].mxu0 %v1911
        %v2584 = vpop.f32.mrb[0].mxu0
        %v2585 = vadd.f32 0.0, %v2584
        %v2586 = vpop.f32.mrb[0].mxu0
        %2587 = vmatprep.mubr.f32.mxu0 0.0
        %2588 = vmatmul.mubr.f32.gmra.mrb[0].mxu0 %v1914
        %v2589 = vpop.f32.mrb[0].mxu0
        %v2590 = vadd.f32 0.0, %v2589
        %v2591 = vpop.f32.mrb[0].mxu0
        %2592 = vmatprep.mubr.f32.mxu0 0.0
        %2593 = vmatmul.mubr.f32.gmra.mrb[0].mxu0 %v1917
        %v2594 = vpop.f32.mrb[0].mxu0
        %v2595 = vadd.f32 0.0, %v2594
        %v2596 = vpop.f32.mrb[0].mxu0
        %2597 = vmatprep.mubr.f32.mxu0 0.0
        %2598 = vmatmul.mubr.f32.gmra.mrb[0].mxu0 %v1920
        %v2599 = vpop.f32.mrb[0].mxu0
        %v2600 = vadd.f32 0.0, %v2599
        %v2601 = vpop.f32.mrb[0].mxu0
        %2602 = vmatprep.mubr.f32.mxu0 0.0
        %2603 = vmatmul.mubr.f32.gmra.mrb[0].mxu0 %v1923
        %v2604 = vpop.f32.mrb[0].mxu0
        %v2605 = vadd.f32 0.0, %v2604
        %v2606 = vpop.f32.mrb[0].mxu0
        %2607 = vmatprep.mubr.f32.mxu0 0.0
        %2608 = vmatmul.mubr.f32.gmra.mrb[0].mxu0 %v1926
        %v2609 = vpop.f32.mrb[0].mxu0
        %v2610 = vadd.f32 0.0, %v2609
        %v2611 = vpop.f32.mrb[0].mxu0
        %2612 = vmatprep.mubr.f32.mxu0 0.0
        %2613 = vmatmul.mubr.f32.gmra.mrb[0].mxu0 %v1929
        %v2614 = vpop.f32.mrb[0].mxu0
        %v2615 = vadd.f32 0.0, %v2614
        %v2616 = vpop.f32.mrb[0].mxu0
        %2617 = vmatprep.mubr.f32.mxu0 0.0
        %2618 = vmatmul.mubr.f32.gmra.mrb[0].mxu0 %v1932
        %v2619 = vpop.f32.mrb[0].mxu0
        %v2620 = vadd.f32 0.0, %v2619
        %v2621 = vpop.f32.mrb[0].mxu0
        %2622 = vmatprep.mubr.f32.mxu0 0.0
        %2623 = vmatmul.mubr.f32.gmra.mrb[0].mxu0 %v1935
        %v2624 = vpop.f32.mrb[0].mxu0
        %v2625 = vadd.f32 0.0, %v2624
        %v2626 = vpop.f32.mrb[0].mxu0
        %2627 = vmatprep.mubr.f32.mxu0 0.0
        %2628 = vmatmul.mubr.f32.gmra.mrb[0].mxu0 %v1938
        %v2629 = vpop.f32.mrb[0].mxu0
        %v2630 = vadd.f32 0.0, %v2629
        %v2631 = vpop.f32.mrb[0].mxu0
        %2632 = vmatprep.mubr.f32.mxu0 0.0
        %2633 = vmatmul.mubr.f32.gmra.mrb[0].mxu0 %v1941
        %v2634 = vpop.f32.mrb[0].mxu0
        %v2635 = vadd.f32 0.0, %v2634
        %v2636 = vpop.f32.mrb[0].mxu0
        %2637 = vmatprep.mubr.f32.mxu0 0.0
        %2638 = vmatmul.mubr.f32.gmra.mrb[0].mxu0 %v1944
        %v2639 = vpop.f32.mrb[0].mxu0
        %v2640 = vadd.f32 0.0, %v2639
        %v2641 = vpop.f32.mrb[0].mxu0
        %2642 = vmatprep.mubr.f32.mxu0 0.0
        %2643 = vmatmul.mubr.f32.gmra.mrb[0].mxu0 %v1947
        %v2644 = vpop.f32.mrb[0].mxu0
        %v2645 = vadd.f32 0.0, %v2644
        %v2646 = vpop.f32.mrb[0].mxu0
        %2647 = vmatprep.mubr.f32.mxu0 0.0
        %2648 = vmatmul.mubr.f32.gmra.mrb[0].mxu0 %v1950
        %v2649 = vpop.f32.mrb[0].mxu0
        %v2650 = vadd.f32 0.0, %v2649
        %v2651 = vpop.f32.mrb[0].mxu0
        %2652 = vmatprep.mubr.f32.mxu0 0.0
        %2653 = vmatmul.mubr.f32.gmra.mrb[0].mxu0 %v1953
        %v2654 = vpop.f32.mrb[0].mxu0
        %v2655 = vadd.f32 0.0, %v2654
        %v2656 = vpop.f32.mrb[0].mxu0
        %2657 = vmatprep.mubr.f32.mxu0 0.0
        %2658 = vmatmul.mubr.f32.gmra.mrb[0].mxu0 %v1956
        %v2659 = vpop.f32.mrb[0].mxu0
        %v2660 = vadd.f32 0.0, %v2659
        %v2661 = vpop.f32.mrb[0].mxu0
        %2662 = vdwg.mxu0
        %v2663 = vadd.f32 %v220, %v932
        %v2664 = vadd.f32 %v221, %v937
        %v2665 = vadd.f32 %v222, %v942
        %v2666 = vadd.f32 %v223, %v947
        %v2667 = vadd.f32 %v224, %v952
        %v2668 = vadd.f32 %v225, %v957
        %v2669 = vadd.f32 %v226, %v962
        %v2670 = vadd.f32 %v227, %v967
        %v2671 = vadd.f32 %v228, %v972
        %v2672 = vadd.f32 %v229, %v977
        %v2673 = vadd.f32 %v230, %v982
        %v2674 = vadd.f32 %v231, %v987
        %v2675 = vadd.f32 %v232, %v992
        %v2676 = vadd.f32 %v233, %v997
        %v2677 = vadd.f32 %v234, %v1002
        %v2678 = vadd.f32 %v235, %v1007
        %v2679 = vadd.f32 %v236, %v1012
        %v2680 = vadd.f32 %v237, %v1017
        %v2681 = vadd.f32 %v238, %v1022
        %v2682 = vadd.f32 %v239, %v1027
        %v2683 = vadd.f32 %v240, %v1032
        %v2684 = vadd.f32 %v241, %v1037
        %v2685 = vadd.f32 %v242, %v1042
        %v2686 = vadd.f32 %v243, %v1047
        %v2687 = vadd.f32 %v244, %v1052
        %v2688 = vadd.f32 %v245, %v1057
        %v2689 = vadd.f32 %v246, %v1062
        %v2690 = vadd.f32 %v247, %v1067
        %v2691 = vadd.f32 %v248, %v1072
        %v2692 = vadd.f32 %v249, %v1077
        %v2693 = vadd.f32 %v250, %v1082
        %v2694 = vadd.f32 %v251, %v1087
        %v2695 = vadd.f32 %v252, %v1092
        %v2696 = vadd.f32 %v253, %v1097
        %v2697 = vadd.f32 %v254, %v1102
        %v2698 = vadd.f32 %v255, %v1107
        %v2699 = vadd.f32 %v256, %v1112
        %v2700 = vadd.f32 %v257, %v1117
        %v2701 = vadd.f32 %v258, %v1122
        %v2702 = vadd.f32 %v259, %v1127
        %v2703 = vadd.f32 %v260, %v1132
        %v2704 = vadd.f32 %v261, %v1137
        %v2705 = vadd.f32 %v262, %v1142
        %v2706 = vadd.f32 %v263, %v1147
        %v2707 = vadd.f32 %v264, %v1152
        %v2708 = vadd.f32 %v265, %v1157
        %v2709 = vadd.f32 %v266, %v1162
        %v2710 = vadd.f32 %v267, %v1167
        %v2711 = vadd.f32 %v268, %v1172
        %v2712 = vadd.f32 %v269, %v1177
        %v2713 = vadd.f32 %v270, %v1182
        %v2714 = vadd.f32 %v271, %v1187
        %v2715 = vadd.f32 %v272, %v1192
        %v2716 = vadd.f32 %v273, %v1197
        %v2717 = vadd.f32 %v274, %v1202
        %v2718 = vadd.f32 %v275, %v1207
        %v2719 = vadd.f32 %v276, %v1212
        %v2720 = vadd.f32 %v277, %v1217
        %v2721 = vadd.f32 %v278, %v1222
        %v2722 = vadd.f32 %v279, %v1227
        %v2723 = vadd.f32 %v280, %v1232
        %v2724 = vadd.f32 %v281, %v1237
        %v2725 = vadd.f32 %v282, %v1242
        %v2726 = vadd.f32 %v283, %v1247
        %v2727 = vadd.f32 %v284, %v1252
        %v2728 = vadd.f32 %v285, %v1257
        %v2729 = vadd.f32 %v286, %v1262
        %v2730 = vadd.f32 %v287, %v1267
        %v2731 = vadd.f32 %v288, %v1272
        %v2732 = vadd.f32 %v289, %v1277
        %v2733 = vadd.f32 %v290, %v1282
        %v2734 = vadd.f32 %v291, %v1287
        %v2735 = vadd.f32 %v292, %v1292
        %v2736 = vadd.f32 %v293, %v1297
        %v2737 = vadd.f32 %v294, %v1302
        %v2738 = vadd.f32 %v295, %v1307
        %v2739 = vadd.f32 %v296, %v1312
        %v2740 = vadd.f32 %v297, %v1317
        %v2741 = vadd.f32 %v298, %v1322
        %v2742 = vadd.f32 %v299, %v1327
        %v2743 = vadd.f32 %v300, %v1332
        %v2744 = vadd.f32 %v301, %v1337
        %v2745 = vadd.f32 %v302, %v1342
        %v2746 = vadd.f32 %v303, %v1347
        %v2747 = vadd.f32 %v304, %v1352
        %v2748 = vadd.f32 %v305, %v1357
        %v2749 = vadd.f32 %v306, %v1362
        %v2750 = vadd.f32 %v307, %v1367
        %v2751 = vadd.f32 %v308, %v1372
        %v2752 = vadd.f32 %v309, %v1377
        %v2753 = vadd.f32 %v310, %v1382
        %v2754 = vadd.f32 %v311, %v1387
        %v2755 = vadd.f32 %v312, %v1392
        %v2756 = vadd.f32 %v313, %v1397
        %v2757 = vadd.f32 %v314, %v1402
        %v2758 = vadd.f32 %v315, %v1407
        %v2759 = vadd.f32 %v316, %v1412
        %v2760 = vadd.f32 %v317, %v1417
        %v2761 = vadd.f32 %v318, %v1422
        %v2762 = vadd.f32 %v319, %v1427
        %v2763 = vadd.f32 %v320, %v1432
        %v2764 = vadd.f32 %v321, %v1437
        %v2765 = vadd.f32 %v322, %v1442
        %v2766 = vadd.f32 %v323, %v1447
        %v2767 = vadd.f32 %v324, %v1452
        %v2768 = vadd.f32 %v325, %v1457
        %v2769 = vadd.f32 %v326, %v1462
        %v2770 = vadd.f32 %v327, %v1467
        %v2771 = vadd.f32 %v328, %v1472
        %v2772 = vadd.f32 %v329, %v1477
        %v2773 = vadd.f32 %v330, %v1482
        %v2774 = vadd.f32 %v331, %v1487
        %v2775 = vadd.f32 %v332, %v1492
        %v2776 = vadd.f32 %v333, %v1497
        %v2777 = vadd.f32 %v334, %v1502
        %v2778 = vadd.f32 %v335, %v1507
        %v2779 = vadd.f32 %v336, %v1512
        %v2780 = vadd.f32 %v337, %v1517
        %v2781 = vadd.f32 %v338, %v1522
        %v2782 = vadd.f32 %v339, %v1527
        %v2783 = vadd.f32 %v340, %v1532
        %v2784 = vadd.f32 %v341, %v1537
        %v2785 = vadd.f32 %v342, %v1542
        %v2786 = vadd.f32 %v343, %v1547
        %v2787 = vadd.f32 %v344, %v1552
        %v2788 = vadd.f32 %v345, %v1557
        %v2789 = vadd.f32 %v346, %v1562
        %v2790 = vadd.f32 %v347, %v1567
        %v2791 = vadd.f32 %v348, %v2025
        %v2792 = vadd.f32 %v349, %v2030
        %v2793 = vadd.f32 %v350, %v2035
        %v2794 = vadd.f32 %v351, %v2040
        %v2795 = vadd.f32 %v352, %v2045
        %v2796 = vadd.f32 %v353, %v2050
        %v2797 = vadd.f32 %v354, %v2055
        %v2798 = vadd.f32 %v355, %v2060
        %v2799 = vadd.f32 %v356, %v2065
        %v2800 = vadd.f32 %v357, %v2070
        %v2801 = vadd.f32 %v358, %v2075
        %v2802 = vadd.f32 %v359, %v2080
        %v2803 = vadd.f32 %v360, %v2085
        %v2804 = vadd.f32 %v361, %v2090
        %v2805 = vadd.f32 %v362, %v2095
        %v2806 = vadd.f32 %v363, %v2100
        %v2807 = vadd.f32 %v364, %v2105
        %v2808 = vadd.f32 %v365, %v2110
        %v2809 = vadd.f32 %v366, %v2115
        %v2810 = vadd.f32 %v367, %v2120
        %v2811 = vadd.f32 %v368, %v2125
        %v2812 = vadd.f32 %v369, %v2130
        %v2813 = vadd.f32 %v370, %v2135
        %v2814 = vadd.f32 %v371, %v2140
        %v2815 = vadd.f32 %v372, %v2145
        %v2816 = vadd.f32 %v373, %v2150
        %v2817 = vadd.f32 %v374, %v2155
        %v2818 = vadd.f32 %v375, %v2160
        %v2819 = vadd.f32 %v376, %v2165
        %v2820 = vadd.f32 %v377, %v2170
        %v2821 = vadd.f32 %v378, %v2175
        %v2822 = vadd.f32 %v379, %v2180
        %v2823 = vadd.f32 %v380, %v2185
        %v2824 = vadd.f32 %v381, %v2190
        %v2825 = vadd.f32 %v382, %v2195
        %v2826 = vadd.f32 %v383, %v2200
        %v2827 = vadd.f32 %v384, %v2205
        %v2828 = vadd.f32 %v385, %v2210
        %v2829 = vadd.f32 %v386, %v2215
        %v2830 = vadd.f32 %v387, %v2220
        %v2831 = vadd.f32 %v388, %v2225
        %v2832 = vadd.f32 %v389, %v2230
        %v2833 = vadd.f32 %v390, %v2235
        %v2834 = vadd.f32 %v391, %v2240
        %v2835 = vadd.f32 %v392, %v2245
        %v2836 = vadd.f32 %v393, %v2250
        %v2837 = vadd.f32 %v394, %v2255
        %v2838 = vadd.f32 %v395, %v2260
        %v2839 = vadd.f32 %v396, %v2265
        %v2840 = vadd.f32 %v397, %v2270
        %v2841 = vadd.f32 %v398, %v2275
        %v2842 = vadd.f32 %v399, %v2280
        %v2843 = vadd.f32 %v400, %v2285
        %v2844 = vadd.f32 %v401, %v2290
        %v2845 = vadd.f32 %v402, %v2295
        %v2846 = vadd.f32 %v403, %v2300
        %v2847 = vadd.f32 %v404, %v2305
        %v2848 = vadd.f32 %v405, %v2310
        %v2849 = vadd.f32 %v406, %v2315
        %v2850 = vadd.f32 %v407, %v2320
        %v2851 = vadd.f32 %v408, %v2325
        %v2852 = vadd.f32 %v409, %v2330
        %v2853 = vadd.f32 %v410, %v2335
        %v2854 = vadd.f32 %v411, %v2340
        %v2855 = vadd.f32 %v412, %v2345
        %v2856 = vadd.f32 %v413, %v2350
        %v2857 = vadd.f32 %v414, %v2355
        %v2858 = vadd.f32 %v415, %v2360
        %v2859 = vadd.f32 %v416, %v2365
        %v2860 = vadd.f32 %v417, %v2370
        %v2861 = vadd.f32 %v418, %v2375
        %v2862 = vadd.f32 %v419, %v2380
        %v2863 = vadd.f32 %v420, %v2385
        %v2864 = vadd.f32 %v421, %v2390
        %v2865 = vadd.f32 %v422, %v2395
        %v2866 = vadd.f32 %v423, %v2400
        %v2867 = vadd.f32 %v424, %v2405
        %v2868 = vadd.f32 %v425, %v2410
        %v2869 = vadd.f32 %v426, %v2415
        %v2870 = vadd.f32 %v427, %v2420
        %v2871 = vadd.f32 %v428, %v2425
        %v2872 = vadd.f32 %v429, %v2430
        %v2873 = vadd.f32 %v430, %v2435
        %v2874 = vadd.f32 %v431, %v2440
        %v2875 = vadd.f32 %v432, %v2445
        %v2876 = vadd.f32 %v433, %v2450
        %v2877 = vadd.f32 %v434, %v2455
        %v2878 = vadd.f32 %v435, %v2460
        %v2879 = vadd.f32 %v436, %v2465
        %v2880 = vadd.f32 %v437, %v2470
        %v2881 = vadd.f32 %v438, %v2475
        %v2882 = vadd.f32 %v439, %v2480
        %v2883 = vadd.f32 %v440, %v2485
        %v2884 = vadd.f32 %v441, %v2490
        %v2885 = vadd.f32 %v442, %v2495
        %v2886 = vadd.f32 %v443, %v2500
        %v2887 = vadd.f32 %v444, %v2505
        %v2888 = vadd.f32 %v445, %v2510
        %v2889 = vadd.f32 %v446, %v2515
        %v2890 = vadd.f32 %v447, %v2520
        %v2891 = vadd.f32 %v448, %v2525
        %v2892 = vadd.f32 %v449, %v2530
        %v2893 = vadd.f32 %v450, %v2535
        %v2894 = vadd.f32 %v451, %v2540
        %v2895 = vadd.f32 %v452, %v2545
        %v2896 = vadd.f32 %v453, %v2550
        %v2897 = vadd.f32 %v454, %v2555
        %v2898 = vadd.f32 %v455, %v2560
        %v2899 = vadd.f32 %v456, %v2565
        %v2900 = vadd.f32 %v457, %v2570
        %v2901 = vadd.f32 %v458, %v2575
        %v2902 = vadd.f32 %v459, %v2580
        %v2903 = vadd.f32 %v460, %v2585
        %v2904 = vadd.f32 %v461, %v2590
        %v2905 = vadd.f32 %v462, %v2595
        %v2906 = vadd.f32 %v463, %v2600
        %v2907 = vadd.f32 %v464, %v2605
        %v2908 = vadd.f32 %v465, %v2610
        %v2909 = vadd.f32 %v466, %v2615
        %v2910 = vadd.f32 %v467, %v2620
        %v2911 = vadd.f32 %v468, %v2625
        %v2912 = vadd.f32 %v469, %v2630
        %v2913 = vadd.f32 %v470, %v2635
        %v2914 = vadd.f32 %v471, %v2640
        %v2915 = vadd.f32 %v472, %v2645
        %v2916 = vadd.f32 %v473, %v2650
        %v2917 = vadd.f32 %v474, %v2655
        %v2918 = vadd.f32 %v475, %v2660
        %v2919 = vmul.f32 %v2663, %v2663
        %v2920 = vmul.f32 %v2664, %v2664
        %v2921 = vmul.f32 %v2665, %v2665
        %v2922 = vmul.f32 %v2666, %v2666
        %v2923 = vmul.f32 %v2667, %v2667
        %v2924 = vmul.f32 %v2668, %v2668
        %v2925 = vmul.f32 %v2669, %v2669
        %v2926 = vmul.f32 %v2670, %v2670
        %v2927 = vmul.f32 %v2671, %v2671
        %v2928 = vmul.f32 %v2672, %v2672
        %v2929 = vmul.f32 %v2673, %v2673
        %v2930 = vmul.f32 %v2674, %v2674
        %v2931 = vmul.f32 %v2675, %v2675
        %v2932 = vmul.f32 %v2676, %v2676
        %v2933 = vmul.f32 %v2677, %v2677
        %v2934 = vmul.f32 %v2678, %v2678
        %v2935 = vmul.f32 %v2679, %v2679
        %v2936 = vmul.f32 %v2680, %v2680
        %v2937 = vmul.f32 %v2681, %v2681
        %v2938 = vmul.f32 %v2682, %v2682
        %v2939 = vmul.f32 %v2683, %v2683
        %v2940 = vmul.f32 %v2684, %v2684
        %v2941 = vmul.f32 %v2685, %v2685
        %v2942 = vmul.f32 %v2686, %v2686
        %v2943 = vmul.f32 %v2687, %v2687
        %v2944 = vmul.f32 %v2688, %v2688
        %v2945 = vmul.f32 %v2689, %v2689
        %v2946 = vmul.f32 %v2690, %v2690
        %v2947 = vmul.f32 %v2691, %v2691
        %v2948 = vmul.f32 %v2692, %v2692
        %v2949 = vmul.f32 %v2693, %v2693
        %v2950 = vmul.f32 %v2694, %v2694
        %v2951 = vmul.f32 %v2695, %v2695
        %v2952 = vmul.f32 %v2696, %v2696
        %v2953 = vmul.f32 %v2697, %v2697
        %v2954 = vmul.f32 %v2698, %v2698
        %v2955 = vmul.f32 %v2699, %v2699
        %v2956 = vmul.f32 %v2700, %v2700
        %v2957 = vmul.f32 %v2701, %v2701
        %v2958 = vmul.f32 %v2702, %v2702
        %v2959 = vmul.f32 %v2703, %v2703
        %v2960 = vmul.f32 %v2704, %v2704
        %v2961 = vmul.f32 %v2705, %v2705
        %v2962 = vmul.f32 %v2706, %v2706
        %v2963 = vmul.f32 %v2707, %v2707
        %v2964 = vmul.f32 %v2708, %v2708
        %v2965 = vmul.f32 %v2709, %v2709
        %v2966 = vmul.f32 %v2710, %v2710
        %v2967 = vmul.f32 %v2711, %v2711
        %v2968 = vmul.f32 %v2712, %v2712
        %v2969 = vmul.f32 %v2713, %v2713
        %v2970 = vmul.f32 %v2714, %v2714
        %v2971 = vmul.f32 %v2715, %v2715
        %v2972 = vmul.f32 %v2716, %v2716
        %v2973 = vmul.f32 %v2717, %v2717
        %v2974 = vmul.f32 %v2718, %v2718
        %v2975 = vmul.f32 %v2719, %v2719
        %v2976 = vmul.f32 %v2720, %v2720
        %v2977 = vmul.f32 %v2721, %v2721
        %v2978 = vmul.f32 %v2722, %v2722
        %v2979 = vmul.f32 %v2723, %v2723
        %v2980 = vmul.f32 %v2724, %v2724
        %v2981 = vmul.f32 %v2725, %v2725
        %v2982 = vmul.f32 %v2726, %v2726
        %v2983 = vmul.f32 %v2727, %v2727
        %v2984 = vmul.f32 %v2728, %v2728
        %v2985 = vmul.f32 %v2729, %v2729
        %v2986 = vmul.f32 %v2730, %v2730
        %v2987 = vmul.f32 %v2731, %v2731
        %v2988 = vmul.f32 %v2732, %v2732
        %v2989 = vmul.f32 %v2733, %v2733
        %v2990 = vmul.f32 %v2734, %v2734
        %v2991 = vmul.f32 %v2735, %v2735
        %v2992 = vmul.f32 %v2736, %v2736
        %v2993 = vmul.f32 %v2737, %v2737
        %v2994 = vmul.f32 %v2738, %v2738
        %v2995 = vmul.f32 %v2739, %v2739
        %v2996 = vmul.f32 %v2740, %v2740
        %v2997 = vmul.f32 %v2741, %v2741
        %v2998 = vmul.f32 %v2742, %v2742
        %v2999 = vmul.f32 %v2743, %v2743
        %v3000 = vmul.f32 %v2744, %v2744
        %v3001 = vmul.f32 %v2745, %v2745
        %v3002 = vmul.f32 %v2746, %v2746
        %v3003 = vmul.f32 %v2747, %v2747
        %v3004 = vmul.f32 %v2748, %v2748
        %v3005 = vmul.f32 %v2749, %v2749
        %v3006 = vmul.f32 %v2750, %v2750
        %v3007 = vmul.f32 %v2751, %v2751
        %v3008 = vmul.f32 %v2752, %v2752
        %v3009 = vmul.f32 %v2753, %v2753
        %v3010 = vmul.f32 %v2754, %v2754
        %v3011 = vmul.f32 %v2755, %v2755
        %v3012 = vmul.f32 %v2756, %v2756
        %v3013 = vmul.f32 %v2757, %v2757
        %v3014 = vmul.f32 %v2758, %v2758
        %v3015 = vmul.f32 %v2759, %v2759
        %v3016 = vmul.f32 %v2760, %v2760
        %v3017 = vmul.f32 %v2761, %v2761
        %v3018 = vmul.f32 %v2762, %v2762
        %v3019 = vmul.f32 %v2763, %v2763
        %v3020 = vmul.f32 %v2764, %v2764
        %v3021 = vmul.f32 %v2765, %v2765
        %v3022 = vmul.f32 %v2766, %v2766
        %v3023 = vmul.f32 %v2767, %v2767
        %v3024 = vmul.f32 %v2768, %v2768
        %v3025 = vmul.f32 %v2769, %v2769
        %v3026 = vmul.f32 %v2770, %v2770
        %v3027 = vmul.f32 %v2771, %v2771
        %v3028 = vmul.f32 %v2772, %v2772
        %v3029 = vmul.f32 %v2773, %v2773
        %v3030 = vmul.f32 %v2774, %v2774
        %v3031 = vmul.f32 %v2775, %v2775
        %v3032 = vmul.f32 %v2776, %v2776
        %v3033 = vmul.f32 %v2777, %v2777
        %v3034 = vmul.f32 %v2778, %v2778
        %v3035 = vmul.f32 %v2779, %v2779
        %v3036 = vmul.f32 %v2780, %v2780
        %v3037 = vmul.f32 %v2781, %v2781
        %v3038 = vmul.f32 %v2782, %v2782
        %v3039 = vmul.f32 %v2783, %v2783
        %v3040 = vmul.f32 %v2784, %v2784
        %v3041 = vmul.f32 %v2785, %v2785
        %v3042 = vmul.f32 %v2786, %v2786
        %v3043 = vmul.f32 %v2787, %v2787
        %v3044 = vmul.f32 %v2788, %v2788
        %v3045 = vmul.f32 %v2789, %v2789
        %v3046 = vmul.f32 %v2790, %v2790
        %v3047 = vsel %vm480, %v2919, 0.0
        %3048 = vadd.xlane.f32.xlu0 %v3047
        %v3049 = vpop.xlane.xlu0 %3048
        %v3050 = vsel %vm480, %v2920, 0.0
        %3051 = vadd.xlane.f32.xlu0 %v3050
        %v3052 = vpop.xlane.xlu0 %3051
        %v3053 = vsel %vm480, %v2921, 0.0
        %3054 = vadd.xlane.f32.xlu0 %v3053
        %v3055 = vpop.xlane.xlu0 %3054
        %v3056 = vsel %vm480, %v2922, 0.0
        %3057 = vadd.xlane.f32.xlu0 %v3056
        %v3058 = vpop.xlane.xlu0 %3057
        %v3059 = vsel %vm480, %v2923, 0.0
        %3060 = vadd.xlane.f32.xlu0 %v3059
        %v3061 = vpop.xlane.xlu0 %3060
        %v3062 = vsel %vm480, %v2924, 0.0
        %3063 = vadd.xlane.f32.xlu0 %v3062
        %v3064 = vpop.xlane.xlu0 %3063
        %v3065 = vsel %vm480, %v2925, 0.0
        %3066 = vadd.xlane.f32.xlu0 %v3065
        %v3067 = vpop.xlane.xlu0 %3066
        %v3068 = vsel %vm480, %v2926, 0.0
        %3069 = vadd.xlane.f32.xlu0 %v3068
        %v3070 = vpop.xlane.xlu0 %3069
        %v3071 = vsel %vm480, %v2927, 0.0
        %3072 = vadd.xlane.f32.xlu0 %v3071
        %v3073 = vpop.xlane.xlu0 %3072
        %v3074 = vsel %vm480, %v2928, 0.0
        %3075 = vadd.xlane.f32.xlu0 %v3074
        %v3076 = vpop.xlane.xlu0 %3075
        %v3077 = vsel %vm480, %v2929, 0.0
        %3078 = vadd.xlane.f32.xlu0 %v3077
        %v3079 = vpop.xlane.xlu0 %3078
        %v3080 = vsel %vm480, %v2930, 0.0
        %3081 = vadd.xlane.f32.xlu0 %v3080
        %v3082 = vpop.xlane.xlu0 %3081
        %v3083 = vsel %vm480, %v2931, 0.0
        %3084 = vadd.xlane.f32.xlu0 %v3083
        %v3085 = vpop.xlane.xlu0 %3084
        %v3086 = vsel %vm480, %v2932, 0.0
        %3087 = vadd.xlane.f32.xlu0 %v3086
        %v3088 = vpop.xlane.xlu0 %3087
        %v3089 = vsel %vm480, %v2933, 0.0
        %3090 = vadd.xlane.f32.xlu0 %v3089
        %v3091 = vpop.xlane.xlu0 %3090
        %v3092 = vsel %vm480, %v2934, 0.0
        %3093 = vadd.xlane.f32.xlu0 %v3092
        %v3094 = vpop.xlane.xlu0 %3093
        %v3095 = vsel %vm480, %v2935, 0.0
        %3096 = vadd.xlane.f32.xlu0 %v3095
        %v3097 = vpop.xlane.xlu0 %3096
        %v3098 = vsel %vm480, %v2936, 0.0
        %3099 = vadd.xlane.f32.xlu0 %v3098
        %v3100 = vpop.xlane.xlu0 %3099
        %v3101 = vsel %vm480, %v2937, 0.0
        %3102 = vadd.xlane.f32.xlu0 %v3101
        %v3103 = vpop.xlane.xlu0 %3102
        %v3104 = vsel %vm480, %v2938, 0.0
        %3105 = vadd.xlane.f32.xlu0 %v3104
        %v3106 = vpop.xlane.xlu0 %3105
        %v3107 = vsel %vm480, %v2939, 0.0
        %3108 = vadd.xlane.f32.xlu0 %v3107
        %v3109 = vpop.xlane.xlu0 %3108
        %v3110 = vsel %vm480, %v2940, 0.0
        %3111 = vadd.xlane.f32.xlu0 %v3110
        %v3112 = vpop.xlane.xlu0 %3111
        %v3113 = vsel %vm480, %v2941, 0.0
        %3114 = vadd.xlane.f32.xlu0 %v3113
        %v3115 = vpop.xlane.xlu0 %3114
        %v3116 = vsel %vm480, %v2942, 0.0
        %3117 = vadd.xlane.f32.xlu0 %v3116
        %v3118 = vpop.xlane.xlu0 %3117
        %v3119 = vsel %vm480, %v2943, 0.0
        %3120 = vadd.xlane.f32.xlu0 %v3119
        %v3121 = vpop.xlane.xlu0 %3120
        %v3122 = vsel %vm480, %v2944, 0.0
        %3123 = vadd.xlane.f32.xlu0 %v3122
        %v3124 = vpop.xlane.xlu0 %3123
        %v3125 = vsel %vm480, %v2945, 0.0
        %3126 = vadd.xlane.f32.xlu0 %v3125
        %v3127 = vpop.xlane.xlu0 %3126
        %v3128 = vsel %vm480, %v2946, 0.0
        %3129 = vadd.xlane.f32.xlu0 %v3128
        %v3130 = vpop.xlane.xlu0 %3129
        %v3131 = vsel %vm480, %v2947, 0.0
        %3132 = vadd.xlane.f32.xlu0 %v3131
        %v3133 = vpop.xlane.xlu0 %3132
        %v3134 = vsel %vm480, %v2948, 0.0
        %3135 = vadd.xlane.f32.xlu0 %v3134
        %v3136 = vpop.xlane.xlu0 %3135
        %v3137 = vsel %vm480, %v2949, 0.0
        %3138 = vadd.xlane.f32.xlu0 %v3137
        %v3139 = vpop.xlane.xlu0 %3138
        %v3140 = vsel %vm480, %v2950, 0.0
        %3141 = vadd.xlane.f32.xlu0 %v3140
        %v3142 = vpop.xlane.xlu0 %3141
        %v3143 = vsel %vm480, %v2951, 0.0
        %3144 = vadd.xlane.f32.xlu0 %v3143
        %v3145 = vpop.xlane.xlu0 %3144
        %v3146 = vsel %vm480, %v2952, 0.0
        %3147 = vadd.xlane.f32.xlu0 %v3146
        %v3148 = vpop.xlane.xlu0 %3147
        %v3149 = vsel %vm480, %v2953, 0.0
        %3150 = vadd.xlane.f32.xlu0 %v3149
        %v3151 = vpop.xlane.xlu0 %3150
        %v3152 = vsel %vm480, %v2954, 0.0
        %3153 = vadd.xlane.f32.xlu0 %v3152
        %v3154 = vpop.xlane.xlu0 %3153
        %v3155 = vsel %vm480, %v2955, 0.0
        %3156 = vadd.xlane.f32.xlu0 %v3155
        %v3157 = vpop.xlane.xlu0 %3156
        %v3158 = vsel %vm480, %v2956, 0.0
        %3159 = vadd.xlane.f32.xlu0 %v3158
        %v3160 = vpop.xlane.xlu0 %3159
        %v3161 = vsel %vm480, %v2957, 0.0
        %3162 = vadd.xlane.f32.xlu0 %v3161
        %v3163 = vpop.xlane.xlu0 %3162
        %v3164 = vsel %vm480, %v2958, 0.0
        %3165 = vadd.xlane.f32.xlu0 %v3164
        %v3166 = vpop.xlane.xlu0 %3165
        %v3167 = vsel %vm480, %v2959, 0.0
        %3168 = vadd.xlane.f32.xlu0 %v3167
        %v3169 = vpop.xlane.xlu0 %3168
        %v3170 = vsel %vm480, %v2960, 0.0
        %3171 = vadd.xlane.f32.xlu0 %v3170
        %v3172 = vpop.xlane.xlu0 %3171
        %v3173 = vsel %vm480, %v2961, 0.0
        %3174 = vadd.xlane.f32.xlu0 %v3173
        %v3175 = vpop.xlane.xlu0 %3174
        %v3176 = vsel %vm480, %v2962, 0.0
        %3177 = vadd.xlane.f32.xlu0 %v3176
        %v3178 = vpop.xlane.xlu0 %3177
        %v3179 = vsel %vm480, %v2963, 0.0
        %3180 = vadd.xlane.f32.xlu0 %v3179
        %v3181 = vpop.xlane.xlu0 %3180
        %v3182 = vsel %vm480, %v2964, 0.0
        %3183 = vadd.xlane.f32.xlu0 %v3182
        %v3184 = vpop.xlane.xlu0 %3183
        %v3185 = vsel %vm480, %v2965, 0.0
        %3186 = vadd.xlane.f32.xlu0 %v3185
        %v3187 = vpop.xlane.xlu0 %3186
        %v3188 = vsel %vm480, %v2966, 0.0
        %3189 = vadd.xlane.f32.xlu0 %v3188
        %v3190 = vpop.xlane.xlu0 %3189
        %v3191 = vsel %vm480, %v2967, 0.0
        %3192 = vadd.xlane.f32.xlu0 %v3191
        %v3193 = vpop.xlane.xlu0 %3192
        %v3194 = vsel %vm480, %v2968, 0.0
        %3195 = vadd.xlane.f32.xlu0 %v3194
        %v3196 = vpop.xlane.xlu0 %3195
        %v3197 = vsel %vm480, %v2969, 0.0
        %3198 = vadd.xlane.f32.xlu0 %v3197
        %v3199 = vpop.xlane.xlu0 %3198
        %v3200 = vsel %vm480, %v2970, 0.0
        %3201 = vadd.xlane.f32.xlu0 %v3200
        %v3202 = vpop.xlane.xlu0 %3201
        %v3203 = vsel %vm480, %v2971, 0.0
        %3204 = vadd.xlane.f32.xlu0 %v3203
        %v3205 = vpop.xlane.xlu0 %3204
        %v3206 = vsel %vm480, %v2972, 0.0
        %3207 = vadd.xlane.f32.xlu0 %v3206
        %v3208 = vpop.xlane.xlu0 %3207
        %v3209 = vsel %vm480, %v2973, 0.0
        %3210 = vadd.xlane.f32.xlu0 %v3209
        %v3211 = vpop.xlane.xlu0 %3210
        %v3212 = vsel %vm480, %v2974, 0.0
        %3213 = vadd.xlane.f32.xlu0 %v3212
        %v3214 = vpop.xlane.xlu0 %3213
        %v3215 = vsel %vm480, %v2975, 0.0
        %3216 = vadd.xlane.f32.xlu0 %v3215
        %v3217 = vpop.xlane.xlu0 %3216
        %v3218 = vsel %vm480, %v2976, 0.0
        %3219 = vadd.xlane.f32.xlu0 %v3218
        %v3220 = vpop.xlane.xlu0 %3219
        %v3221 = vsel %vm480, %v2977, 0.0
        %3222 = vadd.xlane.f32.xlu0 %v3221
        %v3223 = vpop.xlane.xlu0 %3222
        %v3224 = vsel %vm480, %v2978, 0.0
        %3225 = vadd.xlane.f32.xlu0 %v3224
        %v3226 = vpop.xlane.xlu0 %3225
        %v3227 = vsel %vm480, %v2979, 0.0
        %3228 = vadd.xlane.f32.xlu0 %v3227
        %v3229 = vpop.xlane.xlu0 %3228
        %v3230 = vsel %vm480, %v2980, 0.0
        %3231 = vadd.xlane.f32.xlu0 %v3230
        %v3232 = vpop.xlane.xlu0 %3231
        %v3233 = vsel %vm480, %v2981, 0.0
        %3234 = vadd.xlane.f32.xlu0 %v3233
        %v3235 = vpop.xlane.xlu0 %3234
        %v3236 = vsel %vm480, %v2982, 0.0
        %3237 = vadd.xlane.f32.xlu0 %v3236
        %v3238 = vpop.xlane.xlu0 %3237
        %v3239 = vsel %vm480, %v2983, 0.0
        %3240 = vadd.xlane.f32.xlu0 %v3239
        %v3241 = vpop.xlane.xlu0 %3240
        %v3242 = vsel %vm480, %v2984, 0.0
        %3243 = vadd.xlane.f32.xlu0 %v3242
        %v3244 = vpop.xlane.xlu0 %3243
        %v3245 = vsel %vm480, %v2985, 0.0
        %3246 = vadd.xlane.f32.xlu0 %v3245
        %v3247 = vpop.xlane.xlu0 %3246
        %v3248 = vsel %vm480, %v2986, 0.0
        %3249 = vadd.xlane.f32.xlu0 %v3248
        %v3250 = vpop.xlane.xlu0 %3249
        %v3251 = vsel %vm480, %v2987, 0.0
        %3252 = vadd.xlane.f32.xlu0 %v3251
        %v3253 = vpop.xlane.xlu0 %3252
        %v3254 = vsel %vm480, %v2988, 0.0
        %3255 = vadd.xlane.f32.xlu0 %v3254
        %v3256 = vpop.xlane.xlu0 %3255
        %v3257 = vsel %vm480, %v2989, 0.0
        %3258 = vadd.xlane.f32.xlu0 %v3257
        %v3259 = vpop.xlane.xlu0 %3258
        %v3260 = vsel %vm480, %v2990, 0.0
        %3261 = vadd.xlane.f32.xlu0 %v3260
        %v3262 = vpop.xlane.xlu0 %3261
        %v3263 = vsel %vm480, %v2991, 0.0
        %3264 = vadd.xlane.f32.xlu0 %v3263
        %v3265 = vpop.xlane.xlu0 %3264
        %v3266 = vsel %vm480, %v2992, 0.0
        %3267 = vadd.xlane.f32.xlu0 %v3266
        %v3268 = vpop.xlane.xlu0 %3267
        %v3269 = vsel %vm480, %v2993, 0.0
        %3270 = vadd.xlane.f32.xlu0 %v3269
        %v3271 = vpop.xlane.xlu0 %3270
        %v3272 = vsel %vm480, %v2994, 0.0
        %3273 = vadd.xlane.f32.xlu0 %v3272
        %v3274 = vpop.xlane.xlu0 %3273
        %v3275 = vsel %vm480, %v2995, 0.0
        %3276 = vadd.xlane.f32.xlu0 %v3275
        %v3277 = vpop.xlane.xlu0 %3276
        %v3278 = vsel %vm480, %v2996, 0.0
        %3279 = vadd.xlane.f32.xlu0 %v3278
        %v3280 = vpop.xlane.xlu0 %3279
        %v3281 = vsel %vm480, %v2997, 0.0
        %3282 = vadd.xlane.f32.xlu0 %v3281
        %v3283 = vpop.xlane.xlu0 %3282
        %v3284 = vsel %vm480, %v2998, 0.0
        %3285 = vadd.xlane.f32.xlu0 %v3284
        %v3286 = vpop.xlane.xlu0 %3285
        %v3287 = vsel %vm480, %v2999, 0.0
        %3288 = vadd.xlane.f32.xlu0 %v3287
        %v3289 = vpop.xlane.xlu0 %3288
        %v3290 = vsel %vm480, %v3000, 0.0
        %3291 = vadd.xlane.f32.xlu0 %v3290
        %v3292 = vpop.xlane.xlu0 %3291
        %v3293 = vsel %vm480, %v3001, 0.0
        %3294 = vadd.xlane.f32.xlu0 %v3293
        %v3295 = vpop.xlane.xlu0 %3294
        %v3296 = vsel %vm480, %v3002, 0.0
        %3297 = vadd.xlane.f32.xlu0 %v3296
        %v3298 = vpop.xlane.xlu0 %3297
        %v3299 = vsel %vm480, %v3003, 0.0
        %3300 = vadd.xlane.f32.xlu0 %v3299
        %v3301 = vpop.xlane.xlu0 %3300
        %v3302 = vsel %vm480, %v3004, 0.0
        %3303 = vadd.xlane.f32.xlu0 %v3302
        %v3304 = vpop.xlane.xlu0 %3303
        %v3305 = vsel %vm480, %v3005, 0.0
        %3306 = vadd.xlane.f32.xlu0 %v3305
        %v3307 = vpop.xlane.xlu0 %3306
        %v3308 = vsel %vm480, %v3006, 0.0
        %3309 = vadd.xlane.f32.xlu0 %v3308
        %v3310 = vpop.xlane.xlu0 %3309
        %v3311 = vsel %vm480, %v3007, 0.0
        %3312 = vadd.xlane.f32.xlu0 %v3311
        %v3313 = vpop.xlane.xlu0 %3312
        %v3314 = vsel %vm480, %v3008, 0.0
        %3315 = vadd.xlane.f32.xlu0 %v3314
        %v3316 = vpop.xlane.xlu0 %3315
        %v3317 = vsel %vm480, %v3009, 0.0
        %3318 = vadd.xlane.f32.xlu0 %v3317
        %v3319 = vpop.xlane.xlu0 %3318
        %v3320 = vsel %vm480, %v3010, 0.0
        %3321 = vadd.xlane.f32.xlu0 %v3320
        %v3322 = vpop.xlane.xlu0 %3321
        %v3323 = vsel %vm480, %v3011, 0.0
        %3324 = vadd.xlane.f32.xlu0 %v3323
        %v3325 = vpop.xlane.xlu0 %3324
        %v3326 = vsel %vm480, %v3012, 0.0
        %3327 = vadd.xlane.f32.xlu0 %v3326
        %v3328 = vpop.xlane.xlu0 %3327
        %v3329 = vsel %vm480, %v3013, 0.0
        %3330 = vadd.xlane.f32.xlu0 %v3329
        %v3331 = vpop.xlane.xlu0 %3330
        %v3332 = vsel %vm480, %v3014, 0.0
        %3333 = vadd.xlane.f32.xlu0 %v3332
        %v3334 = vpop.xlane.xlu0 %3333
        %v3335 = vsel %vm480, %v3015, 0.0
        %3336 = vadd.xlane.f32.xlu0 %v3335
        %v3337 = vpop.xlane.xlu0 %3336
        %v3338 = vsel %vm480, %v3016, 0.0
        %3339 = vadd.xlane.f32.xlu0 %v3338
        %v3340 = vpop.xlane.xlu0 %3339
        %v3341 = vsel %vm480, %v3017, 0.0
        %3342 = vadd.xlane.f32.xlu0 %v3341
        %v3343 = vpop.xlane.xlu0 %3342
        %v3344 = vsel %vm480, %v3018, 0.0
        %3345 = vadd.xlane.f32.xlu0 %v3344
        %v3346 = vpop.xlane.xlu0 %3345
        %v3347 = vsel %vm480, %v3019, 0.0
        %3348 = vadd.xlane.f32.xlu0 %v3347
        %v3349 = vpop.xlane.xlu0 %3348
        %v3350 = vsel %vm480, %v3020, 0.0
        %3351 = vadd.xlane.f32.xlu0 %v3350
        %v3352 = vpop.xlane.xlu0 %3351
        %v3353 = vsel %vm480, %v3021, 0.0
        %3354 = vadd.xlane.f32.xlu0 %v3353
        %v3355 = vpop.xlane.xlu0 %3354
        %v3356 = vsel %vm480, %v3022, 0.0
        %3357 = vadd.xlane.f32.xlu0 %v3356
        %v3358 = vpop.xlane.xlu0 %3357
        %v3359 = vsel %vm480, %v3023, 0.0
        %3360 = vadd.xlane.f32.xlu0 %v3359
        %v3361 = vpop.xlane.xlu0 %3360
        %v3362 = vsel %vm480, %v3024, 0.0
        %3363 = vadd.xlane.f32.xlu0 %v3362
        %v3364 = vpop.xlane.xlu0 %3363
        %v3365 = vsel %vm480, %v3025, 0.0
        %3366 = vadd.xlane.f32.xlu0 %v3365
        %v3367 = vpop.xlane.xlu0 %3366
        %v3368 = vsel %vm480, %v3026, 0.0
        %3369 = vadd.xlane.f32.xlu0 %v3368
        %v3370 = vpop.xlane.xlu0 %3369
        %v3371 = vsel %vm480, %v3027, 0.0
        %3372 = vadd.xlane.f32.xlu0 %v3371
        %v3373 = vpop.xlane.xlu0 %3372
        %v3374 = vsel %vm480, %v3028, 0.0
        %3375 = vadd.xlane.f32.xlu0 %v3374
        %v3376 = vpop.xlane.xlu0 %3375
        %v3377 = vsel %vm480, %v3029, 0.0
        %3378 = vadd.xlane.f32.xlu0 %v3377
        %v3379 = vpop.xlane.xlu0 %3378
        %v3380 = vsel %vm480, %v3030, 0.0
        %3381 = vadd.xlane.f32.xlu0 %v3380
        %v3382 = vpop.xlane.xlu0 %3381
        %v3383 = vsel %vm480, %v3031, 0.0
        %3384 = vadd.xlane.f32.xlu0 %v3383
        %v3385 = vpop.xlane.xlu0 %3384
        %v3386 = vsel %vm480, %v3032, 0.0
        %3387 = vadd.xlane.f32.xlu0 %v3386
        %v3388 = vpop.xlane.xlu0 %3387
        %v3389 = vsel %vm480, %v3033, 0.0
        %3390 = vadd.xlane.f32.xlu0 %v3389
        %v3391 = vpop.xlane.xlu0 %3390
        %v3392 = vsel %vm480, %v3034, 0.0
        %3393 = vadd.xlane.f32.xlu0 %v3392
        %v3394 = vpop.xlane.xlu0 %3393
        %v3395 = vsel %vm480, %v3035, 0.0
        %3396 = vadd.xlane.f32.xlu0 %v3395
        %v3397 = vpop.xlane.xlu0 %3396
        %v3398 = vsel %vm480, %v3036, 0.0
        %3399 = vadd.xlane.f32.xlu0 %v3398
        %v3400 = vpop.xlane.xlu0 %3399
        %v3401 = vsel %vm480, %v3037, 0.0
        %3402 = vadd.xlane.f32.xlu0 %v3401
        %v3403 = vpop.xlane.xlu0 %3402
        %v3404 = vsel %vm480, %v3038, 0.0
        %3405 = vadd.xlane.f32.xlu0 %v3404
        %v3406 = vpop.xlane.xlu0 %3405
        %v3407 = vsel %vm480, %v3039, 0.0
        %3408 = vadd.xlane.f32.xlu0 %v3407
        %v3409 = vpop.xlane.xlu0 %3408
        %v3410 = vsel %vm480, %v3040, 0.0
        %3411 = vadd.xlane.f32.xlu0 %v3410
        %v3412 = vpop.xlane.xlu0 %3411
        %v3413 = vsel %vm480, %v3041, 0.0
        %3414 = vadd.xlane.f32.xlu0 %v3413
        %v3415 = vpop.xlane.xlu0 %3414
        %v3416 = vsel %vm480, %v3042, 0.0
        %3417 = vadd.xlane.f32.xlu0 %v3416
        %v3418 = vpop.xlane.xlu0 %3417
        %v3419 = vsel %vm480, %v3043, 0.0
        %3420 = vadd.xlane.f32.xlu0 %v3419
        %v3421 = vpop.xlane.xlu0 %3420
        %v3422 = vsel %vm480, %v3044, 0.0
        %3423 = vadd.xlane.f32.xlu0 %v3422
        %v3424 = vpop.xlane.xlu0 %3423
        %v3425 = vsel %vm480, %v3045, 0.0
        %3426 = vadd.xlane.f32.xlu0 %v3425
        %v3427 = vpop.xlane.xlu0 %3426
        %v3428 = vsel %vm480, %v3046, 0.0
        %3429 = vadd.xlane.f32.xlu0 %v3428
        %v3430 = vpop.xlane.xlu0 %3429
        %v3431 = vrsqrt.pop %v3049
        %v3432 = vmul.f32 %v3049, %v3431
        %vm3433 = vcmp.eq.f32.partialorder %v3049, inf
        %v3434 = vsel %vm3433, %v3049, %v3432
        %vm3435 = vcmp.eq.f32.partialorder %v3049, 0.0
        %v3436 = vand.u32 %v3049, 2147483648
        %v3437 = vsel %vm3435, %v3436, %v3434
        %v3438 = vrsqrt.pop %v3052
        %v3439 = vmul.f32 %v3052, %v3438
        %vm3440 = vcmp.eq.f32.partialorder %v3052, inf
        %v3441 = vsel %vm3440, %v3052, %v3439
        %vm3442 = vcmp.eq.f32.partialorder %v3052, 0.0
        %v3443 = vand.u32 %v3052, 2147483648
        %v3444 = vsel %vm3442, %v3443, %v3441
        %v3445 = vrsqrt.pop %v3055
        %v3446 = vmul.f32 %v3055, %v3445
        %vm3447 = vcmp.eq.f32.partialorder %v3055, inf
        %v3448 = vsel %vm3447, %v3055, %v3446
        %vm3449 = vcmp.eq.f32.partialorder %v3055, 0.0
        %v3450 = vand.u32 %v3055, 2147483648
        %v3451 = vsel %vm3449, %v3450, %v3448
        %v3452 = vrsqrt.pop %v3058
        %v3453 = vmul.f32 %v3058, %v3452
        %vm3454 = vcmp.eq.f32.partialorder %v3058, inf
        %v3455 = vsel %vm3454, %v3058, %v3453
        %vm3456 = vcmp.eq.f32.partialorder %v3058, 0.0
        %v3457 = vand.u32 %v3058, 2147483648
        %v3458 = vsel %vm3456, %v3457, %v3455
        %v3459 = vrsqrt.pop %v3061
        %v3460 = vmul.f32 %v3061, %v3459
        %vm3461 = vcmp.eq.f32.partialorder %v3061, inf
        %v3462 = vsel %vm3461, %v3061, %v3460
        %vm3463 = vcmp.eq.f32.partialorder %v3061, 0.0
        %v3464 = vand.u32 %v3061, 2147483648
        %v3465 = vsel %vm3463, %v3464, %v3462
        %v3466 = vrsqrt.pop %v3064
        %v3467 = vmul.f32 %v3064, %v3466
        %vm3468 = vcmp.eq.f32.partialorder %v3064, inf
        %v3469 = vsel %vm3468, %v3064, %v3467
        %vm3470 = vcmp.eq.f32.partialorder %v3064, 0.0
        %v3471 = vand.u32 %v3064, 2147483648
        %v3472 = vsel %vm3470, %v3471, %v3469
        %v3473 = vrsqrt.pop %v3067
        %v3474 = vmul.f32 %v3067, %v3473
        %vm3475 = vcmp.eq.f32.partialorder %v3067, inf
        %v3476 = vsel %vm3475, %v3067, %v3474
        %vm3477 = vcmp.eq.f32.partialorder %v3067, 0.0
        %v3478 = vand.u32 %v3067, 2147483648
        %v3479 = vsel %vm3477, %v3478, %v3476
        %v3480 = vrsqrt.pop %v3070
        %v3481 = vmul.f32 %v3070, %v3480
        %vm3482 = vcmp.eq.f32.partialorder %v3070, inf
        %v3483 = vsel %vm3482, %v3070, %v3481
        %vm3484 = vcmp.eq.f32.partialorder %v3070, 0.0
        %v3485 = vand.u32 %v3070, 2147483648
        %v3486 = vsel %vm3484, %v3485, %v3483
        %v3487 = vrsqrt.pop %v3073
        %v3488 = vmul.f32 %v3073, %v3487
        %vm3489 = vcmp.eq.f32.partialorder %v3073, inf
        %v3490 = vsel %vm3489, %v3073, %v3488
        %vm3491 = vcmp.eq.f32.partialorder %v3073, 0.0
        %v3492 = vand.u32 %v3073, 2147483648
        %v3493 = vsel %vm3491, %v3492, %v3490
        %v3494 = vrsqrt.pop %v3076
        %v3495 = vmul.f32 %v3076, %v3494
        %vm3496 = vcmp.eq.f32.partialorder %v3076, inf
        %v3497 = vsel %vm3496, %v3076, %v3495
        %vm3498 = vcmp.eq.f32.partialorder %v3076, 0.0
        %v3499 = vand.u32 %v3076, 2147483648
        %v3500 = vsel %vm3498, %v3499, %v3497
        %v3501 = vrsqrt.pop %v3079
        %v3502 = vmul.f32 %v3079, %v3501
        %vm3503 = vcmp.eq.f32.partialorder %v3079, inf
        %v3504 = vsel %vm3503, %v3079, %v3502
        %vm3505 = vcmp.eq.f32.partialorder %v3079, 0.0
        %v3506 = vand.u32 %v3079, 2147483648
        %v3507 = vsel %vm3505, %v3506, %v3504
        %v3508 = vrsqrt.pop %v3082
        %v3509 = vmul.f32 %v3082, %v3508
        %vm3510 = vcmp.eq.f32.partialorder %v3082, inf
        %v3511 = vsel %vm3510, %v3082, %v3509
        %vm3512 = vcmp.eq.f32.partialorder %v3082, 0.0
        %v3513 = vand.u32 %v3082, 2147483648
        %v3514 = vsel %vm3512, %v3513, %v3511
        %v3515 = vrsqrt.pop %v3085
        %v3516 = vmul.f32 %v3085, %v3515
        %vm3517 = vcmp.eq.f32.partialorder %v3085, inf
        %v3518 = vsel %vm3517, %v3085, %v3516
        %vm3519 = vcmp.eq.f32.partialorder %v3085, 0.0
        %v3520 = vand.u32 %v3085, 2147483648
        %v3521 = vsel %vm3519, %v3520, %v3518
        %v3522 = vrsqrt.pop %v3088
        %v3523 = vmul.f32 %v3088, %v3522
        %vm3524 = vcmp.eq.f32.partialorder %v3088, inf
        %v3525 = vsel %vm3524, %v3088, %v3523
        %vm3526 = vcmp.eq.f32.partialorder %v3088, 0.0
        %v3527 = vand.u32 %v3088, 2147483648
        %v3528 = vsel %vm3526, %v3527, %v3525
        %v3529 = vrsqrt.pop %v3091
        %v3530 = vmul.f32 %v3091, %v3529
        %vm3531 = vcmp.eq.f32.partialorder %v3091, inf
        %v3532 = vsel %vm3531, %v3091, %v3530
        %vm3533 = vcmp.eq.f32.partialorder %v3091, 0.0
        %v3534 = vand.u32 %v3091, 2147483648
        %v3535 = vsel %vm3533, %v3534, %v3532
        %v3536 = vrsqrt.pop %v3094
        %v3537 = vmul.f32 %v3094, %v3536
        %vm3538 = vcmp.eq.f32.partialorder %v3094, inf
        %v3539 = vsel %vm3538, %v3094, %v3537
        %vm3540 = vcmp.eq.f32.partialorder %v3094, 0.0
        %v3541 = vand.u32 %v3094, 2147483648
        %v3542 = vsel %vm3540, %v3541, %v3539
        %v3543 = vrsqrt.pop %v3097
        %v3544 = vmul.f32 %v3097, %v3543
        %vm3545 = vcmp.eq.f32.partialorder %v3097, inf
        %v3546 = vsel %vm3545, %v3097, %v3544
        %vm3547 = vcmp.eq.f32.partialorder %v3097, 0.0
        %v3548 = vand.u32 %v3097, 2147483648
        %v3549 = vsel %vm3547, %v3548, %v3546
        %v3550 = vrsqrt.pop %v3100
        %v3551 = vmul.f32 %v3100, %v3550
        %vm3552 = vcmp.eq.f32.partialorder %v3100, inf
        %v3553 = vsel %vm3552, %v3100, %v3551
        %vm3554 = vcmp.eq.f32.partialorder %v3100, 0.0
        %v3555 = vand.u32 %v3100, 2147483648
        %v3556 = vsel %vm3554, %v3555, %v3553
        %v3557 = vrsqrt.pop %v3103
        %v3558 = vmul.f32 %v3103, %v3557
        %vm3559 = vcmp.eq.f32.partialorder %v3103, inf
        %v3560 = vsel %vm3559, %v3103, %v3558
        %vm3561 = vcmp.eq.f32.partialorder %v3103, 0.0
        %v3562 = vand.u32 %v3103, 2147483648
        %v3563 = vsel %vm3561, %v3562, %v3560
        %v3564 = vrsqrt.pop %v3106
        %v3565 = vmul.f32 %v3106, %v3564
        %vm3566 = vcmp.eq.f32.partialorder %v3106, inf
        %v3567 = vsel %vm3566, %v3106, %v3565
        %vm3568 = vcmp.eq.f32.partialorder %v3106, 0.0
        %v3569 = vand.u32 %v3106, 2147483648
        %v3570 = vsel %vm3568, %v3569, %v3567
        %v3571 = vrsqrt.pop %v3109
        %v3572 = vmul.f32 %v3109, %v3571
        %vm3573 = vcmp.eq.f32.partialorder %v3109, inf
        %v3574 = vsel %vm3573, %v3109, %v3572
        %vm3575 = vcmp.eq.f32.partialorder %v3109, 0.0
        %v3576 = vand.u32 %v3109, 2147483648
        %v3577 = vsel %vm3575, %v3576, %v3574
        %v3578 = vrsqrt.pop %v3112
        %v3579 = vmul.f32 %v3112, %v3578
        %vm3580 = vcmp.eq.f32.partialorder %v3112, inf
        %v3581 = vsel %vm3580, %v3112, %v3579
        %vm3582 = vcmp.eq.f32.partialorder %v3112, 0.0
        %v3583 = vand.u32 %v3112, 2147483648
        %v3584 = vsel %vm3582, %v3583, %v3581
        %v3585 = vrsqrt.pop %v3115
        %v3586 = vmul.f32 %v3115, %v3585
        %vm3587 = vcmp.eq.f32.partialorder %v3115, inf
        %v3588 = vsel %vm3587, %v3115, %v3586
        %vm3589 = vcmp.eq.f32.partialorder %v3115, 0.0
        %v3590 = vand.u32 %v3115, 2147483648
        %v3591 = vsel %vm3589, %v3590, %v3588
        %v3592 = vrsqrt.pop %v3118
        %v3593 = vmul.f32 %v3118, %v3592
        %vm3594 = vcmp.eq.f32.partialorder %v3118, inf
        %v3595 = vsel %vm3594, %v3118, %v3593
        %vm3596 = vcmp.eq.f32.partialorder %v3118, 0.0
        %v3597 = vand.u32 %v3118, 2147483648
        %v3598 = vsel %vm3596, %v3597, %v3595
        %v3599 = vrsqrt.pop %v3121
        %v3600 = vmul.f32 %v3121, %v3599
        %vm3601 = vcmp.eq.f32.partialorder %v3121, inf
        %v3602 = vsel %vm3601, %v3121, %v3600
        %vm3603 = vcmp.eq.f32.partialorder %v3121, 0.0
        %v3604 = vand.u32 %v3121, 2147483648
        %v3605 = vsel %vm3603, %v3604, %v3602
        %v3606 = vrsqrt.pop %v3124
        %v3607 = vmul.f32 %v3124, %v3606
        %vm3608 = vcmp.eq.f32.partialorder %v3124, inf
        %v3609 = vsel %vm3608, %v3124, %v3607
        %vm3610 = vcmp.eq.f32.partialorder %v3124, 0.0
        %v3611 = vand.u32 %v3124, 2147483648
        %v3612 = vsel %vm3610, %v3611, %v3609
        %v3613 = vrsqrt.pop %v3127
        %v3614 = vmul.f32 %v3127, %v3613
        %vm3615 = vcmp.eq.f32.partialorder %v3127, inf
        %v3616 = vsel %vm3615, %v3127, %v3614
        %vm3617 = vcmp.eq.f32.partialorder %v3127, 0.0
        %v3618 = vand.u32 %v3127, 2147483648
        %v3619 = vsel %vm3617, %v3618, %v3616
        %v3620 = vrsqrt.pop %v3130
        %v3621 = vmul.f32 %v3130, %v3620
        %vm3622 = vcmp.eq.f32.partialorder %v3130, inf
        %v3623 = vsel %vm3622, %v3130, %v3621
        %vm3624 = vcmp.eq.f32.partialorder %v3130, 0.0
        %v3625 = vand.u32 %v3130, 2147483648
        %v3626 = vsel %vm3624, %v3625, %v3623
        %v3627 = vrsqrt.pop %v3133
        %v3628 = vmul.f32 %v3133, %v3627
        %vm3629 = vcmp.eq.f32.partialorder %v3133, inf
        %v3630 = vsel %vm3629, %v3133, %v3628
        %vm3631 = vcmp.eq.f32.partialorder %v3133, 0.0
        %v3632 = vand.u32 %v3133, 2147483648
        %v3633 = vsel %vm3631, %v3632, %v3630
        %v3634 = vrsqrt.pop %v3136
        %v3635 = vmul.f32 %v3136, %v3634
        %vm3636 = vcmp.eq.f32.partialorder %v3136, inf
        %v3637 = vsel %vm3636, %v3136, %v3635
        %vm3638 = vcmp.eq.f32.partialorder %v3136, 0.0
        %v3639 = vand.u32 %v3136, 2147483648
        %v3640 = vsel %vm3638, %v3639, %v3637
        %v3641 = vrsqrt.pop %v3139
        %v3642 = vmul.f32 %v3139, %v3641
        %vm3643 = vcmp.eq.f32.partialorder %v3139, inf
        %v3644 = vsel %vm3643, %v3139, %v3642
        %vm3645 = vcmp.eq.f32.partialorder %v3139, 0.0
        %v3646 = vand.u32 %v3139, 2147483648
        %v3647 = vsel %vm3645, %v3646, %v3644
        %v3648 = vrsqrt.pop %v3142
        %v3649 = vmul.f32 %v3142, %v3648
        %vm3650 = vcmp.eq.f32.partialorder %v3142, inf
        %v3651 = vsel %vm3650, %v3142, %v3649
        %vm3652 = vcmp.eq.f32.partialorder %v3142, 0.0
        %v3653 = vand.u32 %v3142, 2147483648
        %v3654 = vsel %vm3652, %v3653, %v3651
        %v3655 = vrsqrt.pop %v3145
        %v3656 = vmul.f32 %v3145, %v3655
        %vm3657 = vcmp.eq.f32.partialorder %v3145, inf
        %v3658 = vsel %vm3657, %v3145, %v3656
        %vm3659 = vcmp.eq.f32.partialorder %v3145, 0.0
        %v3660 = vand.u32 %v3145, 2147483648
        %v3661 = vsel %vm3659, %v3660, %v3658
        %v3662 = vrsqrt.pop %v3148
        %v3663 = vmul.f32 %v3148, %v3662
        %vm3664 = vcmp.eq.f32.partialorder %v3148, inf
        %v3665 = vsel %vm3664, %v3148, %v3663
        %vm3666 = vcmp.eq.f32.partialorder %v3148, 0.0
        %v3667 = vand.u32 %v3148, 2147483648
        %v3668 = vsel %vm3666, %v3667, %v3665
        %v3669 = vrsqrt.pop %v3151
        %v3670 = vmul.f32 %v3151, %v3669
        %vm3671 = vcmp.eq.f32.partialorder %v3151, inf
        %v3672 = vsel %vm3671, %v3151, %v3670
        %vm3673 = vcmp.eq.f32.partialorder %v3151, 0.0
        %v3674 = vand.u32 %v3151, 2147483648
        %v3675 = vsel %vm3673, %v3674, %v3672
        %v3676 = vrsqrt.pop %v3154
        %v3677 = vmul.f32 %v3154, %v3676
        %vm3678 = vcmp.eq.f32.partialorder %v3154, inf
        %v3679 = vsel %vm3678, %v3154, %v3677
        %vm3680 = vcmp.eq.f32.partialorder %v3154, 0.0
        %v3681 = vand.u32 %v3154, 2147483648
        %v3682 = vsel %vm3680, %v3681, %v3679
        %v3683 = vrsqrt.pop %v3157
        %v3684 = vmul.f32 %v3157, %v3683
        %vm3685 = vcmp.eq.f32.partialorder %v3157, inf
        %v3686 = vsel %vm3685, %v3157, %v3684
        %vm3687 = vcmp.eq.f32.partialorder %v3157, 0.0
        %v3688 = vand.u32 %v3157, 2147483648
        %v3689 = vsel %vm3687, %v3688, %v3686
        %v3690 = vrsqrt.pop %v3160
        %v3691 = vmul.f32 %v3160, %v3690
        %vm3692 = vcmp.eq.f32.partialorder %v3160, inf
        %v3693 = vsel %vm3692, %v3160, %v3691
        %vm3694 = vcmp.eq.f32.partialorder %v3160, 0.0
        %v3695 = vand.u32 %v3160, 2147483648
        %v3696 = vsel %vm3694, %v3695, %v3693
        %v3697 = vrsqrt.pop %v3163
        %v3698 = vmul.f32 %v3163, %v3697
        %vm3699 = vcmp.eq.f32.partialorder %v3163, inf
        %v3700 = vsel %vm3699, %v3163, %v3698
        %vm3701 = vcmp.eq.f32.partialorder %v3163, 0.0
        %v3702 = vand.u32 %v3163, 2147483648
        %v3703 = vsel %vm3701, %v3702, %v3700
        %v3704 = vrsqrt.pop %v3166
        %v3705 = vmul.f32 %v3166, %v3704
        %vm3706 = vcmp.eq.f32.partialorder %v3166, inf
        %v3707 = vsel %vm3706, %v3166, %v3705
        %vm3708 = vcmp.eq.f32.partialorder %v3166, 0.0
        %v3709 = vand.u32 %v3166, 2147483648
        %v3710 = vsel %vm3708, %v3709, %v3707
        %v3711 = vrsqrt.pop %v3169
        %v3712 = vmul.f32 %v3169, %v3711
        %vm3713 = vcmp.eq.f32.partialorder %v3169, inf
        %v3714 = vsel %vm3713, %v3169, %v3712
        %vm3715 = vcmp.eq.f32.partialorder %v3169, 0.0
        %v3716 = vand.u32 %v3169, 2147483648
        %v3717 = vsel %vm3715, %v3716, %v3714
        %v3718 = vrsqrt.pop %v3172
        %v3719 = vmul.f32 %v3172, %v3718
        %vm3720 = vcmp.eq.f32.partialorder %v3172, inf
        %v3721 = vsel %vm3720, %v3172, %v3719
        %vm3722 = vcmp.eq.f32.partialorder %v3172, 0.0
        %v3723 = vand.u32 %v3172, 2147483648
        %v3724 = vsel %vm3722, %v3723, %v3721
        %v3725 = vrsqrt.pop %v3175
        %v3726 = vmul.f32 %v3175, %v3725
        %vm3727 = vcmp.eq.f32.partialorder %v3175, inf
        %v3728 = vsel %vm3727, %v3175, %v3726
        %vm3729 = vcmp.eq.f32.partialorder %v3175, 0.0
        %v3730 = vand.u32 %v3175, 2147483648
        %v3731 = vsel %vm3729, %v3730, %v3728
        %v3732 = vrsqrt.pop %v3178
        %v3733 = vmul.f32 %v3178, %v3732
        %vm3734 = vcmp.eq.f32.partialorder %v3178, inf
        %v3735 = vsel %vm3734, %v3178, %v3733
        %vm3736 = vcmp.eq.f32.partialorder %v3178, 0.0
        %v3737 = vand.u32 %v3178, 2147483648
        %v3738 = vsel %vm3736, %v3737, %v3735
        %v3739 = vrsqrt.pop %v3181
        %v3740 = vmul.f32 %v3181, %v3739
        %vm3741 = vcmp.eq.f32.partialorder %v3181, inf
        %v3742 = vsel %vm3741, %v3181, %v3740
        %vm3743 = vcmp.eq.f32.partialorder %v3181, 0.0
        %v3744 = vand.u32 %v3181, 2147483648
        %v3745 = vsel %vm3743, %v3744, %v3742
        %v3746 = vrsqrt.pop %v3184
        %v3747 = vmul.f32 %v3184, %v3746
        %vm3748 = vcmp.eq.f32.partialorder %v3184, inf
        %v3749 = vsel %vm3748, %v3184, %v3747
        %vm3750 = vcmp.eq.f32.partialorder %v3184, 0.0
        %v3751 = vand.u32 %v3184, 2147483648
        %v3752 = vsel %vm3750, %v3751, %v3749
        %v3753 = vrsqrt.pop %v3187
        %v3754 = vmul.f32 %v3187, %v3753
        %vm3755 = vcmp.eq.f32.partialorder %v3187, inf
        %v3756 = vsel %vm3755, %v3187, %v3754
        %vm3757 = vcmp.eq.f32.partialorder %v3187, 0.0
        %v3758 = vand.u32 %v3187, 2147483648
        %v3759 = vsel %vm3757, %v3758, %v3756
        %v3760 = vrsqrt.pop %v3190
        %v3761 = vmul.f32 %v3190, %v3760
        %vm3762 = vcmp.eq.f32.partialorder %v3190, inf
        %v3763 = vsel %vm3762, %v3190, %v3761
        %vm3764 = vcmp.eq.f32.partialorder %v3190, 0.0
        %v3765 = vand.u32 %v3190, 2147483648
        %v3766 = vsel %vm3764, %v3765, %v3763
        %v3767 = vrsqrt.pop %v3193
        %v3768 = vmul.f32 %v3193, %v3767
        %vm3769 = vcmp.eq.f32.partialorder %v3193, inf
        %v3770 = vsel %vm3769, %v3193, %v3768
        %vm3771 = vcmp.eq.f32.partialorder %v3193, 0.0
        %v3772 = vand.u32 %v3193, 2147483648
        %v3773 = vsel %vm3771, %v3772, %v3770
        %v3774 = vrsqrt.pop %v3196
        %v3775 = vmul.f32 %v3196, %v3774
        %vm3776 = vcmp.eq.f32.partialorder %v3196, inf
        %v3777 = vsel %vm3776, %v3196, %v3775
        %vm3778 = vcmp.eq.f32.partialorder %v3196, 0.0
        %v3779 = vand.u32 %v3196, 2147483648
        %v3780 = vsel %vm3778, %v3779, %v3777
        %v3781 = vrsqrt.pop %v3199
        %v3782 = vmul.f32 %v3199, %v3781
        %vm3783 = vcmp.eq.f32.partialorder %v3199, inf
        %v3784 = vsel %vm3783, %v3199, %v3782
        %vm3785 = vcmp.eq.f32.partialorder %v3199, 0.0
        %v3786 = vand.u32 %v3199, 2147483648
        %v3787 = vsel %vm3785, %v3786, %v3784
        %v3788 = vrsqrt.pop %v3202
        %v3789 = vmul.f32 %v3202, %v3788
        %vm3790 = vcmp.eq.f32.partialorder %v3202, inf
        %v3791 = vsel %vm3790, %v3202, %v3789
        %vm3792 = vcmp.eq.f32.partialorder %v3202, 0.0
        %v3793 = vand.u32 %v3202, 2147483648
        %v3794 = vsel %vm3792, %v3793, %v3791
        %v3795 = vrsqrt.pop %v3205
        %v3796 = vmul.f32 %v3205, %v3795
        %vm3797 = vcmp.eq.f32.partialorder %v3205, inf
        %v3798 = vsel %vm3797, %v3205, %v3796
        %vm3799 = vcmp.eq.f32.partialorder %v3205, 0.0
        %v3800 = vand.u32 %v3205, 2147483648
        %v3801 = vsel %vm3799, %v3800, %v3798
        %v3802 = vrsqrt.pop %v3208
        %v3803 = vmul.f32 %v3208, %v3802
        %vm3804 = vcmp.eq.f32.partialorder %v3208, inf
        %v3805 = vsel %vm3804, %v3208, %v3803
        %vm3806 = vcmp.eq.f32.partialorder %v3208, 0.0
        %v3807 = vand.u32 %v3208, 2147483648
        %v3808 = vsel %vm3806, %v3807, %v3805
        %v3809 = vrsqrt.pop %v3211
        %v3810 = vmul.f32 %v3211, %v3809
        %vm3811 = vcmp.eq.f32.partialorder %v3211, inf
        %v3812 = vsel %vm3811, %v3211, %v3810
        %vm3813 = vcmp.eq.f32.partialorder %v3211, 0.0
        %v3814 = vand.u32 %v3211, 2147483648
        %v3815 = vsel %vm3813, %v3814, %v3812
        %v3816 = vrsqrt.pop %v3214
        %v3817 = vmul.f32 %v3214, %v3816
        %vm3818 = vcmp.eq.f32.partialorder %v3214, inf
        %v3819 = vsel %vm3818, %v3214, %v3817
        %vm3820 = vcmp.eq.f32.partialorder %v3214, 0.0
        %v3821 = vand.u32 %v3214, 2147483648
        %v3822 = vsel %vm3820, %v3821, %v3819
        %v3823 = vrsqrt.pop %v3217
        %v3824 = vmul.f32 %v3217, %v3823
        %vm3825 = vcmp.eq.f32.partialorder %v3217, inf
        %v3826 = vsel %vm3825, %v3217, %v3824
        %vm3827 = vcmp.eq.f32.partialorder %v3217, 0.0
        %v3828 = vand.u32 %v3217, 2147483648
        %v3829 = vsel %vm3827, %v3828, %v3826
        %v3830 = vrsqrt.pop %v3220
        %v3831 = vmul.f32 %v3220, %v3830
        %vm3832 = vcmp.eq.f32.partialorder %v3220, inf
        %v3833 = vsel %vm3832, %v3220, %v3831
        %vm3834 = vcmp.eq.f32.partialorder %v3220, 0.0
        %v3835 = vand.u32 %v3220, 2147483648
        %v3836 = vsel %vm3834, %v3835, %v3833
        %v3837 = vrsqrt.pop %v3223
        %v3838 = vmul.f32 %v3223, %v3837
        %vm3839 = vcmp.eq.f32.partialorder %v3223, inf
        %v3840 = vsel %vm3839, %v3223, %v3838
        %vm3841 = vcmp.eq.f32.partialorder %v3223, 0.0
        %v3842 = vand.u32 %v3223, 2147483648
        %v3843 = vsel %vm3841, %v3842, %v3840
        %v3844 = vrsqrt.pop %v3226
        %v3845 = vmul.f32 %v3226, %v3844
        %vm3846 = vcmp.eq.f32.partialorder %v3226, inf
        %v3847 = vsel %vm3846, %v3226, %v3845
        %vm3848 = vcmp.eq.f32.partialorder %v3226, 0.0
        %v3849 = vand.u32 %v3226, 2147483648
        %v3850 = vsel %vm3848, %v3849, %v3847
        %v3851 = vrsqrt.pop %v3229
        %v3852 = vmul.f32 %v3229, %v3851
        %vm3853 = vcmp.eq.f32.partialorder %v3229, inf
        %v3854 = vsel %vm3853, %v3229, %v3852
        %vm3855 = vcmp.eq.f32.partialorder %v3229, 0.0
        %v3856 = vand.u32 %v3229, 2147483648
        %v3857 = vsel %vm3855, %v3856, %v3854
        %v3858 = vrsqrt.pop %v3232
        %v3859 = vmul.f32 %v3232, %v3858
        %vm3860 = vcmp.eq.f32.partialorder %v3232, inf
        %v3861 = vsel %vm3860, %v3232, %v3859
        %vm3862 = vcmp.eq.f32.partialorder %v3232, 0.0
        %v3863 = vand.u32 %v3232, 2147483648
        %v3864 = vsel %vm3862, %v3863, %v3861
        %v3865 = vrsqrt.pop %v3235
        %v3866 = vmul.f32 %v3235, %v3865
        %vm3867 = vcmp.eq.f32.partialorder %v3235, inf
        %v3868 = vsel %vm3867, %v3235, %v3866
        %vm3869 = vcmp.eq.f32.partialorder %v3235, 0.0
        %v3870 = vand.u32 %v3235, 2147483648
        %v3871 = vsel %vm3869, %v3870, %v3868
        %v3872 = vrsqrt.pop %v3238
        %v3873 = vmul.f32 %v3238, %v3872
        %vm3874 = vcmp.eq.f32.partialorder %v3238, inf
        %v3875 = vsel %vm3874, %v3238, %v3873
        %vm3876 = vcmp.eq.f32.partialorder %v3238, 0.0
        %v3877 = vand.u32 %v3238, 2147483648
        %v3878 = vsel %vm3876, %v3877, %v3875
        %v3879 = vrsqrt.pop %v3241
        %v3880 = vmul.f32 %v3241, %v3879
        %vm3881 = vcmp.eq.f32.partialorder %v3241, inf
        %v3882 = vsel %vm3881, %v3241, %v3880
        %vm3883 = vcmp.eq.f32.partialorder %v3241, 0.0
        %v3884 = vand.u32 %v3241, 2147483648
        %v3885 = vsel %vm3883, %v3884, %v3882
        %v3886 = vrsqrt.pop %v3244
        %v3887 = vmul.f32 %v3244, %v3886
        %vm3888 = vcmp.eq.f32.partialorder %v3244, inf
        %v3889 = vsel %vm3888, %v3244, %v3887
        %vm3890 = vcmp.eq.f32.partialorder %v3244, 0.0
        %v3891 = vand.u32 %v3244, 2147483648
        %v3892 = vsel %vm3890, %v3891, %v3889
        %v3893 = vrsqrt.pop %v3247
        %v3894 = vmul.f32 %v3247, %v3893
        %vm3895 = vcmp.eq.f32.partialorder %v3247, inf
        %v3896 = vsel %vm3895, %v3247, %v3894
        %vm3897 = vcmp.eq.f32.partialorder %v3247, 0.0
        %v3898 = vand.u32 %v3247, 2147483648
        %v3899 = vsel %vm3897, %v3898, %v3896
        %v3900 = vrsqrt.pop %v3250
        %v3901 = vmul.f32 %v3250, %v3900
        %vm3902 = vcmp.eq.f32.partialorder %v3250, inf
        %v3903 = vsel %vm3902, %v3250, %v3901
        %vm3904 = vcmp.eq.f32.partialorder %v3250, 0.0
        %v3905 = vand.u32 %v3250, 2147483648
        %v3906 = vsel %vm3904, %v3905, %v3903
        %v3907 = vrsqrt.pop %v3253
        %v3908 = vmul.f32 %v3253, %v3907
        %vm3909 = vcmp.eq.f32.partialorder %v3253, inf
        %v3910 = vsel %vm3909, %v3253, %v3908
        %vm3911 = vcmp.eq.f32.partialorder %v3253, 0.0
        %v3912 = vand.u32 %v3253, 2147483648
        %v3913 = vsel %vm3911, %v3912, %v3910
        %v3914 = vrsqrt.pop %v3256
        %v3915 = vmul.f32 %v3256, %v3914
        %vm3916 = vcmp.eq.f32.partialorder %v3256, inf
        %v3917 = vsel %vm3916, %v3256, %v3915
        %vm3918 = vcmp.eq.f32.partialorder %v3256, 0.0
        %v3919 = vand.u32 %v3256, 2147483648
        %v3920 = vsel %vm3918, %v3919, %v3917
        %v3921 = vrsqrt.pop %v3259
        %v3922 = vmul.f32 %v3259, %v3921
        %vm3923 = vcmp.eq.f32.partialorder %v3259, inf
        %v3924 = vsel %vm3923, %v3259, %v3922
        %vm3925 = vcmp.eq.f32.partialorder %v3259, 0.0
        %v3926 = vand.u32 %v3259, 2147483648
        %v3927 = vsel %vm3925, %v3926, %v3924
        %v3928 = vrsqrt.pop %v3262
        %v3929 = vmul.f32 %v3262, %v3928
        %vm3930 = vcmp.eq.f32.partialorder %v3262, inf
        %v3931 = vsel %vm3930, %v3262, %v3929
        %vm3932 = vcmp.eq.f32.partialorder %v3262, 0.0
        %v3933 = vand.u32 %v3262, 2147483648
        %v3934 = vsel %vm3932, %v3933, %v3931
        %v3935 = vrsqrt.pop %v3265
        %v3936 = vmul.f32 %v3265, %v3935
        %vm3937 = vcmp.eq.f32.partialorder %v3265, inf
        %v3938 = vsel %vm3937, %v3265, %v3936
        %vm3939 = vcmp.eq.f32.partialorder %v3265, 0.0
        %v3940 = vand.u32 %v3265, 2147483648
        %v3941 = vsel %vm3939, %v3940, %v3938
        %v3942 = vrsqrt.pop %v3268
        %v3943 = vmul.f32 %v3268, %v3942
        %vm3944 = vcmp.eq.f32.partialorder %v3268, inf
        %v3945 = vsel %vm3944, %v3268, %v3943
        %vm3946 = vcmp.eq.f32.partialorder %v3268, 0.0
        %v3947 = vand.u32 %v3268, 2147483648
        %v3948 = vsel %vm3946, %v3947, %v3945
        %v3949 = vrsqrt.pop %v3271
        %v3950 = vmul.f32 %v3271, %v3949
        %vm3951 = vcmp.eq.f32.partialorder %v3271, inf
        %v3952 = vsel %vm3951, %v3271, %v3950
        %vm3953 = vcmp.eq.f32.partialorder %v3271, 0.0
        %v3954 = vand.u32 %v3271, 2147483648
        %v3955 = vsel %vm3953, %v3954, %v3952
        %v3956 = vrsqrt.pop %v3274
        %v3957 = vmul.f32 %v3274, %v3956
        %vm3958 = vcmp.eq.f32.partialorder %v3274, inf
        %v3959 = vsel %vm3958, %v3274, %v3957
        %vm3960 = vcmp.eq.f32.partialorder %v3274, 0.0
        %v3961 = vand.u32 %v3274, 2147483648
        %v3962 = vsel %vm3960, %v3961, %v3959
        %v3963 = vrsqrt.pop %v3277
        %v3964 = vmul.f32 %v3277, %v3963
        %vm3965 = vcmp.eq.f32.partialorder %v3277, inf
        %v3966 = vsel %vm3965, %v3277, %v3964
        %vm3967 = vcmp.eq.f32.partialorder %v3277, 0.0
        %v3968 = vand.u32 %v3277, 2147483648
        %v3969 = vsel %vm3967, %v3968, %v3966
        %v3970 = vrsqrt.pop %v3280
        %v3971 = vmul.f32 %v3280, %v3970
        %vm3972 = vcmp.eq.f32.partialorder %v3280, inf
        %v3973 = vsel %vm3972, %v3280, %v3971
        %vm3974 = vcmp.eq.f32.partialorder %v3280, 0.0
        %v3975 = vand.u32 %v3280, 2147483648
        %v3976 = vsel %vm3974, %v3975, %v3973
        %v3977 = vrsqrt.pop %v3283
        %v3978 = vmul.f32 %v3283, %v3977
        %vm3979 = vcmp.eq.f32.partialorder %v3283, inf
        %v3980 = vsel %vm3979, %v3283, %v3978
        %vm3981 = vcmp.eq.f32.partialorder %v3283, 0.0
        %v3982 = vand.u32 %v3283, 2147483648
        %v3983 = vsel %vm3981, %v3982, %v3980
        %v3984 = vrsqrt.pop %v3286
        %v3985 = vmul.f32 %v3286, %v3984
        %vm3986 = vcmp.eq.f32.partialorder %v3286, inf
        %v3987 = vsel %vm3986, %v3286, %v3985
        %vm3988 = vcmp.eq.f32.partialorder %v3286, 0.0
        %v3989 = vand.u32 %v3286, 2147483648
        %v3990 = vsel %vm3988, %v3989, %v3987
        %v3991 = vrsqrt.pop %v3289
        %v3992 = vmul.f32 %v3289, %v3991
        %vm3993 = vcmp.eq.f32.partialorder %v3289, inf
        %v3994 = vsel %vm3993, %v3289, %v3992
        %vm3995 = vcmp.eq.f32.partialorder %v3289, 0.0
        %v3996 = vand.u32 %v3289, 2147483648
        %v3997 = vsel %vm3995, %v3996, %v3994
        %v3998 = vrsqrt.pop %v3292
        %v3999 = vmul.f32 %v3292, %v3998
        %vm4000 = vcmp.eq.f32.partialorder %v3292, inf
        %v4001 = vsel %vm4000, %v3292, %v3999
        %vm4002 = vcmp.eq.f32.partialorder %v3292, 0.0
        %v4003 = vand.u32 %v3292, 2147483648
        %v4004 = vsel %vm4002, %v4003, %v4001
        %v4005 = vrsqrt.pop %v3295
        %v4006 = vmul.f32 %v3295, %v4005
        %vm4007 = vcmp.eq.f32.partialorder %v3295, inf
        %v4008 = vsel %vm4007, %v3295, %v4006
        %vm4009 = vcmp.eq.f32.partialorder %v3295, 0.0
        %v4010 = vand.u32 %v3295, 2147483648
        %v4011 = vsel %vm4009, %v4010, %v4008
        %v4012 = vrsqrt.pop %v3298
        %v4013 = vmul.f32 %v3298, %v4012
        %vm4014 = vcmp.eq.f32.partialorder %v3298, inf
        %v4015 = vsel %vm4014, %v3298, %v4013
        %vm4016 = vcmp.eq.f32.partialorder %v3298, 0.0
        %v4017 = vand.u32 %v3298, 2147483648
        %v4018 = vsel %vm4016, %v4017, %v4015
        %v4019 = vrsqrt.pop %v3301
        %v4020 = vmul.f32 %v3301, %v4019
        %vm4021 = vcmp.eq.f32.partialorder %v3301, inf
        %v4022 = vsel %vm4021, %v3301, %v4020
        %vm4023 = vcmp.eq.f32.partialorder %v3301, 0.0
        %v4024 = vand.u32 %v3301, 2147483648
        %v4025 = vsel %vm4023, %v4024, %v4022
        %v4026 = vrsqrt.pop %v3304
        %v4027 = vmul.f32 %v3304, %v4026
        %vm4028 = vcmp.eq.f32.partialorder %v3304, inf
        %v4029 = vsel %vm4028, %v3304, %v4027
        %vm4030 = vcmp.eq.f32.partialorder %v3304, 0.0
        %v4031 = vand.u32 %v3304, 2147483648
        %v4032 = vsel %vm4030, %v4031, %v4029
        %v4033 = vrsqrt.pop %v3307
        %v4034 = vmul.f32 %v3307, %v4033
        %vm4035 = vcmp.eq.f32.partialorder %v3307, inf
        %v4036 = vsel %vm4035, %v3307, %v4034
        %vm4037 = vcmp.eq.f32.partialorder %v3307, 0.0
        %v4038 = vand.u32 %v3307, 2147483648
        %v4039 = vsel %vm4037, %v4038, %v4036
        %v4040 = vrsqrt.pop %v3310
        %v4041 = vmul.f32 %v3310, %v4040
        %vm4042 = vcmp.eq.f32.partialorder %v3310, inf
        %v4043 = vsel %vm4042, %v3310, %v4041
        %vm4044 = vcmp.eq.f32.partialorder %v3310, 0.0
        %v4045 = vand.u32 %v3310, 2147483648
        %v4046 = vsel %vm4044, %v4045, %v4043
        %v4047 = vrsqrt.pop %v3313
        %v4048 = vmul.f32 %v3313, %v4047
        %vm4049 = vcmp.eq.f32.partialorder %v3313, inf
        %v4050 = vsel %vm4049, %v3313, %v4048
        %vm4051 = vcmp.eq.f32.partialorder %v3313, 0.0
        %v4052 = vand.u32 %v3313, 2147483648
        %v4053 = vsel %vm4051, %v4052, %v4050
        %v4054 = vrsqrt.pop %v3316
        %v4055 = vmul.f32 %v3316, %v4054
        %vm4056 = vcmp.eq.f32.partialorder %v3316, inf
        %v4057 = vsel %vm4056, %v3316, %v4055
        %vm4058 = vcmp.eq.f32.partialorder %v3316, 0.0
        %v4059 = vand.u32 %v3316, 2147483648
        %v4060 = vsel %vm4058, %v4059, %v4057
        %v4061 = vrsqrt.pop %v3319
        %v4062 = vmul.f32 %v3319, %v4061
        %vm4063 = vcmp.eq.f32.partialorder %v3319, inf
        %v4064 = vsel %vm4063, %v3319, %v4062
        %vm4065 = vcmp.eq.f32.partialorder %v3319, 0.0
        %v4066 = vand.u32 %v3319, 2147483648
        %v4067 = vsel %vm4065, %v4066, %v4064
        %v4068 = vrsqrt.pop %v3322
        %v4069 = vmul.f32 %v3322, %v4068
        %vm4070 = vcmp.eq.f32.partialorder %v3322, inf
        %v4071 = vsel %vm4070, %v3322, %v4069
        %vm4072 = vcmp.eq.f32.partialorder %v3322, 0.0
        %v4073 = vand.u32 %v3322, 2147483648
        %v4074 = vsel %vm4072, %v4073, %v4071
        %v4075 = vrsqrt.pop %v3325
        %v4076 = vmul.f32 %v3325, %v4075
        %vm4077 = vcmp.eq.f32.partialorder %v3325, inf
        %v4078 = vsel %vm4077, %v3325, %v4076
        %vm4079 = vcmp.eq.f32.partialorder %v3325, 0.0
        %v4080 = vand.u32 %v3325, 2147483648
        %v4081 = vsel %vm4079, %v4080, %v4078
        %v4082 = vrsqrt.pop %v3328
        %v4083 = vmul.f32 %v3328, %v4082
        %vm4084 = vcmp.eq.f32.partialorder %v3328, inf
        %v4085 = vsel %vm4084, %v3328, %v4083
        %vm4086 = vcmp.eq.f32.partialorder %v3328, 0.0
        %v4087 = vand.u32 %v3328, 2147483648
        %v4088 = vsel %vm4086, %v4087, %v4085
        %v4089 = vrsqrt.pop %v3331
        %v4090 = vmul.f32 %v3331, %v4089
        %vm4091 = vcmp.eq.f32.partialorder %v3331, inf
        %v4092 = vsel %vm4091, %v3331, %v4090
        %vm4093 = vcmp.eq.f32.partialorder %v3331, 0.0
        %v4094 = vand.u32 %v3331, 2147483648
        %v4095 = vsel %vm4093, %v4094, %v4092
        %v4096 = vrsqrt.pop %v3334
        %v4097 = vmul.f32 %v3334, %v4096
        %vm4098 = vcmp.eq.f32.partialorder %v3334, inf
        %v4099 = vsel %vm4098, %v3334, %v4097
        %vm4100 = vcmp.eq.f32.partialorder %v3334, 0.0
        %v4101 = vand.u32 %v3334, 2147483648
        %v4102 = vsel %vm4100, %v4101, %v4099
        %v4103 = vrsqrt.pop %v3337
        %v4104 = vmul.f32 %v3337, %v4103
        %vm4105 = vcmp.eq.f32.partialorder %v3337, inf
        %v4106 = vsel %vm4105, %v3337, %v4104
        %vm4107 = vcmp.eq.f32.partialorder %v3337, 0.0
        %v4108 = vand.u32 %v3337, 2147483648
        %v4109 = vsel %vm4107, %v4108, %v4106
        %v4110 = vrsqrt.pop %v3340
        %v4111 = vmul.f32 %v3340, %v4110
        %vm4112 = vcmp.eq.f32.partialorder %v3340, inf
        %v4113 = vsel %vm4112, %v3340, %v4111
        %vm4114 = vcmp.eq.f32.partialorder %v3340, 0.0
        %v4115 = vand.u32 %v3340, 2147483648
        %v4116 = vsel %vm4114, %v4115, %v4113
        %v4117 = vrsqrt.pop %v3343
        %v4118 = vmul.f32 %v3343, %v4117
        %vm4119 = vcmp.eq.f32.partialorder %v3343, inf
        %v4120 = vsel %vm4119, %v3343, %v4118
        %vm4121 = vcmp.eq.f32.partialorder %v3343, 0.0
        %v4122 = vand.u32 %v3343, 2147483648
        %v4123 = vsel %vm4121, %v4122, %v4120
        %v4124 = vrsqrt.pop %v3346
        %v4125 = vmul.f32 %v3346, %v4124
        %vm4126 = vcmp.eq.f32.partialorder %v3346, inf
        %v4127 = vsel %vm4126, %v3346, %v4125
        %vm4128 = vcmp.eq.f32.partialorder %v3346, 0.0
        %v4129 = vand.u32 %v3346, 2147483648
        %v4130 = vsel %vm4128, %v4129, %v4127
        %v4131 = vrsqrt.pop %v3349
        %v4132 = vmul.f32 %v3349, %v4131
        %vm4133 = vcmp.eq.f32.partialorder %v3349, inf
        %v4134 = vsel %vm4133, %v3349, %v4132
        %vm4135 = vcmp.eq.f32.partialorder %v3349, 0.0
        %v4136 = vand.u32 %v3349, 2147483648
        %v4137 = vsel %vm4135, %v4136, %v4134
        %v4138 = vrsqrt.pop %v3352
        %v4139 = vmul.f32 %v3352, %v4138
        %vm4140 = vcmp.eq.f32.partialorder %v3352, inf
        %v4141 = vsel %vm4140, %v3352, %v4139
        %vm4142 = vcmp.eq.f32.partialorder %v3352, 0.0
        %v4143 = vand.u32 %v3352, 2147483648
        %v4144 = vsel %vm4142, %v4143, %v4141
        %v4145 = vrsqrt.pop %v3355
        %v4146 = vmul.f32 %v3355, %v4145
        %vm4147 = vcmp.eq.f32.partialorder %v3355, inf
        %v4148 = vsel %vm4147, %v3355, %v4146
        %vm4149 = vcmp.eq.f32.partialorder %v3355, 0.0
        %v4150 = vand.u32 %v3355, 2147483648
        %v4151 = vsel %vm4149, %v4150, %v4148
        %v4152 = vrsqrt.pop %v3358
        %v4153 = vmul.f32 %v3358, %v4152
        %vm4154 = vcmp.eq.f32.partialorder %v3358, inf
        %v4155 = vsel %vm4154, %v3358, %v4153
        %vm4156 = vcmp.eq.f32.partialorder %v3358, 0.0
        %v4157 = vand.u32 %v3358, 2147483648
        %v4158 = vsel %vm4156, %v4157, %v4155
        %v4159 = vrsqrt.pop %v3361
        %v4160 = vmul.f32 %v3361, %v4159
        %vm4161 = vcmp.eq.f32.partialorder %v3361, inf
        %v4162 = vsel %vm4161, %v3361, %v4160
        %vm4163 = vcmp.eq.f32.partialorder %v3361, 0.0
        %v4164 = vand.u32 %v3361, 2147483648
        %v4165 = vsel %vm4163, %v4164, %v4162
        %v4166 = vrsqrt.pop %v3364
        %v4167 = vmul.f32 %v3364, %v4166
        %vm4168 = vcmp.eq.f32.partialorder %v3364, inf
        %v4169 = vsel %vm4168, %v3364, %v4167
        %vm4170 = vcmp.eq.f32.partialorder %v3364, 0.0
        %v4171 = vand.u32 %v3364, 2147483648
        %v4172 = vsel %vm4170, %v4171, %v4169
        %v4173 = vrsqrt.pop %v3367
        %v4174 = vmul.f32 %v3367, %v4173
        %vm4175 = vcmp.eq.f32.partialorder %v3367, inf
        %v4176 = vsel %vm4175, %v3367, %v4174
        %vm4177 = vcmp.eq.f32.partialorder %v3367, 0.0
        %v4178 = vand.u32 %v3367, 2147483648
        %v4179 = vsel %vm4177, %v4178, %v4176
        %v4180 = vrsqrt.pop %v3370
        %v4181 = vmul.f32 %v3370, %v4180
        %vm4182 = vcmp.eq.f32.partialorder %v3370, inf
        %v4183 = vsel %vm4182, %v3370, %v4181
        %vm4184 = vcmp.eq.f32.partialorder %v3370, 0.0
        %v4185 = vand.u32 %v3370, 2147483648
        %v4186 = vsel %vm4184, %v4185, %v4183
        %v4187 = vrsqrt.pop %v3373
        %v4188 = vmul.f32 %v3373, %v4187
        %vm4189 = vcmp.eq.f32.partialorder %v3373, inf
        %v4190 = vsel %vm4189, %v3373, %v4188
        %vm4191 = vcmp.eq.f32.partialorder %v3373, 0.0
        %v4192 = vand.u32 %v3373, 2147483648
        %v4193 = vsel %vm4191, %v4192, %v4190
        %v4194 = vrsqrt.pop %v3376
        %v4195 = vmul.f32 %v3376, %v4194
        %vm4196 = vcmp.eq.f32.partialorder %v3376, inf
        %v4197 = vsel %vm4196, %v3376, %v4195
        %vm4198 = vcmp.eq.f32.partialorder %v3376, 0.0
        %v4199 = vand.u32 %v3376, 2147483648
        %v4200 = vsel %vm4198, %v4199, %v4197
        %v4201 = vrsqrt.pop %v3379
        %v4202 = vmul.f32 %v3379, %v4201
        %vm4203 = vcmp.eq.f32.partialorder %v3379, inf
        %v4204 = vsel %vm4203, %v3379, %v4202
        %vm4205 = vcmp.eq.f32.partialorder %v3379, 0.0
        %v4206 = vand.u32 %v3379, 2147483648
        %v4207 = vsel %vm4205, %v4206, %v4204
        %v4208 = vrsqrt.pop %v3382
        %v4209 = vmul.f32 %v3382, %v4208
        %vm4210 = vcmp.eq.f32.partialorder %v3382, inf
        %v4211 = vsel %vm4210, %v3382, %v4209
        %vm4212 = vcmp.eq.f32.partialorder %v3382, 0.0
        %v4213 = vand.u32 %v3382, 2147483648
        %v4214 = vsel %vm4212, %v4213, %v4211
        %v4215 = vrsqrt.pop %v3385
        %v4216 = vmul.f32 %v3385, %v4215
        %vm4217 = vcmp.eq.f32.partialorder %v3385, inf
        %v4218 = vsel %vm4217, %v3385, %v4216
        %vm4219 = vcmp.eq.f32.partialorder %v3385, 0.0
        %v4220 = vand.u32 %v3385, 2147483648
        %v4221 = vsel %vm4219, %v4220, %v4218
        %v4222 = vrsqrt.pop %v3388
        %v4223 = vmul.f32 %v3388, %v4222
        %vm4224 = vcmp.eq.f32.partialorder %v3388, inf
        %v4225 = vsel %vm4224, %v3388, %v4223
        %vm4226 = vcmp.eq.f32.partialorder %v3388, 0.0
        %v4227 = vand.u32 %v3388, 2147483648
        %v4228 = vsel %vm4226, %v4227, %v4225
        %v4229 = vrsqrt.pop %v3391
        %v4230 = vmul.f32 %v3391, %v4229
        %vm4231 = vcmp.eq.f32.partialorder %v3391, inf
        %v4232 = vsel %vm4231, %v3391, %v4230
        %vm4233 = vcmp.eq.f32.partialorder %v3391, 0.0
        %v4234 = vand.u32 %v3391, 2147483648
        %v4235 = vsel %vm4233, %v4234, %v4232
        %v4236 = vrsqrt.pop %v3394
        %v4237 = vmul.f32 %v3394, %v4236
        %vm4238 = vcmp.eq.f32.partialorder %v3394, inf
        %v4239 = vsel %vm4238, %v3394, %v4237
        %vm4240 = vcmp.eq.f32.partialorder %v3394, 0.0
        %v4241 = vand.u32 %v3394, 2147483648
        %v4242 = vsel %vm4240, %v4241, %v4239
        %v4243 = vrsqrt.pop %v3397
        %v4244 = vmul.f32 %v3397, %v4243
        %vm4245 = vcmp.eq.f32.partialorder %v3397, inf
        %v4246 = vsel %vm4245, %v3397, %v4244
        %vm4247 = vcmp.eq.f32.partialorder %v3397, 0.0
        %v4248 = vand.u32 %v3397, 2147483648
        %v4249 = vsel %vm4247, %v4248, %v4246
        %v4250 = vrsqrt.pop %v3400
        %v4251 = vmul.f32 %v3400, %v4250
        %vm4252 = vcmp.eq.f32.partialorder %v3400, inf
        %v4253 = vsel %vm4252, %v3400, %v4251
        %vm4254 = vcmp.eq.f32.partialorder %v3400, 0.0
        %v4255 = vand.u32 %v3400, 2147483648
        %v4256 = vsel %vm4254, %v4255, %v4253
        %v4257 = vrsqrt.pop %v3403
        %v4258 = vmul.f32 %v3403, %v4257
        %vm4259 = vcmp.eq.f32.partialorder %v3403, inf
        %v4260 = vsel %vm4259, %v3403, %v4258
        %vm4261 = vcmp.eq.f32.partialorder %v3403, 0.0
        %v4262 = vand.u32 %v3403, 2147483648
        %v4263 = vsel %vm4261, %v4262, %v4260
        %v4264 = vrsqrt.pop %v3406
        %v4265 = vmul.f32 %v3406, %v4264
        %vm4266 = vcmp.eq.f32.partialorder %v3406, inf
        %v4267 = vsel %vm4266, %v3406, %v4265
        %vm4268 = vcmp.eq.f32.partialorder %v3406, 0.0
        %v4269 = vand.u32 %v3406, 2147483648
        %v4270 = vsel %vm4268, %v4269, %v4267
        %v4271 = vrsqrt.pop %v3409
        %v4272 = vmul.f32 %v3409, %v4271
        %vm4273 = vcmp.eq.f32.partialorder %v3409, inf
        %v4274 = vsel %vm4273, %v3409, %v4272
        %vm4275 = vcmp.eq.f32.partialorder %v3409, 0.0
        %v4276 = vand.u32 %v3409, 2147483648
        %v4277 = vsel %vm4275, %v4276, %v4274
        %v4278 = vrsqrt.pop %v3412
        %v4279 = vmul.f32 %v3412, %v4278
        %vm4280 = vcmp.eq.f32.partialorder %v3412, inf
        %v4281 = vsel %vm4280, %v3412, %v4279
        %vm4282 = vcmp.eq.f32.partialorder %v3412, 0.0
        %v4283 = vand.u32 %v3412, 2147483648
        %v4284 = vsel %vm4282, %v4283, %v4281
        %v4285 = vrsqrt.pop %v3415
        %v4286 = vmul.f32 %v3415, %v4285
        %vm4287 = vcmp.eq.f32.partialorder %v3415, inf
        %v4288 = vsel %vm4287, %v3415, %v4286
        %vm4289 = vcmp.eq.f32.partialorder %v3415, 0.0
        %v4290 = vand.u32 %v3415, 2147483648
        %v4291 = vsel %vm4289, %v4290, %v4288
        %v4292 = vrsqrt.pop %v3418
        %v4293 = vmul.f32 %v3418, %v4292
        %vm4294 = vcmp.eq.f32.partialorder %v3418, inf
        %v4295 = vsel %vm4294, %v3418, %v4293
        %vm4296 = vcmp.eq.f32.partialorder %v3418, 0.0
        %v4297 = vand.u32 %v3418, 2147483648
        %v4298 = vsel %vm4296, %v4297, %v4295
        %v4299 = vrsqrt.pop %v3421
        %v4300 = vmul.f32 %v3421, %v4299
        %vm4301 = vcmp.eq.f32.partialorder %v3421, inf
        %v4302 = vsel %vm4301, %v3421, %v4300
        %vm4303 = vcmp.eq.f32.partialorder %v3421, 0.0
        %v4304 = vand.u32 %v3421, 2147483648
        %v4305 = vsel %vm4303, %v4304, %v4302
        %v4306 = vrsqrt.pop %v3424
        %v4307 = vmul.f32 %v3424, %v4306
        %vm4308 = vcmp.eq.f32.partialorder %v3424, inf
        %v4309 = vsel %vm4308, %v3424, %v4307
        %vm4310 = vcmp.eq.f32.partialorder %v3424, 0.0
        %v4311 = vand.u32 %v3424, 2147483648
        %v4312 = vsel %vm4310, %v4311, %v4309
        %v4313 = vrsqrt.pop %v3427
        %v4314 = vmul.f32 %v3427, %v4313
        %vm4315 = vcmp.eq.f32.partialorder %v3427, inf
        %v4316 = vsel %vm4315, %v3427, %v4314
        %vm4317 = vcmp.eq.f32.partialorder %v3427, 0.0
        %v4318 = vand.u32 %v3427, 2147483648
        %v4319 = vsel %vm4317, %v4318, %v4316
        %v4320 = vrsqrt.pop %v3430
        %v4321 = vmul.f32 %v3430, %v4320
        %vm4322 = vcmp.eq.f32.partialorder %v3430, inf
        %v4323 = vsel %vm4322, %v3430, %v4321
        %vm4324 = vcmp.eq.f32.partialorder %v3430, 0.0
        %v4325 = vand.u32 %v3430, 2147483648
        %v4326 = vsel %vm4324, %v4325, %v4323
        %v4327 = vmul.f32 %v2791, %v2791
        %v4328 = vmul.f32 %v2792, %v2792
        %v4329 = vmul.f32 %v2793, %v2793
        %v4330 = vmul.f32 %v2794, %v2794
        %v4331 = vmul.f32 %v2795, %v2795
        %v4332 = vmul.f32 %v2796, %v2796
        %v4333 = vmul.f32 %v2797, %v2797
        %v4334 = vmul.f32 %v2798, %v2798
        %v4335 = vmul.f32 %v2799, %v2799
        %v4336 = vmul.f32 %v2800, %v2800
        %v4337 = vmul.f32 %v2801, %v2801
        %v4338 = vmul.f32 %v2802, %v2802
        %v4339 = vmul.f32 %v2803, %v2803
        %v4340 = vmul.f32 %v2804, %v2804
        %v4341 = vmul.f32 %v2805, %v2805
        %v4342 = vmul.f32 %v2806, %v2806
        %v4343 = vmul.f32 %v2807, %v2807
        %v4344 = vmul.f32 %v2808, %v2808
        %v4345 = vmul.f32 %v2809, %v2809
        %v4346 = vmul.f32 %v2810, %v2810
        %v4347 = vmul.f32 %v2811, %v2811
        %v4348 = vmul.f32 %v2812, %v2812
        %v4349 = vmul.f32 %v2813, %v2813
        %v4350 = vmul.f32 %v2814, %v2814
        %v4351 = vmul.f32 %v2815, %v2815
        %v4352 = vmul.f32 %v2816, %v2816
        %v4353 = vmul.f32 %v2817, %v2817
        %v4354 = vmul.f32 %v2818, %v2818
        %v4355 = vmul.f32 %v2819, %v2819
        %v4356 = vmul.f32 %v2820, %v2820
        %v4357 = vmul.f32 %v2821, %v2821
        %v4358 = vmul.f32 %v2822, %v2822
        %v4359 = vmul.f32 %v2823, %v2823
        %v4360 = vmul.f32 %v2824, %v2824
        %v4361 = vmul.f32 %v2825, %v2825
        %v4362 = vmul.f32 %v2826, %v2826
        %v4363 = vmul.f32 %v2827, %v2827
        %v4364 = vmul.f32 %v2828, %v2828
        %v4365 = vmul.f32 %v2829, %v2829
        %v4366 = vmul.f32 %v2830, %v2830
        %v4367 = vmul.f32 %v2831, %v2831
        %v4368 = vmul.f32 %v2832, %v2832
        %v4369 = vmul.f32 %v2833, %v2833
        %v4370 = vmul.f32 %v2834, %v2834
        %v4371 = vmul.f32 %v2835, %v2835
        %v4372 = vmul.f32 %v2836, %v2836
        %v4373 = vmul.f32 %v2837, %v2837
        %v4374 = vmul.f32 %v2838, %v2838
        %v4375 = vmul.f32 %v2839, %v2839
        %v4376 = vmul.f32 %v2840, %v2840
        %v4377 = vmul.f32 %v2841, %v2841
        %v4378 = vmul.f32 %v2842, %v2842
        %v4379 = vmul.f32 %v2843, %v2843
        %v4380 = vmul.f32 %v2844, %v2844
        %v4381 = vmul.f32 %v2845, %v2845
        %v4382 = vmul.f32 %v2846, %v2846
        %v4383 = vmul.f32 %v2847, %v2847
        %v4384 = vmul.f32 %v2848, %v2848
        %v4385 = vmul.f32 %v2849, %v2849
        %v4386 = vmul.f32 %v2850, %v2850
        %v4387 = vmul.f32 %v2851, %v2851
        %v4388 = vmul.f32 %v2852, %v2852
        %v4389 = vmul.f32 %v2853, %v2853
        %v4390 = vmul.f32 %v2854, %v2854
        %v4391 = vmul.f32 %v2855, %v2855
        %v4392 = vmul.f32 %v2856, %v2856
        %v4393 = vmul.f32 %v2857, %v2857
        %v4394 = vmul.f32 %v2858, %v2858
        %v4395 = vmul.f32 %v2859, %v2859
        %v4396 = vmul.f32 %v2860, %v2860
        %v4397 = vmul.f32 %v2861, %v2861
        %v4398 = vmul.f32 %v2862, %v2862
        %v4399 = vmul.f32 %v2863, %v2863
        %v4400 = vmul.f32 %v2864, %v2864
        %v4401 = vmul.f32 %v2865, %v2865
        %v4402 = vmul.f32 %v2866, %v2866
        %v4403 = vmul.f32 %v2867, %v2867
        %v4404 = vmul.f32 %v2868, %v2868
        %v4405 = vmul.f32 %v2869, %v2869
        %v4406 = vmul.f32 %v2870, %v2870
        %v4407 = vmul.f32 %v2871, %v2871
        %v4408 = vmul.f32 %v2872, %v2872
        %v4409 = vmul.f32 %v2873, %v2873
        %v4410 = vmul.f32 %v2874, %v2874
        %v4411 = vmul.f32 %v2875, %v2875
        %v4412 = vmul.f32 %v2876, %v2876
        %v4413 = vmul.f32 %v2877, %v2877
        %v4414 = vmul.f32 %v2878, %v2878
        %v4415 = vmul.f32 %v2879, %v2879
        %v4416 = vmul.f32 %v2880, %v2880
        %v4417 = vmul.f32 %v2881, %v2881
        %v4418 = vmul.f32 %v2882, %v2882
        %v4419 = vmul.f32 %v2883, %v2883
        %v4420 = vmul.f32 %v2884, %v2884
        %v4421 = vmul.f32 %v2885, %v2885
        %v4422 = vmul.f32 %v2886, %v2886
        %v4423 = vmul.f32 %v2887, %v2887
        %v4424 = vmul.f32 %v2888, %v2888
        %v4425 = vmul.f32 %v2889, %v2889
        %v4426 = vmul.f32 %v2890, %v2890
        %v4427 = vmul.f32 %v2891, %v2891
        %v4428 = vmul.f32 %v2892, %v2892
        %v4429 = vmul.f32 %v2893, %v2893
        %v4430 = vmul.f32 %v2894, %v2894
        %v4431 = vmul.f32 %v2895, %v2895
        %v4432 = vmul.f32 %v2896, %v2896
        %v4433 = vmul.f32 %v2897, %v2897
        %v4434 = vmul.f32 %v2898, %v2898
        %v4435 = vmul.f32 %v2899, %v2899
        %v4436 = vmul.f32 %v2900, %v2900
        %v4437 = vmul.f32 %v2901, %v2901
        %v4438 = vmul.f32 %v2902, %v2902
        %v4439 = vmul.f32 %v2903, %v2903
        %v4440 = vmul.f32 %v2904, %v2904
        %v4441 = vmul.f32 %v2905, %v2905
        %v4442 = vmul.f32 %v2906, %v2906
        %v4443 = vmul.f32 %v2907, %v2907
        %v4444 = vmul.f32 %v2908, %v2908
        %v4445 = vmul.f32 %v2909, %v2909
        %v4446 = vmul.f32 %v2910, %v2910
        %v4447 = vmul.f32 %v2911, %v2911
        %v4448 = vmul.f32 %v2912, %v2912
        %v4449 = vmul.f32 %v2913, %v2913
        %v4450 = vmul.f32 %v2914, %v2914
        %v4451 = vmul.f32 %v2915, %v2915
        %v4452 = vmul.f32 %v2916, %v2916
        %v4453 = vmul.f32 %v2917, %v2917
        %v4454 = vmul.f32 %v2918, %v2918
        %v4455 = vsel %vm480, %v4327, 0.0
        %4456 = vadd.xlane.f32.xlu0 %v4455
        %v4457 = vpop.xlane.xlu0 %4456
        %v4458 = vsel %vm480, %v4328, 0.0
        %4459 = vadd.xlane.f32.xlu0 %v4458
        %v4460 = vpop.xlane.xlu0 %4459
        %v4461 = vsel %vm480, %v4329, 0.0
        %4462 = vadd.xlane.f32.xlu0 %v4461
        %v4463 = vpop.xlane.xlu0 %4462
        %v4464 = vsel %vm480, %v4330, 0.0
        %4465 = vadd.xlane.f32.xlu0 %v4464
        %v4466 = vpop.xlane.xlu0 %4465
        %v4467 = vsel %vm480, %v4331, 0.0
        %4468 = vadd.xlane.f32.xlu0 %v4467
        %v4469 = vpop.xlane.xlu0 %4468
        %v4470 = vsel %vm480, %v4332, 0.0
        %4471 = vadd.xlane.f32.xlu0 %v4470
        %v4472 = vpop.xlane.xlu0 %4471
        %v4473 = vsel %vm480, %v4333, 0.0
        %4474 = vadd.xlane.f32.xlu0 %v4473
        %v4475 = vpop.xlane.xlu0 %4474
        %v4476 = vsel %vm480, %v4334, 0.0
        %4477 = vadd.xlane.f32.xlu0 %v4476
        %v4478 = vpop.xlane.xlu0 %4477
        %v4479 = vsel %vm480, %v4335, 0.0
        %4480 = vadd.xlane.f32.xlu0 %v4479
        %v4481 = vpop.xlane.xlu0 %4480
        %v4482 = vsel %vm480, %v4336, 0.0
        %4483 = vadd.xlane.f32.xlu0 %v4482
        %v4484 = vpop.xlane.xlu0 %4483
        %v4485 = vsel %vm480, %v4337, 0.0
        %4486 = vadd.xlane.f32.xlu0 %v4485
        %v4487 = vpop.xlane.xlu0 %4486
        %v4488 = vsel %vm480, %v4338, 0.0
        %4489 = vadd.xlane.f32.xlu0 %v4488
        %v4490 = vpop.xlane.xlu0 %4489
        %v4491 = vsel %vm480, %v4339, 0.0
        %4492 = vadd.xlane.f32.xlu0 %v4491
        %v4493 = vpop.xlane.xlu0 %4492
        %v4494 = vsel %vm480, %v4340, 0.0
        %4495 = vadd.xlane.f32.xlu0 %v4494
        %v4496 = vpop.xlane.xlu0 %4495
        %v4497 = vsel %vm480, %v4341, 0.0
        %4498 = vadd.xlane.f32.xlu0 %v4497
        %v4499 = vpop.xlane.xlu0 %4498
        %v4500 = vsel %vm480, %v4342, 0.0
        %4501 = vadd.xlane.f32.xlu0 %v4500
        %v4502 = vpop.xlane.xlu0 %4501
        %v4503 = vsel %vm480, %v4343, 0.0
        %4504 = vadd.xlane.f32.xlu0 %v4503
        %v4505 = vpop.xlane.xlu0 %4504
        %v4506 = vsel %vm480, %v4344, 0.0
        %4507 = vadd.xlane.f32.xlu0 %v4506
        %v4508 = vpop.xlane.xlu0 %4507
        %v4509 = vsel %vm480, %v4345, 0.0
        %4510 = vadd.xlane.f32.xlu0 %v4509
        %v4511 = vpop.xlane.xlu0 %4510
        %v4512 = vsel %vm480, %v4346, 0.0
        %4513 = vadd.xlane.f32.xlu0 %v4512
        %v4514 = vpop.xlane.xlu0 %4513
        %v4515 = vsel %vm480, %v4347, 0.0
        %4516 = vadd.xlane.f32.xlu0 %v4515
        %v4517 = vpop.xlane.xlu0 %4516
        %v4518 = vsel %vm480, %v4348, 0.0
        %4519 = vadd.xlane.f32.xlu0 %v4518
        %v4520 = vpop.xlane.xlu0 %4519
        %v4521 = vsel %vm480, %v4349, 0.0
        %4522 = vadd.xlane.f32.xlu0 %v4521
        %v4523 = vpop.xlane.xlu0 %4522
        %v4524 = vsel %vm480, %v4350, 0.0
        %4525 = vadd.xlane.f32.xlu0 %v4524
        %v4526 = vpop.xlane.xlu0 %4525
        %v4527 = vsel %vm480, %v4351, 0.0
        %4528 = vadd.xlane.f32.xlu0 %v4527
        %v4529 = vpop.xlane.xlu0 %4528
        %v4530 = vsel %vm480, %v4352, 0.0
        %4531 = vadd.xlane.f32.xlu0 %v4530
        %v4532 = vpop.xlane.xlu0 %4531
        %v4533 = vsel %vm480, %v4353, 0.0
        %4534 = vadd.xlane.f32.xlu0 %v4533
        %v4535 = vpop.xlane.xlu0 %4534
        %v4536 = vsel %vm480, %v4354, 0.0
        %4537 = vadd.xlane.f32.xlu0 %v4536
        %v4538 = vpop.xlane.xlu0 %4537
        %v4539 = vsel %vm480, %v4355, 0.0
        %4540 = vadd.xlane.f32.xlu0 %v4539
        %v4541 = vpop.xlane.xlu0 %4540
        %v4542 = vsel %vm480, %v4356, 0.0
        %4543 = vadd.xlane.f32.xlu0 %v4542
        %v4544 = vpop.xlane.xlu0 %4543
        %v4545 = vsel %vm480, %v4357, 0.0
        %4546 = vadd.xlane.f32.xlu0 %v4545
        %v4547 = vpop.xlane.xlu0 %4546
        %v4548 = vsel %vm480, %v4358, 0.0
        %4549 = vadd.xlane.f32.xlu0 %v4548
        %v4550 = vpop.xlane.xlu0 %4549
        %v4551 = vsel %vm480, %v4359, 0.0
        %4552 = vadd.xlane.f32.xlu0 %v4551
        %v4553 = vpop.xlane.xlu0 %4552
        %v4554 = vsel %vm480, %v4360, 0.0
        %4555 = vadd.xlane.f32.xlu0 %v4554
        %v4556 = vpop.xlane.xlu0 %4555
        %v4557 = vsel %vm480, %v4361, 0.0
        %4558 = vadd.xlane.f32.xlu0 %v4557
        %v4559 = vpop.xlane.xlu0 %4558
        %v4560 = vsel %vm480, %v4362, 0.0
        %4561 = vadd.xlane.f32.xlu0 %v4560
        %v4562 = vpop.xlane.xlu0 %4561
        %v4563 = vsel %vm480, %v4363, 0.0
        %4564 = vadd.xlane.f32.xlu0 %v4563
        %v4565 = vpop.xlane.xlu0 %4564
        %v4566 = vsel %vm480, %v4364, 0.0
        %4567 = vadd.xlane.f32.xlu0 %v4566
        %v4568 = vpop.xlane.xlu0 %4567
        %v4569 = vsel %vm480, %v4365, 0.0
        %4570 = vadd.xlane.f32.xlu0 %v4569
        %v4571 = vpop.xlane.xlu0 %4570
        %v4572 = vsel %vm480, %v4366, 0.0
        %4573 = vadd.xlane.f32.xlu0 %v4572
        %v4574 = vpop.xlane.xlu0 %4573
        %v4575 = vsel %vm480, %v4367, 0.0
        %4576 = vadd.xlane.f32.xlu0 %v4575
        %v4577 = vpop.xlane.xlu0 %4576
        %v4578 = vsel %vm480, %v4368, 0.0
        %4579 = vadd.xlane.f32.xlu0 %v4578
        %v4580 = vpop.xlane.xlu0 %4579
        %v4581 = vsel %vm480, %v4369, 0.0
        %4582 = vadd.xlane.f32.xlu0 %v4581
        %v4583 = vpop.xlane.xlu0 %4582
        %v4584 = vsel %vm480, %v4370, 0.0
        %4585 = vadd.xlane.f32.xlu0 %v4584
        %v4586 = vpop.xlane.xlu0 %4585
        %v4587 = vsel %vm480, %v4371, 0.0
        %4588 = vadd.xlane.f32.xlu0 %v4587
        %v4589 = vpop.xlane.xlu0 %4588
        %v4590 = vsel %vm480, %v4372, 0.0
        %4591 = vadd.xlane.f32.xlu0 %v4590
        %v4592 = vpop.xlane.xlu0 %4591
        %v4593 = vsel %vm480, %v4373, 0.0
        %4594 = vadd.xlane.f32.xlu0 %v4593
        %v4595 = vpop.xlane.xlu0 %4594
        %v4596 = vsel %vm480, %v4374, 0.0
        %4597 = vadd.xlane.f32.xlu0 %v4596
        %v4598 = vpop.xlane.xlu0 %4597
        %v4599 = vsel %vm480, %v4375, 0.0
        %4600 = vadd.xlane.f32.xlu0 %v4599
        %v4601 = vpop.xlane.xlu0 %4600
        %v4602 = vsel %vm480, %v4376, 0.0
        %4603 = vadd.xlane.f32.xlu0 %v4602
        %v4604 = vpop.xlane.xlu0 %4603
        %v4605 = vsel %vm480, %v4377, 0.0
        %4606 = vadd.xlane.f32.xlu0 %v4605
        %v4607 = vpop.xlane.xlu0 %4606
        %v4608 = vsel %vm480, %v4378, 0.0
        %4609 = vadd.xlane.f32.xlu0 %v4608
        %v4610 = vpop.xlane.xlu0 %4609
        %v4611 = vsel %vm480, %v4379, 0.0
        %4612 = vadd.xlane.f32.xlu0 %v4611
        %v4613 = vpop.xlane.xlu0 %4612
        %v4614 = vsel %vm480, %v4380, 0.0
        %4615 = vadd.xlane.f32.xlu0 %v4614
        %v4616 = vpop.xlane.xlu0 %4615
        %v4617 = vsel %vm480, %v4381, 0.0
        %4618 = vadd.xlane.f32.xlu0 %v4617
        %v4619 = vpop.xlane.xlu0 %4618
        %v4620 = vsel %vm480, %v4382, 0.0
        %4621 = vadd.xlane.f32.xlu0 %v4620
        %v4622 = vpop.xlane.xlu0 %4621
        %v4623 = vsel %vm480, %v4383, 0.0
        %4624 = vadd.xlane.f32.xlu0 %v4623
        %v4625 = vpop.xlane.xlu0 %4624
        %v4626 = vsel %vm480, %v4384, 0.0
        %4627 = vadd.xlane.f32.xlu0 %v4626
        %v4628 = vpop.xlane.xlu0 %4627
        %v4629 = vsel %vm480, %v4385, 0.0
        %4630 = vadd.xlane.f32.xlu0 %v4629
        %v4631 = vpop.xlane.xlu0 %4630
        %v4632 = vsel %vm480, %v4386, 0.0
        %4633 = vadd.xlane.f32.xlu0 %v4632
        %v4634 = vpop.xlane.xlu0 %4633
        %v4635 = vsel %vm480, %v4387, 0.0
        %4636 = vadd.xlane.f32.xlu0 %v4635
        %v4637 = vpop.xlane.xlu0 %4636
        %v4638 = vsel %vm480, %v4388, 0.0
        %4639 = vadd.xlane.f32.xlu0 %v4638
        %v4640 = vpop.xlane.xlu0 %4639
        %v4641 = vsel %vm480, %v4389, 0.0
        %4642 = vadd.xlane.f32.xlu0 %v4641
        %v4643 = vpop.xlane.xlu0 %4642
        %v4644 = vsel %vm480, %v4390, 0.0
        %4645 = vadd.xlane.f32.xlu0 %v4644
        %v4646 = vpop.xlane.xlu0 %4645
        %v4647 = vsel %vm480, %v4391, 0.0
        %4648 = vadd.xlane.f32.xlu0 %v4647
        %v4649 = vpop.xlane.xlu0 %4648
        %v4650 = vsel %vm480, %v4392, 0.0
        %4651 = vadd.xlane.f32.xlu0 %v4650
        %v4652 = vpop.xlane.xlu0 %4651
        %v4653 = vsel %vm480, %v4393, 0.0
        %4654 = vadd.xlane.f32.xlu0 %v4653
        %v4655 = vpop.xlane.xlu0 %4654
        %v4656 = vsel %vm480, %v4394, 0.0
        %4657 = vadd.xlane.f32.xlu0 %v4656
        %v4658 = vpop.xlane.xlu0 %4657
        %v4659 = vsel %vm480, %v4395, 0.0
        %4660 = vadd.xlane.f32.xlu0 %v4659
        %v4661 = vpop.xlane.xlu0 %4660
        %v4662 = vsel %vm480, %v4396, 0.0
        %4663 = vadd.xlane.f32.xlu0 %v4662
        %v4664 = vpop.xlane.xlu0 %4663
        %v4665 = vsel %vm480, %v4397, 0.0
        %4666 = vadd.xlane.f32.xlu0 %v4665
        %v4667 = vpop.xlane.xlu0 %4666
        %v4668 = vsel %vm480, %v4398, 0.0
        %4669 = vadd.xlane.f32.xlu0 %v4668
        %v4670 = vpop.xlane.xlu0 %4669
        %v4671 = vsel %vm480, %v4399, 0.0
        %4672 = vadd.xlane.f32.xlu0 %v4671
        %v4673 = vpop.xlane.xlu0 %4672
        %v4674 = vsel %vm480, %v4400, 0.0
        %4675 = vadd.xlane.f32.xlu0 %v4674
        %v4676 = vpop.xlane.xlu0 %4675
        %v4677 = vsel %vm480, %v4401, 0.0
        %4678 = vadd.xlane.f32.xlu0 %v4677
        %v4679 = vpop.xlane.xlu0 %4678
        %v4680 = vsel %vm480, %v4402, 0.0
        %4681 = vadd.xlane.f32.xlu0 %v4680
        %v4682 = vpop.xlane.xlu0 %4681
        %v4683 = vsel %vm480, %v4403, 0.0
        %4684 = vadd.xlane.f32.xlu0 %v4683
        %v4685 = vpop.xlane.xlu0 %4684
        %v4686 = vsel %vm480, %v4404, 0.0
        %4687 = vadd.xlane.f32.xlu0 %v4686
        %v4688 = vpop.xlane.xlu0 %4687
        %v4689 = vsel %vm480, %v4405, 0.0
        %4690 = vadd.xlane.f32.xlu0 %v4689
        %v4691 = vpop.xlane.xlu0 %4690
        %v4692 = vsel %vm480, %v4406, 0.0
        %4693 = vadd.xlane.f32.xlu0 %v4692
        %v4694 = vpop.xlane.xlu0 %4693
        %v4695 = vsel %vm480, %v4407, 0.0
        %4696 = vadd.xlane.f32.xlu0 %v4695
        %v4697 = vpop.xlane.xlu0 %4696
        %v4698 = vsel %vm480, %v4408, 0.0
        %4699 = vadd.xlane.f32.xlu0 %v4698
        %v4700 = vpop.xlane.xlu0 %4699
        %v4701 = vsel %vm480, %v4409, 0.0
        %4702 = vadd.xlane.f32.xlu0 %v4701
        %v4703 = vpop.xlane.xlu0 %4702
        %v4704 = vsel %vm480, %v4410, 0.0
        %4705 = vadd.xlane.f32.xlu0 %v4704
        %v4706 = vpop.xlane.xlu0 %4705
        %v4707 = vsel %vm480, %v4411, 0.0
        %4708 = vadd.xlane.f32.xlu0 %v4707
        %v4709 = vpop.xlane.xlu0 %4708
        %v4710 = vsel %vm480, %v4412, 0.0
        %4711 = vadd.xlane.f32.xlu0 %v4710
        %v4712 = vpop.xlane.xlu0 %4711
        %v4713 = vsel %vm480, %v4413, 0.0
        %4714 = vadd.xlane.f32.xlu0 %v4713
        %v4715 = vpop.xlane.xlu0 %4714
        %v4716 = vsel %vm480, %v4414, 0.0
        %4717 = vadd.xlane.f32.xlu0 %v4716
        %v4718 = vpop.xlane.xlu0 %4717
        %v4719 = vsel %vm480, %v4415, 0.0
        %4720 = vadd.xlane.f32.xlu0 %v4719
        %v4721 = vpop.xlane.xlu0 %4720
        %v4722 = vsel %vm480, %v4416, 0.0
        %4723 = vadd.xlane.f32.xlu0 %v4722
        %v4724 = vpop.xlane.xlu0 %4723
        %v4725 = vsel %vm480, %v4417, 0.0
        %4726 = vadd.xlane.f32.xlu0 %v4725
        %v4727 = vpop.xlane.xlu0 %4726
        %v4728 = vsel %vm480, %v4418, 0.0
        %4729 = vadd.xlane.f32.xlu0 %v4728
        %v4730 = vpop.xlane.xlu0 %4729
        %v4731 = vsel %vm480, %v4419, 0.0
        %4732 = vadd.xlane.f32.xlu0 %v4731
        %v4733 = vpop.xlane.xlu0 %4732
        %v4734 = vsel %vm480, %v4420, 0.0
        %4735 = vadd.xlane.f32.xlu0 %v4734
        %v4736 = vpop.xlane.xlu0 %4735
        %v4737 = vsel %vm480, %v4421, 0.0
        %4738 = vadd.xlane.f32.xlu0 %v4737
        %v4739 = vpop.xlane.xlu0 %4738
        %v4740 = vsel %vm480, %v4422, 0.0
        %4741 = vadd.xlane.f32.xlu0 %v4740
        %v4742 = vpop.xlane.xlu0 %4741
        %v4743 = vsel %vm480, %v4423, 0.0
        %4744 = vadd.xlane.f32.xlu0 %v4743
        %v4745 = vpop.xlane.xlu0 %4744
        %v4746 = vsel %vm480, %v4424, 0.0
        %4747 = vadd.xlane.f32.xlu0 %v4746
        %v4748 = vpop.xlane.xlu0 %4747
        %v4749 = vsel %vm480, %v4425, 0.0
        %4750 = vadd.xlane.f32.xlu0 %v4749
        %v4751 = vpop.xlane.xlu0 %4750
        %v4752 = vsel %vm480, %v4426, 0.0
        %4753 = vadd.xlane.f32.xlu0 %v4752
        %v4754 = vpop.xlane.xlu0 %4753
        %v4755 = vsel %vm480, %v4427, 0.0
        %4756 = vadd.xlane.f32.xlu0 %v4755
        %v4757 = vpop.xlane.xlu0 %4756
        %v4758 = vsel %vm480, %v4428, 0.0
        %4759 = vadd.xlane.f32.xlu0 %v4758
        %v4760 = vpop.xlane.xlu0 %4759
        %v4761 = vsel %vm480, %v4429, 0.0
        %4762 = vadd.xlane.f32.xlu0 %v4761
        %v4763 = vpop.xlane.xlu0 %4762
        %v4764 = vsel %vm480, %v4430, 0.0
        %4765 = vadd.xlane.f32.xlu0 %v4764
        %v4766 = vpop.xlane.xlu0 %4765
        %v4767 = vsel %vm480, %v4431, 0.0
        %4768 = vadd.xlane.f32.xlu0 %v4767
        %v4769 = vpop.xlane.xlu0 %4768
        %v4770 = vsel %vm480, %v4432, 0.0
        %4771 = vadd.xlane.f32.xlu0 %v4770
        %v4772 = vpop.xlane.xlu0 %4771
        %v4773 = vsel %vm480, %v4433, 0.0
        %4774 = vadd.xlane.f32.xlu0 %v4773
        %v4775 = vpop.xlane.xlu0 %4774
        %v4776 = vsel %vm480, %v4434, 0.0
        %4777 = vadd.xlane.f32.xlu0 %v4776
        %v4778 = vpop.xlane.xlu0 %4777
        %v4779 = vsel %vm480, %v4435, 0.0
        %4780 = vadd.xlane.f32.xlu0 %v4779
        %v4781 = vpop.xlane.xlu0 %4780
        %v4782 = vsel %vm480, %v4436, 0.0
        %4783 = vadd.xlane.f32.xlu0 %v4782
        %v4784 = vpop.xlane.xlu0 %4783
        %v4785 = vsel %vm480, %v4437, 0.0
        %4786 = vadd.xlane.f32.xlu0 %v4785
        %v4787 = vpop.xlane.xlu0 %4786
        %v4788 = vsel %vm480, %v4438, 0.0
        %4789 = vadd.xlane.f32.xlu0 %v4788
        %v4790 = vpop.xlane.xlu0 %4789
        %v4791 = vsel %vm480, %v4439, 0.0
        %4792 = vadd.xlane.f32.xlu0 %v4791
        %v4793 = vpop.xlane.xlu0 %4792
        %v4794 = vsel %vm480, %v4440, 0.0
        %4795 = vadd.xlane.f32.xlu0 %v4794
        %v4796 = vpop.xlane.xlu0 %4795
        %v4797 = vsel %vm480, %v4441, 0.0
        %4798 = vadd.xlane.f32.xlu0 %v4797
        %v4799 = vpop.xlane.xlu0 %4798
        %v4800 = vsel %vm480, %v4442, 0.0
        %4801 = vadd.xlane.f32.xlu0 %v4800
        %v4802 = vpop.xlane.xlu0 %4801
        %v4803 = vsel %vm480, %v4443, 0.0
        %4804 = vadd.xlane.f32.xlu0 %v4803
        %v4805 = vpop.xlane.xlu0 %4804
        %v4806 = vsel %vm480, %v4444, 0.0
        %4807 = vadd.xlane.f32.xlu0 %v4806
        %v4808 = vpop.xlane.xlu0 %4807
        %v4809 = vsel %vm480, %v4445, 0.0
        %4810 = vadd.xlane.f32.xlu0 %v4809
        %v4811 = vpop.xlane.xlu0 %4810
        %v4812 = vsel %vm480, %v4446, 0.0
        %4813 = vadd.xlane.f32.xlu0 %v4812
        %v4814 = vpop.xlane.xlu0 %4813
        %v4815 = vsel %vm480, %v4447, 0.0
        %4816 = vadd.xlane.f32.xlu0 %v4815
        %v4817 = vpop.xlane.xlu0 %4816
        %v4818 = vsel %vm480, %v4448, 0.0
        %4819 = vadd.xlane.f32.xlu0 %v4818
        %v4820 = vpop.xlane.xlu0 %4819
        %v4821 = vsel %vm480, %v4449, 0.0
        %4822 = vadd.xlane.f32.xlu0 %v4821
        %v4823 = vpop.xlane.xlu0 %4822
        %v4824 = vsel %vm480, %v4450, 0.0
        %4825 = vadd.xlane.f32.xlu0 %v4824
        %v4826 = vpop.xlane.xlu0 %4825
        %v4827 = vsel %vm480, %v4451, 0.0
        %4828 = vadd.xlane.f32.xlu0 %v4827
        %v4829 = vpop.xlane.xlu0 %4828
        %v4830 = vsel %vm480, %v4452, 0.0
        %4831 = vadd.xlane.f32.xlu0 %v4830
        %v4832 = vpop.xlane.xlu0 %4831
        %v4833 = vsel %vm480, %v4453, 0.0
        %4834 = vadd.xlane.f32.xlu0 %v4833
        %v4835 = vpop.xlane.xlu0 %4834
        %v4836 = vsel %vm480, %v4454, 0.0
        %4837 = vadd.xlane.f32.xlu0 %v4836
        %v4838 = vpop.xlane.xlu0 %4837
        %v4839 = vrsqrt.pop %v4457
        %v4840 = vmul.f32 %v4457, %v4839
        %vm4841 = vcmp.eq.f32.partialorder %v4457, inf
        %v4842 = vsel %vm4841, %v4457, %v4840
        %vm4843 = vcmp.eq.f32.partialorder %v4457, 0.0
        %v4844 = vand.u32 %v4457, 2147483648
        %v4845 = vsel %vm4843, %v4844, %v4842
        %v4846 = vrsqrt.pop %v4460
        %v4847 = vmul.f32 %v4460, %v4846
        %vm4848 = vcmp.eq.f32.partialorder %v4460, inf
        %v4849 = vsel %vm4848, %v4460, %v4847
        %vm4850 = vcmp.eq.f32.partialorder %v4460, 0.0
        %v4851 = vand.u32 %v4460, 2147483648
        %v4852 = vsel %vm4850, %v4851, %v4849
        %v4853 = vrsqrt.pop %v4463
        %v4854 = vmul.f32 %v4463, %v4853
        %vm4855 = vcmp.eq.f32.partialorder %v4463, inf
        %v4856 = vsel %vm4855, %v4463, %v4854
        %vm4857 = vcmp.eq.f32.partialorder %v4463, 0.0
        %v4858 = vand.u32 %v4463, 2147483648
        %v4859 = vsel %vm4857, %v4858, %v4856
        %v4860 = vrsqrt.pop %v4466
        %v4861 = vmul.f32 %v4466, %v4860
        %vm4862 = vcmp.eq.f32.partialorder %v4466, inf
        %v4863 = vsel %vm4862, %v4466, %v4861
        %vm4864 = vcmp.eq.f32.partialorder %v4466, 0.0
        %v4865 = vand.u32 %v4466, 2147483648
        %v4866 = vsel %vm4864, %v4865, %v4863
        %v4867 = vrsqrt.pop %v4469
        %v4868 = vmul.f32 %v4469, %v4867
        %vm4869 = vcmp.eq.f32.partialorder %v4469, inf
        %v4870 = vsel %vm4869, %v4469, %v4868
        %vm4871 = vcmp.eq.f32.partialorder %v4469, 0.0
        %v4872 = vand.u32 %v4469, 2147483648
        %v4873 = vsel %vm4871, %v4872, %v4870
        %v4874 = vrsqrt.pop %v4472
        %v4875 = vmul.f32 %v4472, %v4874
        %vm4876 = vcmp.eq.f32.partialorder %v4472, inf
        %v4877 = vsel %vm4876, %v4472, %v4875
        %vm4878 = vcmp.eq.f32.partialorder %v4472, 0.0
        %v4879 = vand.u32 %v4472, 2147483648
        %v4880 = vsel %vm4878, %v4879, %v4877
        %v4881 = vrsqrt.pop %v4475
        %v4882 = vmul.f32 %v4475, %v4881
        %vm4883 = vcmp.eq.f32.partialorder %v4475, inf
        %v4884 = vsel %vm4883, %v4475, %v4882
        %vm4885 = vcmp.eq.f32.partialorder %v4475, 0.0
        %v4886 = vand.u32 %v4475, 2147483648
        %v4887 = vsel %vm4885, %v4886, %v4884
        %v4888 = vrsqrt.pop %v4478
        %v4889 = vmul.f32 %v4478, %v4888
        %vm4890 = vcmp.eq.f32.partialorder %v4478, inf
        %v4891 = vsel %vm4890, %v4478, %v4889
        %vm4892 = vcmp.eq.f32.partialorder %v4478, 0.0
        %v4893 = vand.u32 %v4478, 2147483648
        %v4894 = vsel %vm4892, %v4893, %v4891
        %v4895 = vrsqrt.pop %v4481
        %v4896 = vmul.f32 %v4481, %v4895
        %vm4897 = vcmp.eq.f32.partialorder %v4481, inf
        %v4898 = vsel %vm4897, %v4481, %v4896
        %vm4899 = vcmp.eq.f32.partialorder %v4481, 0.0
        %v4900 = vand.u32 %v4481, 2147483648
        %v4901 = vsel %vm4899, %v4900, %v4898
        %v4902 = vrsqrt.pop %v4484
        %v4903 = vmul.f32 %v4484, %v4902
        %vm4904 = vcmp.eq.f32.partialorder %v4484, inf
        %v4905 = vsel %vm4904, %v4484, %v4903
        %vm4906 = vcmp.eq.f32.partialorder %v4484, 0.0
        %v4907 = vand.u32 %v4484, 2147483648
        %v4908 = vsel %vm4906, %v4907, %v4905
        %v4909 = vrsqrt.pop %v4487
        %v4910 = vmul.f32 %v4487, %v4909
        %vm4911 = vcmp.eq.f32.partialorder %v4487, inf
        %v4912 = vsel %vm4911, %v4487, %v4910
        %vm4913 = vcmp.eq.f32.partialorder %v4487, 0.0
        %v4914 = vand.u32 %v4487, 2147483648
        %v4915 = vsel %vm4913, %v4914, %v4912
        %v4916 = vrsqrt.pop %v4490
        %v4917 = vmul.f32 %v4490, %v4916
        %vm4918 = vcmp.eq.f32.partialorder %v4490, inf
        %v4919 = vsel %vm4918, %v4490, %v4917
        %vm4920 = vcmp.eq.f32.partialorder %v4490, 0.0
        %v4921 = vand.u32 %v4490, 2147483648
        %v4922 = vsel %vm4920, %v4921, %v4919
        %v4923 = vrsqrt.pop %v4493
        %v4924 = vmul.f32 %v4493, %v4923
        %vm4925 = vcmp.eq.f32.partialorder %v4493, inf
        %v4926 = vsel %vm4925, %v4493, %v4924
        %vm4927 = vcmp.eq.f32.partialorder %v4493, 0.0
        %v4928 = vand.u32 %v4493, 2147483648
        %v4929 = vsel %vm4927, %v4928, %v4926
        %v4930 = vrsqrt.pop %v4496
        %v4931 = vmul.f32 %v4496, %v4930
        %vm4932 = vcmp.eq.f32.partialorder %v4496, inf
        %v4933 = vsel %vm4932, %v4496, %v4931
        %vm4934 = vcmp.eq.f32.partialorder %v4496, 0.0
        %v4935 = vand.u32 %v4496, 2147483648
        %v4936 = vsel %vm4934, %v4935, %v4933
        %v4937 = vrsqrt.pop %v4499
        %v4938 = vmul.f32 %v4499, %v4937
        %vm4939 = vcmp.eq.f32.partialorder %v4499, inf
        %v4940 = vsel %vm4939, %v4499, %v4938
        %vm4941 = vcmp.eq.f32.partialorder %v4499, 0.0
        %v4942 = vand.u32 %v4499, 2147483648
        %v4943 = vsel %vm4941, %v4942, %v4940
        %v4944 = vrsqrt.pop %v4502
        %v4945 = vmul.f32 %v4502, %v4944
        %vm4946 = vcmp.eq.f32.partialorder %v4502, inf
        %v4947 = vsel %vm4946, %v4502, %v4945
        %vm4948 = vcmp.eq.f32.partialorder %v4502, 0.0
        %v4949 = vand.u32 %v4502, 2147483648
        %v4950 = vsel %vm4948, %v4949, %v4947
        %v4951 = vrsqrt.pop %v4505
        %v4952 = vmul.f32 %v4505, %v4951
        %vm4953 = vcmp.eq.f32.partialorder %v4505, inf
        %v4954 = vsel %vm4953, %v4505, %v4952
        %vm4955 = vcmp.eq.f32.partialorder %v4505, 0.0
        %v4956 = vand.u32 %v4505, 2147483648
        %v4957 = vsel %vm4955, %v4956, %v4954
        %v4958 = vrsqrt.pop %v4508
        %v4959 = vmul.f32 %v4508, %v4958
        %vm4960 = vcmp.eq.f32.partialorder %v4508, inf
        %v4961 = vsel %vm4960, %v4508, %v4959
        %vm4962 = vcmp.eq.f32.partialorder %v4508, 0.0
        %v4963 = vand.u32 %v4508, 2147483648
        %v4964 = vsel %vm4962, %v4963, %v4961
        %v4965 = vrsqrt.pop %v4511
        %v4966 = vmul.f32 %v4511, %v4965
        %vm4967 = vcmp.eq.f32.partialorder %v4511, inf
        %v4968 = vsel %vm4967, %v4511, %v4966
        %vm4969 = vcmp.eq.f32.partialorder %v4511, 0.0
        %v4970 = vand.u32 %v4511, 2147483648
        %v4971 = vsel %vm4969, %v4970, %v4968
        %v4972 = vrsqrt.pop %v4514
        %v4973 = vmul.f32 %v4514, %v4972
        %vm4974 = vcmp.eq.f32.partialorder %v4514, inf
        %v4975 = vsel %vm4974, %v4514, %v4973
        %vm4976 = vcmp.eq.f32.partialorder %v4514, 0.0
        %v4977 = vand.u32 %v4514, 2147483648
        %v4978 = vsel %vm4976, %v4977, %v4975
        %v4979 = vrsqrt.pop %v4517
        %v4980 = vmul.f32 %v4517, %v4979
        %vm4981 = vcmp.eq.f32.partialorder %v4517, inf
        %v4982 = vsel %vm4981, %v4517, %v4980
        %vm4983 = vcmp.eq.f32.partialorder %v4517, 0.0
        %v4984 = vand.u32 %v4517, 2147483648
        %v4985 = vsel %vm4983, %v4984, %v4982
        %v4986 = vrsqrt.pop %v4520
        %v4987 = vmul.f32 %v4520, %v4986
        %vm4988 = vcmp.eq.f32.partialorder %v4520, inf
        %v4989 = vsel %vm4988, %v4520, %v4987
        %vm4990 = vcmp.eq.f32.partialorder %v4520, 0.0
        %v4991 = vand.u32 %v4520, 2147483648
        %v4992 = vsel %vm4990, %v4991, %v4989
        %v4993 = vrsqrt.pop %v4523
        %v4994 = vmul.f32 %v4523, %v4993
        %vm4995 = vcmp.eq.f32.partialorder %v4523, inf
        %v4996 = vsel %vm4995, %v4523, %v4994
        %vm4997 = vcmp.eq.f32.partialorder %v4523, 0.0
        %v4998 = vand.u32 %v4523, 2147483648
        %v4999 = vsel %vm4997, %v4998, %v4996
        %v5000 = vrsqrt.pop %v4526
        %v5001 = vmul.f32 %v4526, %v5000
        %vm5002 = vcmp.eq.f32.partialorder %v4526, inf
        %v5003 = vsel %vm5002, %v4526, %v5001
        %vm5004 = vcmp.eq.f32.partialorder %v4526, 0.0
        %v5005 = vand.u32 %v4526, 2147483648
        %v5006 = vsel %vm5004, %v5005, %v5003
        %v5007 = vrsqrt.pop %v4529
        %v5008 = vmul.f32 %v4529, %v5007
        %vm5009 = vcmp.eq.f32.partialorder %v4529, inf
        %v5010 = vsel %vm5009, %v4529, %v5008
        %vm5011 = vcmp.eq.f32.partialorder %v4529, 0.0
        %v5012 = vand.u32 %v4529, 2147483648
        %v5013 = vsel %vm5011, %v5012, %v5010
        %v5014 = vrsqrt.pop %v4532
        %v5015 = vmul.f32 %v4532, %v5014
        %vm5016 = vcmp.eq.f32.partialorder %v4532, inf
        %v5017 = vsel %vm5016, %v4532, %v5015
        %vm5018 = vcmp.eq.f32.partialorder %v4532, 0.0
        %v5019 = vand.u32 %v4532, 2147483648
        %v5020 = vsel %vm5018, %v5019, %v5017
        %v5021 = vrsqrt.pop %v4535
        %v5022 = vmul.f32 %v4535, %v5021
        %vm5023 = vcmp.eq.f32.partialorder %v4535, inf
        %v5024 = vsel %vm5023, %v4535, %v5022
        %vm5025 = vcmp.eq.f32.partialorder %v4535, 0.0
        %v5026 = vand.u32 %v4535, 2147483648
        %v5027 = vsel %vm5025, %v5026, %v5024
        %v5028 = vrsqrt.pop %v4538
        %v5029 = vmul.f32 %v4538, %v5028
        %vm5030 = vcmp.eq.f32.partialorder %v4538, inf
        %v5031 = vsel %vm5030, %v4538, %v5029
        %vm5032 = vcmp.eq.f32.partialorder %v4538, 0.0
        %v5033 = vand.u32 %v4538, 2147483648
        %v5034 = vsel %vm5032, %v5033, %v5031
        %v5035 = vrsqrt.pop %v4541
        %v5036 = vmul.f32 %v4541, %v5035
        %vm5037 = vcmp.eq.f32.partialorder %v4541, inf
        %v5038 = vsel %vm5037, %v4541, %v5036
        %vm5039 = vcmp.eq.f32.partialorder %v4541, 0.0
        %v5040 = vand.u32 %v4541, 2147483648
        %v5041 = vsel %vm5039, %v5040, %v5038
        %v5042 = vrsqrt.pop %v4544
        %v5043 = vmul.f32 %v4544, %v5042
        %vm5044 = vcmp.eq.f32.partialorder %v4544, inf
        %v5045 = vsel %vm5044, %v4544, %v5043
        %vm5046 = vcmp.eq.f32.partialorder %v4544, 0.0
        %v5047 = vand.u32 %v4544, 2147483648
        %v5048 = vsel %vm5046, %v5047, %v5045
        %v5049 = vrsqrt.pop %v4547
        %v5050 = vmul.f32 %v4547, %v5049
        %vm5051 = vcmp.eq.f32.partialorder %v4547, inf
        %v5052 = vsel %vm5051, %v4547, %v5050
        %vm5053 = vcmp.eq.f32.partialorder %v4547, 0.0
        %v5054 = vand.u32 %v4547, 2147483648
        %v5055 = vsel %vm5053, %v5054, %v5052
        %v5056 = vrsqrt.pop %v4550
        %v5057 = vmul.f32 %v4550, %v5056
        %vm5058 = vcmp.eq.f32.partialorder %v4550, inf
        %v5059 = vsel %vm5058, %v4550, %v5057
        %vm5060 = vcmp.eq.f32.partialorder %v4550, 0.0
        %v5061 = vand.u32 %v4550, 2147483648
        %v5062 = vsel %vm5060, %v5061, %v5059
        %v5063 = vrsqrt.pop %v4553
        %v5064 = vmul.f32 %v4553, %v5063
        %vm5065 = vcmp.eq.f32.partialorder %v4553, inf
        %v5066 = vsel %vm5065, %v4553, %v5064
        %vm5067 = vcmp.eq.f32.partialorder %v4553, 0.0
        %v5068 = vand.u32 %v4553, 2147483648
        %v5069 = vsel %vm5067, %v5068, %v5066
        %v5070 = vrsqrt.pop %v4556
        %v5071 = vmul.f32 %v4556, %v5070
        %vm5072 = vcmp.eq.f32.partialorder %v4556, inf
        %v5073 = vsel %vm5072, %v4556, %v5071
        %vm5074 = vcmp.eq.f32.partialorder %v4556, 0.0
        %v5075 = vand.u32 %v4556, 2147483648
        %v5076 = vsel %vm5074, %v5075, %v5073
        %v5077 = vrsqrt.pop %v4559
        %v5078 = vmul.f32 %v4559, %v5077
        %vm5079 = vcmp.eq.f32.partialorder %v4559, inf
        %v5080 = vsel %vm5079, %v4559, %v5078
        %vm5081 = vcmp.eq.f32.partialorder %v4559, 0.0
        %v5082 = vand.u32 %v4559, 2147483648
        %v5083 = vsel %vm5081, %v5082, %v5080
        %v5084 = vrsqrt.pop %v4562
        %v5085 = vmul.f32 %v4562, %v5084
        %vm5086 = vcmp.eq.f32.partialorder %v4562, inf
        %v5087 = vsel %vm5086, %v4562, %v5085
        %vm5088 = vcmp.eq.f32.partialorder %v4562, 0.0
        %v5089 = vand.u32 %v4562, 2147483648
        %v5090 = vsel %vm5088, %v5089, %v5087
        %v5091 = vrsqrt.pop %v4565
        %v5092 = vmul.f32 %v4565, %v5091
        %vm5093 = vcmp.eq.f32.partialorder %v4565, inf
        %v5094 = vsel %vm5093, %v4565, %v5092
        %vm5095 = vcmp.eq.f32.partialorder %v4565, 0.0
        %v5096 = vand.u32 %v4565, 2147483648
        %v5097 = vsel %vm5095, %v5096, %v5094
        %v5098 = vrsqrt.pop %v4568
        %v5099 = vmul.f32 %v4568, %v5098
        %vm5100 = vcmp.eq.f32.partialorder %v4568, inf
        %v5101 = vsel %vm5100, %v4568, %v5099
        %vm5102 = vcmp.eq.f32.partialorder %v4568, 0.0
        %v5103 = vand.u32 %v4568, 2147483648
        %v5104 = vsel %vm5102, %v5103, %v5101
        %v5105 = vrsqrt.pop %v4571
        %v5106 = vmul.f32 %v4571, %v5105
        %vm5107 = vcmp.eq.f32.partialorder %v4571, inf
        %v5108 = vsel %vm5107, %v4571, %v5106
        %vm5109 = vcmp.eq.f32.partialorder %v4571, 0.0
        %v5110 = vand.u32 %v4571, 2147483648
        %v5111 = vsel %vm5109, %v5110, %v5108
        %v5112 = vrsqrt.pop %v4574
        %v5113 = vmul.f32 %v4574, %v5112
        %vm5114 = vcmp.eq.f32.partialorder %v4574, inf
        %v5115 = vsel %vm5114, %v4574, %v5113
        %vm5116 = vcmp.eq.f32.partialorder %v4574, 0.0
        %v5117 = vand.u32 %v4574, 2147483648
        %v5118 = vsel %vm5116, %v5117, %v5115
        %v5119 = vrsqrt.pop %v4577
        %v5120 = vmul.f32 %v4577, %v5119
        %vm5121 = vcmp.eq.f32.partialorder %v4577, inf
        %v5122 = vsel %vm5121, %v4577, %v5120
        %vm5123 = vcmp.eq.f32.partialorder %v4577, 0.0
        %v5124 = vand.u32 %v4577, 2147483648
        %v5125 = vsel %vm5123, %v5124, %v5122
        %v5126 = vrsqrt.pop %v4580
        %v5127 = vmul.f32 %v4580, %v5126
        %vm5128 = vcmp.eq.f32.partialorder %v4580, inf
        %v5129 = vsel %vm5128, %v4580, %v5127
        %vm5130 = vcmp.eq.f32.partialorder %v4580, 0.0
        %v5131 = vand.u32 %v4580, 2147483648
        %v5132 = vsel %vm5130, %v5131, %v5129
        %v5133 = vrsqrt.pop %v4583
        %v5134 = vmul.f32 %v4583, %v5133
        %vm5135 = vcmp.eq.f32.partialorder %v4583, inf
        %v5136 = vsel %vm5135, %v4583, %v5134
        %vm5137 = vcmp.eq.f32.partialorder %v4583, 0.0
        %v5138 = vand.u32 %v4583, 2147483648
        %v5139 = vsel %vm5137, %v5138, %v5136
        %v5140 = vrsqrt.pop %v4586
        %v5141 = vmul.f32 %v4586, %v5140
        %vm5142 = vcmp.eq.f32.partialorder %v4586, inf
        %v5143 = vsel %vm5142, %v4586, %v5141
        %vm5144 = vcmp.eq.f32.partialorder %v4586, 0.0
        %v5145 = vand.u32 %v4586, 2147483648
        %v5146 = vsel %vm5144, %v5145, %v5143
        %v5147 = vrsqrt.pop %v4589
        %v5148 = vmul.f32 %v4589, %v5147
        %vm5149 = vcmp.eq.f32.partialorder %v4589, inf
        %v5150 = vsel %vm5149, %v4589, %v5148
        %vm5151 = vcmp.eq.f32.partialorder %v4589, 0.0
        %v5152 = vand.u32 %v4589, 2147483648
        %v5153 = vsel %vm5151, %v5152, %v5150
        %v5154 = vrsqrt.pop %v4592
        %v5155 = vmul.f32 %v4592, %v5154
        %vm5156 = vcmp.eq.f32.partialorder %v4592, inf
        %v5157 = vsel %vm5156, %v4592, %v5155
        %vm5158 = vcmp.eq.f32.partialorder %v4592, 0.0
        %v5159 = vand.u32 %v4592, 2147483648
        %v5160 = vsel %vm5158, %v5159, %v5157
        %v5161 = vrsqrt.pop %v4595
        %v5162 = vmul.f32 %v4595, %v5161
        %vm5163 = vcmp.eq.f32.partialorder %v4595, inf
        %v5164 = vsel %vm5163, %v4595, %v5162
        %vm5165 = vcmp.eq.f32.partialorder %v4595, 0.0
        %v5166 = vand.u32 %v4595, 2147483648
        %v5167 = vsel %vm5165, %v5166, %v5164
        %v5168 = vrsqrt.pop %v4598
        %v5169 = vmul.f32 %v4598, %v5168
        %vm5170 = vcmp.eq.f32.partialorder %v4598, inf
        %v5171 = vsel %vm5170, %v4598, %v5169
        %vm5172 = vcmp.eq.f32.partialorder %v4598, 0.0
        %v5173 = vand.u32 %v4598, 2147483648
        %v5174 = vsel %vm5172, %v5173, %v5171
        %v5175 = vrsqrt.pop %v4601
        %v5176 = vmul.f32 %v4601, %v5175
        %vm5177 = vcmp.eq.f32.partialorder %v4601, inf
        %v5178 = vsel %vm5177, %v4601, %v5176
        %vm5179 = vcmp.eq.f32.partialorder %v4601, 0.0
        %v5180 = vand.u32 %v4601, 2147483648
        %v5181 = vsel %vm5179, %v5180, %v5178
        %v5182 = vrsqrt.pop %v4604
        %v5183 = vmul.f32 %v4604, %v5182
        %vm5184 = vcmp.eq.f32.partialorder %v4604, inf
        %v5185 = vsel %vm5184, %v4604, %v5183
        %vm5186 = vcmp.eq.f32.partialorder %v4604, 0.0
        %v5187 = vand.u32 %v4604, 2147483648
        %v5188 = vsel %vm5186, %v5187, %v5185
        %v5189 = vrsqrt.pop %v4607
        %v5190 = vmul.f32 %v4607, %v5189
        %vm5191 = vcmp.eq.f32.partialorder %v4607, inf
        %v5192 = vsel %vm5191, %v4607, %v5190
        %vm5193 = vcmp.eq.f32.partialorder %v4607, 0.0
        %v5194 = vand.u32 %v4607, 2147483648
        %v5195 = vsel %vm5193, %v5194, %v5192
        %v5196 = vrsqrt.pop %v4610
        %v5197 = vmul.f32 %v4610, %v5196
        %vm5198 = vcmp.eq.f32.partialorder %v4610, inf
        %v5199 = vsel %vm5198, %v4610, %v5197
        %vm5200 = vcmp.eq.f32.partialorder %v4610, 0.0
        %v5201 = vand.u32 %v4610, 2147483648
        %v5202 = vsel %vm5200, %v5201, %v5199
        %v5203 = vrsqrt.pop %v4613
        %v5204 = vmul.f32 %v4613, %v5203
        %vm5205 = vcmp.eq.f32.partialorder %v4613, inf
        %v5206 = vsel %vm5205, %v4613, %v5204
        %vm5207 = vcmp.eq.f32.partialorder %v4613, 0.0
        %v5208 = vand.u32 %v4613, 2147483648
        %v5209 = vsel %vm5207, %v5208, %v5206
        %v5210 = vrsqrt.pop %v4616
        %v5211 = vmul.f32 %v4616, %v5210
        %vm5212 = vcmp.eq.f32.partialorder %v4616, inf
        %v5213 = vsel %vm5212, %v4616, %v5211
        %vm5214 = vcmp.eq.f32.partialorder %v4616, 0.0
        %v5215 = vand.u32 %v4616, 2147483648
        %v5216 = vsel %vm5214, %v5215, %v5213
        %v5217 = vrsqrt.pop %v4619
        %v5218 = vmul.f32 %v4619, %v5217
        %vm5219 = vcmp.eq.f32.partialorder %v4619, inf
        %v5220 = vsel %vm5219, %v4619, %v5218
        %vm5221 = vcmp.eq.f32.partialorder %v4619, 0.0
        %v5222 = vand.u32 %v4619, 2147483648
        %v5223 = vsel %vm5221, %v5222, %v5220
        %v5224 = vrsqrt.pop %v4622
        %v5225 = vmul.f32 %v4622, %v5224
        %vm5226 = vcmp.eq.f32.partialorder %v4622, inf
        %v5227 = vsel %vm5226, %v4622, %v5225
        %vm5228 = vcmp.eq.f32.partialorder %v4622, 0.0
        %v5229 = vand.u32 %v4622, 2147483648
        %v5230 = vsel %vm5228, %v5229, %v5227
        %v5231 = vrsqrt.pop %v4625
        %v5232 = vmul.f32 %v4625, %v5231
        %vm5233 = vcmp.eq.f32.partialorder %v4625, inf
        %v5234 = vsel %vm5233, %v4625, %v5232
        %vm5235 = vcmp.eq.f32.partialorder %v4625, 0.0
        %v5236 = vand.u32 %v4625, 2147483648
        %v5237 = vsel %vm5235, %v5236, %v5234
        %v5238 = vrsqrt.pop %v4628
        %v5239 = vmul.f32 %v4628, %v5238
        %vm5240 = vcmp.eq.f32.partialorder %v4628, inf
        %v5241 = vsel %vm5240, %v4628, %v5239
        %vm5242 = vcmp.eq.f32.partialorder %v4628, 0.0
        %v5243 = vand.u32 %v4628, 2147483648
        %v5244 = vsel %vm5242, %v5243, %v5241
        %v5245 = vrsqrt.pop %v4631
        %v5246 = vmul.f32 %v4631, %v5245
        %vm5247 = vcmp.eq.f32.partialorder %v4631, inf
        %v5248 = vsel %vm5247, %v4631, %v5246
        %vm5249 = vcmp.eq.f32.partialorder %v4631, 0.0
        %v5250 = vand.u32 %v4631, 2147483648
        %v5251 = vsel %vm5249, %v5250, %v5248
        %v5252 = vrsqrt.pop %v4634
        %v5253 = vmul.f32 %v4634, %v5252
        %vm5254 = vcmp.eq.f32.partialorder %v4634, inf
        %v5255 = vsel %vm5254, %v4634, %v5253
        %vm5256 = vcmp.eq.f32.partialorder %v4634, 0.0
        %v5257 = vand.u32 %v4634, 2147483648
        %v5258 = vsel %vm5256, %v5257, %v5255
        %v5259 = vrsqrt.pop %v4637
        %v5260 = vmul.f32 %v4637, %v5259
        %vm5261 = vcmp.eq.f32.partialorder %v4637, inf
        %v5262 = vsel %vm5261, %v4637, %v5260
        %vm5263 = vcmp.eq.f32.partialorder %v4637, 0.0
        %v5264 = vand.u32 %v4637, 2147483648
        %v5265 = vsel %vm5263, %v5264, %v5262
        %v5266 = vrsqrt.pop %v4640
        %v5267 = vmul.f32 %v4640, %v5266
        %vm5268 = vcmp.eq.f32.partialorder %v4640, inf
        %v5269 = vsel %vm5268, %v4640, %v5267
        %vm5270 = vcmp.eq.f32.partialorder %v4640, 0.0
        %v5271 = vand.u32 %v4640, 2147483648
        %v5272 = vsel %vm5270, %v5271, %v5269
        %v5273 = vrsqrt.pop %v4643
        %v5274 = vmul.f32 %v4643, %v5273
        %vm5275 = vcmp.eq.f32.partialorder %v4643, inf
        %v5276 = vsel %vm5275, %v4643, %v5274
        %vm5277 = vcmp.eq.f32.partialorder %v4643, 0.0
        %v5278 = vand.u32 %v4643, 2147483648
        %v5279 = vsel %vm5277, %v5278, %v5276
        %v5280 = vrsqrt.pop %v4646
        %v5281 = vmul.f32 %v4646, %v5280
        %vm5282 = vcmp.eq.f32.partialorder %v4646, inf
        %v5283 = vsel %vm5282, %v4646, %v5281
        %vm5284 = vcmp.eq.f32.partialorder %v4646, 0.0
        %v5285 = vand.u32 %v4646, 2147483648
        %v5286 = vsel %vm5284, %v5285, %v5283
        %v5287 = vrsqrt.pop %v4649
        %v5288 = vmul.f32 %v4649, %v5287
        %vm5289 = vcmp.eq.f32.partialorder %v4649, inf
        %v5290 = vsel %vm5289, %v4649, %v5288
        %vm5291 = vcmp.eq.f32.partialorder %v4649, 0.0
        %v5292 = vand.u32 %v4649, 2147483648
        %v5293 = vsel %vm5291, %v5292, %v5290
        %v5294 = vrsqrt.pop %v4652
        %v5295 = vmul.f32 %v4652, %v5294
        %vm5296 = vcmp.eq.f32.partialorder %v4652, inf
        %v5297 = vsel %vm5296, %v4652, %v5295
        %vm5298 = vcmp.eq.f32.partialorder %v4652, 0.0
        %v5299 = vand.u32 %v4652, 2147483648
        %v5300 = vsel %vm5298, %v5299, %v5297
        %v5301 = vrsqrt.pop %v4655
        %v5302 = vmul.f32 %v4655, %v5301
        %vm5303 = vcmp.eq.f32.partialorder %v4655, inf
        %v5304 = vsel %vm5303, %v4655, %v5302
        %vm5305 = vcmp.eq.f32.partialorder %v4655, 0.0
        %v5306 = vand.u32 %v4655, 2147483648
        %v5307 = vsel %vm5305, %v5306, %v5304
        %v5308 = vrsqrt.pop %v4658
        %v5309 = vmul.f32 %v4658, %v5308
        %vm5310 = vcmp.eq.f32.partialorder %v4658, inf
        %v5311 = vsel %vm5310, %v4658, %v5309
        %vm5312 = vcmp.eq.f32.partialorder %v4658, 0.0
        %v5313 = vand.u32 %v4658, 2147483648
        %v5314 = vsel %vm5312, %v5313, %v5311
        %v5315 = vrsqrt.pop %v4661
        %v5316 = vmul.f32 %v4661, %v5315
        %vm5317 = vcmp.eq.f32.partialorder %v4661, inf
        %v5318 = vsel %vm5317, %v4661, %v5316
        %vm5319 = vcmp.eq.f32.partialorder %v4661, 0.0
        %v5320 = vand.u32 %v4661, 2147483648
        %v5321 = vsel %vm5319, %v5320, %v5318
        %v5322 = vrsqrt.pop %v4664
        %v5323 = vmul.f32 %v4664, %v5322
        %vm5324 = vcmp.eq.f32.partialorder %v4664, inf
        %v5325 = vsel %vm5324, %v4664, %v5323
        %vm5326 = vcmp.eq.f32.partialorder %v4664, 0.0
        %v5327 = vand.u32 %v4664, 2147483648
        %v5328 = vsel %vm5326, %v5327, %v5325
        %v5329 = vrsqrt.pop %v4667
        %v5330 = vmul.f32 %v4667, %v5329
        %vm5331 = vcmp.eq.f32.partialorder %v4667, inf
        %v5332 = vsel %vm5331, %v4667, %v5330
        %vm5333 = vcmp.eq.f32.partialorder %v4667, 0.0
        %v5334 = vand.u32 %v4667, 2147483648
        %v5335 = vsel %vm5333, %v5334, %v5332
        %v5336 = vrsqrt.pop %v4670
        %v5337 = vmul.f32 %v4670, %v5336
        %vm5338 = vcmp.eq.f32.partialorder %v4670, inf
        %v5339 = vsel %vm5338, %v4670, %v5337
        %vm5340 = vcmp.eq.f32.partialorder %v4670, 0.0
        %v5341 = vand.u32 %v4670, 2147483648
        %v5342 = vsel %vm5340, %v5341, %v5339
        %v5343 = vrsqrt.pop %v4673
        %v5344 = vmul.f32 %v4673, %v5343
        %vm5345 = vcmp.eq.f32.partialorder %v4673, inf
        %v5346 = vsel %vm5345, %v4673, %v5344
        %vm5347 = vcmp.eq.f32.partialorder %v4673, 0.0
        %v5348 = vand.u32 %v4673, 2147483648
        %v5349 = vsel %vm5347, %v5348, %v5346
        %v5350 = vrsqrt.pop %v4676
        %v5351 = vmul.f32 %v4676, %v5350
        %vm5352 = vcmp.eq.f32.partialorder %v4676, inf
        %v5353 = vsel %vm5352, %v4676, %v5351
        %vm5354 = vcmp.eq.f32.partialorder %v4676, 0.0
        %v5355 = vand.u32 %v4676, 2147483648
        %v5356 = vsel %vm5354, %v5355, %v5353
        %v5357 = vrsqrt.pop %v4679
        %v5358 = vmul.f32 %v4679, %v5357
        %vm5359 = vcmp.eq.f32.partialorder %v4679, inf
        %v5360 = vsel %vm5359, %v4679, %v5358
        %vm5361 = vcmp.eq.f32.partialorder %v4679, 0.0
        %v5362 = vand.u32 %v4679, 2147483648
        %v5363 = vsel %vm5361, %v5362, %v5360
        %v5364 = vrsqrt.pop %v4682
        %v5365 = vmul.f32 %v4682, %v5364
        %vm5366 = vcmp.eq.f32.partialorder %v4682, inf
        %v5367 = vsel %vm5366, %v4682, %v5365
        %vm5368 = vcmp.eq.f32.partialorder %v4682, 0.0
        %v5369 = vand.u32 %v4682, 2147483648
        %v5370 = vsel %vm5368, %v5369, %v5367
        %v5371 = vrsqrt.pop %v4685
        %v5372 = vmul.f32 %v4685, %v5371
        %vm5373 = vcmp.eq.f32.partialorder %v4685, inf
        %v5374 = vsel %vm5373, %v4685, %v5372
        %vm5375 = vcmp.eq.f32.partialorder %v4685, 0.0
        %v5376 = vand.u32 %v4685, 2147483648
        %v5377 = vsel %vm5375, %v5376, %v5374
        %v5378 = vrsqrt.pop %v4688
        %v5379 = vmul.f32 %v4688, %v5378
        %vm5380 = vcmp.eq.f32.partialorder %v4688, inf
        %v5381 = vsel %vm5380, %v4688, %v5379
        %vm5382 = vcmp.eq.f32.partialorder %v4688, 0.0
        %v5383 = vand.u32 %v4688, 2147483648
        %v5384 = vsel %vm5382, %v5383, %v5381
        %v5385 = vrsqrt.pop %v4691
        %v5386 = vmul.f32 %v4691, %v5385
        %vm5387 = vcmp.eq.f32.partialorder %v4691, inf
        %v5388 = vsel %vm5387, %v4691, %v5386
        %vm5389 = vcmp.eq.f32.partialorder %v4691, 0.0
        %v5390 = vand.u32 %v4691, 2147483648
        %v5391 = vsel %vm5389, %v5390, %v5388
        %v5392 = vrsqrt.pop %v4694
        %v5393 = vmul.f32 %v4694, %v5392
        %vm5394 = vcmp.eq.f32.partialorder %v4694, inf
        %v5395 = vsel %vm5394, %v4694, %v5393
        %vm5396 = vcmp.eq.f32.partialorder %v4694, 0.0
        %v5397 = vand.u32 %v4694, 2147483648
        %v5398 = vsel %vm5396, %v5397, %v5395
        %v5399 = vrsqrt.pop %v4697
        %v5400 = vmul.f32 %v4697, %v5399
        %vm5401 = vcmp.eq.f32.partialorder %v4697, inf
        %v5402 = vsel %vm5401, %v4697, %v5400
        %vm5403 = vcmp.eq.f32.partialorder %v4697, 0.0
        %v5404 = vand.u32 %v4697, 2147483648
        %v5405 = vsel %vm5403, %v5404, %v5402
        %v5406 = vrsqrt.pop %v4700
        %v5407 = vmul.f32 %v4700, %v5406
        %vm5408 = vcmp.eq.f32.partialorder %v4700, inf
        %v5409 = vsel %vm5408, %v4700, %v5407
        %vm5410 = vcmp.eq.f32.partialorder %v4700, 0.0
        %v5411 = vand.u32 %v4700, 2147483648
        %v5412 = vsel %vm5410, %v5411, %v5409
        %v5413 = vrsqrt.pop %v4703
        %v5414 = vmul.f32 %v4703, %v5413
        %vm5415 = vcmp.eq.f32.partialorder %v4703, inf
        %v5416 = vsel %vm5415, %v4703, %v5414
        %vm5417 = vcmp.eq.f32.partialorder %v4703, 0.0
        %v5418 = vand.u32 %v4703, 2147483648
        %v5419 = vsel %vm5417, %v5418, %v5416
        %v5420 = vrsqrt.pop %v4706
        %v5421 = vmul.f32 %v4706, %v5420
        %vm5422 = vcmp.eq.f32.partialorder %v4706, inf
        %v5423 = vsel %vm5422, %v4706, %v5421
        %vm5424 = vcmp.eq.f32.partialorder %v4706, 0.0
        %v5425 = vand.u32 %v4706, 2147483648
        %v5426 = vsel %vm5424, %v5425, %v5423
        %v5427 = vrsqrt.pop %v4709
        %v5428 = vmul.f32 %v4709, %v5427
        %vm5429 = vcmp.eq.f32.partialorder %v4709, inf
        %v5430 = vsel %vm5429, %v4709, %v5428
        %vm5431 = vcmp.eq.f32.partialorder %v4709, 0.0
        %v5432 = vand.u32 %v4709, 2147483648
        %v5433 = vsel %vm5431, %v5432, %v5430
        %v5434 = vrsqrt.pop %v4712
        %v5435 = vmul.f32 %v4712, %v5434
        %vm5436 = vcmp.eq.f32.partialorder %v4712, inf
        %v5437 = vsel %vm5436, %v4712, %v5435
        %vm5438 = vcmp.eq.f32.partialorder %v4712, 0.0
        %v5439 = vand.u32 %v4712, 2147483648
        %v5440 = vsel %vm5438, %v5439, %v5437
        %v5441 = vrsqrt.pop %v4715
        %v5442 = vmul.f32 %v4715, %v5441
        %vm5443 = vcmp.eq.f32.partialorder %v4715, inf
        %v5444 = vsel %vm5443, %v4715, %v5442
        %vm5445 = vcmp.eq.f32.partialorder %v4715, 0.0
        %v5446 = vand.u32 %v4715, 2147483648
        %v5447 = vsel %vm5445, %v5446, %v5444
        %v5448 = vrsqrt.pop %v4718
        %v5449 = vmul.f32 %v4718, %v5448
        %vm5450 = vcmp.eq.f32.partialorder %v4718, inf
        %v5451 = vsel %vm5450, %v4718, %v5449
        %vm5452 = vcmp.eq.f32.partialorder %v4718, 0.0
        %v5453 = vand.u32 %v4718, 2147483648
        %v5454 = vsel %vm5452, %v5453, %v5451
        %v5455 = vrsqrt.pop %v4721
        %v5456 = vmul.f32 %v4721, %v5455
        %vm5457 = vcmp.eq.f32.partialorder %v4721, inf
        %v5458 = vsel %vm5457, %v4721, %v5456
        %vm5459 = vcmp.eq.f32.partialorder %v4721, 0.0
        %v5460 = vand.u32 %v4721, 2147483648
        %v5461 = vsel %vm5459, %v5460, %v5458
        %v5462 = vrsqrt.pop %v4724
        %v5463 = vmul.f32 %v4724, %v5462
        %vm5464 = vcmp.eq.f32.partialorder %v4724, inf
        %v5465 = vsel %vm5464, %v4724, %v5463
        %vm5466 = vcmp.eq.f32.partialorder %v4724, 0.0
        %v5467 = vand.u32 %v4724, 2147483648
        %v5468 = vsel %vm5466, %v5467, %v5465
        %v5469 = vrsqrt.pop %v4727
        %v5470 = vmul.f32 %v4727, %v5469
        %vm5471 = vcmp.eq.f32.partialorder %v4727, inf
        %v5472 = vsel %vm5471, %v4727, %v5470
        %vm5473 = vcmp.eq.f32.partialorder %v4727, 0.0
        %v5474 = vand.u32 %v4727, 2147483648
        %v5475 = vsel %vm5473, %v5474, %v5472
        %v5476 = vrsqrt.pop %v4730
        %v5477 = vmul.f32 %v4730, %v5476
        %vm5478 = vcmp.eq.f32.partialorder %v4730, inf
        %v5479 = vsel %vm5478, %v4730, %v5477
        %vm5480 = vcmp.eq.f32.partialorder %v4730, 0.0
        %v5481 = vand.u32 %v4730, 2147483648
        %v5482 = vsel %vm5480, %v5481, %v5479
        %v5483 = vrsqrt.pop %v4733
        %v5484 = vmul.f32 %v4733, %v5483
        %vm5485 = vcmp.eq.f32.partialorder %v4733, inf
        %v5486 = vsel %vm5485, %v4733, %v5484
        %vm5487 = vcmp.eq.f32.partialorder %v4733, 0.0
        %v5488 = vand.u32 %v4733, 2147483648
        %v5489 = vsel %vm5487, %v5488, %v5486
        %v5490 = vrsqrt.pop %v4736
        %v5491 = vmul.f32 %v4736, %v5490
        %vm5492 = vcmp.eq.f32.partialorder %v4736, inf
        %v5493 = vsel %vm5492, %v4736, %v5491
        %vm5494 = vcmp.eq.f32.partialorder %v4736, 0.0
        %v5495 = vand.u32 %v4736, 2147483648
        %v5496 = vsel %vm5494, %v5495, %v5493
        %v5497 = vrsqrt.pop %v4739
        %v5498 = vmul.f32 %v4739, %v5497
        %vm5499 = vcmp.eq.f32.partialorder %v4739, inf
        %v5500 = vsel %vm5499, %v4739, %v5498
        %vm5501 = vcmp.eq.f32.partialorder %v4739, 0.0
        %v5502 = vand.u32 %v4739, 2147483648
        %v5503 = vsel %vm5501, %v5502, %v5500
        %v5504 = vrsqrt.pop %v4742
        %v5505 = vmul.f32 %v4742, %v5504
        %vm5506 = vcmp.eq.f32.partialorder %v4742, inf
        %v5507 = vsel %vm5506, %v4742, %v5505
        %vm5508 = vcmp.eq.f32.partialorder %v4742, 0.0
        %v5509 = vand.u32 %v4742, 2147483648
        %v5510 = vsel %vm5508, %v5509, %v5507
        %v5511 = vrsqrt.pop %v4745
        %v5512 = vmul.f32 %v4745, %v5511
        %vm5513 = vcmp.eq.f32.partialorder %v4745, inf
        %v5514 = vsel %vm5513, %v4745, %v5512
        %vm5515 = vcmp.eq.f32.partialorder %v4745, 0.0
        %v5516 = vand.u32 %v4745, 2147483648
        %v5517 = vsel %vm5515, %v5516, %v5514
        %v5518 = vrsqrt.pop %v4748
        %v5519 = vmul.f32 %v4748, %v5518
        %vm5520 = vcmp.eq.f32.partialorder %v4748, inf
        %v5521 = vsel %vm5520, %v4748, %v5519
        %vm5522 = vcmp.eq.f32.partialorder %v4748, 0.0
        %v5523 = vand.u32 %v4748, 2147483648
        %v5524 = vsel %vm5522, %v5523, %v5521
        %v5525 = vrsqrt.pop %v4751
        %v5526 = vmul.f32 %v4751, %v5525
        %vm5527 = vcmp.eq.f32.partialorder %v4751, inf
        %v5528 = vsel %vm5527, %v4751, %v5526
        %vm5529 = vcmp.eq.f32.partialorder %v4751, 0.0
        %v5530 = vand.u32 %v4751, 2147483648
        %v5531 = vsel %vm5529, %v5530, %v5528
        %v5532 = vrsqrt.pop %v4754
        %v5533 = vmul.f32 %v4754, %v5532
        %vm5534 = vcmp.eq.f32.partialorder %v4754, inf
        %v5535 = vsel %vm5534, %v4754, %v5533
        %vm5536 = vcmp.eq.f32.partialorder %v4754, 0.0
        %v5537 = vand.u32 %v4754, 2147483648
        %v5538 = vsel %vm5536, %v5537, %v5535
        %v5539 = vrsqrt.pop %v4757
        %v5540 = vmul.f32 %v4757, %v5539
        %vm5541 = vcmp.eq.f32.partialorder %v4757, inf
        %v5542 = vsel %vm5541, %v4757, %v5540
        %vm5543 = vcmp.eq.f32.partialorder %v4757, 0.0
        %v5544 = vand.u32 %v4757, 2147483648
        %v5545 = vsel %vm5543, %v5544, %v5542
        %v5546 = vrsqrt.pop %v4760
        %v5547 = vmul.f32 %v4760, %v5546
        %vm5548 = vcmp.eq.f32.partialorder %v4760, inf
        %v5549 = vsel %vm5548, %v4760, %v5547
        %vm5550 = vcmp.eq.f32.partialorder %v4760, 0.0
        %v5551 = vand.u32 %v4760, 2147483648
        %v5552 = vsel %vm5550, %v5551, %v5549
        %v5553 = vrsqrt.pop %v4763
        %v5554 = vmul.f32 %v4763, %v5553
        %vm5555 = vcmp.eq.f32.partialorder %v4763, inf
        %v5556 = vsel %vm5555, %v4763, %v5554
        %vm5557 = vcmp.eq.f32.partialorder %v4763, 0.0
        %v5558 = vand.u32 %v4763, 2147483648
        %v5559 = vsel %vm5557, %v5558, %v5556
        %v5560 = vrsqrt.pop %v4766
        %v5561 = vmul.f32 %v4766, %v5560
        %vm5562 = vcmp.eq.f32.partialorder %v4766, inf
        %v5563 = vsel %vm5562, %v4766, %v5561
        %vm5564 = vcmp.eq.f32.partialorder %v4766, 0.0
        %v5565 = vand.u32 %v4766, 2147483648
        %v5566 = vsel %vm5564, %v5565, %v5563
        %v5567 = vrsqrt.pop %v4769
        %v5568 = vmul.f32 %v4769, %v5567
        %vm5569 = vcmp.eq.f32.partialorder %v4769, inf
        %v5570 = vsel %vm5569, %v4769, %v5568
        %vm5571 = vcmp.eq.f32.partialorder %v4769, 0.0
        %v5572 = vand.u32 %v4769, 2147483648
        %v5573 = vsel %vm5571, %v5572, %v5570
        %v5574 = vrsqrt.pop %v4772
        %v5575 = vmul.f32 %v4772, %v5574
        %vm5576 = vcmp.eq.f32.partialorder %v4772, inf
        %v5577 = vsel %vm5576, %v4772, %v5575
        %vm5578 = vcmp.eq.f32.partialorder %v4772, 0.0
        %v5579 = vand.u32 %v4772, 2147483648
        %v5580 = vsel %vm5578, %v5579, %v5577
        %v5581 = vrsqrt.pop %v4775
        %v5582 = vmul.f32 %v4775, %v5581
        %vm5583 = vcmp.eq.f32.partialorder %v4775, inf
        %v5584 = vsel %vm5583, %v4775, %v5582
        %vm5585 = vcmp.eq.f32.partialorder %v4775, 0.0
        %v5586 = vand.u32 %v4775, 2147483648
        %v5587 = vsel %vm5585, %v5586, %v5584
        %v5588 = vrsqrt.pop %v4778
        %v5589 = vmul.f32 %v4778, %v5588
        %vm5590 = vcmp.eq.f32.partialorder %v4778, inf
        %v5591 = vsel %vm5590, %v4778, %v5589
        %vm5592 = vcmp.eq.f32.partialorder %v4778, 0.0
        %v5593 = vand.u32 %v4778, 2147483648
        %v5594 = vsel %vm5592, %v5593, %v5591
        %v5595 = vrsqrt.pop %v4781
        %v5596 = vmul.f32 %v4781, %v5595
        %vm5597 = vcmp.eq.f32.partialorder %v4781, inf
        %v5598 = vsel %vm5597, %v4781, %v5596
        %vm5599 = vcmp.eq.f32.partialorder %v4781, 0.0
        %v5600 = vand.u32 %v4781, 2147483648
        %v5601 = vsel %vm5599, %v5600, %v5598
        %v5602 = vrsqrt.pop %v4784
        %v5603 = vmul.f32 %v4784, %v5602
        %vm5604 = vcmp.eq.f32.partialorder %v4784, inf
        %v5605 = vsel %vm5604, %v4784, %v5603
        %vm5606 = vcmp.eq.f32.partialorder %v4784, 0.0
        %v5607 = vand.u32 %v4784, 2147483648
        %v5608 = vsel %vm5606, %v5607, %v5605
        %v5609 = vrsqrt.pop %v4787
        %v5610 = vmul.f32 %v4787, %v5609
        %vm5611 = vcmp.eq.f32.partialorder %v4787, inf
        %v5612 = vsel %vm5611, %v4787, %v5610
        %vm5613 = vcmp.eq.f32.partialorder %v4787, 0.0
        %v5614 = vand.u32 %v4787, 2147483648
        %v5615 = vsel %vm5613, %v5614, %v5612
        %v5616 = vrsqrt.pop %v4790
        %v5617 = vmul.f32 %v4790, %v5616
        %vm5618 = vcmp.eq.f32.partialorder %v4790, inf
        %v5619 = vsel %vm5618, %v4790, %v5617
        %vm5620 = vcmp.eq.f32.partialorder %v4790, 0.0
        %v5621 = vand.u32 %v4790, 2147483648
        %v5622 = vsel %vm5620, %v5621, %v5619
        %v5623 = vrsqrt.pop %v4793
        %v5624 = vmul.f32 %v4793, %v5623
        %vm5625 = vcmp.eq.f32.partialorder %v4793, inf
        %v5626 = vsel %vm5625, %v4793, %v5624
        %vm5627 = vcmp.eq.f32.partialorder %v4793, 0.0
        %v5628 = vand.u32 %v4793, 2147483648
        %v5629 = vsel %vm5627, %v5628, %v5626
        %v5630 = vrsqrt.pop %v4796
        %v5631 = vmul.f32 %v4796, %v5630
        %vm5632 = vcmp.eq.f32.partialorder %v4796, inf
        %v5633 = vsel %vm5632, %v4796, %v5631
        %vm5634 = vcmp.eq.f32.partialorder %v4796, 0.0
        %v5635 = vand.u32 %v4796, 2147483648
        %v5636 = vsel %vm5634, %v5635, %v5633
        %v5637 = vrsqrt.pop %v4799
        %v5638 = vmul.f32 %v4799, %v5637
        %vm5639 = vcmp.eq.f32.partialorder %v4799, inf
        %v5640 = vsel %vm5639, %v4799, %v5638
        %vm5641 = vcmp.eq.f32.partialorder %v4799, 0.0
        %v5642 = vand.u32 %v4799, 2147483648
        %v5643 = vsel %vm5641, %v5642, %v5640
        %v5644 = vrsqrt.pop %v4802
        %v5645 = vmul.f32 %v4802, %v5644
        %vm5646 = vcmp.eq.f32.partialorder %v4802, inf
        %v5647 = vsel %vm5646, %v4802, %v5645
        %vm5648 = vcmp.eq.f32.partialorder %v4802, 0.0
        %v5649 = vand.u32 %v4802, 2147483648
        %v5650 = vsel %vm5648, %v5649, %v5647
        %v5651 = vrsqrt.pop %v4805
        %v5652 = vmul.f32 %v4805, %v5651
        %vm5653 = vcmp.eq.f32.partialorder %v4805, inf
        %v5654 = vsel %vm5653, %v4805, %v5652
        %vm5655 = vcmp.eq.f32.partialorder %v4805, 0.0
        %v5656 = vand.u32 %v4805, 2147483648
        %v5657 = vsel %vm5655, %v5656, %v5654
        %v5658 = vrsqrt.pop %v4808
        %v5659 = vmul.f32 %v4808, %v5658
        %vm5660 = vcmp.eq.f32.partialorder %v4808, inf
        %v5661 = vsel %vm5660, %v4808, %v5659
        %vm5662 = vcmp.eq.f32.partialorder %v4808, 0.0
        %v5663 = vand.u32 %v4808, 2147483648
        %v5664 = vsel %vm5662, %v5663, %v5661
        %v5665 = vrsqrt.pop %v4811
        %v5666 = vmul.f32 %v4811, %v5665
        %vm5667 = vcmp.eq.f32.partialorder %v4811, inf
        %v5668 = vsel %vm5667, %v4811, %v5666
        %vm5669 = vcmp.eq.f32.partialorder %v4811, 0.0
        %v5670 = vand.u32 %v4811, 2147483648
        %v5671 = vsel %vm5669, %v5670, %v5668
        %v5672 = vrsqrt.pop %v4814
        %v5673 = vmul.f32 %v4814, %v5672
        %vm5674 = vcmp.eq.f32.partialorder %v4814, inf
        %v5675 = vsel %vm5674, %v4814, %v5673
        %vm5676 = vcmp.eq.f32.partialorder %v4814, 0.0
        %v5677 = vand.u32 %v4814, 2147483648
        %v5678 = vsel %vm5676, %v5677, %v5675
        %v5679 = vrsqrt.pop %v4817
        %v5680 = vmul.f32 %v4817, %v5679
        %vm5681 = vcmp.eq.f32.partialorder %v4817, inf
        %v5682 = vsel %vm5681, %v4817, %v5680
        %vm5683 = vcmp.eq.f32.partialorder %v4817, 0.0
        %v5684 = vand.u32 %v4817, 2147483648
        %v5685 = vsel %vm5683, %v5684, %v5682
        %v5686 = vrsqrt.pop %v4820
        %v5687 = vmul.f32 %v4820, %v5686
        %vm5688 = vcmp.eq.f32.partialorder %v4820, inf
        %v5689 = vsel %vm5688, %v4820, %v5687
        %vm5690 = vcmp.eq.f32.partialorder %v4820, 0.0
        %v5691 = vand.u32 %v4820, 2147483648
        %v5692 = vsel %vm5690, %v5691, %v5689
        %v5693 = vrsqrt.pop %v4823
        %v5694 = vmul.f32 %v4823, %v5693
        %vm5695 = vcmp.eq.f32.partialorder %v4823, inf
        %v5696 = vsel %vm5695, %v4823, %v5694
        %vm5697 = vcmp.eq.f32.partialorder %v4823, 0.0
        %v5698 = vand.u32 %v4823, 2147483648
        %v5699 = vsel %vm5697, %v5698, %v5696
        %v5700 = vrsqrt.pop %v4826
        %v5701 = vmul.f32 %v4826, %v5700
        %vm5702 = vcmp.eq.f32.partialorder %v4826, inf
        %v5703 = vsel %vm5702, %v4826, %v5701
        %vm5704 = vcmp.eq.f32.partialorder %v4826, 0.0
        %v5705 = vand.u32 %v4826, 2147483648
        %v5706 = vsel %vm5704, %v5705, %v5703
        %v5707 = vrsqrt.pop %v4829
        %v5708 = vmul.f32 %v4829, %v5707
        %vm5709 = vcmp.eq.f32.partialorder %v4829, inf
        %v5710 = vsel %vm5709, %v4829, %v5708
        %vm5711 = vcmp.eq.f32.partialorder %v4829, 0.0
        %v5712 = vand.u32 %v4829, 2147483648
        %v5713 = vsel %vm5711, %v5712, %v5710
        %v5714 = vrsqrt.pop %v4832
        %v5715 = vmul.f32 %v4832, %v5714
        %vm5716 = vcmp.eq.f32.partialorder %v4832, inf
        %v5717 = vsel %vm5716, %v4832, %v5715
        %vm5718 = vcmp.eq.f32.partialorder %v4832, 0.0
        %v5719 = vand.u32 %v4832, 2147483648
        %v5720 = vsel %vm5718, %v5719, %v5717
        %v5721 = vrsqrt.pop %v4835
        %v5722 = vmul.f32 %v4835, %v5721
        %vm5723 = vcmp.eq.f32.partialorder %v4835, inf
        %v5724 = vsel %vm5723, %v4835, %v5722
        %vm5725 = vcmp.eq.f32.partialorder %v4835, 0.0
        %v5726 = vand.u32 %v4835, 2147483648
        %v5727 = vsel %vm5725, %v5726, %v5724
        %v5728 = vrsqrt.pop %v4838
        %v5729 = vmul.f32 %v4838, %v5728
        %vm5730 = vcmp.eq.f32.partialorder %v4838, inf
        %v5731 = vsel %vm5730, %v4838, %v5729
        %vm5732 = vcmp.eq.f32.partialorder %v4838, 0.0
        %v5733 = vand.u32 %v4838, 2147483648
        %v5734 = vsel %vm5732, %v5733, %v5731
        %v5735 = vadd.f32 %v3437, 1e-09
        %v5736 = vadd.f32 %v3444, 1e-09
        %v5737 = vadd.f32 %v3451, 1e-09
        %v5738 = vadd.f32 %v3458, 1e-09
        %v5739 = vadd.f32 %v3465, 1e-09
        %v5740 = vadd.f32 %v3472, 1e-09
        %v5741 = vadd.f32 %v3479, 1e-09
        %v5742 = vadd.f32 %v3486, 1e-09
        %v5743 = vadd.f32 %v3493, 1e-09
        %v5744 = vadd.f32 %v3500, 1e-09
        %v5745 = vadd.f32 %v3507, 1e-09
        %v5746 = vadd.f32 %v3514, 1e-09
        %v5747 = vadd.f32 %v3521, 1e-09
        %v5748 = vadd.f32 %v3528, 1e-09
        %v5749 = vadd.f32 %v3535, 1e-09
        %v5750 = vadd.f32 %v3542, 1e-09
        %v5751 = vadd.f32 %v3549, 1e-09
        %v5752 = vadd.f32 %v3556, 1e-09
        %v5753 = vadd.f32 %v3563, 1e-09
        %v5754 = vadd.f32 %v3570, 1e-09
        %v5755 = vadd.f32 %v3577, 1e-09
        %v5756 = vadd.f32 %v3584, 1e-09
        %v5757 = vadd.f32 %v3591, 1e-09
        %v5758 = vadd.f32 %v3598, 1e-09
        %v5759 = vadd.f32 %v3605, 1e-09
        %v5760 = vadd.f32 %v3612, 1e-09
        %v5761 = vadd.f32 %v3619, 1e-09
        %v5762 = vadd.f32 %v3626, 1e-09
        %v5763 = vadd.f32 %v3633, 1e-09
        %v5764 = vadd.f32 %v3640, 1e-09
        %v5765 = vadd.f32 %v3647, 1e-09
        %v5766 = vadd.f32 %v3654, 1e-09
        %v5767 = vadd.f32 %v3661, 1e-09
        %v5768 = vadd.f32 %v3668, 1e-09
        %v5769 = vadd.f32 %v3675, 1e-09
        %v5770 = vadd.f32 %v3682, 1e-09
        %v5771 = vadd.f32 %v3689, 1e-09
        %v5772 = vadd.f32 %v3696, 1e-09
        %v5773 = vadd.f32 %v3703, 1e-09
        %v5774 = vadd.f32 %v3710, 1e-09
        %v5775 = vadd.f32 %v3717, 1e-09
        %v5776 = vadd.f32 %v3724, 1e-09
        %v5777 = vadd.f32 %v3731, 1e-09
        %v5778 = vadd.f32 %v3738, 1e-09
        %v5779 = vadd.f32 %v3745, 1e-09
        %v5780 = vadd.f32 %v3752, 1e-09
        %v5781 = vadd.f32 %v3759, 1e-09
        %v5782 = vadd.f32 %v3766, 1e-09
        %v5783 = vadd.f32 %v3773, 1e-09
        %v5784 = vadd.f32 %v3780, 1e-09
        %v5785 = vadd.f32 %v3787, 1e-09
        %v5786 = vadd.f32 %v3794, 1e-09
        %v5787 = vadd.f32 %v3801, 1e-09
        %v5788 = vadd.f32 %v3808, 1e-09
        %v5789 = vadd.f32 %v3815, 1e-09
        %v5790 = vadd.f32 %v3822, 1e-09
        %v5791 = vadd.f32 %v3829, 1e-09
        %v5792 = vadd.f32 %v3836, 1e-09
        %v5793 = vadd.f32 %v3843, 1e-09
        %v5794 = vadd.f32 %v3850, 1e-09
        %v5795 = vadd.f32 %v3857, 1e-09
        %v5796 = vadd.f32 %v3864, 1e-09
        %v5797 = vadd.f32 %v3871, 1e-09
        %v5798 = vadd.f32 %v3878, 1e-09
        %v5799 = vadd.f32 %v3885, 1e-09
        %v5800 = vadd.f32 %v3892, 1e-09
        %v5801 = vadd.f32 %v3899, 1e-09
        %v5802 = vadd.f32 %v3906, 1e-09
        %v5803 = vadd.f32 %v3913, 1e-09
        %v5804 = vadd.f32 %v3920, 1e-09
        %v5805 = vadd.f32 %v3927, 1e-09
        %v5806 = vadd.f32 %v3934, 1e-09
        %v5807 = vadd.f32 %v3941, 1e-09
        %v5808 = vadd.f32 %v3948, 1e-09
        %v5809 = vadd.f32 %v3955, 1e-09
        %v5810 = vadd.f32 %v3962, 1e-09
        %v5811 = vadd.f32 %v3969, 1e-09
        %v5812 = vadd.f32 %v3976, 1e-09
        %v5813 = vadd.f32 %v3983, 1e-09
        %v5814 = vadd.f32 %v3990, 1e-09
        %v5815 = vadd.f32 %v3997, 1e-09
        %v5816 = vadd.f32 %v4004, 1e-09
        %v5817 = vadd.f32 %v4011, 1e-09
        %v5818 = vadd.f32 %v4018, 1e-09
        %v5819 = vadd.f32 %v4025, 1e-09
        %v5820 = vadd.f32 %v4032, 1e-09
        %v5821 = vadd.f32 %v4039, 1e-09
        %v5822 = vadd.f32 %v4046, 1e-09
        %v5823 = vadd.f32 %v4053, 1e-09
        %v5824 = vadd.f32 %v4060, 1e-09
        %v5825 = vadd.f32 %v4067, 1e-09
        %v5826 = vadd.f32 %v4074, 1e-09
        %v5827 = vadd.f32 %v4081, 1e-09
        %v5828 = vadd.f32 %v4088, 1e-09
        %v5829 = vadd.f32 %v4095, 1e-09
        %v5830 = vadd.f32 %v4102, 1e-09
        %v5831 = vadd.f32 %v4109, 1e-09
        %v5832 = vadd.f32 %v4116, 1e-09
        %v5833 = vadd.f32 %v4123, 1e-09
        %v5834 = vadd.f32 %v4130, 1e-09
        %v5835 = vadd.f32 %v4137, 1e-09
        %v5836 = vadd.f32 %v4144, 1e-09
        %v5837 = vadd.f32 %v4151, 1e-09
        %v5838 = vadd.f32 %v4158, 1e-09
        %v5839 = vadd.f32 %v4165, 1e-09
        %v5840 = vadd.f32 %v4172, 1e-09
        %v5841 = vadd.f32 %v4179, 1e-09
        %v5842 = vadd.f32 %v4186, 1e-09
        %v5843 = vadd.f32 %v4193, 1e-09
        %v5844 = vadd.f32 %v4200, 1e-09
        %v5845 = vadd.f32 %v4207, 1e-09
        %v5846 = vadd.f32 %v4214, 1e-09
        %v5847 = vadd.f32 %v4221, 1e-09
        %v5848 = vadd.f32 %v4228, 1e-09
        %v5849 = vadd.f32 %v4235, 1e-09
        %v5850 = vadd.f32 %v4242, 1e-09
        %v5851 = vadd.f32 %v4249, 1e-09
        %v5852 = vadd.f32 %v4256, 1e-09
        %v5853 = vadd.f32 %v4263, 1e-09
        %v5854 = vadd.f32 %v4270, 1e-09
        %v5855 = vadd.f32 %v4277, 1e-09
        %v5856 = vadd.f32 %v4284, 1e-09
        %v5857 = vadd.f32 %v4291, 1e-09
        %v5858 = vadd.f32 %v4298, 1e-09
        %v5859 = vadd.f32 %v4305, 1e-09
        %v5860 = vadd.f32 %v4312, 1e-09
        %v5861 = vadd.f32 %v4319, 1e-09
        %v5862 = vadd.f32 %v4326, 1e-09
        %v5863 = vrcp.pop %v5735
        %v5864 = vmul.f32 %v2663, %v5863
        %v5865 = vrcp.pop %v5736
        %v5866 = vmul.f32 %v2664, %v5865
        %v5867 = vrcp.pop %v5737
        %v5868 = vmul.f32 %v2665, %v5867
        %v5869 = vrcp.pop %v5738
        %v5870 = vmul.f32 %v2666, %v5869
        %v5871 = vrcp.pop %v5739
        %v5872 = vmul.f32 %v2667, %v5871
        %v5873 = vrcp.pop %v5740
        %v5874 = vmul.f32 %v2668, %v5873
        %v5875 = vrcp.pop %v5741
        %v5876 = vmul.f32 %v2669, %v5875
        %v5877 = vrcp.pop %v5742
        %v5878 = vmul.f32 %v2670, %v5877
        %v5879 = vrcp.pop %v5743
        %v5880 = vmul.f32 %v2671, %v5879
        %v5881 = vrcp.pop %v5744
        %v5882 = vmul.f32 %v2672, %v5881
        %v5883 = vrcp.pop %v5745
        %v5884 = vmul.f32 %v2673, %v5883
        %v5885 = vrcp.pop %v5746
        %v5886 = vmul.f32 %v2674, %v5885
        %v5887 = vrcp.pop %v5747
        %v5888 = vmul.f32 %v2675, %v5887
        %v5889 = vrcp.pop %v5748
        %v5890 = vmul.f32 %v2676, %v5889
        %v5891 = vrcp.pop %v5749
        %v5892 = vmul.f32 %v2677, %v5891
        %v5893 = vrcp.pop %v5750
        %v5894 = vmul.f32 %v2678, %v5893
        %v5895 = vrcp.pop %v5751
        %v5896 = vmul.f32 %v2679, %v5895
        %v5897 = vrcp.pop %v5752
        %v5898 = vmul.f32 %v2680, %v5897
        %v5899 = vrcp.pop %v5753
        %v5900 = vmul.f32 %v2681, %v5899
        %v5901 = vrcp.pop %v5754
        %v5902 = vmul.f32 %v2682, %v5901
        %v5903 = vrcp.pop %v5755
        %v5904 = vmul.f32 %v2683, %v5903
        %v5905 = vrcp.pop %v5756
        %v5906 = vmul.f32 %v2684, %v5905
        %v5907 = vrcp.pop %v5757
        %v5908 = vmul.f32 %v2685, %v5907
        %v5909 = vrcp.pop %v5758
        %v5910 = vmul.f32 %v2686, %v5909
        %v5911 = vrcp.pop %v5759
        %v5912 = vmul.f32 %v2687, %v5911
        %v5913 = vrcp.pop %v5760
        %v5914 = vmul.f32 %v2688, %v5913
        %v5915 = vrcp.pop %v5761
        %v5916 = vmul.f32 %v2689, %v5915
        %v5917 = vrcp.pop %v5762
        %v5918 = vmul.f32 %v2690, %v5917
        %v5919 = vrcp.pop %v5763
        %v5920 = vmul.f32 %v2691, %v5919
        %v5921 = vrcp.pop %v5764
        %v5922 = vmul.f32 %v2692, %v5921
        %v5923 = vrcp.pop %v5765
        %v5924 = vmul.f32 %v2693, %v5923
        %v5925 = vrcp.pop %v5766
        %v5926 = vmul.f32 %v2694, %v5925
        %v5927 = vrcp.pop %v5767
        %v5928 = vmul.f32 %v2695, %v5927
        %v5929 = vrcp.pop %v5768
        %v5930 = vmul.f32 %v2696, %v5929
        %v5931 = vrcp.pop %v5769
        %v5932 = vmul.f32 %v2697, %v5931
        %v5933 = vrcp.pop %v5770
        %v5934 = vmul.f32 %v2698, %v5933
        %v5935 = vrcp.pop %v5771
        %v5936 = vmul.f32 %v2699, %v5935
        %v5937 = vrcp.pop %v5772
        %v5938 = vmul.f32 %v2700, %v5937
        %v5939 = vrcp.pop %v5773
        %v5940 = vmul.f32 %v2701, %v5939
        %v5941 = vrcp.pop %v5774
        %v5942 = vmul.f32 %v2702, %v5941
        %v5943 = vrcp.pop %v5775
        %v5944 = vmul.f32 %v2703, %v5943
        %v5945 = vrcp.pop %v5776
        %v5946 = vmul.f32 %v2704, %v5945
        %v5947 = vrcp.pop %v5777
        %v5948 = vmul.f32 %v2705, %v5947
        %v5949 = vrcp.pop %v5778
        %v5950 = vmul.f32 %v2706, %v5949
        %v5951 = vrcp.pop %v5779
        %v5952 = vmul.f32 %v2707, %v5951
        %v5953 = vrcp.pop %v5780
        %v5954 = vmul.f32 %v2708, %v5953
        %v5955 = vrcp.pop %v5781
        %v5956 = vmul.f32 %v2709, %v5955
        %v5957 = vrcp.pop %v5782
        %v5958 = vmul.f32 %v2710, %v5957
        %v5959 = vrcp.pop %v5783
        %v5960 = vmul.f32 %v2711, %v5959
        %v5961 = vrcp.pop %v5784
        %v5962 = vmul.f32 %v2712, %v5961
        %v5963 = vrcp.pop %v5785
        %v5964 = vmul.f32 %v2713, %v5963
        %v5965 = vrcp.pop %v5786
        %v5966 = vmul.f32 %v2714, %v5965
        %v5967 = vrcp.pop %v5787
        %v5968 = vmul.f32 %v2715, %v5967
        %v5969 = vrcp.pop %v5788
        %v5970 = vmul.f32 %v2716, %v5969
        %v5971 = vrcp.pop %v5789
        %v5972 = vmul.f32 %v2717, %v5971
        %v5973 = vrcp.pop %v5790
        %v5974 = vmul.f32 %v2718, %v5973
        %v5975 = vrcp.pop %v5791
        %v5976 = vmul.f32 %v2719, %v5975
        %v5977 = vrcp.pop %v5792
        %v5978 = vmul.f32 %v2720, %v5977
        %v5979 = vrcp.pop %v5793
        %v5980 = vmul.f32 %v2721, %v5979
        %v5981 = vrcp.pop %v5794
        %v5982 = vmul.f32 %v2722, %v5981
        %v5983 = vrcp.pop %v5795
        %v5984 = vmul.f32 %v2723, %v5983
        %v5985 = vrcp.pop %v5796
        %v5986 = vmul.f32 %v2724, %v5985
        %v5987 = vrcp.pop %v5797
        %v5988 = vmul.f32 %v2725, %v5987
        %v5989 = vrcp.pop %v5798
        %v5990 = vmul.f32 %v2726, %v5989
        %v5991 = vrcp.pop %v5799
        %v5992 = vmul.f32 %v2727, %v5991
        %v5993 = vrcp.pop %v5800
        %v5994 = vmul.f32 %v2728, %v5993
        %v5995 = vrcp.pop %v5801
        %v5996 = vmul.f32 %v2729, %v5995
        %v5997 = vrcp.pop %v5802
        %v5998 = vmul.f32 %v2730, %v5997
        %v5999 = vrcp.pop %v5803
        %v6000 = vmul.f32 %v2731, %v5999
        %v6001 = vrcp.pop %v5804
        %v6002 = vmul.f32 %v2732, %v6001
        %v6003 = vrcp.pop %v5805
        %v6004 = vmul.f32 %v2733, %v6003
        %v6005 = vrcp.pop %v5806
        %v6006 = vmul.f32 %v2734, %v6005
        %v6007 = vrcp.pop %v5807
        %v6008 = vmul.f32 %v2735, %v6007
        %v6009 = vrcp.pop %v5808
        %v6010 = vmul.f32 %v2736, %v6009
        %v6011 = vrcp.pop %v5809
        %v6012 = vmul.f32 %v2737, %v6011
        %v6013 = vrcp.pop %v5810
        %v6014 = vmul.f32 %v2738, %v6013
        %v6015 = vrcp.pop %v5811
        %v6016 = vmul.f32 %v2739, %v6015
        %v6017 = vrcp.pop %v5812
        %v6018 = vmul.f32 %v2740, %v6017
        %v6019 = vrcp.pop %v5813
        %v6020 = vmul.f32 %v2741, %v6019
        %v6021 = vrcp.pop %v5814
        %v6022 = vmul.f32 %v2742, %v6021
        %v6023 = vrcp.pop %v5815
        %v6024 = vmul.f32 %v2743, %v6023
        %v6025 = vrcp.pop %v5816
        %v6026 = vmul.f32 %v2744, %v6025
        %v6027 = vrcp.pop %v5817
        %v6028 = vmul.f32 %v2745, %v6027
        %v6029 = vrcp.pop %v5818
        %v6030 = vmul.f32 %v2746, %v6029
        %v6031 = vrcp.pop %v5819
        %v6032 = vmul.f32 %v2747, %v6031
        %v6033 = vrcp.pop %v5820
        %v6034 = vmul.f32 %v2748, %v6033
        %v6035 = vrcp.pop %v5821
        %v6036 = vmul.f32 %v2749, %v6035
        %v6037 = vrcp.pop %v5822
        %v6038 = vmul.f32 %v2750, %v6037
        %v6039 = vrcp.pop %v5823
        %v6040 = vmul.f32 %v2751, %v6039
        %v6041 = vrcp.pop %v5824
        %v6042 = vmul.f32 %v2752, %v6041
        %v6043 = vrcp.pop %v5825
        %v6044 = vmul.f32 %v2753, %v6043
        %v6045 = vrcp.pop %v5826
        %v6046 = vmul.f32 %v2754, %v6045
        %v6047 = vrcp.pop %v5827
        %v6048 = vmul.f32 %v2755, %v6047
        %v6049 = vrcp.pop %v5828
        %v6050 = vmul.f32 %v2756, %v6049
        %v6051 = vrcp.pop %v5829
        %v6052 = vmul.f32 %v2757, %v6051
        %v6053 = vrcp.pop %v5830
        %v6054 = vmul.f32 %v2758, %v6053
        %v6055 = vrcp.pop %v5831
        %v6056 = vmul.f32 %v2759, %v6055
        %v6057 = vrcp.pop %v5832
        %v6058 = vmul.f32 %v2760, %v6057
        %v6059 = vrcp.pop %v5833
        %v6060 = vmul.f32 %v2761, %v6059
        %v6061 = vrcp.pop %v5834
        %v6062 = vmul.f32 %v2762, %v6061
        %v6063 = vrcp.pop %v5835
        %v6064 = vmul.f32 %v2763, %v6063
        %v6065 = vrcp.pop %v5836
        %v6066 = vmul.f32 %v2764, %v6065
        %v6067 = vrcp.pop %v5837
        %v6068 = vmul.f32 %v2765, %v6067
        %v6069 = vrcp.pop %v5838
        %v6070 = vmul.f32 %v2766, %v6069
        %v6071 = vrcp.pop %v5839
        %v6072 = vmul.f32 %v2767, %v6071
        %v6073 = vrcp.pop %v5840
        %v6074 = vmul.f32 %v2768, %v6073
        %v6075 = vrcp.pop %v5841
        %v6076 = vmul.f32 %v2769, %v6075
        %v6077 = vrcp.pop %v5842
        %v6078 = vmul.f32 %v2770, %v6077
        %v6079 = vrcp.pop %v5843
        %v6080 = vmul.f32 %v2771, %v6079
        %v6081 = vrcp.pop %v5844
        %v6082 = vmul.f32 %v2772, %v6081
        %v6083 = vrcp.pop %v5845
        %v6084 = vmul.f32 %v2773, %v6083
        %v6085 = vrcp.pop %v5846
        %v6086 = vmul.f32 %v2774, %v6085
        %v6087 = vrcp.pop %v5847
        %v6088 = vmul.f32 %v2775, %v6087
        %v6089 = vrcp.pop %v5848
        %v6090 = vmul.f32 %v2776, %v6089
        %v6091 = vrcp.pop %v5849
        %v6092 = vmul.f32 %v2777, %v6091
        %v6093 = vrcp.pop %v5850
        %v6094 = vmul.f32 %v2778, %v6093
        %v6095 = vrcp.pop %v5851
        %v6096 = vmul.f32 %v2779, %v6095
        %v6097 = vrcp.pop %v5852
        %v6098 = vmul.f32 %v2780, %v6097
        %v6099 = vrcp.pop %v5853
        %v6100 = vmul.f32 %v2781, %v6099
        %v6101 = vrcp.pop %v5854
        %v6102 = vmul.f32 %v2782, %v6101
        %v6103 = vrcp.pop %v5855
        %v6104 = vmul.f32 %v2783, %v6103
        %v6105 = vrcp.pop %v5856
        %v6106 = vmul.f32 %v2784, %v6105
        %v6107 = vrcp.pop %v5857
        %v6108 = vmul.f32 %v2785, %v6107
        %v6109 = vrcp.pop %v5858
        %v6110 = vmul.f32 %v2786, %v6109
        %v6111 = vrcp.pop %v5859
        %v6112 = vmul.f32 %v2787, %v6111
        %v6113 = vrcp.pop %v5860
        %v6114 = vmul.f32 %v2788, %v6113
        %v6115 = vrcp.pop %v5861
        %v6116 = vmul.f32 %v2789, %v6115
        %v6117 = vrcp.pop %v5862
        %v6118 = vmul.f32 %v2790, %v6117
        %v6119 = vadd.f32 %v4845, 1e-09
        %v6120 = vadd.f32 %v4852, 1e-09
        %v6121 = vadd.f32 %v4859, 1e-09
        %v6122 = vadd.f32 %v4866, 1e-09
        %v6123 = vadd.f32 %v4873, 1e-09
        %v6124 = vadd.f32 %v4880, 1e-09
        %v6125 = vadd.f32 %v4887, 1e-09
        %v6126 = vadd.f32 %v4894, 1e-09
        %v6127 = vadd.f32 %v4901, 1e-09
        %v6128 = vadd.f32 %v4908, 1e-09
        %v6129 = vadd.f32 %v4915, 1e-09
        %v6130 = vadd.f32 %v4922, 1e-09
        %v6131 = vadd.f32 %v4929, 1e-09
        %v6132 = vadd.f32 %v4936, 1e-09
        %v6133 = vadd.f32 %v4943, 1e-09
        %v6134 = vadd.f32 %v4950, 1e-09
        %v6135 = vadd.f32 %v4957, 1e-09
        %v6136 = vadd.f32 %v4964, 1e-09
        %v6137 = vadd.f32 %v4971, 1e-09
        %v6138 = vadd.f32 %v4978, 1e-09
        %v6139 = vadd.f32 %v4985, 1e-09
        %v6140 = vadd.f32 %v4992, 1e-09
        %v6141 = vadd.f32 %v4999, 1e-09
        %v6142 = vadd.f32 %v5006, 1e-09
        %v6143 = vadd.f32 %v5013, 1e-09
        %v6144 = vadd.f32 %v5020, 1e-09
        %v6145 = vadd.f32 %v5027, 1e-09
        %v6146 = vadd.f32 %v5034, 1e-09
        %v6147 = vadd.f32 %v5041, 1e-09
        %v6148 = vadd.f32 %v5048, 1e-09
        %v6149 = vadd.f32 %v5055, 1e-09
        %v6150 = vadd.f32 %v5062, 1e-09
        %v6151 = vadd.f32 %v5069, 1e-09
        %v6152 = vadd.f32 %v5076, 1e-09
        %v6153 = vadd.f32 %v5083, 1e-09
        %v6154 = vadd.f32 %v5090, 1e-09
        %v6155 = vadd.f32 %v5097, 1e-09
        %v6156 = vadd.f32 %v5104, 1e-09
        %v6157 = vadd.f32 %v5111, 1e-09
        %v6158 = vadd.f32 %v5118, 1e-09
        %v6159 = vadd.f32 %v5125, 1e-09
        %v6160 = vadd.f32 %v5132, 1e-09
        %v6161 = vadd.f32 %v5139, 1e-09
        %v6162 = vadd.f32 %v5146, 1e-09
        %v6163 = vadd.f32 %v5153, 1e-09
        %v6164 = vadd.f32 %v5160, 1e-09
        %v6165 = vadd.f32 %v5167, 1e-09
        %v6166 = vadd.f32 %v5174, 1e-09
        %v6167 = vadd.f32 %v5181, 1e-09
        %v6168 = vadd.f32 %v5188, 1e-09
        %v6169 = vadd.f32 %v5195, 1e-09
        %v6170 = vadd.f32 %v5202, 1e-09
        %v6171 = vadd.f32 %v5209, 1e-09
        %v6172 = vadd.f32 %v5216, 1e-09
        %v6173 = vadd.f32 %v5223, 1e-09
        %v6174 = vadd.f32 %v5230, 1e-09
        %v6175 = vadd.f32 %v5237, 1e-09
        %v6176 = vadd.f32 %v5244, 1e-09
        %v6177 = vadd.f32 %v5251, 1e-09
        %v6178 = vadd.f32 %v5258, 1e-09
        %v6179 = vadd.f32 %v5265, 1e-09
        %v6180 = vadd.f32 %v5272, 1e-09
        %v6181 = vadd.f32 %v5279, 1e-09
        %v6182 = vadd.f32 %v5286, 1e-09
        %v6183 = vadd.f32 %v5293, 1e-09
        %v6184 = vadd.f32 %v5300, 1e-09
        %v6185 = vadd.f32 %v5307, 1e-09
        %v6186 = vadd.f32 %v5314, 1e-09
        %v6187 = vadd.f32 %v5321, 1e-09
        %v6188 = vadd.f32 %v5328, 1e-09
        %v6189 = vadd.f32 %v5335, 1e-09
        %v6190 = vadd.f32 %v5342, 1e-09
        %v6191 = vadd.f32 %v5349, 1e-09
        %v6192 = vadd.f32 %v5356, 1e-09
        %v6193 = vadd.f32 %v5363, 1e-09
        %v6194 = vadd.f32 %v5370, 1e-09
        %v6195 = vadd.f32 %v5377, 1e-09
        %v6196 = vadd.f32 %v5384, 1e-09
        %v6197 = vadd.f32 %v5391, 1e-09
        %v6198 = vadd.f32 %v5398, 1e-09
        %v6199 = vadd.f32 %v5405, 1e-09
        %v6200 = vadd.f32 %v5412, 1e-09
        %v6201 = vadd.f32 %v5419, 1e-09
        %v6202 = vadd.f32 %v5426, 1e-09
        %v6203 = vadd.f32 %v5433, 1e-09
        %v6204 = vadd.f32 %v5440, 1e-09
        %v6205 = vadd.f32 %v5447, 1e-09
        %v6206 = vadd.f32 %v5454, 1e-09
        %v6207 = vadd.f32 %v5461, 1e-09
        %v6208 = vadd.f32 %v5468, 1e-09
        %v6209 = vadd.f32 %v5475, 1e-09
        %v6210 = vadd.f32 %v5482, 1e-09
        %v6211 = vadd.f32 %v5489, 1e-09
        %v6212 = vadd.f32 %v5496, 1e-09
        %v6213 = vadd.f32 %v5503, 1e-09
        %v6214 = vadd.f32 %v5510, 1e-09
        %v6215 = vadd.f32 %v5517, 1e-09
        %v6216 = vadd.f32 %v5524, 1e-09
        %v6217 = vadd.f32 %v5531, 1e-09
        %v6218 = vadd.f32 %v5538, 1e-09
        %v6219 = vadd.f32 %v5545, 1e-09
        %v6220 = vadd.f32 %v5552, 1e-09
        %v6221 = vadd.f32 %v5559, 1e-09
        %v6222 = vadd.f32 %v5566, 1e-09
        %v6223 = vadd.f32 %v5573, 1e-09
        %v6224 = vadd.f32 %v5580, 1e-09
        %v6225 = vadd.f32 %v5587, 1e-09
        %v6226 = vadd.f32 %v5594, 1e-09
        %v6227 = vadd.f32 %v5601, 1e-09
        %v6228 = vadd.f32 %v5608, 1e-09
        %v6229 = vadd.f32 %v5615, 1e-09
        %v6230 = vadd.f32 %v5622, 1e-09
        %v6231 = vadd.f32 %v5629, 1e-09
        %v6232 = vadd.f32 %v5636, 1e-09
        %v6233 = vadd.f32 %v5643, 1e-09
        %v6234 = vadd.f32 %v5650, 1e-09
        %v6235 = vadd.f32 %v5657, 1e-09
        %v6236 = vadd.f32 %v5664, 1e-09
        %v6237 = vadd.f32 %v5671, 1e-09
        %v6238 = vadd.f32 %v5678, 1e-09
        %v6239 = vadd.f32 %v5685, 1e-09
        %v6240 = vadd.f32 %v5692, 1e-09
        %v6241 = vadd.f32 %v5699, 1e-09
        %v6242 = vadd.f32 %v5706, 1e-09
        %v6243 = vadd.f32 %v5713, 1e-09
        %v6244 = vadd.f32 %v5720, 1e-09
        %v6245 = vadd.f32 %v5727, 1e-09
        %v6246 = vadd.f32 %v5734, 1e-09
        %v6247 = vrcp.pop %v6119
        %v6248 = vmul.f32 %v2791, %v6247
        %v6249 = vrcp.pop %v6120
        %v6250 = vmul.f32 %v2792, %v6249
        %v6251 = vrcp.pop %v6121
        %v6252 = vmul.f32 %v2793, %v6251
        %v6253 = vrcp.pop %v6122
        %v6254 = vmul.f32 %v2794, %v6253
        %v6255 = vrcp.pop %v6123
        %v6256 = vmul.f32 %v2795, %v6255
        %v6257 = vrcp.pop %v6124
        %v6258 = vmul.f32 %v2796, %v6257
        %v6259 = vrcp.pop %v6125
        %v6260 = vmul.f32 %v2797, %v6259
        %v6261 = vrcp.pop %v6126
        %v6262 = vmul.f32 %v2798, %v6261
        %v6263 = vrcp.pop %v6127
        %v6264 = vmul.f32 %v2799, %v6263
        %v6265 = vrcp.pop %v6128
        %v6266 = vmul.f32 %v2800, %v6265
        %v6267 = vrcp.pop %v6129
        %v6268 = vmul.f32 %v2801, %v6267
        %v6269 = vrcp.pop %v6130
        %v6270 = vmul.f32 %v2802, %v6269
        %v6271 = vrcp.pop %v6131
        %v6272 = vmul.f32 %v2803, %v6271
        %v6273 = vrcp.pop %v6132
        %v6274 = vmul.f32 %v2804, %v6273
        %v6275 = vrcp.pop %v6133
        %v6276 = vmul.f32 %v2805, %v6275
        %v6277 = vrcp.pop %v6134
        %v6278 = vmul.f32 %v2806, %v6277
        %v6279 = vrcp.pop %v6135
        %v6280 = vmul.f32 %v2807, %v6279
        %v6281 = vrcp.pop %v6136
        %v6282 = vmul.f32 %v2808, %v6281
        %v6283 = vrcp.pop %v6137
        %v6284 = vmul.f32 %v2809, %v6283
        %v6285 = vrcp.pop %v6138
        %v6286 = vmul.f32 %v2810, %v6285
        %v6287 = vrcp.pop %v6139
        %v6288 = vmul.f32 %v2811, %v6287
        %v6289 = vrcp.pop %v6140
        %v6290 = vmul.f32 %v2812, %v6289
        %v6291 = vrcp.pop %v6141
        %v6292 = vmul.f32 %v2813, %v6291
        %v6293 = vrcp.pop %v6142
        %v6294 = vmul.f32 %v2814, %v6293
        %v6295 = vrcp.pop %v6143
        %v6296 = vmul.f32 %v2815, %v6295
        %v6297 = vrcp.pop %v6144
        %v6298 = vmul.f32 %v2816, %v6297
        %v6299 = vrcp.pop %v6145
        %v6300 = vmul.f32 %v2817, %v6299
        %v6301 = vrcp.pop %v6146
        %v6302 = vmul.f32 %v2818, %v6301
        %v6303 = vrcp.pop %v6147
        %v6304 = vmul.f32 %v2819, %v6303
        %v6305 = vrcp.pop %v6148
        %v6306 = vmul.f32 %v2820, %v6305
        %v6307 = vrcp.pop %v6149
        %v6308 = vmul.f32 %v2821, %v6307
        %v6309 = vrcp.pop %v6150
        %v6310 = vmul.f32 %v2822, %v6309
        %v6311 = vrcp.pop %v6151
        %v6312 = vmul.f32 %v2823, %v6311
        %v6313 = vrcp.pop %v6152
        %v6314 = vmul.f32 %v2824, %v6313
        %v6315 = vrcp.pop %v6153
        %v6316 = vmul.f32 %v2825, %v6315
        %v6317 = vrcp.pop %v6154
        %v6318 = vmul.f32 %v2826, %v6317
        %v6319 = vrcp.pop %v6155
        %v6320 = vmul.f32 %v2827, %v6319
        %v6321 = vrcp.pop %v6156
        %v6322 = vmul.f32 %v2828, %v6321
        %v6323 = vrcp.pop %v6157
        %v6324 = vmul.f32 %v2829, %v6323
        %v6325 = vrcp.pop %v6158
        %v6326 = vmul.f32 %v2830, %v6325
        %v6327 = vrcp.pop %v6159
        %v6328 = vmul.f32 %v2831, %v6327
        %v6329 = vrcp.pop %v6160
        %v6330 = vmul.f32 %v2832, %v6329
        %v6331 = vrcp.pop %v6161
        %v6332 = vmul.f32 %v2833, %v6331
        %v6333 = vrcp.pop %v6162
        %v6334 = vmul.f32 %v2834, %v6333
        %v6335 = vrcp.pop %v6163
        %v6336 = vmul.f32 %v2835, %v6335
        %v6337 = vrcp.pop %v6164
        %v6338 = vmul.f32 %v2836, %v6337
        %v6339 = vrcp.pop %v6165
        %v6340 = vmul.f32 %v2837, %v6339
        %v6341 = vrcp.pop %v6166
        %v6342 = vmul.f32 %v2838, %v6341
        %v6343 = vrcp.pop %v6167
        %v6344 = vmul.f32 %v2839, %v6343
        %v6345 = vrcp.pop %v6168
        %v6346 = vmul.f32 %v2840, %v6345
        %v6347 = vrcp.pop %v6169
        %v6348 = vmul.f32 %v2841, %v6347
        %v6349 = vrcp.pop %v6170
        %v6350 = vmul.f32 %v2842, %v6349
        %v6351 = vrcp.pop %v6171
        %v6352 = vmul.f32 %v2843, %v6351
        %v6353 = vrcp.pop %v6172
        %v6354 = vmul.f32 %v2844, %v6353
        %v6355 = vrcp.pop %v6173
        %v6356 = vmul.f32 %v2845, %v6355
        %v6357 = vrcp.pop %v6174
        %v6358 = vmul.f32 %v2846, %v6357
        %v6359 = vrcp.pop %v6175
        %v6360 = vmul.f32 %v2847, %v6359
        %v6361 = vrcp.pop %v6176
        %v6362 = vmul.f32 %v2848, %v6361
        %v6363 = vrcp.pop %v6177
        %v6364 = vmul.f32 %v2849, %v6363
        %v6365 = vrcp.pop %v6178
        %v6366 = vmul.f32 %v2850, %v6365
        %v6367 = vrcp.pop %v6179
        %v6368 = vmul.f32 %v2851, %v6367
        %v6369 = vrcp.pop %v6180
        %v6370 = vmul.f32 %v2852, %v6369
        %v6371 = vrcp.pop %v6181
        %v6372 = vmul.f32 %v2853, %v6371
        %v6373 = vrcp.pop %v6182
        %v6374 = vmul.f32 %v2854, %v6373
        %v6375 = vrcp.pop %v6183
        %v6376 = vmul.f32 %v2855, %v6375
        %v6377 = vrcp.pop %v6184
        %v6378 = vmul.f32 %v2856, %v6377
        %v6379 = vrcp.pop %v6185
        %v6380 = vmul.f32 %v2857, %v6379
        %v6381 = vrcp.pop %v6186
        %v6382 = vmul.f32 %v2858, %v6381
        %v6383 = vrcp.pop %v6187
        %v6384 = vmul.f32 %v2859, %v6383
        %v6385 = vrcp.pop %v6188
        %v6386 = vmul.f32 %v2860, %v6385
        %v6387 = vrcp.pop %v6189
        %v6388 = vmul.f32 %v2861, %v6387
        %v6389 = vrcp.pop %v6190
        %v6390 = vmul.f32 %v2862, %v6389
        %v6391 = vrcp.pop %v6191
        %v6392 = vmul.f32 %v2863, %v6391
        %v6393 = vrcp.pop %v6192
        %v6394 = vmul.f32 %v2864, %v6393
        %v6395 = vrcp.pop %v6193
        %v6396 = vmul.f32 %v2865, %v6395
        %v6397 = vrcp.pop %v6194
        %v6398 = vmul.f32 %v2866, %v6397
        %v6399 = vrcp.pop %v6195
        %v6400 = vmul.f32 %v2867, %v6399
        %v6401 = vrcp.pop %v6196
        %v6402 = vmul.f32 %v2868, %v6401
        %v6403 = vrcp.pop %v6197
        %v6404 = vmul.f32 %v2869, %v6403
        %v6405 = vrcp.pop %v6198
        %v6406 = vmul.f32 %v2870, %v6405
        %v6407 = vrcp.pop %v6199
        %v6408 = vmul.f32 %v2871, %v6407
        %v6409 = vrcp.pop %v6200
        %v6410 = vmul.f32 %v2872, %v6409
        %v6411 = vrcp.pop %v6201
        %v6412 = vmul.f32 %v2873, %v6411
        %v6413 = vrcp.pop %v6202
        %v6414 = vmul.f32 %v2874, %v6413
        %v6415 = vrcp.pop %v6203
        %v6416 = vmul.f32 %v2875, %v6415
        %v6417 = vrcp.pop %v6204
        %v6418 = vmul.f32 %v2876, %v6417
        %v6419 = vrcp.pop %v6205
        %v6420 = vmul.f32 %v2877, %v6419
        %v6421 = vrcp.pop %v6206
        %v6422 = vmul.f32 %v2878, %v6421
        %v6423 = vrcp.pop %v6207
        %v6424 = vmul.f32 %v2879, %v6423
        %v6425 = vrcp.pop %v6208
        %v6426 = vmul.f32 %v2880, %v6425
        %v6427 = vrcp.pop %v6209
        %v6428 = vmul.f32 %v2881, %v6427
        %v6429 = vrcp.pop %v6210
        %v6430 = vmul.f32 %v2882, %v6429
        %v6431 = vrcp.pop %v6211
        %v6432 = vmul.f32 %v2883, %v6431
        %v6433 = vrcp.pop %v6212
        %v6434 = vmul.f32 %v2884, %v6433
        %v6435 = vrcp.pop %v6213
        %v6436 = vmul.f32 %v2885, %v6435
        %v6437 = vrcp.pop %v6214
        %v6438 = vmul.f32 %v2886, %v6437
        %v6439 = vrcp.pop %v6215
        %v6440 = vmul.f32 %v2887, %v6439
        %v6441 = vrcp.pop %v6216
        %v6442 = vmul.f32 %v2888, %v6441
        %v6443 = vrcp.pop %v6217
        %v6444 = vmul.f32 %v2889, %v6443
        %v6445 = vrcp.pop %v6218
        %v6446 = vmul.f32 %v2890, %v6445
        %v6447 = vrcp.pop %v6219
        %v6448 = vmul.f32 %v2891, %v6447
        %v6449 = vrcp.pop %v6220
        %v6450 = vmul.f32 %v2892, %v6449
        %v6451 = vrcp.pop %v6221
        %v6452 = vmul.f32 %v2893, %v6451
        %v6453 = vrcp.pop %v6222
        %v6454 = vmul.f32 %v2894, %v6453
        %v6455 = vrcp.pop %v6223
        %v6456 = vmul.f32 %v2895, %v6455
        %v6457 = vrcp.pop %v6224
        %v6458 = vmul.f32 %v2896, %v6457
        %v6459 = vrcp.pop %v6225
        %v6460 = vmul.f32 %v2897, %v6459
        %v6461 = vrcp.pop %v6226
        %v6462 = vmul.f32 %v2898, %v6461
        %v6463 = vrcp.pop %v6227
        %v6464 = vmul.f32 %v2899, %v6463
        %v6465 = vrcp.pop %v6228
        %v6466 = vmul.f32 %v2900, %v6465
        %v6467 = vrcp.pop %v6229
        %v6468 = vmul.f32 %v2901, %v6467
        %v6469 = vrcp.pop %v6230
        %v6470 = vmul.f32 %v2902, %v6469
        %v6471 = vrcp.pop %v6231
        %v6472 = vmul.f32 %v2903, %v6471
        %v6473 = vrcp.pop %v6232
        %v6474 = vmul.f32 %v2904, %v6473
        %v6475 = vrcp.pop %v6233
        %v6476 = vmul.f32 %v2905, %v6475
        %v6477 = vrcp.pop %v6234
        %v6478 = vmul.f32 %v2906, %v6477
        %v6479 = vrcp.pop %v6235
        %v6480 = vmul.f32 %v2907, %v6479
        %v6481 = vrcp.pop %v6236
        %v6482 = vmul.f32 %v2908, %v6481
        %v6483 = vrcp.pop %v6237
        %v6484 = vmul.f32 %v2909, %v6483
        %v6485 = vrcp.pop %v6238
        %v6486 = vmul.f32 %v2910, %v6485
        %v6487 = vrcp.pop %v6239
        %v6488 = vmul.f32 %v2911, %v6487
        %v6489 = vrcp.pop %v6240
        %v6490 = vmul.f32 %v2912, %v6489
        %v6491 = vrcp.pop %v6241
        %v6492 = vmul.f32 %v2913, %v6491
        %v6493 = vrcp.pop %v6242
        %v6494 = vmul.f32 %v2914, %v6493
        %v6495 = vrcp.pop %v6243
        %v6496 = vmul.f32 %v2915, %v6495
        %v6497 = vrcp.pop %v6244
        %v6498 = vmul.f32 %v2916, %v6497
        %v6499 = vrcp.pop %v6245
        %v6500 = vmul.f32 %v2917, %v6499
        %v6501 = vrcp.pop %v6246
        %v6502 = vmul.f32 %v2918, %v6501
        %v6503 = vlaneseq
        %v6504 = vshrl.u32 %v6503, 7
        %v6505 = vsub.s32 0, %v6504
        %v6506 = vrot.slane %v6248, %v6505
        %v6507 = vlaneseq
        %v6508 = vshrl.u32 %v6507, 7
        %v6509 = vsub.s32 0, %v6508
        %v6510 = vrot.slane %v6250, %v6509
        %v6511 = vlaneseq
        %v6512 = vshrl.u32 %v6511, 7
        %v6513 = vsub.s32 0, %v6512
        %v6514 = vrot.slane %v6252, %v6513
        %v6515 = vlaneseq
        %v6516 = vshrl.u32 %v6515, 7
        %v6517 = vsub.s32 0, %v6516
        %v6518 = vrot.slane %v6254, %v6517
        %v6519 = vlaneseq
        %v6520 = vshrl.u32 %v6519, 7
        %v6521 = vsub.s32 0, %v6520
        %v6522 = vrot.slane %v6256, %v6521
        %v6523 = vlaneseq
        %v6524 = vshrl.u32 %v6523, 7
        %v6525 = vsub.s32 0, %v6524
        %v6526 = vrot.slane %v6258, %v6525
        %v6527 = vlaneseq
        %v6528 = vshrl.u32 %v6527, 7
        %v6529 = vsub.s32 0, %v6528
        %v6530 = vrot.slane %v6260, %v6529
        %v6531 = vlaneseq
        %v6532 = vshrl.u32 %v6531, 7
        %v6533 = vsub.s32 0, %v6532
        %v6534 = vrot.slane %v6262, %v6533
        %v6535 = vlaneseq
        %v6536 = vshrl.u32 %v6535, 7
        %v6537 = vsub.s32 0, %v6536
        %v6538 = vrot.slane %v6264, %v6537
        %v6539 = vlaneseq
        %v6540 = vshrl.u32 %v6539, 7
        %v6541 = vsub.s32 0, %v6540
        %v6542 = vrot.slane %v6266, %v6541
        %v6543 = vlaneseq
        %v6544 = vshrl.u32 %v6543, 7
        %v6545 = vsub.s32 0, %v6544
        %v6546 = vrot.slane %v6268, %v6545
        %v6547 = vlaneseq
        %v6548 = vshrl.u32 %v6547, 7
        %v6549 = vsub.s32 0, %v6548
        %v6550 = vrot.slane %v6270, %v6549
        %v6551 = vlaneseq
        %v6552 = vshrl.u32 %v6551, 7
        %v6553 = vsub.s32 0, %v6552
        %v6554 = vrot.slane %v6272, %v6553
        %v6555 = vlaneseq
        %v6556 = vshrl.u32 %v6555, 7
        %v6557 = vsub.s32 0, %v6556
        %v6558 = vrot.slane %v6274, %v6557
        %v6559 = vlaneseq
        %v6560 = vshrl.u32 %v6559, 7
        %v6561 = vsub.s32 0, %v6560
        %v6562 = vrot.slane %v6276, %v6561
        %v6563 = vlaneseq
        %v6564 = vshrl.u32 %v6563, 7
        %v6565 = vsub.s32 0, %v6564
        %v6566 = vrot.slane %v6278, %v6565
        %v6567 = vlaneseq
        %v6568 = vshrl.u32 %v6567, 7
        %v6569 = vsub.s32 0, %v6568
        %v6570 = vrot.slane %v6280, %v6569
        %v6571 = vlaneseq
        %v6572 = vshrl.u32 %v6571, 7
        %v6573 = vsub.s32 0, %v6572
        %v6574 = vrot.slane %v6282, %v6573
        %v6575 = vlaneseq
        %v6576 = vshrl.u32 %v6575, 7
        %v6577 = vsub.s32 0, %v6576
        %v6578 = vrot.slane %v6284, %v6577
        %v6579 = vlaneseq
        %v6580 = vshrl.u32 %v6579, 7
        %v6581 = vsub.s32 0, %v6580
        %v6582 = vrot.slane %v6286, %v6581
        %v6583 = vlaneseq
        %v6584 = vshrl.u32 %v6583, 7
        %v6585 = vsub.s32 0, %v6584
        %v6586 = vrot.slane %v6288, %v6585
        %v6587 = vlaneseq
        %v6588 = vshrl.u32 %v6587, 7
        %v6589 = vsub.s32 0, %v6588
        %v6590 = vrot.slane %v6290, %v6589
        %v6591 = vlaneseq
        %v6592 = vshrl.u32 %v6591, 7
        %v6593 = vsub.s32 0, %v6592
        %v6594 = vrot.slane %v6292, %v6593
        %v6595 = vlaneseq
        %v6596 = vshrl.u32 %v6595, 7
        %v6597 = vsub.s32 0, %v6596
        %v6598 = vrot.slane %v6294, %v6597
        %v6599 = vlaneseq
        %v6600 = vshrl.u32 %v6599, 7
        %v6601 = vsub.s32 0, %v6600
        %v6602 = vrot.slane %v6296, %v6601
        %v6603 = vlaneseq
        %v6604 = vshrl.u32 %v6603, 7
        %v6605 = vsub.s32 0, %v6604
        %v6606 = vrot.slane %v6298, %v6605
        %v6607 = vlaneseq
        %v6608 = vshrl.u32 %v6607, 7
        %v6609 = vsub.s32 0, %v6608
        %v6610 = vrot.slane %v6300, %v6609
        %v6611 = vlaneseq
        %v6612 = vshrl.u32 %v6611, 7
        %v6613 = vsub.s32 0, %v6612
        %v6614 = vrot.slane %v6302, %v6613
        %v6615 = vlaneseq
        %v6616 = vshrl.u32 %v6615, 7
        %v6617 = vsub.s32 0, %v6616
        %v6618 = vrot.slane %v6304, %v6617
        %v6619 = vlaneseq
        %v6620 = vshrl.u32 %v6619, 7
        %v6621 = vsub.s32 0, %v6620
        %v6622 = vrot.slane %v6306, %v6621
        %v6623 = vlaneseq
        %v6624 = vshrl.u32 %v6623, 7
        %v6625 = vsub.s32 0, %v6624
        %v6626 = vrot.slane %v6308, %v6625
        %v6627 = vlaneseq
        %v6628 = vshrl.u32 %v6627, 7
        %v6629 = vsub.s32 0, %v6628
        %v6630 = vrot.slane %v6310, %v6629
        %v6631 = vlaneseq
        %v6632 = vshrl.u32 %v6631, 7
        %v6633 = vsub.s32 0, %v6632
        %v6634 = vrot.slane %v6312, %v6633
        %v6635 = vlaneseq
        %v6636 = vshrl.u32 %v6635, 7
        %v6637 = vsub.s32 0, %v6636
        %v6638 = vrot.slane %v6314, %v6637
        %v6639 = vlaneseq
        %v6640 = vshrl.u32 %v6639, 7
        %v6641 = vsub.s32 0, %v6640
        %v6642 = vrot.slane %v6316, %v6641
        %v6643 = vlaneseq
        %v6644 = vshrl.u32 %v6643, 7
        %v6645 = vsub.s32 0, %v6644
        %v6646 = vrot.slane %v6318, %v6645
        %v6647 = vlaneseq
        %v6648 = vshrl.u32 %v6647, 7
        %v6649 = vsub.s32 0, %v6648
        %v6650 = vrot.slane %v6320, %v6649
        %v6651 = vlaneseq
        %v6652 = vshrl.u32 %v6651, 7
        %v6653 = vsub.s32 0, %v6652
        %v6654 = vrot.slane %v6322, %v6653
        %v6655 = vlaneseq
        %v6656 = vshrl.u32 %v6655, 7
        %v6657 = vsub.s32 0, %v6656
        %v6658 = vrot.slane %v6324, %v6657
        %v6659 = vlaneseq
        %v6660 = vshrl.u32 %v6659, 7
        %v6661 = vsub.s32 0, %v6660
        %v6662 = vrot.slane %v6326, %v6661
        %v6663 = vlaneseq
        %v6664 = vshrl.u32 %v6663, 7
        %v6665 = vsub.s32 0, %v6664
        %v6666 = vrot.slane %v6328, %v6665
        %v6667 = vlaneseq
        %v6668 = vshrl.u32 %v6667, 7
        %v6669 = vsub.s32 0, %v6668
        %v6670 = vrot.slane %v6330, %v6669
        %v6671 = vlaneseq
        %v6672 = vshrl.u32 %v6671, 7
        %v6673 = vsub.s32 0, %v6672
        %v6674 = vrot.slane %v6332, %v6673
        %v6675 = vlaneseq
        %v6676 = vshrl.u32 %v6675, 7
        %v6677 = vsub.s32 0, %v6676
        %v6678 = vrot.slane %v6334, %v6677
        %v6679 = vlaneseq
        %v6680 = vshrl.u32 %v6679, 7
        %v6681 = vsub.s32 0, %v6680
        %v6682 = vrot.slane %v6336, %v6681
        %v6683 = vlaneseq
        %v6684 = vshrl.u32 %v6683, 7
        %v6685 = vsub.s32 0, %v6684
        %v6686 = vrot.slane %v6338, %v6685
        %v6687 = vlaneseq
        %v6688 = vshrl.u32 %v6687, 7
        %v6689 = vsub.s32 0, %v6688
        %v6690 = vrot.slane %v6340, %v6689
        %v6691 = vlaneseq
        %v6692 = vshrl.u32 %v6691, 7
        %v6693 = vsub.s32 0, %v6692
        %v6694 = vrot.slane %v6342, %v6693
        %v6695 = vlaneseq
        %v6696 = vshrl.u32 %v6695, 7
        %v6697 = vsub.s32 0, %v6696
        %v6698 = vrot.slane %v6344, %v6697
        %v6699 = vlaneseq
        %v6700 = vshrl.u32 %v6699, 7
        %v6701 = vsub.s32 0, %v6700
        %v6702 = vrot.slane %v6346, %v6701
        %v6703 = vlaneseq
        %v6704 = vshrl.u32 %v6703, 7
        %v6705 = vsub.s32 0, %v6704
        %v6706 = vrot.slane %v6348, %v6705
        %v6707 = vlaneseq
        %v6708 = vshrl.u32 %v6707, 7
        %v6709 = vsub.s32 0, %v6708
        %v6710 = vrot.slane %v6350, %v6709
        %v6711 = vlaneseq
        %v6712 = vshrl.u32 %v6711, 7
        %v6713 = vsub.s32 0, %v6712
        %v6714 = vrot.slane %v6352, %v6713
        %v6715 = vlaneseq
        %v6716 = vshrl.u32 %v6715, 7
        %v6717 = vsub.s32 0, %v6716
        %v6718 = vrot.slane %v6354, %v6717
        %v6719 = vlaneseq
        %v6720 = vshrl.u32 %v6719, 7
        %v6721 = vsub.s32 0, %v6720
        %v6722 = vrot.slane %v6356, %v6721
        %v6723 = vlaneseq
        %v6724 = vshrl.u32 %v6723, 7
        %v6725 = vsub.s32 0, %v6724
        %v6726 = vrot.slane %v6358, %v6725
        %v6727 = vlaneseq
        %v6728 = vshrl.u32 %v6727, 7
        %v6729 = vsub.s32 0, %v6728
        %v6730 = vrot.slane %v6360, %v6729
        %v6731 = vlaneseq
        %v6732 = vshrl.u32 %v6731, 7
        %v6733 = vsub.s32 0, %v6732
        %v6734 = vrot.slane %v6362, %v6733
        %v6735 = vlaneseq
        %v6736 = vshrl.u32 %v6735, 7
        %v6737 = vsub.s32 0, %v6736
        %v6738 = vrot.slane %v6364, %v6737
        %v6739 = vlaneseq
        %v6740 = vshrl.u32 %v6739, 7
        %v6741 = vsub.s32 0, %v6740
        %v6742 = vrot.slane %v6366, %v6741
        %v6743 = vlaneseq
        %v6744 = vshrl.u32 %v6743, 7
        %v6745 = vsub.s32 0, %v6744
        %v6746 = vrot.slane %v6368, %v6745
        %v6747 = vlaneseq
        %v6748 = vshrl.u32 %v6747, 7
        %v6749 = vsub.s32 0, %v6748
        %v6750 = vrot.slane %v6370, %v6749
        %v6751 = vlaneseq
        %v6752 = vshrl.u32 %v6751, 7
        %v6753 = vsub.s32 0, %v6752
        %v6754 = vrot.slane %v6372, %v6753
        %v6755 = vlaneseq
        %v6756 = vshrl.u32 %v6755, 7
        %v6757 = vsub.s32 0, %v6756
        %v6758 = vrot.slane %v6374, %v6757
        %v6759 = vlaneseq
        %v6760 = vshrl.u32 %v6759, 7
        %v6761 = vsub.s32 0, %v6760
        %v6762 = vrot.slane %v6376, %v6761
        %v6763 = vlaneseq
        %v6764 = vshrl.u32 %v6763, 7
        %v6765 = vsub.s32 0, %v6764
        %v6766 = vrot.slane %v6378, %v6765
        %v6767 = vlaneseq
        %v6768 = vshrl.u32 %v6767, 7
        %v6769 = vsub.s32 0, %v6768
        %v6770 = vrot.slane %v6380, %v6769
        %v6771 = vlaneseq
        %v6772 = vshrl.u32 %v6771, 7
        %v6773 = vsub.s32 0, %v6772
        %v6774 = vrot.slane %v6382, %v6773
        %v6775 = vlaneseq
        %v6776 = vshrl.u32 %v6775, 7
        %v6777 = vsub.s32 0, %v6776
        %v6778 = vrot.slane %v6384, %v6777
        %v6779 = vlaneseq
        %v6780 = vshrl.u32 %v6779, 7
        %v6781 = vsub.s32 0, %v6780
        %v6782 = vrot.slane %v6386, %v6781
        %v6783 = vlaneseq
        %v6784 = vshrl.u32 %v6783, 7
        %v6785 = vsub.s32 0, %v6784
        %v6786 = vrot.slane %v6388, %v6785
        %v6787 = vlaneseq
        %v6788 = vshrl.u32 %v6787, 7
        %v6789 = vsub.s32 0, %v6788
        %v6790 = vrot.slane %v6390, %v6789
        %v6791 = vlaneseq
        %v6792 = vshrl.u32 %v6791, 7
        %v6793 = vsub.s32 0, %v6792
        %v6794 = vrot.slane %v6392, %v6793
        %v6795 = vlaneseq
        %v6796 = vshrl.u32 %v6795, 7
        %v6797 = vsub.s32 0, %v6796
        %v6798 = vrot.slane %v6394, %v6797
        %v6799 = vlaneseq
        %v6800 = vshrl.u32 %v6799, 7
        %v6801 = vsub.s32 0, %v6800
        %v6802 = vrot.slane %v6396, %v6801
        %v6803 = vlaneseq
        %v6804 = vshrl.u32 %v6803, 7
        %v6805 = vsub.s32 0, %v6804
        %v6806 = vrot.slane %v6398, %v6805
        %v6807 = vlaneseq
        %v6808 = vshrl.u32 %v6807, 7
        %v6809 = vsub.s32 0, %v6808
        %v6810 = vrot.slane %v6400, %v6809
        %v6811 = vlaneseq
        %v6812 = vshrl.u32 %v6811, 7
        %v6813 = vsub.s32 0, %v6812
        %v6814 = vrot.slane %v6402, %v6813
        %v6815 = vlaneseq
        %v6816 = vshrl.u32 %v6815, 7
        %v6817 = vsub.s32 0, %v6816
        %v6818 = vrot.slane %v6404, %v6817
        %v6819 = vlaneseq
        %v6820 = vshrl.u32 %v6819, 7
        %v6821 = vsub.s32 0, %v6820
        %v6822 = vrot.slane %v6406, %v6821
        %v6823 = vlaneseq
        %v6824 = vshrl.u32 %v6823, 7
        %v6825 = vsub.s32 0, %v6824
        %v6826 = vrot.slane %v6408, %v6825
        %v6827 = vlaneseq
        %v6828 = vshrl.u32 %v6827, 7
        %v6829 = vsub.s32 0, %v6828
        %v6830 = vrot.slane %v6410, %v6829
        %v6831 = vlaneseq
        %v6832 = vshrl.u32 %v6831, 7
        %v6833 = vsub.s32 0, %v6832
        %v6834 = vrot.slane %v6412, %v6833
        %v6835 = vlaneseq
        %v6836 = vshrl.u32 %v6835, 7
        %v6837 = vsub.s32 0, %v6836
        %v6838 = vrot.slane %v6414, %v6837
        %v6839 = vlaneseq
        %v6840 = vshrl.u32 %v6839, 7
        %v6841 = vsub.s32 0, %v6840
        %v6842 = vrot.slane %v6416, %v6841
        %v6843 = vlaneseq
        %v6844 = vshrl.u32 %v6843, 7
        %v6845 = vsub.s32 0, %v6844
        %v6846 = vrot.slane %v6418, %v6845
        %v6847 = vlaneseq
        %v6848 = vshrl.u32 %v6847, 7
        %v6849 = vsub.s32 0, %v6848
        %v6850 = vrot.slane %v6420, %v6849
        %v6851 = vlaneseq
        %v6852 = vshrl.u32 %v6851, 7
        %v6853 = vsub.s32 0, %v6852
        %v6854 = vrot.slane %v6422, %v6853
        %v6855 = vlaneseq
        %v6856 = vshrl.u32 %v6855, 7
        %v6857 = vsub.s32 0, %v6856
        %v6858 = vrot.slane %v6424, %v6857
        %v6859 = vlaneseq
        %v6860 = vshrl.u32 %v6859, 7
        %v6861 = vsub.s32 0, %v6860
        %v6862 = vrot.slane %v6426, %v6861
        %v6863 = vlaneseq
        %v6864 = vshrl.u32 %v6863, 7
        %v6865 = vsub.s32 0, %v6864
        %v6866 = vrot.slane %v6428, %v6865
        %v6867 = vlaneseq
        %v6868 = vshrl.u32 %v6867, 7
        %v6869 = vsub.s32 0, %v6868
        %v6870 = vrot.slane %v6430, %v6869
        %v6871 = vlaneseq
        %v6872 = vshrl.u32 %v6871, 7
        %v6873 = vsub.s32 0, %v6872
        %v6874 = vrot.slane %v6432, %v6873
        %v6875 = vlaneseq
        %v6876 = vshrl.u32 %v6875, 7
        %v6877 = vsub.s32 0, %v6876
        %v6878 = vrot.slane %v6434, %v6877
        %v6879 = vlaneseq
        %v6880 = vshrl.u32 %v6879, 7
        %v6881 = vsub.s32 0, %v6880
        %v6882 = vrot.slane %v6436, %v6881
        %v6883 = vlaneseq
        %v6884 = vshrl.u32 %v6883, 7
        %v6885 = vsub.s32 0, %v6884
        %v6886 = vrot.slane %v6438, %v6885
        %v6887 = vlaneseq
        %v6888 = vshrl.u32 %v6887, 7
        %v6889 = vsub.s32 0, %v6888
        %v6890 = vrot.slane %v6440, %v6889
        %v6891 = vlaneseq
        %v6892 = vshrl.u32 %v6891, 7
        %v6893 = vsub.s32 0, %v6892
        %v6894 = vrot.slane %v6442, %v6893
        %v6895 = vlaneseq
        %v6896 = vshrl.u32 %v6895, 7
        %v6897 = vsub.s32 0, %v6896
        %v6898 = vrot.slane %v6444, %v6897
        %v6899 = vlaneseq
        %v6900 = vshrl.u32 %v6899, 7
        %v6901 = vsub.s32 0, %v6900
        %v6902 = vrot.slane %v6446, %v6901
        %v6903 = vlaneseq
        %v6904 = vshrl.u32 %v6903, 7
        %v6905 = vsub.s32 0, %v6904
        %v6906 = vrot.slane %v6448, %v6905
        %v6907 = vlaneseq
        %v6908 = vshrl.u32 %v6907, 7
        %v6909 = vsub.s32 0, %v6908
        %v6910 = vrot.slane %v6450, %v6909
        %v6911 = vlaneseq
        %v6912 = vshrl.u32 %v6911, 7
        %v6913 = vsub.s32 0, %v6912
        %v6914 = vrot.slane %v6452, %v6913
        %v6915 = vlaneseq
        %v6916 = vshrl.u32 %v6915, 7
        %v6917 = vsub.s32 0, %v6916
        %v6918 = vrot.slane %v6454, %v6917
        %v6919 = vlaneseq
        %v6920 = vshrl.u32 %v6919, 7
        %v6921 = vsub.s32 0, %v6920
        %v6922 = vrot.slane %v6456, %v6921
        %v6923 = vlaneseq
        %v6924 = vshrl.u32 %v6923, 7
        %v6925 = vsub.s32 0, %v6924
        %v6926 = vrot.slane %v6458, %v6925
        %v6927 = vlaneseq
        %v6928 = vshrl.u32 %v6927, 7
        %v6929 = vsub.s32 0, %v6928
        %v6930 = vrot.slane %v6460, %v6929
        %v6931 = vlaneseq
        %v6932 = vshrl.u32 %v6931, 7
        %v6933 = vsub.s32 0, %v6932
        %v6934 = vrot.slane %v6462, %v6933
        %v6935 = vlaneseq
        %v6936 = vshrl.u32 %v6935, 7
        %v6937 = vsub.s32 0, %v6936
        %v6938 = vrot.slane %v6464, %v6937
        %v6939 = vlaneseq
        %v6940 = vshrl.u32 %v6939, 7
        %v6941 = vsub.s32 0, %v6940
        %v6942 = vrot.slane %v6466, %v6941
        %v6943 = vlaneseq
        %v6944 = vshrl.u32 %v6943, 7
        %v6945 = vsub.s32 0, %v6944
        %v6946 = vrot.slane %v6468, %v6945
        %v6947 = vlaneseq
        %v6948 = vshrl.u32 %v6947, 7
        %v6949 = vsub.s32 0, %v6948
        %v6950 = vrot.slane %v6470, %v6949
        %v6951 = vlaneseq
        %v6952 = vshrl.u32 %v6951, 7
        %v6953 = vsub.s32 0, %v6952
        %v6954 = vrot.slane %v6472, %v6953
        %v6955 = vlaneseq
        %v6956 = vshrl.u32 %v6955, 7
        %v6957 = vsub.s32 0, %v6956
        %v6958 = vrot.slane %v6474, %v6957
        %v6959 = vlaneseq
        %v6960 = vshrl.u32 %v6959, 7
        %v6961 = vsub.s32 0, %v6960
        %v6962 = vrot.slane %v6476, %v6961
        %v6963 = vlaneseq
        %v6964 = vshrl.u32 %v6963, 7
        %v6965 = vsub.s32 0, %v6964
        %v6966 = vrot.slane %v6478, %v6965
        %v6967 = vlaneseq
        %v6968 = vshrl.u32 %v6967, 7
        %v6969 = vsub.s32 0, %v6968
        %v6970 = vrot.slane %v6480, %v6969
        %v6971 = vlaneseq
        %v6972 = vshrl.u32 %v6971, 7
        %v6973 = vsub.s32 0, %v6972
        %v6974 = vrot.slane %v6482, %v6973
        %v6975 = vlaneseq
        %v6976 = vshrl.u32 %v6975, 7
        %v6977 = vsub.s32 0, %v6976
        %v6978 = vrot.slane %v6484, %v6977
        %v6979 = vlaneseq
        %v6980 = vshrl.u32 %v6979, 7
        %v6981 = vsub.s32 0, %v6980
        %v6982 = vrot.slane %v6486, %v6981
        %v6983 = vlaneseq
        %v6984 = vshrl.u32 %v6983, 7
        %v6985 = vsub.s32 0, %v6984
        %v6986 = vrot.slane %v6488, %v6985
        %v6987 = vlaneseq
        %v6988 = vshrl.u32 %v6987, 7
        %v6989 = vsub.s32 0, %v6988
        %v6990 = vrot.slane %v6490, %v6989
        %v6991 = vlaneseq
        %v6992 = vshrl.u32 %v6991, 7
        %v6993 = vsub.s32 0, %v6992
        %v6994 = vrot.slane %v6492, %v6993
        %v6995 = vlaneseq
        %v6996 = vshrl.u32 %v6995, 7
        %v6997 = vsub.s32 0, %v6996
        %v6998 = vrot.slane %v6494, %v6997
        %v6999 = vlaneseq
        %v7000 = vshrl.u32 %v6999, 7
        %v7001 = vsub.s32 0, %v7000
        %v7002 = vrot.slane %v6496, %v7001
        %v7003 = vlaneseq
        %v7004 = vshrl.u32 %v7003, 7
        %v7005 = vsub.s32 0, %v7004
        %v7006 = vrot.slane %v6498, %v7005
        %v7007 = vlaneseq
        %v7008 = vshrl.u32 %v7007, 7
        %v7009 = vsub.s32 0, %v7008
        %v7010 = vrot.slane %v6500, %v7009
        %v7011 = vlaneseq
        %v7012 = vshrl.u32 %v7011, 7
        %v7013 = vsub.s32 0, %v7012
        %v7014 = vrot.slane %v6502, %v7013
        %v7015 = vmul.f32 %v5864, %v6506
        %v7016 = vmul.f32 %v5866, %v6510
        %v7017 = vmul.f32 %v5868, %v6514
        %v7018 = vmul.f32 %v5870, %v6518
        %v7019 = vmul.f32 %v5872, %v6522
        %v7020 = vmul.f32 %v5874, %v6526
        %v7021 = vmul.f32 %v5876, %v6530
        %v7022 = vmul.f32 %v5878, %v6534
        %v7023 = vmul.f32 %v5880, %v6538
        %v7024 = vmul.f32 %v5882, %v6542
        %v7025 = vmul.f32 %v5884, %v6546
        %v7026 = vmul.f32 %v5886, %v6550
        %v7027 = vmul.f32 %v5888, %v6554
        %v7028 = vmul.f32 %v5890, %v6558
        %v7029 = vmul.f32 %v5892, %v6562
        %v7030 = vmul.f32 %v5894, %v6566
        %v7031 = vmul.f32 %v5896, %v6570
        %v7032 = vmul.f32 %v5898, %v6574
        %v7033 = vmul.f32 %v5900, %v6578
        %v7034 = vmul.f32 %v5902, %v6582
        %v7035 = vmul.f32 %v5904, %v6586
        %v7036 = vmul.f32 %v5906, %v6590
        %v7037 = vmul.f32 %v5908, %v6594
        %v7038 = vmul.f32 %v5910, %v6598
        %v7039 = vmul.f32 %v5912, %v6602
        %v7040 = vmul.f32 %v5914, %v6606
        %v7041 = vmul.f32 %v5916, %v6610
        %v7042 = vmul.f32 %v5918, %v6614
        %v7043 = vmul.f32 %v5920, %v6618
        %v7044 = vmul.f32 %v5922, %v6622
        %v7045 = vmul.f32 %v5924, %v6626
        %v7046 = vmul.f32 %v5926, %v6630
        %v7047 = vmul.f32 %v5928, %v6634
        %v7048 = vmul.f32 %v5930, %v6638
        %v7049 = vmul.f32 %v5932, %v6642
        %v7050 = vmul.f32 %v5934, %v6646
        %v7051 = vmul.f32 %v5936, %v6650
        %v7052 = vmul.f32 %v5938, %v6654
        %v7053 = vmul.f32 %v5940, %v6658
        %v7054 = vmul.f32 %v5942, %v6662
        %v7055 = vmul.f32 %v5944, %v6666
        %v7056 = vmul.f32 %v5946, %v6670
        %v7057 = vmul.f32 %v5948, %v6674
        %v7058 = vmul.f32 %v5950, %v6678
        %v7059 = vmul.f32 %v5952, %v6682
        %v7060 = vmul.f32 %v5954, %v6686
        %v7061 = vmul.f32 %v5956, %v6690
        %v7062 = vmul.f32 %v5958, %v6694
        %v7063 = vmul.f32 %v5960, %v6698
        %v7064 = vmul.f32 %v5962, %v6702
        %v7065 = vmul.f32 %v5964, %v6706
        %v7066 = vmul.f32 %v5966, %v6710
        %v7067 = vmul.f32 %v5968, %v6714
        %v7068 = vmul.f32 %v5970, %v6718
        %v7069 = vmul.f32 %v5972, %v6722
        %v7070 = vmul.f32 %v5974, %v6726
        %v7071 = vmul.f32 %v5976, %v6730
        %v7072 = vmul.f32 %v5978, %v6734
        %v7073 = vmul.f32 %v5980, %v6738
        %v7074 = vmul.f32 %v5982, %v6742
        %v7075 = vmul.f32 %v5984, %v6746
        %v7076 = vmul.f32 %v5986, %v6750
        %v7077 = vmul.f32 %v5988, %v6754
        %v7078 = vmul.f32 %v5990, %v6758
        %v7079 = vmul.f32 %v5992, %v6762
        %v7080 = vmul.f32 %v5994, %v6766
        %v7081 = vmul.f32 %v5996, %v6770
        %v7082 = vmul.f32 %v5998, %v6774
        %v7083 = vmul.f32 %v6000, %v6778
        %v7084 = vmul.f32 %v6002, %v6782
        %v7085 = vmul.f32 %v6004, %v6786
        %v7086 = vmul.f32 %v6006, %v6790
        %v7087 = vmul.f32 %v6008, %v6794
        %v7088 = vmul.f32 %v6010, %v6798
        %v7089 = vmul.f32 %v6012, %v6802
        %v7090 = vmul.f32 %v6014, %v6806
        %v7091 = vmul.f32 %v6016, %v6810
        %v7092 = vmul.f32 %v6018, %v6814
        %v7093 = vmul.f32 %v6020, %v6818
        %v7094 = vmul.f32 %v6022, %v6822
        %v7095 = vmul.f32 %v6024, %v6826
        %v7096 = vmul.f32 %v6026, %v6830
        %v7097 = vmul.f32 %v6028, %v6834
        %v7098 = vmul.f32 %v6030, %v6838
        %v7099 = vmul.f32 %v6032, %v6842
        %v7100 = vmul.f32 %v6034, %v6846
        %v7101 = vmul.f32 %v6036, %v6850
        %v7102 = vmul.f32 %v6038, %v6854
        %v7103 = vmul.f32 %v6040, %v6858
        %v7104 = vmul.f32 %v6042, %v6862
        %v7105 = vmul.f32 %v6044, %v6866
        %v7106 = vmul.f32 %v6046, %v6870
        %v7107 = vmul.f32 %v6048, %v6874
        %v7108 = vmul.f32 %v6050, %v6878
        %v7109 = vmul.f32 %v6052, %v6882
        %v7110 = vmul.f32 %v6054, %v6886
        %v7111 = vmul.f32 %v6056, %v6890
        %v7112 = vmul.f32 %v6058, %v6894
        %v7113 = vmul.f32 %v6060, %v6898
        %v7114 = vmul.f32 %v6062, %v6902
        %v7115 = vmul.f32 %v6064, %v6906
        %v7116 = vmul.f32 %v6066, %v6910
        %v7117 = vmul.f32 %v6068, %v6914
        %v7118 = vmul.f32 %v6070, %v6918
        %v7119 = vmul.f32 %v6072, %v6922
        %v7120 = vmul.f32 %v6074, %v6926
        %v7121 = vmul.f32 %v6076, %v6930
        %v7122 = vmul.f32 %v6078, %v6934
        %v7123 = vmul.f32 %v6080, %v6938
        %v7124 = vmul.f32 %v6082, %v6942
        %v7125 = vmul.f32 %v6084, %v6946
        %v7126 = vmul.f32 %v6086, %v6950
        %v7127 = vmul.f32 %v6088, %v6954
        %v7128 = vmul.f32 %v6090, %v6958
        %v7129 = vmul.f32 %v6092, %v6962
        %v7130 = vmul.f32 %v6094, %v6966
        %v7131 = vmul.f32 %v6096, %v6970
        %v7132 = vmul.f32 %v6098, %v6974
        %v7133 = vmul.f32 %v6100, %v6978
        %v7134 = vmul.f32 %v6102, %v6982
        %v7135 = vmul.f32 %v6104, %v6986
        %v7136 = vmul.f32 %v6106, %v6990
        %v7137 = vmul.f32 %v6108, %v6994
        %v7138 = vmul.f32 %v6110, %v6998
        %v7139 = vmul.f32 %v6112, %v7002
        %v7140 = vmul.f32 %v6114, %v7006
        %v7141 = vmul.f32 %v6116, %v7010
        %v7142 = vmul.f32 %v6118, %v7014
        %v7143 = vsel %vm480, %v7015, 0.0
        %7144 = vadd.xlane.f32.xlu0 %v7143
        %v7145 = vpop.xlane.xlu0 %7144
        %v7146 = vsel %vm480, %v7016, 0.0
        %7147 = vadd.xlane.f32.xlu0 %v7146
        %v7148 = vpop.xlane.xlu0 %7147
        %v7149 = vsel %vm480, %v7017, 0.0
        %7150 = vadd.xlane.f32.xlu0 %v7149
        %v7151 = vpop.xlane.xlu0 %7150
        %v7152 = vsel %vm480, %v7018, 0.0
        %7153 = vadd.xlane.f32.xlu0 %v7152
        %v7154 = vpop.xlane.xlu0 %7153
        %v7155 = vsel %vm480, %v7019, 0.0
        %7156 = vadd.xlane.f32.xlu0 %v7155
        %v7157 = vpop.xlane.xlu0 %7156
        %v7158 = vsel %vm480, %v7020, 0.0
        %7159 = vadd.xlane.f32.xlu0 %v7158
        %v7160 = vpop.xlane.xlu0 %7159
        %v7161 = vsel %vm480, %v7021, 0.0
        %7162 = vadd.xlane.f32.xlu0 %v7161
        %v7163 = vpop.xlane.xlu0 %7162
        %v7164 = vsel %vm480, %v7022, 0.0
        %7165 = vadd.xlane.f32.xlu0 %v7164
        %v7166 = vpop.xlane.xlu0 %7165
        %v7167 = vsel %vm480, %v7023, 0.0
        %7168 = vadd.xlane.f32.xlu0 %v7167
        %v7169 = vpop.xlane.xlu0 %7168
        %v7170 = vsel %vm480, %v7024, 0.0
        %7171 = vadd.xlane.f32.xlu0 %v7170
        %v7172 = vpop.xlane.xlu0 %7171
        %v7173 = vsel %vm480, %v7025, 0.0
        %7174 = vadd.xlane.f32.xlu0 %v7173
        %v7175 = vpop.xlane.xlu0 %7174
        %v7176 = vsel %vm480, %v7026, 0.0
        %7177 = vadd.xlane.f32.xlu0 %v7176
        %v7178 = vpop.xlane.xlu0 %7177
        %v7179 = vsel %vm480, %v7027, 0.0
        %7180 = vadd.xlane.f32.xlu0 %v7179
        %v7181 = vpop.xlane.xlu0 %7180
        %v7182 = vsel %vm480, %v7028, 0.0
        %7183 = vadd.xlane.f32.xlu0 %v7182
        %v7184 = vpop.xlane.xlu0 %7183
        %v7185 = vsel %vm480, %v7029, 0.0
        %7186 = vadd.xlane.f32.xlu0 %v7185
        %v7187 = vpop.xlane.xlu0 %7186
        %v7188 = vsel %vm480, %v7030, 0.0
        %7189 = vadd.xlane.f32.xlu0 %v7188
        %v7190 = vpop.xlane.xlu0 %7189
        %v7191 = vsel %vm480, %v7031, 0.0
        %7192 = vadd.xlane.f32.xlu0 %v7191
        %v7193 = vpop.xlane.xlu0 %7192
        %v7194 = vsel %vm480, %v7032, 0.0
        %7195 = vadd.xlane.f32.xlu0 %v7194
        %v7196 = vpop.xlane.xlu0 %7195
        %v7197 = vsel %vm480, %v7033, 0.0
        %7198 = vadd.xlane.f32.xlu0 %v7197
        %v7199 = vpop.xlane.xlu0 %7198
        %v7200 = vsel %vm480, %v7034, 0.0
        %7201 = vadd.xlane.f32.xlu0 %v7200
        %v7202 = vpop.xlane.xlu0 %7201
        %v7203 = vsel %vm480, %v7035, 0.0
        %7204 = vadd.xlane.f32.xlu0 %v7203
        %v7205 = vpop.xlane.xlu0 %7204
        %v7206 = vsel %vm480, %v7036, 0.0
        %7207 = vadd.xlane.f32.xlu0 %v7206
        %v7208 = vpop.xlane.xlu0 %7207
        %v7209 = vsel %vm480, %v7037, 0.0
        %7210 = vadd.xlane.f32.xlu0 %v7209
        %v7211 = vpop.xlane.xlu0 %7210
        %v7212 = vsel %vm480, %v7038, 0.0
        %7213 = vadd.xlane.f32.xlu0 %v7212
        %v7214 = vpop.xlane.xlu0 %7213
        %v7215 = vsel %vm480, %v7039, 0.0
        %7216 = vadd.xlane.f32.xlu0 %v7215
        %v7217 = vpop.xlane.xlu0 %7216
        %v7218 = vsel %vm480, %v7040, 0.0
        %7219 = vadd.xlane.f32.xlu0 %v7218
        %v7220 = vpop.xlane.xlu0 %7219
        %v7221 = vsel %vm480, %v7041, 0.0
        %7222 = vadd.xlane.f32.xlu0 %v7221
        %v7223 = vpop.xlane.xlu0 %7222
        %v7224 = vsel %vm480, %v7042, 0.0
        %7225 = vadd.xlane.f32.xlu0 %v7224
        %v7226 = vpop.xlane.xlu0 %7225
        %v7227 = vsel %vm480, %v7043, 0.0
        %7228 = vadd.xlane.f32.xlu0 %v7227
        %v7229 = vpop.xlane.xlu0 %7228
        %v7230 = vsel %vm480, %v7044, 0.0
        %7231 = vadd.xlane.f32.xlu0 %v7230
        %v7232 = vpop.xlane.xlu0 %7231
        %v7233 = vsel %vm480, %v7045, 0.0
        %7234 = vadd.xlane.f32.xlu0 %v7233
        %v7235 = vpop.xlane.xlu0 %7234
        %v7236 = vsel %vm480, %v7046, 0.0
        %7237 = vadd.xlane.f32.xlu0 %v7236
        %v7238 = vpop.xlane.xlu0 %7237
        %v7239 = vsel %vm480, %v7047, 0.0
        %7240 = vadd.xlane.f32.xlu0 %v7239
        %v7241 = vpop.xlane.xlu0 %7240
        %v7242 = vsel %vm480, %v7048, 0.0
        %7243 = vadd.xlane.f32.xlu0 %v7242
        %v7244 = vpop.xlane.xlu0 %7243
        %v7245 = vsel %vm480, %v7049, 0.0
        %7246 = vadd.xlane.f32.xlu0 %v7245
        %v7247 = vpop.xlane.xlu0 %7246
        %v7248 = vsel %vm480, %v7050, 0.0
        %7249 = vadd.xlane.f32.xlu0 %v7248
        %v7250 = vpop.xlane.xlu0 %7249
        %v7251 = vsel %vm480, %v7051, 0.0
        %7252 = vadd.xlane.f32.xlu0 %v7251
        %v7253 = vpop.xlane.xlu0 %7252
        %v7254 = vsel %vm480, %v7052, 0.0
        %7255 = vadd.xlane.f32.xlu0 %v7254
        %v7256 = vpop.xlane.xlu0 %7255
        %v7257 = vsel %vm480, %v7053, 0.0
        %7258 = vadd.xlane.f32.xlu0 %v7257
        %v7259 = vpop.xlane.xlu0 %7258
        %v7260 = vsel %vm480, %v7054, 0.0
        %7261 = vadd.xlane.f32.xlu0 %v7260
        %v7262 = vpop.xlane.xlu0 %7261
        %v7263 = vsel %vm480, %v7055, 0.0
        %7264 = vadd.xlane.f32.xlu0 %v7263
        %v7265 = vpop.xlane.xlu0 %7264
        %v7266 = vsel %vm480, %v7056, 0.0
        %7267 = vadd.xlane.f32.xlu0 %v7266
        %v7268 = vpop.xlane.xlu0 %7267
        %v7269 = vsel %vm480, %v7057, 0.0
        %7270 = vadd.xlane.f32.xlu0 %v7269
        %v7271 = vpop.xlane.xlu0 %7270
        %v7272 = vsel %vm480, %v7058, 0.0
        %7273 = vadd.xlane.f32.xlu0 %v7272
        %v7274 = vpop.xlane.xlu0 %7273
        %v7275 = vsel %vm480, %v7059, 0.0
        %7276 = vadd.xlane.f32.xlu0 %v7275
        %v7277 = vpop.xlane.xlu0 %7276
        %v7278 = vsel %vm480, %v7060, 0.0
        %7279 = vadd.xlane.f32.xlu0 %v7278
        %v7280 = vpop.xlane.xlu0 %7279
        %v7281 = vsel %vm480, %v7061, 0.0
        %7282 = vadd.xlane.f32.xlu0 %v7281
        %v7283 = vpop.xlane.xlu0 %7282
        %v7284 = vsel %vm480, %v7062, 0.0
        %7285 = vadd.xlane.f32.xlu0 %v7284
        %v7286 = vpop.xlane.xlu0 %7285
        %v7287 = vsel %vm480, %v7063, 0.0
        %7288 = vadd.xlane.f32.xlu0 %v7287
        %v7289 = vpop.xlane.xlu0 %7288
        %v7290 = vsel %vm480, %v7064, 0.0
        %7291 = vadd.xlane.f32.xlu0 %v7290
        %v7292 = vpop.xlane.xlu0 %7291
        %v7293 = vsel %vm480, %v7065, 0.0
        %7294 = vadd.xlane.f32.xlu0 %v7293
        %v7295 = vpop.xlane.xlu0 %7294
        %v7296 = vsel %vm480, %v7066, 0.0
        %7297 = vadd.xlane.f32.xlu0 %v7296
        %v7298 = vpop.xlane.xlu0 %7297
        %v7299 = vsel %vm480, %v7067, 0.0
        %7300 = vadd.xlane.f32.xlu0 %v7299
        %v7301 = vpop.xlane.xlu0 %7300
        %v7302 = vsel %vm480, %v7068, 0.0
        %7303 = vadd.xlane.f32.xlu0 %v7302
        %v7304 = vpop.xlane.xlu0 %7303
        %v7305 = vsel %vm480, %v7069, 0.0
        %7306 = vadd.xlane.f32.xlu0 %v7305
        %v7307 = vpop.xlane.xlu0 %7306
        %v7308 = vsel %vm480, %v7070, 0.0
        %7309 = vadd.xlane.f32.xlu0 %v7308
        %v7310 = vpop.xlane.xlu0 %7309
        %v7311 = vsel %vm480, %v7071, 0.0
        %7312 = vadd.xlane.f32.xlu0 %v7311
        %v7313 = vpop.xlane.xlu0 %7312
        %v7314 = vsel %vm480, %v7072, 0.0
        %7315 = vadd.xlane.f32.xlu0 %v7314
        %v7316 = vpop.xlane.xlu0 %7315
        %v7317 = vsel %vm480, %v7073, 0.0
        %7318 = vadd.xlane.f32.xlu0 %v7317
        %v7319 = vpop.xlane.xlu0 %7318
        %v7320 = vsel %vm480, %v7074, 0.0
        %7321 = vadd.xlane.f32.xlu0 %v7320
        %v7322 = vpop.xlane.xlu0 %7321
        %v7323 = vsel %vm480, %v7075, 0.0
        %7324 = vadd.xlane.f32.xlu0 %v7323
        %v7325 = vpop.xlane.xlu0 %7324
        %v7326 = vsel %vm480, %v7076, 0.0
        %7327 = vadd.xlane.f32.xlu0 %v7326
        %v7328 = vpop.xlane.xlu0 %7327
        %v7329 = vsel %vm480, %v7077, 0.0
        %7330 = vadd.xlane.f32.xlu0 %v7329
        %v7331 = vpop.xlane.xlu0 %7330
        %v7332 = vsel %vm480, %v7078, 0.0
        %7333 = vadd.xlane.f32.xlu0 %v7332
        %v7334 = vpop.xlane.xlu0 %7333
        %v7335 = vsel %vm480, %v7079, 0.0
        %7336 = vadd.xlane.f32.xlu0 %v7335
        %v7337 = vpop.xlane.xlu0 %7336
        %v7338 = vsel %vm480, %v7080, 0.0
        %7339 = vadd.xlane.f32.xlu0 %v7338
        %v7340 = vpop.xlane.xlu0 %7339
        %v7341 = vsel %vm480, %v7081, 0.0
        %7342 = vadd.xlane.f32.xlu0 %v7341
        %v7343 = vpop.xlane.xlu0 %7342
        %v7344 = vsel %vm480, %v7082, 0.0
        %7345 = vadd.xlane.f32.xlu0 %v7344
        %v7346 = vpop.xlane.xlu0 %7345
        %v7347 = vsel %vm480, %v7083, 0.0
        %7348 = vadd.xlane.f32.xlu0 %v7347
        %v7349 = vpop.xlane.xlu0 %7348
        %v7350 = vsel %vm480, %v7084, 0.0
        %7351 = vadd.xlane.f32.xlu0 %v7350
        %v7352 = vpop.xlane.xlu0 %7351
        %v7353 = vsel %vm480, %v7085, 0.0
        %7354 = vadd.xlane.f32.xlu0 %v7353
        %v7355 = vpop.xlane.xlu0 %7354
        %v7356 = vsel %vm480, %v7086, 0.0
        %7357 = vadd.xlane.f32.xlu0 %v7356
        %v7358 = vpop.xlane.xlu0 %7357
        %v7359 = vsel %vm480, %v7087, 0.0
        %7360 = vadd.xlane.f32.xlu0 %v7359
        %v7361 = vpop.xlane.xlu0 %7360
        %v7362 = vsel %vm480, %v7088, 0.0
        %7363 = vadd.xlane.f32.xlu0 %v7362
        %v7364 = vpop.xlane.xlu0 %7363
        %v7365 = vsel %vm480, %v7089, 0.0
        %7366 = vadd.xlane.f32.xlu0 %v7365
        %v7367 = vpop.xlane.xlu0 %7366
        %v7368 = vsel %vm480, %v7090, 0.0
        %7369 = vadd.xlane.f32.xlu0 %v7368
        %v7370 = vpop.xlane.xlu0 %7369
        %v7371 = vsel %vm480, %v7091, 0.0
        %7372 = vadd.xlane.f32.xlu0 %v7371
        %v7373 = vpop.xlane.xlu0 %7372
        %v7374 = vsel %vm480, %v7092, 0.0
        %7375 = vadd.xlane.f32.xlu0 %v7374
        %v7376 = vpop.xlane.xlu0 %7375
        %v7377 = vsel %vm480, %v7093, 0.0
        %7378 = vadd.xlane.f32.xlu0 %v7377
        %v7379 = vpop.xlane.xlu0 %7378
        %v7380 = vsel %vm480, %v7094, 0.0
        %7381 = vadd.xlane.f32.xlu0 %v7380
        %v7382 = vpop.xlane.xlu0 %7381
        %v7383 = vsel %vm480, %v7095, 0.0
        %7384 = vadd.xlane.f32.xlu0 %v7383
        %v7385 = vpop.xlane.xlu0 %7384
        %v7386 = vsel %vm480, %v7096, 0.0
        %7387 = vadd.xlane.f32.xlu0 %v7386
        %v7388 = vpop.xlane.xlu0 %7387
        %v7389 = vsel %vm480, %v7097, 0.0
        %7390 = vadd.xlane.f32.xlu0 %v7389
        %v7391 = vpop.xlane.xlu0 %7390
        %v7392 = vsel %vm480, %v7098, 0.0
        %7393 = vadd.xlane.f32.xlu0 %v7392
        %v7394 = vpop.xlane.xlu0 %7393
        %v7395 = vsel %vm480, %v7099, 0.0
        %7396 = vadd.xlane.f32.xlu0 %v7395
        %v7397 = vpop.xlane.xlu0 %7396
        %v7398 = vsel %vm480, %v7100, 0.0
        %7399 = vadd.xlane.f32.xlu0 %v7398
        %v7400 = vpop.xlane.xlu0 %7399
        %v7401 = vsel %vm480, %v7101, 0.0
        %7402 = vadd.xlane.f32.xlu0 %v7401
        %v7403 = vpop.xlane.xlu0 %7402
        %v7404 = vsel %vm480, %v7102, 0.0
        %7405 = vadd.xlane.f32.xlu0 %v7404
        %v7406 = vpop.xlane.xlu0 %7405
        %v7407 = vsel %vm480, %v7103, 0.0
        %7408 = vadd.xlane.f32.xlu0 %v7407
        %v7409 = vpop.xlane.xlu0 %7408
        %v7410 = vsel %vm480, %v7104, 0.0
        %7411 = vadd.xlane.f32.xlu0 %v7410
        %v7412 = vpop.xlane.xlu0 %7411
        %v7413 = vsel %vm480, %v7105, 0.0
        %7414 = vadd.xlane.f32.xlu0 %v7413
        %v7415 = vpop.xlane.xlu0 %7414
        %v7416 = vsel %vm480, %v7106, 0.0
        %7417 = vadd.xlane.f32.xlu0 %v7416
        %v7418 = vpop.xlane.xlu0 %7417
        %v7419 = vsel %vm480, %v7107, 0.0
        %7420 = vadd.xlane.f32.xlu0 %v7419
        %v7421 = vpop.xlane.xlu0 %7420
        %v7422 = vsel %vm480, %v7108, 0.0
        %7423 = vadd.xlane.f32.xlu0 %v7422
        %v7424 = vpop.xlane.xlu0 %7423
        %v7425 = vsel %vm480, %v7109, 0.0
        %7426 = vadd.xlane.f32.xlu0 %v7425
        %v7427 = vpop.xlane.xlu0 %7426
        %v7428 = vsel %vm480, %v7110, 0.0
        %7429 = vadd.xlane.f32.xlu0 %v7428
        %v7430 = vpop.xlane.xlu0 %7429
        %v7431 = vsel %vm480, %v7111, 0.0
        %7432 = vadd.xlane.f32.xlu0 %v7431
        %v7433 = vpop.xlane.xlu0 %7432
        %v7434 = vsel %vm480, %v7112, 0.0
        %7435 = vadd.xlane.f32.xlu0 %v7434
        %v7436 = vpop.xlane.xlu0 %7435
        %v7437 = vsel %vm480, %v7113, 0.0
        %7438 = vadd.xlane.f32.xlu0 %v7437
        %v7439 = vpop.xlane.xlu0 %7438
        %v7440 = vsel %vm480, %v7114, 0.0
        %7441 = vadd.xlane.f32.xlu0 %v7440
        %v7442 = vpop.xlane.xlu0 %7441
        %v7443 = vsel %vm480, %v7115, 0.0
        %7444 = vadd.xlane.f32.xlu0 %v7443
        %v7445 = vpop.xlane.xlu0 %7444
        %v7446 = vsel %vm480, %v7116, 0.0
        %7447 = vadd.xlane.f32.xlu0 %v7446
        %v7448 = vpop.xlane.xlu0 %7447
        %v7449 = vsel %vm480, %v7117, 0.0
        %7450 = vadd.xlane.f32.xlu0 %v7449
        %v7451 = vpop.xlane.xlu0 %7450
        %v7452 = vsel %vm480, %v7118, 0.0
        %7453 = vadd.xlane.f32.xlu0 %v7452
        %v7454 = vpop.xlane.xlu0 %7453
        %v7455 = vsel %vm480, %v7119, 0.0
        %7456 = vadd.xlane.f32.xlu0 %v7455
        %v7457 = vpop.xlane.xlu0 %7456
        %v7458 = vsel %vm480, %v7120, 0.0
        %7459 = vadd.xlane.f32.xlu0 %v7458
        %v7460 = vpop.xlane.xlu0 %7459
        %v7461 = vsel %vm480, %v7121, 0.0
        %7462 = vadd.xlane.f32.xlu0 %v7461
        %v7463 = vpop.xlane.xlu0 %7462
        %v7464 = vsel %vm480, %v7122, 0.0
        %7465 = vadd.xlane.f32.xlu0 %v7464
        %v7466 = vpop.xlane.xlu0 %7465
        %v7467 = vsel %vm480, %v7123, 0.0
        %7468 = vadd.xlane.f32.xlu0 %v7467
        %v7469 = vpop.xlane.xlu0 %7468
        %v7470 = vsel %vm480, %v7124, 0.0
        %7471 = vadd.xlane.f32.xlu0 %v7470
        %v7472 = vpop.xlane.xlu0 %7471
        %v7473 = vsel %vm480, %v7125, 0.0
        %7474 = vadd.xlane.f32.xlu0 %v7473
        %v7475 = vpop.xlane.xlu0 %7474
        %v7476 = vsel %vm480, %v7126, 0.0
        %7477 = vadd.xlane.f32.xlu0 %v7476
        %v7478 = vpop.xlane.xlu0 %7477
        %v7479 = vsel %vm480, %v7127, 0.0
        %7480 = vadd.xlane.f32.xlu0 %v7479
        %v7481 = vpop.xlane.xlu0 %7480
        %v7482 = vsel %vm480, %v7128, 0.0
        %7483 = vadd.xlane.f32.xlu0 %v7482
        %v7484 = vpop.xlane.xlu0 %7483
        %v7485 = vsel %vm480, %v7129, 0.0
        %7486 = vadd.xlane.f32.xlu0 %v7485
        %v7487 = vpop.xlane.xlu0 %7486
        %v7488 = vsel %vm480, %v7130, 0.0
        %7489 = vadd.xlane.f32.xlu0 %v7488
        %v7490 = vpop.xlane.xlu0 %7489
        %v7491 = vsel %vm480, %v7131, 0.0
        %7492 = vadd.xlane.f32.xlu0 %v7491
        %v7493 = vpop.xlane.xlu0 %7492
        %v7494 = vsel %vm480, %v7132, 0.0
        %7495 = vadd.xlane.f32.xlu0 %v7494
        %v7496 = vpop.xlane.xlu0 %7495
        %v7497 = vsel %vm480, %v7133, 0.0
        %7498 = vadd.xlane.f32.xlu0 %v7497
        %v7499 = vpop.xlane.xlu0 %7498
        %v7500 = vsel %vm480, %v7134, 0.0
        %7501 = vadd.xlane.f32.xlu0 %v7500
        %v7502 = vpop.xlane.xlu0 %7501
        %v7503 = vsel %vm480, %v7135, 0.0
        %7504 = vadd.xlane.f32.xlu0 %v7503
        %v7505 = vpop.xlane.xlu0 %7504
        %v7506 = vsel %vm480, %v7136, 0.0
        %7507 = vadd.xlane.f32.xlu0 %v7506
        %v7508 = vpop.xlane.xlu0 %7507
        %v7509 = vsel %vm480, %v7137, 0.0
        %7510 = vadd.xlane.f32.xlu0 %v7509
        %v7511 = vpop.xlane.xlu0 %7510
        %v7512 = vsel %vm480, %v7138, 0.0
        %7513 = vadd.xlane.f32.xlu0 %v7512
        %v7514 = vpop.xlane.xlu0 %7513
        %v7515 = vsel %vm480, %v7139, 0.0
        %7516 = vadd.xlane.f32.xlu0 %v7515
        %v7517 = vpop.xlane.xlu0 %7516
        %v7518 = vsel %vm480, %v7140, 0.0
        %7519 = vadd.xlane.f32.xlu0 %v7518
        %v7520 = vpop.xlane.xlu0 %7519
        %v7521 = vsel %vm480, %v7141, 0.0
        %7522 = vadd.xlane.f32.xlu0 %v7521
        %v7523 = vpop.xlane.xlu0 %7522
        %v7524 = vsel %vm480, %v7142, 0.0
        %7525 = vadd.xlane.f32.xlu0 %v7524
        %v7526 = vpop.xlane.xlu0 %7525
        %v7527 = vlaneseq
        %v7528 = vshrl.u32 %v7527, 7
        %v7529 = vsub.s32 0, %v7528
        %v7530 = vrot.slane %v5864, %v7529
        %v7531 = vlaneseq
        %v7532 = vshrl.u32 %v7531, 7
        %v7533 = vsub.s32 0, %v7532
        %v7534 = vrot.slane %v5866, %v7533
        %v7535 = vlaneseq
        %v7536 = vshrl.u32 %v7535, 7
        %v7537 = vsub.s32 0, %v7536
        %v7538 = vrot.slane %v5868, %v7537
        %v7539 = vlaneseq
        %v7540 = vshrl.u32 %v7539, 7
        %v7541 = vsub.s32 0, %v7540
        %v7542 = vrot.slane %v5870, %v7541
        %v7543 = vlaneseq
        %v7544 = vshrl.u32 %v7543, 7
        %v7545 = vsub.s32 0, %v7544
        %v7546 = vrot.slane %v5872, %v7545
        %v7547 = vlaneseq
        %v7548 = vshrl.u32 %v7547, 7
        %v7549 = vsub.s32 0, %v7548
        %v7550 = vrot.slane %v5874, %v7549
        %v7551 = vlaneseq
        %v7552 = vshrl.u32 %v7551, 7
        %v7553 = vsub.s32 0, %v7552
        %v7554 = vrot.slane %v5876, %v7553
        %v7555 = vlaneseq
        %v7556 = vshrl.u32 %v7555, 7
        %v7557 = vsub.s32 0, %v7556
        %v7558 = vrot.slane %v5878, %v7557
        %v7559 = vlaneseq
        %v7560 = vshrl.u32 %v7559, 7
        %v7561 = vsub.s32 0, %v7560
        %v7562 = vrot.slane %v5880, %v7561
        %v7563 = vlaneseq
        %v7564 = vshrl.u32 %v7563, 7
        %v7565 = vsub.s32 0, %v7564
        %v7566 = vrot.slane %v5882, %v7565
        %v7567 = vlaneseq
        %v7568 = vshrl.u32 %v7567, 7
        %v7569 = vsub.s32 0, %v7568
        %v7570 = vrot.slane %v5884, %v7569
        %v7571 = vlaneseq
        %v7572 = vshrl.u32 %v7571, 7
        %v7573 = vsub.s32 0, %v7572
        %v7574 = vrot.slane %v5886, %v7573
        %v7575 = vlaneseq
        %v7576 = vshrl.u32 %v7575, 7
        %v7577 = vsub.s32 0, %v7576
        %v7578 = vrot.slane %v5888, %v7577
        %v7579 = vlaneseq
        %v7580 = vshrl.u32 %v7579, 7
        %v7581 = vsub.s32 0, %v7580
        %v7582 = vrot.slane %v5890, %v7581
        %v7583 = vlaneseq
        %v7584 = vshrl.u32 %v7583, 7
        %v7585 = vsub.s32 0, %v7584
        %v7586 = vrot.slane %v5892, %v7585
        %v7587 = vlaneseq
        %v7588 = vshrl.u32 %v7587, 7
        %v7589 = vsub.s32 0, %v7588
        %v7590 = vrot.slane %v5894, %v7589
        %v7591 = vlaneseq
        %v7592 = vshrl.u32 %v7591, 7
        %v7593 = vsub.s32 0, %v7592
        %v7594 = vrot.slane %v5896, %v7593
        %v7595 = vlaneseq
        %v7596 = vshrl.u32 %v7595, 7
        %v7597 = vsub.s32 0, %v7596
        %v7598 = vrot.slane %v5898, %v7597
        %v7599 = vlaneseq
        %v7600 = vshrl.u32 %v7599, 7
        %v7601 = vsub.s32 0, %v7600
        %v7602 = vrot.slane %v5900, %v7601
        %v7603 = vlaneseq
        %v7604 = vshrl.u32 %v7603, 7
        %v7605 = vsub.s32 0, %v7604
        %v7606 = vrot.slane %v5902, %v7605
        %v7607 = vlaneseq
        %v7608 = vshrl.u32 %v7607, 7
        %v7609 = vsub.s32 0, %v7608
        %v7610 = vrot.slane %v5904, %v7609
        %v7611 = vlaneseq
        %v7612 = vshrl.u32 %v7611, 7
        %v7613 = vsub.s32 0, %v7612
        %v7614 = vrot.slane %v5906, %v7613
        %v7615 = vlaneseq
        %v7616 = vshrl.u32 %v7615, 7
        %v7617 = vsub.s32 0, %v7616
        %v7618 = vrot.slane %v5908, %v7617
        %v7619 = vlaneseq
        %v7620 = vshrl.u32 %v7619, 7
        %v7621 = vsub.s32 0, %v7620
        %v7622 = vrot.slane %v5910, %v7621
        %v7623 = vlaneseq
        %v7624 = vshrl.u32 %v7623, 7
        %v7625 = vsub.s32 0, %v7624
        %v7626 = vrot.slane %v5912, %v7625
        %v7627 = vlaneseq
        %v7628 = vshrl.u32 %v7627, 7
        %v7629 = vsub.s32 0, %v7628
        %v7630 = vrot.slane %v5914, %v7629
        %v7631 = vlaneseq
        %v7632 = vshrl.u32 %v7631, 7
        %v7633 = vsub.s32 0, %v7632
        %v7634 = vrot.slane %v5916, %v7633
        %v7635 = vlaneseq
        %v7636 = vshrl.u32 %v7635, 7
        %v7637 = vsub.s32 0, %v7636
        %v7638 = vrot.slane %v5918, %v7637
        %v7639 = vlaneseq
        %v7640 = vshrl.u32 %v7639, 7
        %v7641 = vsub.s32 0, %v7640
        %v7642 = vrot.slane %v5920, %v7641
        %v7643 = vlaneseq
        %v7644 = vshrl.u32 %v7643, 7
        %v7645 = vsub.s32 0, %v7644
        %v7646 = vrot.slane %v5922, %v7645
        %v7647 = vlaneseq
        %v7648 = vshrl.u32 %v7647, 7
        %v7649 = vsub.s32 0, %v7648
        %v7650 = vrot.slane %v5924, %v7649
        %v7651 = vlaneseq
        %v7652 = vshrl.u32 %v7651, 7
        %v7653 = vsub.s32 0, %v7652
        %v7654 = vrot.slane %v5926, %v7653
        %v7655 = vlaneseq
        %v7656 = vshrl.u32 %v7655, 7
        %v7657 = vsub.s32 0, %v7656
        %v7658 = vrot.slane %v5928, %v7657
        %v7659 = vlaneseq
        %v7660 = vshrl.u32 %v7659, 7
        %v7661 = vsub.s32 0, %v7660
        %v7662 = vrot.slane %v5930, %v7661
        %v7663 = vlaneseq
        %v7664 = vshrl.u32 %v7663, 7
        %v7665 = vsub.s32 0, %v7664
        %v7666 = vrot.slane %v5932, %v7665
        %v7667 = vlaneseq
        %v7668 = vshrl.u32 %v7667, 7
        %v7669 = vsub.s32 0, %v7668
        %v7670 = vrot.slane %v5934, %v7669
        %v7671 = vlaneseq
        %v7672 = vshrl.u32 %v7671, 7
        %v7673 = vsub.s32 0, %v7672
        %v7674 = vrot.slane %v5936, %v7673
        %v7675 = vlaneseq
        %v7676 = vshrl.u32 %v7675, 7
        %v7677 = vsub.s32 0, %v7676
        %v7678 = vrot.slane %v5938, %v7677
        %v7679 = vlaneseq
        %v7680 = vshrl.u32 %v7679, 7
        %v7681 = vsub.s32 0, %v7680
        %v7682 = vrot.slane %v5940, %v7681
        %v7683 = vlaneseq
        %v7684 = vshrl.u32 %v7683, 7
        %v7685 = vsub.s32 0, %v7684
        %v7686 = vrot.slane %v5942, %v7685
        %v7687 = vlaneseq
        %v7688 = vshrl.u32 %v7687, 7
        %v7689 = vsub.s32 0, %v7688
        %v7690 = vrot.slane %v5944, %v7689
        %v7691 = vlaneseq
        %v7692 = vshrl.u32 %v7691, 7
        %v7693 = vsub.s32 0, %v7692
        %v7694 = vrot.slane %v5946, %v7693
        %v7695 = vlaneseq
        %v7696 = vshrl.u32 %v7695, 7
        %v7697 = vsub.s32 0, %v7696
        %v7698 = vrot.slane %v5948, %v7697
        %v7699 = vlaneseq
        %v7700 = vshrl.u32 %v7699, 7
        %v7701 = vsub.s32 0, %v7700
        %v7702 = vrot.slane %v5950, %v7701
        %v7703 = vlaneseq
        %v7704 = vshrl.u32 %v7703, 7
        %v7705 = vsub.s32 0, %v7704
        %v7706 = vrot.slane %v5952, %v7705
        %v7707 = vlaneseq
        %v7708 = vshrl.u32 %v7707, 7
        %v7709 = vsub.s32 0, %v7708
        %v7710 = vrot.slane %v5954, %v7709
        %v7711 = vlaneseq
        %v7712 = vshrl.u32 %v7711, 7
        %v7713 = vsub.s32 0, %v7712
        %v7714 = vrot.slane %v5956, %v7713
        %v7715 = vlaneseq
        %v7716 = vshrl.u32 %v7715, 7
        %v7717 = vsub.s32 0, %v7716
        %v7718 = vrot.slane %v5958, %v7717
        %v7719 = vlaneseq
        %v7720 = vshrl.u32 %v7719, 7
        %v7721 = vsub.s32 0, %v7720
        %v7722 = vrot.slane %v5960, %v7721
        %v7723 = vlaneseq
        %v7724 = vshrl.u32 %v7723, 7
        %v7725 = vsub.s32 0, %v7724
        %v7726 = vrot.slane %v5962, %v7725
        %v7727 = vlaneseq
        %v7728 = vshrl.u32 %v7727, 7
        %v7729 = vsub.s32 0, %v7728
        %v7730 = vrot.slane %v5964, %v7729
        %v7731 = vlaneseq
        %v7732 = vshrl.u32 %v7731, 7
        %v7733 = vsub.s32 0, %v7732
        %v7734 = vrot.slane %v5966, %v7733
        %v7735 = vlaneseq
        %v7736 = vshrl.u32 %v7735, 7
        %v7737 = vsub.s32 0, %v7736
        %v7738 = vrot.slane %v5968, %v7737
        %v7739 = vlaneseq
        %v7740 = vshrl.u32 %v7739, 7
        %v7741 = vsub.s32 0, %v7740
        %v7742 = vrot.slane %v5970, %v7741
        %v7743 = vlaneseq
        %v7744 = vshrl.u32 %v7743, 7
        %v7745 = vsub.s32 0, %v7744
        %v7746 = vrot.slane %v5972, %v7745
        %v7747 = vlaneseq
        %v7748 = vshrl.u32 %v7747, 7
        %v7749 = vsub.s32 0, %v7748
        %v7750 = vrot.slane %v5974, %v7749
        %v7751 = vlaneseq
        %v7752 = vshrl.u32 %v7751, 7
        %v7753 = vsub.s32 0, %v7752
        %v7754 = vrot.slane %v5976, %v7753
        %v7755 = vlaneseq
        %v7756 = vshrl.u32 %v7755, 7
        %v7757 = vsub.s32 0, %v7756
        %v7758 = vrot.slane %v5978, %v7757
        %v7759 = vlaneseq
        %v7760 = vshrl.u32 %v7759, 7
        %v7761 = vsub.s32 0, %v7760
        %v7762 = vrot.slane %v5980, %v7761
        %v7763 = vlaneseq
        %v7764 = vshrl.u32 %v7763, 7
        %v7765 = vsub.s32 0, %v7764
        %v7766 = vrot.slane %v5982, %v7765
        %v7767 = vlaneseq
        %v7768 = vshrl.u32 %v7767, 7
        %v7769 = vsub.s32 0, %v7768
        %v7770 = vrot.slane %v5984, %v7769
        %v7771 = vlaneseq
        %v7772 = vshrl.u32 %v7771, 7
        %v7773 = vsub.s32 0, %v7772
        %v7774 = vrot.slane %v5986, %v7773
        %v7775 = vlaneseq
        %v7776 = vshrl.u32 %v7775, 7
        %v7777 = vsub.s32 0, %v7776
        %v7778 = vrot.slane %v5988, %v7777
        %v7779 = vlaneseq
        %v7780 = vshrl.u32 %v7779, 7
        %v7781 = vsub.s32 0, %v7780
        %v7782 = vrot.slane %v5990, %v7781
        %v7783 = vlaneseq
        %v7784 = vshrl.u32 %v7783, 7
        %v7785 = vsub.s32 0, %v7784
        %v7786 = vrot.slane %v5992, %v7785
        %v7787 = vlaneseq
        %v7788 = vshrl.u32 %v7787, 7
        %v7789 = vsub.s32 0, %v7788
        %v7790 = vrot.slane %v5994, %v7789
        %v7791 = vlaneseq
        %v7792 = vshrl.u32 %v7791, 7
        %v7793 = vsub.s32 0, %v7792
        %v7794 = vrot.slane %v5996, %v7793
        %v7795 = vlaneseq
        %v7796 = vshrl.u32 %v7795, 7
        %v7797 = vsub.s32 0, %v7796
        %v7798 = vrot.slane %v5998, %v7797
        %v7799 = vlaneseq
        %v7800 = vshrl.u32 %v7799, 7
        %v7801 = vsub.s32 0, %v7800
        %v7802 = vrot.slane %v6000, %v7801
        %v7803 = vlaneseq
        %v7804 = vshrl.u32 %v7803, 7
        %v7805 = vsub.s32 0, %v7804
        %v7806 = vrot.slane %v6002, %v7805
        %v7807 = vlaneseq
        %v7808 = vshrl.u32 %v7807, 7
        %v7809 = vsub.s32 0, %v7808
        %v7810 = vrot.slane %v6004, %v7809
        %v7811 = vlaneseq
        %v7812 = vshrl.u32 %v7811, 7
        %v7813 = vsub.s32 0, %v7812
        %v7814 = vrot.slane %v6006, %v7813
        %v7815 = vlaneseq
        %v7816 = vshrl.u32 %v7815, 7
        %v7817 = vsub.s32 0, %v7816
        %v7818 = vrot.slane %v6008, %v7817
        %v7819 = vlaneseq
        %v7820 = vshrl.u32 %v7819, 7
        %v7821 = vsub.s32 0, %v7820
        %v7822 = vrot.slane %v6010, %v7821
        %v7823 = vlaneseq
        %v7824 = vshrl.u32 %v7823, 7
        %v7825 = vsub.s32 0, %v7824
        %v7826 = vrot.slane %v6012, %v7825
        %v7827 = vlaneseq
        %v7828 = vshrl.u32 %v7827, 7
        %v7829 = vsub.s32 0, %v7828
        %v7830 = vrot.slane %v6014, %v7829
        %v7831 = vlaneseq
        %v7832 = vshrl.u32 %v7831, 7
        %v7833 = vsub.s32 0, %v7832
        %v7834 = vrot.slane %v6016, %v7833
        %v7835 = vlaneseq
        %v7836 = vshrl.u32 %v7835, 7
        %v7837 = vsub.s32 0, %v7836
        %v7838 = vrot.slane %v6018, %v7837
        %v7839 = vlaneseq
        %v7840 = vshrl.u32 %v7839, 7
        %v7841 = vsub.s32 0, %v7840
        %v7842 = vrot.slane %v6020, %v7841
        %v7843 = vlaneseq
        %v7844 = vshrl.u32 %v7843, 7
        %v7845 = vsub.s32 0, %v7844
        %v7846 = vrot.slane %v6022, %v7845
        %v7847 = vlaneseq
        %v7848 = vshrl.u32 %v7847, 7
        %v7849 = vsub.s32 0, %v7848
        %v7850 = vrot.slane %v6024, %v7849
        %v7851 = vlaneseq
        %v7852 = vshrl.u32 %v7851, 7
        %v7853 = vsub.s32 0, %v7852
        %v7854 = vrot.slane %v6026, %v7853
        %v7855 = vlaneseq
        %v7856 = vshrl.u32 %v7855, 7
        %v7857 = vsub.s32 0, %v7856
        %v7858 = vrot.slane %v6028, %v7857
        %v7859 = vlaneseq
        %v7860 = vshrl.u32 %v7859, 7
        %v7861 = vsub.s32 0, %v7860
        %v7862 = vrot.slane %v6030, %v7861
        %v7863 = vlaneseq
        %v7864 = vshrl.u32 %v7863, 7
        %v7865 = vsub.s32 0, %v7864
        %v7866 = vrot.slane %v6032, %v7865
        %v7867 = vlaneseq
        %v7868 = vshrl.u32 %v7867, 7
        %v7869 = vsub.s32 0, %v7868
        %v7870 = vrot.slane %v6034, %v7869
        %v7871 = vlaneseq
        %v7872 = vshrl.u32 %v7871, 7
        %v7873 = vsub.s32 0, %v7872
        %v7874 = vrot.slane %v6036, %v7873
        %v7875 = vlaneseq
        %v7876 = vshrl.u32 %v7875, 7
        %v7877 = vsub.s32 0, %v7876
        %v7878 = vrot.slane %v6038, %v7877
        %v7879 = vlaneseq
        %v7880 = vshrl.u32 %v7879, 7
        %v7881 = vsub.s32 0, %v7880
        %v7882 = vrot.slane %v6040, %v7881
        %v7883 = vlaneseq
        %v7884 = vshrl.u32 %v7883, 7
        %v7885 = vsub.s32 0, %v7884
        %v7886 = vrot.slane %v6042, %v7885
        %v7887 = vlaneseq
        %v7888 = vshrl.u32 %v7887, 7
        %v7889 = vsub.s32 0, %v7888
        %v7890 = vrot.slane %v6044, %v7889
        %v7891 = vlaneseq
        %v7892 = vshrl.u32 %v7891, 7
        %v7893 = vsub.s32 0, %v7892
        %v7894 = vrot.slane %v6046, %v7893
        %v7895 = vlaneseq
        %v7896 = vshrl.u32 %v7895, 7
        %v7897 = vsub.s32 0, %v7896
        %v7898 = vrot.slane %v6048, %v7897
        %v7899 = vlaneseq
        %v7900 = vshrl.u32 %v7899, 7
        %v7901 = vsub.s32 0, %v7900
        %v7902 = vrot.slane %v6050, %v7901
        %v7903 = vlaneseq
        %v7904 = vshrl.u32 %v7903, 7
        %v7905 = vsub.s32 0, %v7904
        %v7906 = vrot.slane %v6052, %v7905
        %v7907 = vlaneseq
        %v7908 = vshrl.u32 %v7907, 7
        %v7909 = vsub.s32 0, %v7908
        %v7910 = vrot.slane %v6054, %v7909
        %v7911 = vlaneseq
        %v7912 = vshrl.u32 %v7911, 7
        %v7913 = vsub.s32 0, %v7912
        %v7914 = vrot.slane %v6056, %v7913
        %v7915 = vlaneseq
        %v7916 = vshrl.u32 %v7915, 7
        %v7917 = vsub.s32 0, %v7916
        %v7918 = vrot.slane %v6058, %v7917
        %v7919 = vlaneseq
        %v7920 = vshrl.u32 %v7919, 7
        %v7921 = vsub.s32 0, %v7920
        %v7922 = vrot.slane %v6060, %v7921
        %v7923 = vlaneseq
        %v7924 = vshrl.u32 %v7923, 7
        %v7925 = vsub.s32 0, %v7924
        %v7926 = vrot.slane %v6062, %v7925
        %v7927 = vlaneseq
        %v7928 = vshrl.u32 %v7927, 7
        %v7929 = vsub.s32 0, %v7928
        %v7930 = vrot.slane %v6064, %v7929
        %v7931 = vlaneseq
        %v7932 = vshrl.u32 %v7931, 7
        %v7933 = vsub.s32 0, %v7932
        %v7934 = vrot.slane %v6066, %v7933
        %v7935 = vlaneseq
        %v7936 = vshrl.u32 %v7935, 7
        %v7937 = vsub.s32 0, %v7936
        %v7938 = vrot.slane %v6068, %v7937
        %v7939 = vlaneseq
        %v7940 = vshrl.u32 %v7939, 7
        %v7941 = vsub.s32 0, %v7940
        %v7942 = vrot.slane %v6070, %v7941
        %v7943 = vlaneseq
        %v7944 = vshrl.u32 %v7943, 7
        %v7945 = vsub.s32 0, %v7944
        %v7946 = vrot.slane %v6072, %v7945
        %v7947 = vlaneseq
        %v7948 = vshrl.u32 %v7947, 7
        %v7949 = vsub.s32 0, %v7948
        %v7950 = vrot.slane %v6074, %v7949
        %v7951 = vlaneseq
        %v7952 = vshrl.u32 %v7951, 7
        %v7953 = vsub.s32 0, %v7952
        %v7954 = vrot.slane %v6076, %v7953
        %v7955 = vlaneseq
        %v7956 = vshrl.u32 %v7955, 7
        %v7957 = vsub.s32 0, %v7956
        %v7958 = vrot.slane %v6078, %v7957
        %v7959 = vlaneseq
        %v7960 = vshrl.u32 %v7959, 7
        %v7961 = vsub.s32 0, %v7960
        %v7962 = vrot.slane %v6080, %v7961
        %v7963 = vlaneseq
        %v7964 = vshrl.u32 %v7963, 7
        %v7965 = vsub.s32 0, %v7964
        %v7966 = vrot.slane %v6082, %v7965
        %v7967 = vlaneseq
        %v7968 = vshrl.u32 %v7967, 7
        %v7969 = vsub.s32 0, %v7968
        %v7970 = vrot.slane %v6084, %v7969
        %v7971 = vlaneseq
        %v7972 = vshrl.u32 %v7971, 7
        %v7973 = vsub.s32 0, %v7972
        %v7974 = vrot.slane %v6086, %v7973
        %v7975 = vlaneseq
        %v7976 = vshrl.u32 %v7975, 7
        %v7977 = vsub.s32 0, %v7976
        %v7978 = vrot.slane %v6088, %v7977
        %v7979 = vlaneseq
        %v7980 = vshrl.u32 %v7979, 7
        %v7981 = vsub.s32 0, %v7980
        %v7982 = vrot.slane %v6090, %v7981
        %v7983 = vlaneseq
        %v7984 = vshrl.u32 %v7983, 7
        %v7985 = vsub.s32 0, %v7984
        %v7986 = vrot.slane %v6092, %v7985
        %v7987 = vlaneseq
        %v7988 = vshrl.u32 %v7987, 7
        %v7989 = vsub.s32 0, %v7988
        %v7990 = vrot.slane %v6094, %v7989
        %v7991 = vlaneseq
        %v7992 = vshrl.u32 %v7991, 7
        %v7993 = vsub.s32 0, %v7992
        %v7994 = vrot.slane %v6096, %v7993
        %v7995 = vlaneseq
        %v7996 = vshrl.u32 %v7995, 7
        %v7997 = vsub.s32 0, %v7996
        %v7998 = vrot.slane %v6098, %v7997
        %v7999 = vlaneseq
        %v8000 = vshrl.u32 %v7999, 7
        %v8001 = vsub.s32 0, %v8000
        %v8002 = vrot.slane %v6100, %v8001
        %v8003 = vlaneseq
        %v8004 = vshrl.u32 %v8003, 7
        %v8005 = vsub.s32 0, %v8004
        %v8006 = vrot.slane %v6102, %v8005
        %v8007 = vlaneseq
        %v8008 = vshrl.u32 %v8007, 7
        %v8009 = vsub.s32 0, %v8008
        %v8010 = vrot.slane %v6104, %v8009
        %v8011 = vlaneseq
        %v8012 = vshrl.u32 %v8011, 7
        %v8013 = vsub.s32 0, %v8012
        %v8014 = vrot.slane %v6106, %v8013
        %v8015 = vlaneseq
        %v8016 = vshrl.u32 %v8015, 7
        %v8017 = vsub.s32 0, %v8016
        %v8018 = vrot.slane %v6108, %v8017
        %v8019 = vlaneseq
        %v8020 = vshrl.u32 %v8019, 7
        %v8021 = vsub.s32 0, %v8020
        %v8022 = vrot.slane %v6110, %v8021
        %v8023 = vlaneseq
        %v8024 = vshrl.u32 %v8023, 7
        %v8025 = vsub.s32 0, %v8024
        %v8026 = vrot.slane %v6112, %v8025
        %v8027 = vlaneseq
        %v8028 = vshrl.u32 %v8027, 7
        %v8029 = vsub.s32 0, %v8028
        %v8030 = vrot.slane %v6114, %v8029
        %v8031 = vlaneseq
        %v8032 = vshrl.u32 %v8031, 7
        %v8033 = vsub.s32 0, %v8032
        %v8034 = vrot.slane %v6116, %v8033
        %v8035 = vlaneseq
        %v8036 = vshrl.u32 %v8035, 7
        %v8037 = vsub.s32 0, %v8036
        %v8038 = vrot.slane %v6118, %v8037
        %v8039 = vmul.f32 %v6248, %v7530
        %v8040 = vmul.f32 %v6250, %v7534
        %v8041 = vmul.f32 %v6252, %v7538
        %v8042 = vmul.f32 %v6254, %v7542
        %v8043 = vmul.f32 %v6256, %v7546
        %v8044 = vmul.f32 %v6258, %v7550
        %v8045 = vmul.f32 %v6260, %v7554
        %v8046 = vmul.f32 %v6262, %v7558
        %v8047 = vmul.f32 %v6264, %v7562
        %v8048 = vmul.f32 %v6266, %v7566
        %v8049 = vmul.f32 %v6268, %v7570
        %v8050 = vmul.f32 %v6270, %v7574
        %v8051 = vmul.f32 %v6272, %v7578
        %v8052 = vmul.f32 %v6274, %v7582
        %v8053 = vmul.f32 %v6276, %v7586
        %v8054 = vmul.f32 %v6278, %v7590
        %v8055 = vmul.f32 %v6280, %v7594
        %v8056 = vmul.f32 %v6282, %v7598
        %v8057 = vmul.f32 %v6284, %v7602
        %v8058 = vmul.f32 %v6286, %v7606
        %v8059 = vmul.f32 %v6288, %v7610
        %v8060 = vmul.f32 %v6290, %v7614
        %v8061 = vmul.f32 %v6292, %v7618
        %v8062 = vmul.f32 %v6294, %v7622
        %v8063 = vmul.f32 %v6296, %v7626
        %v8064 = vmul.f32 %v6298, %v7630
        %v8065 = vmul.f32 %v6300, %v7634
        %v8066 = vmul.f32 %v6302, %v7638
        %v8067 = vmul.f32 %v6304, %v7642
        %v8068 = vmul.f32 %v6306, %v7646
        %v8069 = vmul.f32 %v6308, %v7650
        %v8070 = vmul.f32 %v6310, %v7654
        %v8071 = vmul.f32 %v6312, %v7658
        %v8072 = vmul.f32 %v6314, %v7662
        %v8073 = vmul.f32 %v6316, %v7666
        %v8074 = vmul.f32 %v6318, %v7670
        %v8075 = vmul.f32 %v6320, %v7674
        %v8076 = vmul.f32 %v6322, %v7678
        %v8077 = vmul.f32 %v6324, %v7682
        %v8078 = vmul.f32 %v6326, %v7686
        %v8079 = vmul.f32 %v6328, %v7690
        %v8080 = vmul.f32 %v6330, %v7694
        %v8081 = vmul.f32 %v6332, %v7698
        %v8082 = vmul.f32 %v6334, %v7702
        %v8083 = vmul.f32 %v6336, %v7706
        %v8084 = vmul.f32 %v6338, %v7710
        %v8085 = vmul.f32 %v6340, %v7714
        %v8086 = vmul.f32 %v6342, %v7718
        %v8087 = vmul.f32 %v6344, %v7722
        %v8088 = vmul.f32 %v6346, %v7726
        %v8089 = vmul.f32 %v6348, %v7730
        %v8090 = vmul.f32 %v6350, %v7734
        %v8091 = vmul.f32 %v6352, %v7738
        %v8092 = vmul.f32 %v6354, %v7742
        %v8093 = vmul.f32 %v6356, %v7746
        %v8094 = vmul.f32 %v6358, %v7750
        %v8095 = vmul.f32 %v6360, %v7754
        %v8096 = vmul.f32 %v6362, %v7758
        %v8097 = vmul.f32 %v6364, %v7762
        %v8098 = vmul.f32 %v6366, %v7766
        %v8099 = vmul.f32 %v6368, %v7770
        %v8100 = vmul.f32 %v6370, %v7774
        %v8101 = vmul.f32 %v6372, %v7778
        %v8102 = vmul.f32 %v6374, %v7782
        %v8103 = vmul.f32 %v6376, %v7786
        %v8104 = vmul.f32 %v6378, %v7790
        %v8105 = vmul.f32 %v6380, %v7794
        %v8106 = vmul.f32 %v6382, %v7798
        %v8107 = vmul.f32 %v6384, %v7802
        %v8108 = vmul.f32 %v6386, %v7806
        %v8109 = vmul.f32 %v6388, %v7810
        %v8110 = vmul.f32 %v6390, %v7814
        %v8111 = vmul.f32 %v6392, %v7818
        %v8112 = vmul.f32 %v6394, %v7822
        %v8113 = vmul.f32 %v6396, %v7826
        %v8114 = vmul.f32 %v6398, %v7830
        %v8115 = vmul.f32 %v6400, %v7834
        %v8116 = vmul.f32 %v6402, %v7838
        %v8117 = vmul.f32 %v6404, %v7842
        %v8118 = vmul.f32 %v6406, %v7846
        %v8119 = vmul.f32 %v6408, %v7850
        %v8120 = vmul.f32 %v6410, %v7854
        %v8121 = vmul.f32 %v6412, %v7858
        %v8122 = vmul.f32 %v6414, %v7862
        %v8123 = vmul.f32 %v6416, %v7866
        %v8124 = vmul.f32 %v6418, %v7870
        %v8125 = vmul.f32 %v6420, %v7874
        %v8126 = vmul.f32 %v6422, %v7878
        %v8127 = vmul.f32 %v6424, %v7882
        %v8128 = vmul.f32 %v6426, %v7886
        %v8129 = vmul.f32 %v6428, %v7890
        %v8130 = vmul.f32 %v6430, %v7894
        %v8131 = vmul.f32 %v6432, %v7898
        %v8132 = vmul.f32 %v6434, %v7902
        %v8133 = vmul.f32 %v6436, %v7906
        %v8134 = vmul.f32 %v6438, %v7910
        %v8135 = vmul.f32 %v6440, %v7914
        %v8136 = vmul.f32 %v6442, %v7918
        %v8137 = vmul.f32 %v6444, %v7922
        %v8138 = vmul.f32 %v6446, %v7926
        %v8139 = vmul.f32 %v6448, %v7930
        %v8140 = vmul.f32 %v6450, %v7934
        %v8141 = vmul.f32 %v6452, %v7938
        %v8142 = vmul.f32 %v6454, %v7942
        %v8143 = vmul.f32 %v6456, %v7946
        %v8144 = vmul.f32 %v6458, %v7950
        %v8145 = vmul.f32 %v6460, %v7954
        %v8146 = vmul.f32 %v6462, %v7958
        %v8147 = vmul.f32 %v6464, %v7962
        %v8148 = vmul.f32 %v6466, %v7966
        %v8149 = vmul.f32 %v6468, %v7970
        %v8150 = vmul.f32 %v6470, %v7974
        %v8151 = vmul.f32 %v6472, %v7978
        %v8152 = vmul.f32 %v6474, %v7982
        %v8153 = vmul.f32 %v6476, %v7986
        %v8154 = vmul.f32 %v6478, %v7990
        %v8155 = vmul.f32 %v6480, %v7994
        %v8156 = vmul.f32 %v6482, %v7998
        %v8157 = vmul.f32 %v6484, %v8002
        %v8158 = vmul.f32 %v6486, %v8006
        %v8159 = vmul.f32 %v6488, %v8010
        %v8160 = vmul.f32 %v6490, %v8014
        %v8161 = vmul.f32 %v6492, %v8018
        %v8162 = vmul.f32 %v6494, %v8022
        %v8163 = vmul.f32 %v6496, %v8026
        %v8164 = vmul.f32 %v6498, %v8030
        %v8165 = vmul.f32 %v6500, %v8034
        %v8166 = vmul.f32 %v6502, %v8038
        %v8167 = vsel %vm480, %v8039, 0.0
        %8168 = vadd.xlane.f32.xlu0 %v8167
        %v8169 = vpop.xlane.xlu0 %8168
        %v8170 = vsel %vm480, %v8040, 0.0
        %8171 = vadd.xlane.f32.xlu0 %v8170
        %v8172 = vpop.xlane.xlu0 %8171
        %v8173 = vsel %vm480, %v8041, 0.0
        %8174 = vadd.xlane.f32.xlu0 %v8173
        %v8175 = vpop.xlane.xlu0 %8174
        %v8176 = vsel %vm480, %v8042, 0.0
        %8177 = vadd.xlane.f32.xlu0 %v8176
        %v8178 = vpop.xlane.xlu0 %8177
        %v8179 = vsel %vm480, %v8043, 0.0
        %8180 = vadd.xlane.f32.xlu0 %v8179
        %v8181 = vpop.xlane.xlu0 %8180
        %v8182 = vsel %vm480, %v8044, 0.0
        %8183 = vadd.xlane.f32.xlu0 %v8182
        %v8184 = vpop.xlane.xlu0 %8183
        %v8185 = vsel %vm480, %v8045, 0.0
        %8186 = vadd.xlane.f32.xlu0 %v8185
        %v8187 = vpop.xlane.xlu0 %8186
        %v8188 = vsel %vm480, %v8046, 0.0
        %8189 = vadd.xlane.f32.xlu0 %v8188
        %v8190 = vpop.xlane.xlu0 %8189
        %v8191 = vsel %vm480, %v8047, 0.0
        %8192 = vadd.xlane.f32.xlu0 %v8191
        %v8193 = vpop.xlane.xlu0 %8192
        %v8194 = vsel %vm480, %v8048, 0.0
        %8195 = vadd.xlane.f32.xlu0 %v8194
        %v8196 = vpop.xlane.xlu0 %8195
        %v8197 = vsel %vm480, %v8049, 0.0
        %8198 = vadd.xlane.f32.xlu0 %v8197
        %v8199 = vpop.xlane.xlu0 %8198
        %v8200 = vsel %vm480, %v8050, 0.0
        %8201 = vadd.xlane.f32.xlu0 %v8200
        %v8202 = vpop.xlane.xlu0 %8201
        %v8203 = vsel %vm480, %v8051, 0.0
        %8204 = vadd.xlane.f32.xlu0 %v8203
        %v8205 = vpop.xlane.xlu0 %8204
        %v8206 = vsel %vm480, %v8052, 0.0
        %8207 = vadd.xlane.f32.xlu0 %v8206
        %v8208 = vpop.xlane.xlu0 %8207
        %v8209 = vsel %vm480, %v8053, 0.0
        %8210 = vadd.xlane.f32.xlu0 %v8209
        %v8211 = vpop.xlane.xlu0 %8210
        %v8212 = vsel %vm480, %v8054, 0.0
        %8213 = vadd.xlane.f32.xlu0 %v8212
        %v8214 = vpop.xlane.xlu0 %8213
        %v8215 = vsel %vm480, %v8055, 0.0
        %8216 = vadd.xlane.f32.xlu0 %v8215
        %v8217 = vpop.xlane.xlu0 %8216
        %v8218 = vsel %vm480, %v8056, 0.0
        %8219 = vadd.xlane.f32.xlu0 %v8218
        %v8220 = vpop.xlane.xlu0 %8219
        %v8221 = vsel %vm480, %v8057, 0.0
        %8222 = vadd.xlane.f32.xlu0 %v8221
        %v8223 = vpop.xlane.xlu0 %8222
        %v8224 = vsel %vm480, %v8058, 0.0
        %8225 = vadd.xlane.f32.xlu0 %v8224
        %v8226 = vpop.xlane.xlu0 %8225
        %v8227 = vsel %vm480, %v8059, 0.0
        %8228 = vadd.xlane.f32.xlu0 %v8227
        %v8229 = vpop.xlane.xlu0 %8228
        %v8230 = vsel %vm480, %v8060, 0.0
        %8231 = vadd.xlane.f32.xlu0 %v8230
        %v8232 = vpop.xlane.xlu0 %8231
        %v8233 = vsel %vm480, %v8061, 0.0
        %8234 = vadd.xlane.f32.xlu0 %v8233
        %v8235 = vpop.xlane.xlu0 %8234
        %v8236 = vsel %vm480, %v8062, 0.0
        %8237 = vadd.xlane.f32.xlu0 %v8236
        %v8238 = vpop.xlane.xlu0 %8237
        %v8239 = vsel %vm480, %v8063, 0.0
        %8240 = vadd.xlane.f32.xlu0 %v8239
        %v8241 = vpop.xlane.xlu0 %8240
        %v8242 = vsel %vm480, %v8064, 0.0
        %8243 = vadd.xlane.f32.xlu0 %v8242
        %v8244 = vpop.xlane.xlu0 %8243
        %v8245 = vsel %vm480, %v8065, 0.0
        %8246 = vadd.xlane.f32.xlu0 %v8245
        %v8247 = vpop.xlane.xlu0 %8246
        %v8248 = vsel %vm480, %v8066, 0.0
        %8249 = vadd.xlane.f32.xlu0 %v8248
        %v8250 = vpop.xlane.xlu0 %8249
        %v8251 = vsel %vm480, %v8067, 0.0
        %8252 = vadd.xlane.f32.xlu0 %v8251
        %v8253 = vpop.xlane.xlu0 %8252
        %v8254 = vsel %vm480, %v8068, 0.0
        %8255 = vadd.xlane.f32.xlu0 %v8254
        %v8256 = vpop.xlane.xlu0 %8255
        %v8257 = vsel %vm480, %v8069, 0.0
        %8258 = vadd.xlane.f32.xlu0 %v8257
        %v8259 = vpop.xlane.xlu0 %8258
        %v8260 = vsel %vm480, %v8070, 0.0
        %8261 = vadd.xlane.f32.xlu0 %v8260
        %v8262 = vpop.xlane.xlu0 %8261
        %v8263 = vsel %vm480, %v8071, 0.0
        %8264 = vadd.xlane.f32.xlu0 %v8263
        %v8265 = vpop.xlane.xlu0 %8264
        %v8266 = vsel %vm480, %v8072, 0.0
        %8267 = vadd.xlane.f32.xlu0 %v8266
        %v8268 = vpop.xlane.xlu0 %8267
        %v8269 = vsel %vm480, %v8073, 0.0
        %8270 = vadd.xlane.f32.xlu0 %v8269
        %v8271 = vpop.xlane.xlu0 %8270
        %v8272 = vsel %vm480, %v8074, 0.0
        %8273 = vadd.xlane.f32.xlu0 %v8272
        %v8274 = vpop.xlane.xlu0 %8273
        %v8275 = vsel %vm480, %v8075, 0.0
        %8276 = vadd.xlane.f32.xlu0 %v8275
        %v8277 = vpop.xlane.xlu0 %8276
        %v8278 = vsel %vm480, %v8076, 0.0
        %8279 = vadd.xlane.f32.xlu0 %v8278
        %v8280 = vpop.xlane.xlu0 %8279
        %v8281 = vsel %vm480, %v8077, 0.0
        %8282 = vadd.xlane.f32.xlu0 %v8281
        %v8283 = vpop.xlane.xlu0 %8282
        %v8284 = vsel %vm480, %v8078, 0.0
        %8285 = vadd.xlane.f32.xlu0 %v8284
        %v8286 = vpop.xlane.xlu0 %8285
        %v8287 = vsel %vm480, %v8079, 0.0
        %8288 = vadd.xlane.f32.xlu0 %v8287
        %v8289 = vpop.xlane.xlu0 %8288
        %v8290 = vsel %vm480, %v8080, 0.0
        %8291 = vadd.xlane.f32.xlu0 %v8290
        %v8292 = vpop.xlane.xlu0 %8291
        %v8293 = vsel %vm480, %v8081, 0.0
        %8294 = vadd.xlane.f32.xlu0 %v8293
        %v8295 = vpop.xlane.xlu0 %8294
        %v8296 = vsel %vm480, %v8082, 0.0
        %8297 = vadd.xlane.f32.xlu0 %v8296
        %v8298 = vpop.xlane.xlu0 %8297
        %v8299 = vsel %vm480, %v8083, 0.0
        %8300 = vadd.xlane.f32.xlu0 %v8299
        %v8301 = vpop.xlane.xlu0 %8300
        %v8302 = vsel %vm480, %v8084, 0.0
        %8303 = vadd.xlane.f32.xlu0 %v8302
        %v8304 = vpop.xlane.xlu0 %8303
        %v8305 = vsel %vm480, %v8085, 0.0
        %8306 = vadd.xlane.f32.xlu0 %v8305
        %v8307 = vpop.xlane.xlu0 %8306
        %v8308 = vsel %vm480, %v8086, 0.0
        %8309 = vadd.xlane.f32.xlu0 %v8308
        %v8310 = vpop.xlane.xlu0 %8309
        %v8311 = vsel %vm480, %v8087, 0.0
        %8312 = vadd.xlane.f32.xlu0 %v8311
        %v8313 = vpop.xlane.xlu0 %8312
        %v8314 = vsel %vm480, %v8088, 0.0
        %8315 = vadd.xlane.f32.xlu0 %v8314
        %v8316 = vpop.xlane.xlu0 %8315
        %v8317 = vsel %vm480, %v8089, 0.0
        %8318 = vadd.xlane.f32.xlu0 %v8317
        %v8319 = vpop.xlane.xlu0 %8318
        %v8320 = vsel %vm480, %v8090, 0.0
        %8321 = vadd.xlane.f32.xlu0 %v8320
        %v8322 = vpop.xlane.xlu0 %8321
        %v8323 = vsel %vm480, %v8091, 0.0
        %8324 = vadd.xlane.f32.xlu0 %v8323
        %v8325 = vpop.xlane.xlu0 %8324
        %v8326 = vsel %vm480, %v8092, 0.0
        %8327 = vadd.xlane.f32.xlu0 %v8326
        %v8328 = vpop.xlane.xlu0 %8327
        %v8329 = vsel %vm480, %v8093, 0.0
        %8330 = vadd.xlane.f32.xlu0 %v8329
        %v8331 = vpop.xlane.xlu0 %8330
        %v8332 = vsel %vm480, %v8094, 0.0
        %8333 = vadd.xlane.f32.xlu0 %v8332
        %v8334 = vpop.xlane.xlu0 %8333
        %v8335 = vsel %vm480, %v8095, 0.0
        %8336 = vadd.xlane.f32.xlu0 %v8335
        %v8337 = vpop.xlane.xlu0 %8336
        %v8338 = vsel %vm480, %v8096, 0.0
        %8339 = vadd.xlane.f32.xlu0 %v8338
        %v8340 = vpop.xlane.xlu0 %8339
        %v8341 = vsel %vm480, %v8097, 0.0
        %8342 = vadd.xlane.f32.xlu0 %v8341
        %v8343 = vpop.xlane.xlu0 %8342
        %v8344 = vsel %vm480, %v8098, 0.0
        %8345 = vadd.xlane.f32.xlu0 %v8344
        %v8346 = vpop.xlane.xlu0 %8345
        %v8347 = vsel %vm480, %v8099, 0.0
        %8348 = vadd.xlane.f32.xlu0 %v8347
        %v8349 = vpop.xlane.xlu0 %8348
        %v8350 = vsel %vm480, %v8100, 0.0
        %8351 = vadd.xlane.f32.xlu0 %v8350
        %v8352 = vpop.xlane.xlu0 %8351
        %v8353 = vsel %vm480, %v8101, 0.0
        %8354 = vadd.xlane.f32.xlu0 %v8353
        %v8355 = vpop.xlane.xlu0 %8354
        %v8356 = vsel %vm480, %v8102, 0.0
        %8357 = vadd.xlane.f32.xlu0 %v8356
        %v8358 = vpop.xlane.xlu0 %8357
        %v8359 = vsel %vm480, %v8103, 0.0
        %8360 = vadd.xlane.f32.xlu0 %v8359
        %v8361 = vpop.xlane.xlu0 %8360
        %v8362 = vsel %vm480, %v8104, 0.0
        %8363 = vadd.xlane.f32.xlu0 %v8362
        %v8364 = vpop.xlane.xlu0 %8363
        %v8365 = vsel %vm480, %v8105, 0.0
        %8366 = vadd.xlane.f32.xlu0 %v8365
        %v8367 = vpop.xlane.xlu0 %8366
        %v8368 = vsel %vm480, %v8106, 0.0
        %8369 = vadd.xlane.f32.xlu0 %v8368
        %v8370 = vpop.xlane.xlu0 %8369
        %v8371 = vsel %vm480, %v8107, 0.0
        %8372 = vadd.xlane.f32.xlu0 %v8371
        %v8373 = vpop.xlane.xlu0 %8372
        %v8374 = vsel %vm480, %v8108, 0.0
        %8375 = vadd.xlane.f32.xlu0 %v8374
        %v8376 = vpop.xlane.xlu0 %8375
        %v8377 = vsel %vm480, %v8109, 0.0
        %8378 = vadd.xlane.f32.xlu0 %v8377
        %v8379 = vpop.xlane.xlu0 %8378
        %v8380 = vsel %vm480, %v8110, 0.0
        %8381 = vadd.xlane.f32.xlu0 %v8380
        %v8382 = vpop.xlane.xlu0 %8381
        %v8383 = vsel %vm480, %v8111, 0.0
        %8384 = vadd.xlane.f32.xlu0 %v8383
        %v8385 = vpop.xlane.xlu0 %8384
        %v8386 = vsel %vm480, %v8112, 0.0
        %8387 = vadd.xlane.f32.xlu0 %v8386
        %v8388 = vpop.xlane.xlu0 %8387
        %v8389 = vsel %vm480, %v8113, 0.0
        %8390 = vadd.xlane.f32.xlu0 %v8389
        %v8391 = vpop.xlane.xlu0 %8390
        %v8392 = vsel %vm480, %v8114, 0.0
        %8393 = vadd.xlane.f32.xlu0 %v8392
        %v8394 = vpop.xlane.xlu0 %8393
        %v8395 = vsel %vm480, %v8115, 0.0
        %8396 = vadd.xlane.f32.xlu0 %v8395
        %v8397 = vpop.xlane.xlu0 %8396
        %v8398 = vsel %vm480, %v8116, 0.0
        %8399 = vadd.xlane.f32.xlu0 %v8398
        %v8400 = vpop.xlane.xlu0 %8399
        %v8401 = vsel %vm480, %v8117, 0.0
        %8402 = vadd.xlane.f32.xlu0 %v8401
        %v8403 = vpop.xlane.xlu0 %8402
        %v8404 = vsel %vm480, %v8118, 0.0
        %8405 = vadd.xlane.f32.xlu0 %v8404
        %v8406 = vpop.xlane.xlu0 %8405
        %v8407 = vsel %vm480, %v8119, 0.0
        %8408 = vadd.xlane.f32.xlu0 %v8407
        %v8409 = vpop.xlane.xlu0 %8408
        %v8410 = vsel %vm480, %v8120, 0.0
        %8411 = vadd.xlane.f32.xlu0 %v8410
        %v8412 = vpop.xlane.xlu0 %8411
        %v8413 = vsel %vm480, %v8121, 0.0
        %8414 = vadd.xlane.f32.xlu0 %v8413
        %v8415 = vpop.xlane.xlu0 %8414
        %v8416 = vsel %vm480, %v8122, 0.0
        %8417 = vadd.xlane.f32.xlu0 %v8416
        %v8418 = vpop.xlane.xlu0 %8417
        %v8419 = vsel %vm480, %v8123, 0.0
        %8420 = vadd.xlane.f32.xlu0 %v8419
        %v8421 = vpop.xlane.xlu0 %8420
        %v8422 = vsel %vm480, %v8124, 0.0
        %8423 = vadd.xlane.f32.xlu0 %v8422
        %v8424 = vpop.xlane.xlu0 %8423
        %v8425 = vsel %vm480, %v8125, 0.0
        %8426 = vadd.xlane.f32.xlu0 %v8425
        %v8427 = vpop.xlane.xlu0 %8426
        %v8428 = vsel %vm480, %v8126, 0.0
        %8429 = vadd.xlane.f32.xlu0 %v8428
        %v8430 = vpop.xlane.xlu0 %8429
        %v8431 = vsel %vm480, %v8127, 0.0
        %8432 = vadd.xlane.f32.xlu0 %v8431
        %v8433 = vpop.xlane.xlu0 %8432
        %v8434 = vsel %vm480, %v8128, 0.0
        %8435 = vadd.xlane.f32.xlu0 %v8434
        %v8436 = vpop.xlane.xlu0 %8435
        %v8437 = vsel %vm480, %v8129, 0.0
        %8438 = vadd.xlane.f32.xlu0 %v8437
        %v8439 = vpop.xlane.xlu0 %8438
        %v8440 = vsel %vm480, %v8130, 0.0
        %8441 = vadd.xlane.f32.xlu0 %v8440
        %v8442 = vpop.xlane.xlu0 %8441
        %v8443 = vsel %vm480, %v8131, 0.0
        %8444 = vadd.xlane.f32.xlu0 %v8443
        %v8445 = vpop.xlane.xlu0 %8444
        %v8446 = vsel %vm480, %v8132, 0.0
        %8447 = vadd.xlane.f32.xlu0 %v8446
        %v8448 = vpop.xlane.xlu0 %8447
        %v8449 = vsel %vm480, %v8133, 0.0
        %8450 = vadd.xlane.f32.xlu0 %v8449
        %v8451 = vpop.xlane.xlu0 %8450
        %v8452 = vsel %vm480, %v8134, 0.0
        %8453 = vadd.xlane.f32.xlu0 %v8452
        %v8454 = vpop.xlane.xlu0 %8453
        %v8455 = vsel %vm480, %v8135, 0.0
        %8456 = vadd.xlane.f32.xlu0 %v8455
        %v8457 = vpop.xlane.xlu0 %8456
        %v8458 = vsel %vm480, %v8136, 0.0
        %8459 = vadd.xlane.f32.xlu0 %v8458
        %v8460 = vpop.xlane.xlu0 %8459
        %v8461 = vsel %vm480, %v8137, 0.0
        %8462 = vadd.xlane.f32.xlu0 %v8461
        %v8463 = vpop.xlane.xlu0 %8462
        %v8464 = vsel %vm480, %v8138, 0.0
        %8465 = vadd.xlane.f32.xlu0 %v8464
        %v8466 = vpop.xlane.xlu0 %8465
        %v8467 = vsel %vm480, %v8139, 0.0
        %8468 = vadd.xlane.f32.xlu0 %v8467
        %v8469 = vpop.xlane.xlu0 %8468
        %v8470 = vsel %vm480, %v8140, 0.0
        %8471 = vadd.xlane.f32.xlu0 %v8470
        %v8472 = vpop.xlane.xlu0 %8471
        %v8473 = vsel %vm480, %v8141, 0.0
        %8474 = vadd.xlane.f32.xlu0 %v8473
        %v8475 = vpop.xlane.xlu0 %8474
        %v8476 = vsel %vm480, %v8142, 0.0
        %8477 = vadd.xlane.f32.xlu0 %v8476
        %v8478 = vpop.xlane.xlu0 %8477
        %v8479 = vsel %vm480, %v8143, 0.0
        %8480 = vadd.xlane.f32.xlu0 %v8479
        %v8481 = vpop.xlane.xlu0 %8480
        %v8482 = vsel %vm480, %v8144, 0.0
        %8483 = vadd.xlane.f32.xlu0 %v8482
        %v8484 = vpop.xlane.xlu0 %8483
        %v8485 = vsel %vm480, %v8145, 0.0
        %8486 = vadd.xlane.f32.xlu0 %v8485
        %v8487 = vpop.xlane.xlu0 %8486
        %v8488 = vsel %vm480, %v8146, 0.0
        %8489 = vadd.xlane.f32.xlu0 %v8488
        %v8490 = vpop.xlane.xlu0 %8489
        %v8491 = vsel %vm480, %v8147, 0.0
        %8492 = vadd.xlane.f32.xlu0 %v8491
        %v8493 = vpop.xlane.xlu0 %8492
        %v8494 = vsel %vm480, %v8148, 0.0
        %8495 = vadd.xlane.f32.xlu0 %v8494
        %v8496 = vpop.xlane.xlu0 %8495
        %v8497 = vsel %vm480, %v8149, 0.0
        %8498 = vadd.xlane.f32.xlu0 %v8497
        %v8499 = vpop.xlane.xlu0 %8498
        %v8500 = vsel %vm480, %v8150, 0.0
        %8501 = vadd.xlane.f32.xlu0 %v8500
        %v8502 = vpop.xlane.xlu0 %8501
        %v8503 = vsel %vm480, %v8151, 0.0
        %8504 = vadd.xlane.f32.xlu0 %v8503
        %v8505 = vpop.xlane.xlu0 %8504
        %v8506 = vsel %vm480, %v8152, 0.0
        %8507 = vadd.xlane.f32.xlu0 %v8506
        %v8508 = vpop.xlane.xlu0 %8507
        %v8509 = vsel %vm480, %v8153, 0.0
        %8510 = vadd.xlane.f32.xlu0 %v8509
        %v8511 = vpop.xlane.xlu0 %8510
        %v8512 = vsel %vm480, %v8154, 0.0
        %8513 = vadd.xlane.f32.xlu0 %v8512
        %v8514 = vpop.xlane.xlu0 %8513
        %v8515 = vsel %vm480, %v8155, 0.0
        %8516 = vadd.xlane.f32.xlu0 %v8515
        %v8517 = vpop.xlane.xlu0 %8516
        %v8518 = vsel %vm480, %v8156, 0.0
        %8519 = vadd.xlane.f32.xlu0 %v8518
        %v8520 = vpop.xlane.xlu0 %8519
        %v8521 = vsel %vm480, %v8157, 0.0
        %8522 = vadd.xlane.f32.xlu0 %v8521
        %v8523 = vpop.xlane.xlu0 %8522
        %v8524 = vsel %vm480, %v8158, 0.0
        %8525 = vadd.xlane.f32.xlu0 %v8524
        %v8526 = vpop.xlane.xlu0 %8525
        %v8527 = vsel %vm480, %v8159, 0.0
        %8528 = vadd.xlane.f32.xlu0 %v8527
        %v8529 = vpop.xlane.xlu0 %8528
        %v8530 = vsel %vm480, %v8160, 0.0
        %8531 = vadd.xlane.f32.xlu0 %v8530
        %v8532 = vpop.xlane.xlu0 %8531
        %v8533 = vsel %vm480, %v8161, 0.0
        %8534 = vadd.xlane.f32.xlu0 %v8533
        %v8535 = vpop.xlane.xlu0 %8534
        %v8536 = vsel %vm480, %v8162, 0.0
        %8537 = vadd.xlane.f32.xlu0 %v8536
        %v8538 = vpop.xlane.xlu0 %8537
        %v8539 = vsel %vm480, %v8163, 0.0
        %8540 = vadd.xlane.f32.xlu0 %v8539
        %v8541 = vpop.xlane.xlu0 %8540
        %v8542 = vsel %vm480, %v8164, 0.0
        %8543 = vadd.xlane.f32.xlu0 %v8542
        %v8544 = vpop.xlane.xlu0 %8543
        %v8545 = vsel %vm480, %v8165, 0.0
        %8546 = vadd.xlane.f32.xlu0 %v8545
        %v8547 = vpop.xlane.xlu0 %8546
        %v8548 = vsel %vm480, %v8166, 0.0
        %8549 = vadd.xlane.f32.xlu0 %v8548
        %v8550 = vpop.xlane.xlu0 %8549
        %v8679 = vlaneseq
        %v8680 = vand.u32 %v8679, 127
        %v8681 = vlaneseq
        %v8682 = vshrl.u32 %v8681, 7
        %v8683 = vsub.s32 %v8680, %v8682
        %v8684 = vrot.slane %v7145, %v8683
        %v8685 = vlaneseq
        %v8686 = vshrl.u32 %v8685, 7
        %v8687 = vsub.s32 %v8680, %v8686
        %v8688 = vrot.slane %v7148, %v8687
        %v8689 = vlaneseq
        %v8690 = vshrl.u32 %v8689, 7
        %v8691 = vsub.s32 %v8680, %v8690
        %v8692 = vrot.slane %v7151, %v8691
        %v8693 = vlaneseq
        %v8694 = vshrl.u32 %v8693, 7
        %v8695 = vsub.s32 %v8680, %v8694
        %v8696 = vrot.slane %v7154, %v8695
        %v8697 = vlaneseq
        %v8698 = vshrl.u32 %v8697, 7
        %v8699 = vsub.s32 %v8680, %v8698
        %v8700 = vrot.slane %v7157, %v8699
        %v8701 = vlaneseq
        %v8702 = vshrl.u32 %v8701, 7
        %v8703 = vsub.s32 %v8680, %v8702
        %v8704 = vrot.slane %v7160, %v8703
        %v8705 = vlaneseq
        %v8706 = vshrl.u32 %v8705, 7
        %v8707 = vsub.s32 %v8680, %v8706
        %v8708 = vrot.slane %v7163, %v8707
        %v8709 = vlaneseq
        %v8710 = vshrl.u32 %v8709, 7
        %v8711 = vsub.s32 %v8680, %v8710
        %v8712 = vrot.slane %v7166, %v8711
        %v8713 = vlaneseq
        %v8714 = vshrl.u32 %v8713, 7
        %v8715 = vsub.s32 %v8680, %v8714
        %v8716 = vrot.slane %v7169, %v8715
        %v8717 = vlaneseq
        %v8718 = vshrl.u32 %v8717, 7
        %v8719 = vsub.s32 %v8680, %v8718
        %v8720 = vrot.slane %v7172, %v8719
        %v8721 = vlaneseq
        %v8722 = vshrl.u32 %v8721, 7
        %v8723 = vsub.s32 %v8680, %v8722
        %v8724 = vrot.slane %v7175, %v8723
        %v8725 = vlaneseq
        %v8726 = vshrl.u32 %v8725, 7
        %v8727 = vsub.s32 %v8680, %v8726
        %v8728 = vrot.slane %v7178, %v8727
        %v8729 = vlaneseq
        %v8730 = vshrl.u32 %v8729, 7
        %v8731 = vsub.s32 %v8680, %v8730
        %v8732 = vrot.slane %v7181, %v8731
        %v8733 = vlaneseq
        %v8734 = vshrl.u32 %v8733, 7
        %v8735 = vsub.s32 %v8680, %v8734
        %v8736 = vrot.slane %v7184, %v8735
        %v8737 = vlaneseq
        %v8738 = vshrl.u32 %v8737, 7
        %v8739 = vsub.s32 %v8680, %v8738
        %v8740 = vrot.slane %v7187, %v8739
        %v8741 = vlaneseq
        %v8742 = vshrl.u32 %v8741, 7
        %v8743 = vsub.s32 %v8680, %v8742
        %v8744 = vrot.slane %v7190, %v8743
        %v8745 = vlaneseq
        %v8746 = vshrl.u32 %v8745, 7
        %v8747 = vsub.s32 %v8680, %v8746
        %v8748 = vrot.slane %v7193, %v8747
        %v8749 = vlaneseq
        %v8750 = vshrl.u32 %v8749, 7
        %v8751 = vsub.s32 %v8680, %v8750
        %v8752 = vrot.slane %v7196, %v8751
        %v8753 = vlaneseq
        %v8754 = vshrl.u32 %v8753, 7
        %v8755 = vsub.s32 %v8680, %v8754
        %v8756 = vrot.slane %v7199, %v8755
        %v8757 = vlaneseq
        %v8758 = vshrl.u32 %v8757, 7
        %v8759 = vsub.s32 %v8680, %v8758
        %v8760 = vrot.slane %v7202, %v8759
        %v8761 = vlaneseq
        %v8762 = vshrl.u32 %v8761, 7
        %v8763 = vsub.s32 %v8680, %v8762
        %v8764 = vrot.slane %v7205, %v8763
        %v8765 = vlaneseq
        %v8766 = vshrl.u32 %v8765, 7
        %v8767 = vsub.s32 %v8680, %v8766
        %v8768 = vrot.slane %v7208, %v8767
        %v8769 = vlaneseq
        %v8770 = vshrl.u32 %v8769, 7
        %v8771 = vsub.s32 %v8680, %v8770
        %v8772 = vrot.slane %v7211, %v8771
        %v8773 = vlaneseq
        %v8774 = vshrl.u32 %v8773, 7
        %v8775 = vsub.s32 %v8680, %v8774
        %v8776 = vrot.slane %v7214, %v8775
        %v8777 = vlaneseq
        %v8778 = vshrl.u32 %v8777, 7
        %v8779 = vsub.s32 %v8680, %v8778
        %v8780 = vrot.slane %v7217, %v8779
        %v8781 = vlaneseq
        %v8782 = vshrl.u32 %v8781, 7
        %v8783 = vsub.s32 %v8680, %v8782
        %v8784 = vrot.slane %v7220, %v8783
        %v8785 = vlaneseq
        %v8786 = vshrl.u32 %v8785, 7
        %v8787 = vsub.s32 %v8680, %v8786
        %v8788 = vrot.slane %v7223, %v8787
        %v8789 = vlaneseq
        %v8790 = vshrl.u32 %v8789, 7
        %v8791 = vsub.s32 %v8680, %v8790
        %v8792 = vrot.slane %v7226, %v8791
        %v8793 = vlaneseq
        %v8794 = vshrl.u32 %v8793, 7
        %v8795 = vsub.s32 %v8680, %v8794
        %v8796 = vrot.slane %v7229, %v8795
        %v8797 = vlaneseq
        %v8798 = vshrl.u32 %v8797, 7
        %v8799 = vsub.s32 %v8680, %v8798
        %v8800 = vrot.slane %v7232, %v8799
        %v8801 = vlaneseq
        %v8802 = vshrl.u32 %v8801, 7
        %v8803 = vsub.s32 %v8680, %v8802
        %v8804 = vrot.slane %v7235, %v8803
        %v8805 = vlaneseq
        %v8806 = vshrl.u32 %v8805, 7
        %v8807 = vsub.s32 %v8680, %v8806
        %v8808 = vrot.slane %v7238, %v8807
        %v8809 = vlaneseq
        %v8810 = vshrl.u32 %v8809, 7
        %v8811 = vsub.s32 %v8680, %v8810
        %v8812 = vrot.slane %v7241, %v8811
        %v8813 = vlaneseq
        %v8814 = vshrl.u32 %v8813, 7
        %v8815 = vsub.s32 %v8680, %v8814
        %v8816 = vrot.slane %v7244, %v8815
        %v8817 = vlaneseq
        %v8818 = vshrl.u32 %v8817, 7
        %v8819 = vsub.s32 %v8680, %v8818
        %v8820 = vrot.slane %v7247, %v8819
        %v8821 = vlaneseq
        %v8822 = vshrl.u32 %v8821, 7
        %v8823 = vsub.s32 %v8680, %v8822
        %v8824 = vrot.slane %v7250, %v8823
        %v8825 = vlaneseq
        %v8826 = vshrl.u32 %v8825, 7
        %v8827 = vsub.s32 %v8680, %v8826
        %v8828 = vrot.slane %v7253, %v8827
        %v8829 = vlaneseq
        %v8830 = vshrl.u32 %v8829, 7
        %v8831 = vsub.s32 %v8680, %v8830
        %v8832 = vrot.slane %v7256, %v8831
        %v8833 = vlaneseq
        %v8834 = vshrl.u32 %v8833, 7
        %v8835 = vsub.s32 %v8680, %v8834
        %v8836 = vrot.slane %v7259, %v8835
        %v8837 = vlaneseq
        %v8838 = vshrl.u32 %v8837, 7
        %v8839 = vsub.s32 %v8680, %v8838
        %v8840 = vrot.slane %v7262, %v8839
        %v8841 = vlaneseq
        %v8842 = vshrl.u32 %v8841, 7
        %v8843 = vsub.s32 %v8680, %v8842
        %v8844 = vrot.slane %v7265, %v8843
        %v8845 = vlaneseq
        %v8846 = vshrl.u32 %v8845, 7
        %v8847 = vsub.s32 %v8680, %v8846
        %v8848 = vrot.slane %v7268, %v8847
        %v8849 = vlaneseq
        %v8850 = vshrl.u32 %v8849, 7
        %v8851 = vsub.s32 %v8680, %v8850
        %v8852 = vrot.slane %v7271, %v8851
        %v8853 = vlaneseq
        %v8854 = vshrl.u32 %v8853, 7
        %v8855 = vsub.s32 %v8680, %v8854
        %v8856 = vrot.slane %v7274, %v8855
        %v8857 = vlaneseq
        %v8858 = vshrl.u32 %v8857, 7
        %v8859 = vsub.s32 %v8680, %v8858
        %v8860 = vrot.slane %v7277, %v8859
        %v8861 = vlaneseq
        %v8862 = vshrl.u32 %v8861, 7
        %v8863 = vsub.s32 %v8680, %v8862
        %v8864 = vrot.slane %v7280, %v8863
        %v8865 = vlaneseq
        %v8866 = vshrl.u32 %v8865, 7
        %v8867 = vsub.s32 %v8680, %v8866
        %v8868 = vrot.slane %v7283, %v8867
        %v8869 = vlaneseq
        %v8870 = vshrl.u32 %v8869, 7
        %v8871 = vsub.s32 %v8680, %v8870
        %v8872 = vrot.slane %v7286, %v8871
        %v8873 = vlaneseq
        %v8874 = vshrl.u32 %v8873, 7
        %v8875 = vsub.s32 %v8680, %v8874
        %v8876 = vrot.slane %v7289, %v8875
        %v8877 = vlaneseq
        %v8878 = vshrl.u32 %v8877, 7
        %v8879 = vsub.s32 %v8680, %v8878
        %v8880 = vrot.slane %v7292, %v8879
        %v8881 = vlaneseq
        %v8882 = vshrl.u32 %v8881, 7
        %v8883 = vsub.s32 %v8680, %v8882
        %v8884 = vrot.slane %v7295, %v8883
        %v8885 = vlaneseq
        %v8886 = vshrl.u32 %v8885, 7
        %v8887 = vsub.s32 %v8680, %v8886
        %v8888 = vrot.slane %v7298, %v8887
        %v8889 = vlaneseq
        %v8890 = vshrl.u32 %v8889, 7
        %v8891 = vsub.s32 %v8680, %v8890
        %v8892 = vrot.slane %v7301, %v8891
        %v8893 = vlaneseq
        %v8894 = vshrl.u32 %v8893, 7
        %v8895 = vsub.s32 %v8680, %v8894
        %v8896 = vrot.slane %v7304, %v8895
        %v8897 = vlaneseq
        %v8898 = vshrl.u32 %v8897, 7
        %v8899 = vsub.s32 %v8680, %v8898
        %v8900 = vrot.slane %v7307, %v8899
        %v8901 = vlaneseq
        %v8902 = vshrl.u32 %v8901, 7
        %v8903 = vsub.s32 %v8680, %v8902
        %v8904 = vrot.slane %v7310, %v8903
        %v8905 = vlaneseq
        %v8906 = vshrl.u32 %v8905, 7
        %v8907 = vsub.s32 %v8680, %v8906
        %v8908 = vrot.slane %v7313, %v8907
        %v8909 = vlaneseq
        %v8910 = vshrl.u32 %v8909, 7
        %v8911 = vsub.s32 %v8680, %v8910
        %v8912 = vrot.slane %v7316, %v8911
        %v8913 = vlaneseq
        %v8914 = vshrl.u32 %v8913, 7
        %v8915 = vsub.s32 %v8680, %v8914
        %v8916 = vrot.slane %v7319, %v8915
        %v8917 = vlaneseq
        %v8918 = vshrl.u32 %v8917, 7
        %v8919 = vsub.s32 %v8680, %v8918
        %v8920 = vrot.slane %v7322, %v8919
        %v8921 = vlaneseq
        %v8922 = vshrl.u32 %v8921, 7
        %v8923 = vsub.s32 %v8680, %v8922
        %v8924 = vrot.slane %v7325, %v8923
        %v8925 = vlaneseq
        %v8926 = vshrl.u32 %v8925, 7
        %v8927 = vsub.s32 %v8680, %v8926
        %v8928 = vrot.slane %v7328, %v8927
        %v8929 = vlaneseq
        %v8930 = vshrl.u32 %v8929, 7
        %v8931 = vsub.s32 %v8680, %v8930
        %v8932 = vrot.slane %v7331, %v8931
        %v8933 = vlaneseq
        %v8934 = vshrl.u32 %v8933, 7
        %v8935 = vsub.s32 %v8680, %v8934
        %v8936 = vrot.slane %v7334, %v8935
        %v8937 = vlaneseq
        %v8938 = vshrl.u32 %v8937, 7
        %v8939 = vsub.s32 %v8680, %v8938
        %v8940 = vrot.slane %v7337, %v8939
        %v8941 = vlaneseq
        %v8942 = vshrl.u32 %v8941, 7
        %v8943 = vsub.s32 %v8680, %v8942
        %v8944 = vrot.slane %v7340, %v8943
        %v8945 = vlaneseq
        %v8946 = vshrl.u32 %v8945, 7
        %v8947 = vsub.s32 %v8680, %v8946
        %v8948 = vrot.slane %v7343, %v8947
        %v8949 = vlaneseq
        %v8950 = vshrl.u32 %v8949, 7
        %v8951 = vsub.s32 %v8680, %v8950
        %v8952 = vrot.slane %v7346, %v8951
        %v8953 = vlaneseq
        %v8954 = vshrl.u32 %v8953, 7
        %v8955 = vsub.s32 %v8680, %v8954
        %v8956 = vrot.slane %v7349, %v8955
        %v8957 = vlaneseq
        %v8958 = vshrl.u32 %v8957, 7
        %v8959 = vsub.s32 %v8680, %v8958
        %v8960 = vrot.slane %v7352, %v8959
        %v8961 = vlaneseq
        %v8962 = vshrl.u32 %v8961, 7
        %v8963 = vsub.s32 %v8680, %v8962
        %v8964 = vrot.slane %v7355, %v8963
        %v8965 = vlaneseq
        %v8966 = vshrl.u32 %v8965, 7
        %v8967 = vsub.s32 %v8680, %v8966
        %v8968 = vrot.slane %v7358, %v8967
        %v8969 = vlaneseq
        %v8970 = vshrl.u32 %v8969, 7
        %v8971 = vsub.s32 %v8680, %v8970
        %v8972 = vrot.slane %v7361, %v8971
        %v8973 = vlaneseq
        %v8974 = vshrl.u32 %v8973, 7
        %v8975 = vsub.s32 %v8680, %v8974
        %v8976 = vrot.slane %v7364, %v8975
        %v8977 = vlaneseq
        %v8978 = vshrl.u32 %v8977, 7
        %v8979 = vsub.s32 %v8680, %v8978
        %v8980 = vrot.slane %v7367, %v8979
        %v8981 = vlaneseq
        %v8982 = vshrl.u32 %v8981, 7
        %v8983 = vsub.s32 %v8680, %v8982
        %v8984 = vrot.slane %v7370, %v8983
        %v8985 = vlaneseq
        %v8986 = vshrl.u32 %v8985, 7
        %v8987 = vsub.s32 %v8680, %v8986
        %v8988 = vrot.slane %v7373, %v8987
        %v8989 = vlaneseq
        %v8990 = vshrl.u32 %v8989, 7
        %v8991 = vsub.s32 %v8680, %v8990
        %v8992 = vrot.slane %v7376, %v8991
        %v8993 = vlaneseq
        %v8994 = vshrl.u32 %v8993, 7
        %v8995 = vsub.s32 %v8680, %v8994
        %v8996 = vrot.slane %v7379, %v8995
        %v8997 = vlaneseq
        %v8998 = vshrl.u32 %v8997, 7
        %v8999 = vsub.s32 %v8680, %v8998
        %v9000 = vrot.slane %v7382, %v8999
        %v9001 = vlaneseq
        %v9002 = vshrl.u32 %v9001, 7
        %v9003 = vsub.s32 %v8680, %v9002
        %v9004 = vrot.slane %v7385, %v9003
        %v9005 = vlaneseq
        %v9006 = vshrl.u32 %v9005, 7
        %v9007 = vsub.s32 %v8680, %v9006
        %v9008 = vrot.slane %v7388, %v9007
        %v9009 = vlaneseq
        %v9010 = vshrl.u32 %v9009, 7
        %v9011 = vsub.s32 %v8680, %v9010
        %v9012 = vrot.slane %v7391, %v9011
        %v9013 = vlaneseq
        %v9014 = vshrl.u32 %v9013, 7
        %v9015 = vsub.s32 %v8680, %v9014
        %v9016 = vrot.slane %v7394, %v9015
        %v9017 = vlaneseq
        %v9018 = vshrl.u32 %v9017, 7
        %v9019 = vsub.s32 %v8680, %v9018
        %v9020 = vrot.slane %v7397, %v9019
        %v9021 = vlaneseq
        %v9022 = vshrl.u32 %v9021, 7
        %v9023 = vsub.s32 %v8680, %v9022
        %v9024 = vrot.slane %v7400, %v9023
        %v9025 = vlaneseq
        %v9026 = vshrl.u32 %v9025, 7
        %v9027 = vsub.s32 %v8680, %v9026
        %v9028 = vrot.slane %v7403, %v9027
        %v9029 = vlaneseq
        %v9030 = vshrl.u32 %v9029, 7
        %v9031 = vsub.s32 %v8680, %v9030
        %v9032 = vrot.slane %v7406, %v9031
        %v9033 = vlaneseq
        %v9034 = vshrl.u32 %v9033, 7
        %v9035 = vsub.s32 %v8680, %v9034
        %v9036 = vrot.slane %v7409, %v9035
        %v9037 = vlaneseq
        %v9038 = vshrl.u32 %v9037, 7
        %v9039 = vsub.s32 %v8680, %v9038
        %v9040 = vrot.slane %v7412, %v9039
        %v9041 = vlaneseq
        %v9042 = vshrl.u32 %v9041, 7
        %v9043 = vsub.s32 %v8680, %v9042
        %v9044 = vrot.slane %v7415, %v9043
        %v9045 = vlaneseq
        %v9046 = vshrl.u32 %v9045, 7
        %v9047 = vsub.s32 %v8680, %v9046
        %v9048 = vrot.slane %v7418, %v9047
        %v9049 = vlaneseq
        %v9050 = vshrl.u32 %v9049, 7
        %v9051 = vsub.s32 %v8680, %v9050
        %v9052 = vrot.slane %v7421, %v9051
        %v9053 = vlaneseq
        %v9054 = vshrl.u32 %v9053, 7
        %v9055 = vsub.s32 %v8680, %v9054
        %v9056 = vrot.slane %v7424, %v9055
        %v9057 = vlaneseq
        %v9058 = vshrl.u32 %v9057, 7
        %v9059 = vsub.s32 %v8680, %v9058
        %v9060 = vrot.slane %v7427, %v9059
        %v9061 = vlaneseq
        %v9062 = vshrl.u32 %v9061, 7
        %v9063 = vsub.s32 %v8680, %v9062
        %v9064 = vrot.slane %v7430, %v9063
        %v9065 = vlaneseq
        %v9066 = vshrl.u32 %v9065, 7
        %v9067 = vsub.s32 %v8680, %v9066
        %v9068 = vrot.slane %v7433, %v9067
        %v9069 = vlaneseq
        %v9070 = vshrl.u32 %v9069, 7
        %v9071 = vsub.s32 %v8680, %v9070
        %v9072 = vrot.slane %v7436, %v9071
        %v9073 = vlaneseq
        %v9074 = vshrl.u32 %v9073, 7
        %v9075 = vsub.s32 %v8680, %v9074
        %v9076 = vrot.slane %v7439, %v9075
        %v9077 = vlaneseq
        %v9078 = vshrl.u32 %v9077, 7
        %v9079 = vsub.s32 %v8680, %v9078
        %v9080 = vrot.slane %v7442, %v9079
        %v9081 = vlaneseq
        %v9082 = vshrl.u32 %v9081, 7
        %v9083 = vsub.s32 %v8680, %v9082
        %v9084 = vrot.slane %v7445, %v9083
        %v9085 = vlaneseq
        %v9086 = vshrl.u32 %v9085, 7
        %v9087 = vsub.s32 %v8680, %v9086
        %v9088 = vrot.slane %v7448, %v9087
        %v9089 = vlaneseq
        %v9090 = vshrl.u32 %v9089, 7
        %v9091 = vsub.s32 %v8680, %v9090
        %v9092 = vrot.slane %v7451, %v9091
        %v9093 = vlaneseq
        %v9094 = vshrl.u32 %v9093, 7
        %v9095 = vsub.s32 %v8680, %v9094
        %v9096 = vrot.slane %v7454, %v9095
        %v9097 = vlaneseq
        %v9098 = vshrl.u32 %v9097, 7
        %v9099 = vsub.s32 %v8680, %v9098
        %v9100 = vrot.slane %v7457, %v9099
        %v9101 = vlaneseq
        %v9102 = vshrl.u32 %v9101, 7
        %v9103 = vsub.s32 %v8680, %v9102
        %v9104 = vrot.slane %v7460, %v9103
        %v9105 = vlaneseq
        %v9106 = vshrl.u32 %v9105, 7
        %v9107 = vsub.s32 %v8680, %v9106
        %v9108 = vrot.slane %v7463, %v9107
        %v9109 = vlaneseq
        %v9110 = vshrl.u32 %v9109, 7
        %v9111 = vsub.s32 %v8680, %v9110
        %v9112 = vrot.slane %v7466, %v9111
        %v9113 = vlaneseq
        %v9114 = vshrl.u32 %v9113, 7
        %v9115 = vsub.s32 %v8680, %v9114
        %v9116 = vrot.slane %v7469, %v9115
        %v9117 = vlaneseq
        %v9118 = vshrl.u32 %v9117, 7
        %v9119 = vsub.s32 %v8680, %v9118
        %v9120 = vrot.slane %v7472, %v9119
        %v9121 = vlaneseq
        %v9122 = vshrl.u32 %v9121, 7
        %v9123 = vsub.s32 %v8680, %v9122
        %v9124 = vrot.slane %v7475, %v9123
        %v9125 = vlaneseq
        %v9126 = vshrl.u32 %v9125, 7
        %v9127 = vsub.s32 %v8680, %v9126
        %v9128 = vrot.slane %v7478, %v9127
        %v9129 = vlaneseq
        %v9130 = vshrl.u32 %v9129, 7
        %v9131 = vsub.s32 %v8680, %v9130
        %v9132 = vrot.slane %v7481, %v9131
        %v9133 = vlaneseq
        %v9134 = vshrl.u32 %v9133, 7
        %v9135 = vsub.s32 %v8680, %v9134
        %v9136 = vrot.slane %v7484, %v9135
        %v9137 = vlaneseq
        %v9138 = vshrl.u32 %v9137, 7
        %v9139 = vsub.s32 %v8680, %v9138
        %v9140 = vrot.slane %v7487, %v9139
        %v9141 = vlaneseq
        %v9142 = vshrl.u32 %v9141, 7
        %v9143 = vsub.s32 %v8680, %v9142
        %v9144 = vrot.slane %v7490, %v9143
        %v9145 = vlaneseq
        %v9146 = vshrl.u32 %v9145, 7
        %v9147 = vsub.s32 %v8680, %v9146
        %v9148 = vrot.slane %v7493, %v9147
        %v9149 = vlaneseq
        %v9150 = vshrl.u32 %v9149, 7
        %v9151 = vsub.s32 %v8680, %v9150
        %v9152 = vrot.slane %v7496, %v9151
        %v9153 = vlaneseq
        %v9154 = vshrl.u32 %v9153, 7
        %v9155 = vsub.s32 %v8680, %v9154
        %v9156 = vrot.slane %v7499, %v9155
        %v9157 = vlaneseq
        %v9158 = vshrl.u32 %v9157, 7
        %v9159 = vsub.s32 %v8680, %v9158
        %v9160 = vrot.slane %v7502, %v9159
        %v9161 = vlaneseq
        %v9162 = vshrl.u32 %v9161, 7
        %v9163 = vsub.s32 %v8680, %v9162
        %v9164 = vrot.slane %v7505, %v9163
        %v9165 = vlaneseq
        %v9166 = vshrl.u32 %v9165, 7
        %v9167 = vsub.s32 %v8680, %v9166
        %v9168 = vrot.slane %v7508, %v9167
        %v9169 = vlaneseq
        %v9170 = vshrl.u32 %v9169, 7
        %v9171 = vsub.s32 %v8680, %v9170
        %v9172 = vrot.slane %v7511, %v9171
        %v9173 = vlaneseq
        %v9174 = vshrl.u32 %v9173, 7
        %v9175 = vsub.s32 %v8680, %v9174
        %v9176 = vrot.slane %v7514, %v9175
        %v9177 = vlaneseq
        %v9178 = vshrl.u32 %v9177, 7
        %v9179 = vsub.s32 %v8680, %v9178
        %v9180 = vrot.slane %v7517, %v9179
        %v9181 = vlaneseq
        %v9182 = vshrl.u32 %v9181, 7
        %v9183 = vsub.s32 %v8680, %v9182
        %v9184 = vrot.slane %v7520, %v9183
        %v9185 = vlaneseq
        %v9186 = vshrl.u32 %v9185, 7
        %v9187 = vsub.s32 %v8680, %v9186
        %v9188 = vrot.slane %v7523, %v9187
        %v9189 = vlaneseq
        %v9190 = vshrl.u32 %v9189, 7
        %v9191 = vsub.s32 %v8680, %v9190
        %v9192 = vrot.slane %v7526, %v9191
        %vm9193 = vcmask 1041409
        %v9194 = vsel %vm9193, %v8688, %v8684
        %vm9195 = vcmask 1042434
        %v9196 = vsel %vm9195, %v8692, %v9194
        %vm9197 = vcmask 1043459
        %v9198 = vsel %vm9197, %v8696, %v9196
        %vm9199 = vcmask 1044484
        %v9200 = vsel %vm9199, %v8700, %v9198
        %vm9201 = vcmask 1045509
        %v9202 = vsel %vm9201, %v8704, %v9200
        %vm9203 = vcmask 1046534
        %v9204 = vsel %vm9203, %v8708, %v9202
        %vm9205 = vcmask 1047559
        %v9206 = vsel %vm9205, %v8712, %v9204
        %v9207 = vsel %vm9193, %v8720, %v8716
        %v9208 = vsel %vm9195, %v8724, %v9207
        %v9209 = vsel %vm9197, %v8728, %v9208
        %v9210 = vsel %vm9199, %v8732, %v9209
        %v9211 = vsel %vm9201, %v8736, %v9210
        %v9212 = vsel %vm9203, %v8740, %v9211
        %v9213 = vsel %vm9205, %v8744, %v9212
        %v9214 = vsel %vm9193, %v8752, %v8748
        %v9215 = vsel %vm9195, %v8756, %v9214
        %v9216 = vsel %vm9197, %v8760, %v9215
        %v9217 = vsel %vm9199, %v8764, %v9216
        %v9218 = vsel %vm9201, %v8768, %v9217
        %v9219 = vsel %vm9203, %v8772, %v9218
        %v9220 = vsel %vm9205, %v8776, %v9219
        %v9221 = vsel %vm9193, %v8784, %v8780
        %v9222 = vsel %vm9195, %v8788, %v9221
        %v9223 = vsel %vm9197, %v8792, %v9222
        %v9224 = vsel %vm9199, %v8796, %v9223
        %v9225 = vsel %vm9201, %v8800, %v9224
        %v9226 = vsel %vm9203, %v8804, %v9225
        %v9227 = vsel %vm9205, %v8808, %v9226
        %v9228 = vsel %vm9193, %v8816, %v8812
        %v9229 = vsel %vm9195, %v8820, %v9228
        %v9230 = vsel %vm9197, %v8824, %v9229
        %v9231 = vsel %vm9199, %v8828, %v9230
        %v9232 = vsel %vm9201, %v8832, %v9231
        %v9233 = vsel %vm9203, %v8836, %v9232
        %v9234 = vsel %vm9205, %v8840, %v9233
        %v9235 = vsel %vm9193, %v8848, %v8844
        %v9236 = vsel %vm9195, %v8852, %v9235
        %v9237 = vsel %vm9197, %v8856, %v9236
        %v9238 = vsel %vm9199, %v8860, %v9237
        %v9239 = vsel %vm9201, %v8864, %v9238
        %v9240 = vsel %vm9203, %v8868, %v9239
        %v9241 = vsel %vm9205, %v8872, %v9240
        %v9242 = vsel %vm9193, %v8880, %v8876
        %v9243 = vsel %vm9195, %v8884, %v9242
        %v9244 = vsel %vm9197, %v8888, %v9243
        %v9245 = vsel %vm9199, %v8892, %v9244
        %v9246 = vsel %vm9201, %v8896, %v9245
        %v9247 = vsel %vm9203, %v8900, %v9246
        %v9248 = vsel %vm9205, %v8904, %v9247
        %v9249 = vsel %vm9193, %v8912, %v8908
        %v9250 = vsel %vm9195, %v8916, %v9249
        %v9251 = vsel %vm9197, %v8920, %v9250
        %v9252 = vsel %vm9199, %v8924, %v9251
        %v9253 = vsel %vm9201, %v8928, %v9252
        %v9254 = vsel %vm9203, %v8932, %v9253
        %v9255 = vsel %vm9205, %v8936, %v9254
        %v9256 = vsel %vm9193, %v8944, %v8940
        %v9257 = vsel %vm9195, %v8948, %v9256
        %v9258 = vsel %vm9197, %v8952, %v9257
        %v9259 = vsel %vm9199, %v8956, %v9258
        %v9260 = vsel %vm9201, %v8960, %v9259
        %v9261 = vsel %vm9203, %v8964, %v9260
        %v9262 = vsel %vm9205, %v8968, %v9261
        %v9263 = vsel %vm9193, %v8976, %v8972
        %v9264 = vsel %vm9195, %v8980, %v9263
        %v9265 = vsel %vm9197, %v8984, %v9264
        %v9266 = vsel %vm9199, %v8988, %v9265
        %v9267 = vsel %vm9201, %v8992, %v9266
        %v9268 = vsel %vm9203, %v8996, %v9267
        %v9269 = vsel %vm9205, %v9000, %v9268
        %v9270 = vsel %vm9193, %v9008, %v9004
        %v9271 = vsel %vm9195, %v9012, %v9270
        %v9272 = vsel %vm9197, %v9016, %v9271
        %v9273 = vsel %vm9199, %v9020, %v9272
        %v9274 = vsel %vm9201, %v9024, %v9273
        %v9275 = vsel %vm9203, %v9028, %v9274
        %v9276 = vsel %vm9205, %v9032, %v9275
        %v9277 = vsel %vm9193, %v9040, %v9036
        %v9278 = vsel %vm9195, %v9044, %v9277
        %v9279 = vsel %vm9197, %v9048, %v9278
        %v9280 = vsel %vm9199, %v9052, %v9279
        %v9281 = vsel %vm9201, %v9056, %v9280
        %v9282 = vsel %vm9203, %v9060, %v9281
        %v9283 = vsel %vm9205, %v9064, %v9282
        %v9284 = vsel %vm9193, %v9072, %v9068
        %v9285 = vsel %vm9195, %v9076, %v9284
        %v9286 = vsel %vm9197, %v9080, %v9285
        %v9287 = vsel %vm9199, %v9084, %v9286
        %v9288 = vsel %vm9201, %v9088, %v9287
        %v9289 = vsel %vm9203, %v9092, %v9288
        %v9290 = vsel %vm9205, %v9096, %v9289
        %v9291 = vsel %vm9193, %v9104, %v9100
        %v9292 = vsel %vm9195, %v9108, %v9291
        %v9293 = vsel %vm9197, %v9112, %v9292
        %v9294 = vsel %vm9199, %v9116, %v9293
        %v9295 = vsel %vm9201, %v9120, %v9294
        %v9296 = vsel %vm9203, %v9124, %v9295
        %v9297 = vsel %vm9205, %v9128, %v9296
        %v9298 = vsel %vm9193, %v9136, %v9132
        %v9299 = vsel %vm9195, %v9140, %v9298
        %v9300 = vsel %vm9197, %v9144, %v9299
        %v9301 = vsel %vm9199, %v9148, %v9300
        %v9302 = vsel %vm9201, %v9152, %v9301
        %v9303 = vsel %vm9203, %v9156, %v9302
        %v9304 = vsel %vm9205, %v9160, %v9303
        %v9305 = vsel %vm9193, %v9168, %v9164
        %v9306 = vsel %vm9195, %v9172, %v9305
        %v9307 = vsel %vm9197, %v9176, %v9306
        %v9308 = vsel %vm9199, %v9180, %v9307
        %v9309 = vsel %vm9201, %v9184, %v9308
        %v9310 = vsel %vm9203, %v9188, %v9309
        %v9311 = vsel %vm9205, %v9192, %v9310
        %9328 = vxpose.xlu0.b32.start [1/16] %v9206, 128
        %9329 = vxpose.xlu0.b32.cont [2/16] %v9213, 128
        %9330 = vxpose.xlu0.b32.cont [3/16] %v9220, 128
        %9331 = vxpose.xlu0.b32.cont [4/16] %v9227, 128
        %9332 = vxpose.xlu0.b32.cont [5/16] %v9234, 128
        %9333 = vxpose.xlu0.b32.cont [6/16] %v9241, 128
        %9334 = vxpose.xlu0.b32.cont [7/16] %v9248, 128
        %9335 = vxpose.xlu0.b32.cont [8/16] %v9255, 128
        %9336 = vxpose.xlu0.b32.cont [9/16] %v9262, 128
        %9337 = vxpose.xlu0.b32.cont [10/16] %v9269, 128
        %9338 = vxpose.xlu0.b32.cont [11/16] %v9276, 128
        %9339 = vxpose.xlu0.b32.cont [12/16] %v9283, 128
        %9340 = vxpose.xlu0.b32.cont [13/16] %v9290, 128
        %9341 = vxpose.xlu0.b32.cont [14/16] %v9297, 128
        %9342 = vxpose.xlu0.b32.cont [15/16] %v9304, 128
        %9343 = vxpose.xlu0.b32.end [16/16] %v9311, 128
        %v9344 = vpop.trf.xlu0
        %v9345 = vpop.trf.xlu0
        %v9346 = vpop.trf.xlu0
        %v9347 = vpop.trf.xlu0
        %v9348 = vpop.trf.xlu0
        %v9349 = vpop.trf.xlu0
        %v9350 = vpop.trf.xlu0
        %v9351 = vpop.trf.xlu0
        %v9352 = vpop.trf.xlu0
        %v9353 = vpop.trf.xlu0
        %v9354 = vpop.trf.xlu0
        %v9355 = vpop.trf.xlu0
        %v9356 = vpop.trf.xlu0
        %v9357 = vpop.trf.xlu0
        %v9358 = vpop.trf.xlu0
        %v9359 = vpop.trf.xlu0
        %v9488 = vlaneseq
        %v9489 = vshrl.u32 %v9488, 7
        %v9490 = vsub.s32 %v8680, %v9489
        %v9491 = vrot.slane %v8169, %v9490
        %v9492 = vlaneseq
        %v9493 = vshrl.u32 %v9492, 7
        %v9494 = vsub.s32 %v8680, %v9493
        %v9495 = vrot.slane %v8172, %v9494
        %v9496 = vlaneseq
        %v9497 = vshrl.u32 %v9496, 7
        %v9498 = vsub.s32 %v8680, %v9497
        %v9499 = vrot.slane %v8175, %v9498
        %v9500 = vlaneseq
        %v9501 = vshrl.u32 %v9500, 7
        %v9502 = vsub.s32 %v8680, %v9501
        %v9503 = vrot.slane %v8178, %v9502
        %v9504 = vlaneseq
        %v9505 = vshrl.u32 %v9504, 7
        %v9506 = vsub.s32 %v8680, %v9505
        %v9507 = vrot.slane %v8181, %v9506
        %v9508 = vlaneseq
        %v9509 = vshrl.u32 %v9508, 7
        %v9510 = vsub.s32 %v8680, %v9509
        %v9511 = vrot.slane %v8184, %v9510
        %v9512 = vlaneseq
        %v9513 = vshrl.u32 %v9512, 7
        %v9514 = vsub.s32 %v8680, %v9513
        %v9515 = vrot.slane %v8187, %v9514
        %v9516 = vlaneseq
        %v9517 = vshrl.u32 %v9516, 7
        %v9518 = vsub.s32 %v8680, %v9517
        %v9519 = vrot.slane %v8190, %v9518
        %v9520 = vlaneseq
        %v9521 = vshrl.u32 %v9520, 7
        %v9522 = vsub.s32 %v8680, %v9521
        %v9523 = vrot.slane %v8193, %v9522
        %v9524 = vlaneseq
        %v9525 = vshrl.u32 %v9524, 7
        %v9526 = vsub.s32 %v8680, %v9525
        %v9527 = vrot.slane %v8196, %v9526
        %v9528 = vlaneseq
        %v9529 = vshrl.u32 %v9528, 7
        %v9530 = vsub.s32 %v8680, %v9529
        %v9531 = vrot.slane %v8199, %v9530
        %v9532 = vlaneseq
        %v9533 = vshrl.u32 %v9532, 7
        %v9534 = vsub.s32 %v8680, %v9533
        %v9535 = vrot.slane %v8202, %v9534
        %v9536 = vlaneseq
        %v9537 = vshrl.u32 %v9536, 7
        %v9538 = vsub.s32 %v8680, %v9537
        %v9539 = vrot.slane %v8205, %v9538
        %v9540 = vlaneseq
        %v9541 = vshrl.u32 %v9540, 7
        %v9542 = vsub.s32 %v8680, %v9541
        %v9543 = vrot.slane %v8208, %v9542
        %v9544 = vlaneseq
        %v9545 = vshrl.u32 %v9544, 7
        %v9546 = vsub.s32 %v8680, %v9545
        %v9547 = vrot.slane %v8211, %v9546
        %v9548 = vlaneseq
        %v9549 = vshrl.u32 %v9548, 7
        %v9550 = vsub.s32 %v8680, %v9549
        %v9551 = vrot.slane %v8214, %v9550
        %v9552 = vlaneseq
        %v9553 = vshrl.u32 %v9552, 7
        %v9554 = vsub.s32 %v8680, %v9553
        %v9555 = vrot.slane %v8217, %v9554
        %v9556 = vlaneseq
        %v9557 = vshrl.u32 %v9556, 7
        %v9558 = vsub.s32 %v8680, %v9557
        %v9559 = vrot.slane %v8220, %v9558
        %v9560 = vlaneseq
        %v9561 = vshrl.u32 %v9560, 7
        %v9562 = vsub.s32 %v8680, %v9561
        %v9563 = vrot.slane %v8223, %v9562
        %v9564 = vlaneseq
        %v9565 = vshrl.u32 %v9564, 7
        %v9566 = vsub.s32 %v8680, %v9565
        %v9567 = vrot.slane %v8226, %v9566
        %v9568 = vlaneseq
        %v9569 = vshrl.u32 %v9568, 7
        %v9570 = vsub.s32 %v8680, %v9569
        %v9571 = vrot.slane %v8229, %v9570
        %v9572 = vlaneseq
        %v9573 = vshrl.u32 %v9572, 7
        %v9574 = vsub.s32 %v8680, %v9573
        %v9575 = vrot.slane %v8232, %v9574
        %v9576 = vlaneseq
        %v9577 = vshrl.u32 %v9576, 7
        %v9578 = vsub.s32 %v8680, %v9577
        %v9579 = vrot.slane %v8235, %v9578
        %v9580 = vlaneseq
        %v9581 = vshrl.u32 %v9580, 7
        %v9582 = vsub.s32 %v8680, %v9581
        %v9583 = vrot.slane %v8238, %v9582
        %v9584 = vlaneseq
        %v9585 = vshrl.u32 %v9584, 7
        %v9586 = vsub.s32 %v8680, %v9585
        %v9587 = vrot.slane %v8241, %v9586
        %v9588 = vlaneseq
        %v9589 = vshrl.u32 %v9588, 7
        %v9590 = vsub.s32 %v8680, %v9589
        %v9591 = vrot.slane %v8244, %v9590
        %v9592 = vlaneseq
        %v9593 = vshrl.u32 %v9592, 7
        %v9594 = vsub.s32 %v8680, %v9593
        %v9595 = vrot.slane %v8247, %v9594
        %v9596 = vlaneseq
        %v9597 = vshrl.u32 %v9596, 7
        %v9598 = vsub.s32 %v8680, %v9597
        %v9599 = vrot.slane %v8250, %v9598
        %v9600 = vlaneseq
        %v9601 = vshrl.u32 %v9600, 7
        %v9602 = vsub.s32 %v8680, %v9601
        %v9603 = vrot.slane %v8253, %v9602
        %v9604 = vlaneseq
        %v9605 = vshrl.u32 %v9604, 7
        %v9606 = vsub.s32 %v8680, %v9605
        %v9607 = vrot.slane %v8256, %v9606
        %v9608 = vlaneseq
        %v9609 = vshrl.u32 %v9608, 7
        %v9610 = vsub.s32 %v8680, %v9609
        %v9611 = vrot.slane %v8259, %v9610
        %v9612 = vlaneseq
        %v9613 = vshrl.u32 %v9612, 7
        %v9614 = vsub.s32 %v8680, %v9613
        %v9615 = vrot.slane %v8262, %v9614
        %v9616 = vlaneseq
        %v9617 = vshrl.u32 %v9616, 7
        %v9618 = vsub.s32 %v8680, %v9617
        %v9619 = vrot.slane %v8265, %v9618
        %v9620 = vlaneseq
        %v9621 = vshrl.u32 %v9620, 7
        %v9622 = vsub.s32 %v8680, %v9621
        %v9623 = vrot.slane %v8268, %v9622
        %v9624 = vlaneseq
        %v9625 = vshrl.u32 %v9624, 7
        %v9626 = vsub.s32 %v8680, %v9625
        %v9627 = vrot.slane %v8271, %v9626
        %v9628 = vlaneseq
        %v9629 = vshrl.u32 %v9628, 7
        %v9630 = vsub.s32 %v8680, %v9629
        %v9631 = vrot.slane %v8274, %v9630
        %v9632 = vlaneseq
        %v9633 = vshrl.u32 %v9632, 7
        %v9634 = vsub.s32 %v8680, %v9633
        %v9635 = vrot.slane %v8277, %v9634
        %v9636 = vlaneseq
        %v9637 = vshrl.u32 %v9636, 7
        %v9638 = vsub.s32 %v8680, %v9637
        %v9639 = vrot.slane %v8280, %v9638
        %v9640 = vlaneseq
        %v9641 = vshrl.u32 %v9640, 7
        %v9642 = vsub.s32 %v8680, %v9641
        %v9643 = vrot.slane %v8283, %v9642
        %v9644 = vlaneseq
        %v9645 = vshrl.u32 %v9644, 7
        %v9646 = vsub.s32 %v8680, %v9645
        %v9647 = vrot.slane %v8286, %v9646
        %v9648 = vlaneseq
        %v9649 = vshrl.u32 %v9648, 7
        %v9650 = vsub.s32 %v8680, %v9649
        %v9651 = vrot.slane %v8289, %v9650
        %v9652 = vlaneseq
        %v9653 = vshrl.u32 %v9652, 7
        %v9654 = vsub.s32 %v8680, %v9653
        %v9655 = vrot.slane %v8292, %v9654
        %v9656 = vlaneseq
        %v9657 = vshrl.u32 %v9656, 7
        %v9658 = vsub.s32 %v8680, %v9657
        %v9659 = vrot.slane %v8295, %v9658
        %v9660 = vlaneseq
        %v9661 = vshrl.u32 %v9660, 7
        %v9662 = vsub.s32 %v8680, %v9661
        %v9663 = vrot.slane %v8298, %v9662
        %v9664 = vlaneseq
        %v9665 = vshrl.u32 %v9664, 7
        %v9666 = vsub.s32 %v8680, %v9665
        %v9667 = vrot.slane %v8301, %v9666
        %v9668 = vlaneseq
        %v9669 = vshrl.u32 %v9668, 7
        %v9670 = vsub.s32 %v8680, %v9669
        %v9671 = vrot.slane %v8304, %v9670
        %v9672 = vlaneseq
        %v9673 = vshrl.u32 %v9672, 7
        %v9674 = vsub.s32 %v8680, %v9673
        %v9675 = vrot.slane %v8307, %v9674
        %v9676 = vlaneseq
        %v9677 = vshrl.u32 %v9676, 7
        %v9678 = vsub.s32 %v8680, %v9677
        %v9679 = vrot.slane %v8310, %v9678
        %v9680 = vlaneseq
        %v9681 = vshrl.u32 %v9680, 7
        %v9682 = vsub.s32 %v8680, %v9681
        %v9683 = vrot.slane %v8313, %v9682
        %v9684 = vlaneseq
        %v9685 = vshrl.u32 %v9684, 7
        %v9686 = vsub.s32 %v8680, %v9685
        %v9687 = vrot.slane %v8316, %v9686
        %v9688 = vlaneseq
        %v9689 = vshrl.u32 %v9688, 7
        %v9690 = vsub.s32 %v8680, %v9689
        %v9691 = vrot.slane %v8319, %v9690
        %v9692 = vlaneseq
        %v9693 = vshrl.u32 %v9692, 7
        %v9694 = vsub.s32 %v8680, %v9693
        %v9695 = vrot.slane %v8322, %v9694
        %v9696 = vlaneseq
        %v9697 = vshrl.u32 %v9696, 7
        %v9698 = vsub.s32 %v8680, %v9697
        %v9699 = vrot.slane %v8325, %v9698
        %v9700 = vlaneseq
        %v9701 = vshrl.u32 %v9700, 7
        %v9702 = vsub.s32 %v8680, %v9701
        %v9703 = vrot.slane %v8328, %v9702
        %v9704 = vlaneseq
        %v9705 = vshrl.u32 %v9704, 7
        %v9706 = vsub.s32 %v8680, %v9705
        %v9707 = vrot.slane %v8331, %v9706
        %v9708 = vlaneseq
        %v9709 = vshrl.u32 %v9708, 7
        %v9710 = vsub.s32 %v8680, %v9709
        %v9711 = vrot.slane %v8334, %v9710
        %v9712 = vlaneseq
        %v9713 = vshrl.u32 %v9712, 7
        %v9714 = vsub.s32 %v8680, %v9713
        %v9715 = vrot.slane %v8337, %v9714
        %v9716 = vlaneseq
        %v9717 = vshrl.u32 %v9716, 7
        %v9718 = vsub.s32 %v8680, %v9717
        %v9719 = vrot.slane %v8340, %v9718
        %v9720 = vlaneseq
        %v9721 = vshrl.u32 %v9720, 7
        %v9722 = vsub.s32 %v8680, %v9721
        %v9723 = vrot.slane %v8343, %v9722
        %v9724 = vlaneseq
        %v9725 = vshrl.u32 %v9724, 7
        %v9726 = vsub.s32 %v8680, %v9725
        %v9727 = vrot.slane %v8346, %v9726
        %v9728 = vlaneseq
        %v9729 = vshrl.u32 %v9728, 7
        %v9730 = vsub.s32 %v8680, %v9729
        %v9731 = vrot.slane %v8349, %v9730
        %v9732 = vlaneseq
        %v9733 = vshrl.u32 %v9732, 7
        %v9734 = vsub.s32 %v8680, %v9733
        %v9735 = vrot.slane %v8352, %v9734
        %v9736 = vlaneseq
        %v9737 = vshrl.u32 %v9736, 7
        %v9738 = vsub.s32 %v8680, %v9737
        %v9739 = vrot.slane %v8355, %v9738
        %v9740 = vlaneseq
        %v9741 = vshrl.u32 %v9740, 7
        %v9742 = vsub.s32 %v8680, %v9741
        %v9743 = vrot.slane %v8358, %v9742
        %v9744 = vlaneseq
        %v9745 = vshrl.u32 %v9744, 7
        %v9746 = vsub.s32 %v8680, %v9745
        %v9747 = vrot.slane %v8361, %v9746
        %v9748 = vlaneseq
        %v9749 = vshrl.u32 %v9748, 7
        %v9750 = vsub.s32 %v8680, %v9749
        %v9751 = vrot.slane %v8364, %v9750
        %v9752 = vlaneseq
        %v9753 = vshrl.u32 %v9752, 7
        %v9754 = vsub.s32 %v8680, %v9753
        %v9755 = vrot.slane %v8367, %v9754
        %v9756 = vlaneseq
        %v9757 = vshrl.u32 %v9756, 7
        %v9758 = vsub.s32 %v8680, %v9757
        %v9759 = vrot.slane %v8370, %v9758
        %v9760 = vlaneseq
        %v9761 = vshrl.u32 %v9760, 7
        %v9762 = vsub.s32 %v8680, %v9761
        %v9763 = vrot.slane %v8373, %v9762
        %v9764 = vlaneseq
        %v9765 = vshrl.u32 %v9764, 7
        %v9766 = vsub.s32 %v8680, %v9765
        %v9767 = vrot.slane %v8376, %v9766
        %v9768 = vlaneseq
        %v9769 = vshrl.u32 %v9768, 7
        %v9770 = vsub.s32 %v8680, %v9769
        %v9771 = vrot.slane %v8379, %v9770
        %v9772 = vlaneseq
        %v9773 = vshrl.u32 %v9772, 7
        %v9774 = vsub.s32 %v8680, %v9773
        %v9775 = vrot.slane %v8382, %v9774
        %v9776 = vlaneseq
        %v9777 = vshrl.u32 %v9776, 7
        %v9778 = vsub.s32 %v8680, %v9777
        %v9779 = vrot.slane %v8385, %v9778
        %v9780 = vlaneseq
        %v9781 = vshrl.u32 %v9780, 7
        %v9782 = vsub.s32 %v8680, %v9781
        %v9783 = vrot.slane %v8388, %v9782
        %v9784 = vlaneseq
        %v9785 = vshrl.u32 %v9784, 7
        %v9786 = vsub.s32 %v8680, %v9785
        %v9787 = vrot.slane %v8391, %v9786
        %v9788 = vlaneseq
        %v9789 = vshrl.u32 %v9788, 7
        %v9790 = vsub.s32 %v8680, %v9789
        %v9791 = vrot.slane %v8394, %v9790
        %v9792 = vlaneseq
        %v9793 = vshrl.u32 %v9792, 7
        %v9794 = vsub.s32 %v8680, %v9793
        %v9795 = vrot.slane %v8397, %v9794
        %v9796 = vlaneseq
        %v9797 = vshrl.u32 %v9796, 7
        %v9798 = vsub.s32 %v8680, %v9797
        %v9799 = vrot.slane %v8400, %v9798
        %v9800 = vlaneseq
        %v9801 = vshrl.u32 %v9800, 7
        %v9802 = vsub.s32 %v8680, %v9801
        %v9803 = vrot.slane %v8403, %v9802
        %v9804 = vlaneseq
        %v9805 = vshrl.u32 %v9804, 7
        %v9806 = vsub.s32 %v8680, %v9805
        %v9807 = vrot.slane %v8406, %v9806
        %v9808 = vlaneseq
        %v9809 = vshrl.u32 %v9808, 7
        %v9810 = vsub.s32 %v8680, %v9809
        %v9811 = vrot.slane %v8409, %v9810
        %v9812 = vlaneseq
        %v9813 = vshrl.u32 %v9812, 7
        %v9814 = vsub.s32 %v8680, %v9813
        %v9815 = vrot.slane %v8412, %v9814
        %v9816 = vlaneseq
        %v9817 = vshrl.u32 %v9816, 7
        %v9818 = vsub.s32 %v8680, %v9817
        %v9819 = vrot.slane %v8415, %v9818
        %v9820 = vlaneseq
        %v9821 = vshrl.u32 %v9820, 7
        %v9822 = vsub.s32 %v8680, %v9821
        %v9823 = vrot.slane %v8418, %v9822
        %v9824 = vlaneseq
        %v9825 = vshrl.u32 %v9824, 7
        %v9826 = vsub.s32 %v8680, %v9825
        %v9827 = vrot.slane %v8421, %v9826
        %v9828 = vlaneseq
        %v9829 = vshrl.u32 %v9828, 7
        %v9830 = vsub.s32 %v8680, %v9829
        %v9831 = vrot.slane %v8424, %v9830
        %v9832 = vlaneseq
        %v9833 = vshrl.u32 %v9832, 7
        %v9834 = vsub.s32 %v8680, %v9833
        %v9835 = vrot.slane %v8427, %v9834
        %v9836 = vlaneseq
        %v9837 = vshrl.u32 %v9836, 7
        %v9838 = vsub.s32 %v8680, %v9837
        %v9839 = vrot.slane %v8430, %v9838
        %v9840 = vlaneseq
        %v9841 = vshrl.u32 %v9840, 7
        %v9842 = vsub.s32 %v8680, %v9841
        %v9843 = vrot.slane %v8433, %v9842
        %v9844 = vlaneseq
        %v9845 = vshrl.u32 %v9844, 7
        %v9846 = vsub.s32 %v8680, %v9845
        %v9847 = vrot.slane %v8436, %v9846
        %v9848 = vlaneseq
        %v9849 = vshrl.u32 %v9848, 7
        %v9850 = vsub.s32 %v8680, %v9849
        %v9851 = vrot.slane %v8439, %v9850
        %v9852 = vlaneseq
        %v9853 = vshrl.u32 %v9852, 7
        %v9854 = vsub.s32 %v8680, %v9853
        %v9855 = vrot.slane %v8442, %v9854
        %v9856 = vlaneseq
        %v9857 = vshrl.u32 %v9856, 7
        %v9858 = vsub.s32 %v8680, %v9857
        %v9859 = vrot.slane %v8445, %v9858
        %v9860 = vlaneseq
        %v9861 = vshrl.u32 %v9860, 7
        %v9862 = vsub.s32 %v8680, %v9861
        %v9863 = vrot.slane %v8448, %v9862
        %v9864 = vlaneseq
        %v9865 = vshrl.u32 %v9864, 7
        %v9866 = vsub.s32 %v8680, %v9865
        %v9867 = vrot.slane %v8451, %v9866
        %v9868 = vlaneseq
        %v9869 = vshrl.u32 %v9868, 7
        %v9870 = vsub.s32 %v8680, %v9869
        %v9871 = vrot.slane %v8454, %v9870
        %v9872 = vlaneseq
        %v9873 = vshrl.u32 %v9872, 7
        %v9874 = vsub.s32 %v8680, %v9873
        %v9875 = vrot.slane %v8457, %v9874
        %v9876 = vlaneseq
        %v9877 = vshrl.u32 %v9876, 7
        %v9878 = vsub.s32 %v8680, %v9877
        %v9879 = vrot.slane %v8460, %v9878
        %v9880 = vlaneseq
        %v9881 = vshrl.u32 %v9880, 7
        %v9882 = vsub.s32 %v8680, %v9881
        %v9883 = vrot.slane %v8463, %v9882
        %v9884 = vlaneseq
        %v9885 = vshrl.u32 %v9884, 7
        %v9886 = vsub.s32 %v8680, %v9885
        %v9887 = vrot.slane %v8466, %v9886
        %v9888 = vlaneseq
        %v9889 = vshrl.u32 %v9888, 7
        %v9890 = vsub.s32 %v8680, %v9889
        %v9891 = vrot.slane %v8469, %v9890
        %v9892 = vlaneseq
        %v9893 = vshrl.u32 %v9892, 7
        %v9894 = vsub.s32 %v8680, %v9893
        %v9895 = vrot.slane %v8472, %v9894
        %v9896 = vlaneseq
        %v9897 = vshrl.u32 %v9896, 7
        %v9898 = vsub.s32 %v8680, %v9897
        %v9899 = vrot.slane %v8475, %v9898
        %v9900 = vlaneseq
        %v9901 = vshrl.u32 %v9900, 7
        %v9902 = vsub.s32 %v8680, %v9901
        %v9903 = vrot.slane %v8478, %v9902
        %v9904 = vlaneseq
        %v9905 = vshrl.u32 %v9904, 7
        %v9906 = vsub.s32 %v8680, %v9905
        %v9907 = vrot.slane %v8481, %v9906
        %v9908 = vlaneseq
        %v9909 = vshrl.u32 %v9908, 7
        %v9910 = vsub.s32 %v8680, %v9909
        %v9911 = vrot.slane %v8484, %v9910
        %v9912 = vlaneseq
        %v9913 = vshrl.u32 %v9912, 7
        %v9914 = vsub.s32 %v8680, %v9913
        %v9915 = vrot.slane %v8487, %v9914
        %v9916 = vlaneseq
        %v9917 = vshrl.u32 %v9916, 7
        %v9918 = vsub.s32 %v8680, %v9917
        %v9919 = vrot.slane %v8490, %v9918
        %v9920 = vlaneseq
        %v9921 = vshrl.u32 %v9920, 7
        %v9922 = vsub.s32 %v8680, %v9921
        %v9923 = vrot.slane %v8493, %v9922
        %v9924 = vlaneseq
        %v9925 = vshrl.u32 %v9924, 7
        %v9926 = vsub.s32 %v8680, %v9925
        %v9927 = vrot.slane %v8496, %v9926
        %v9928 = vlaneseq
        %v9929 = vshrl.u32 %v9928, 7
        %v9930 = vsub.s32 %v8680, %v9929
        %v9931 = vrot.slane %v8499, %v9930
        %v9932 = vlaneseq
        %v9933 = vshrl.u32 %v9932, 7
        %v9934 = vsub.s32 %v8680, %v9933
        %v9935 = vrot.slane %v8502, %v9934
        %v9936 = vlaneseq
        %v9937 = vshrl.u32 %v9936, 7
        %v9938 = vsub.s32 %v8680, %v9937
        %v9939 = vrot.slane %v8505, %v9938
        %v9940 = vlaneseq
        %v9941 = vshrl.u32 %v9940, 7
        %v9942 = vsub.s32 %v8680, %v9941
        %v9943 = vrot.slane %v8508, %v9942
        %v9944 = vlaneseq
        %v9945 = vshrl.u32 %v9944, 7
        %v9946 = vsub.s32 %v8680, %v9945
        %v9947 = vrot.slane %v8511, %v9946
        %v9948 = vlaneseq
        %v9949 = vshrl.u32 %v9948, 7
        %v9950 = vsub.s32 %v8680, %v9949
        %v9951 = vrot.slane %v8514, %v9950
        %v9952 = vlaneseq
        %v9953 = vshrl.u32 %v9952, 7
        %v9954 = vsub.s32 %v8680, %v9953
        %v9955 = vrot.slane %v8517, %v9954
        %v9956 = vlaneseq
        %v9957 = vshrl.u32 %v9956, 7
        %v9958 = vsub.s32 %v8680, %v9957
        %v9959 = vrot.slane %v8520, %v9958
        %v9960 = vlaneseq
        %v9961 = vshrl.u32 %v9960, 7
        %v9962 = vsub.s32 %v8680, %v9961
        %v9963 = vrot.slane %v8523, %v9962
        %v9964 = vlaneseq
        %v9965 = vshrl.u32 %v9964, 7
        %v9966 = vsub.s32 %v8680, %v9965
        %v9967 = vrot.slane %v8526, %v9966
        %v9968 = vlaneseq
        %v9969 = vshrl.u32 %v9968, 7
        %v9970 = vsub.s32 %v8680, %v9969
        %v9971 = vrot.slane %v8529, %v9970
        %v9972 = vlaneseq
        %v9973 = vshrl.u32 %v9972, 7
        %v9974 = vsub.s32 %v8680, %v9973
        %v9975 = vrot.slane %v8532, %v9974
        %v9976 = vlaneseq
        %v9977 = vshrl.u32 %v9976, 7
        %v9978 = vsub.s32 %v8680, %v9977
        %v9979 = vrot.slane %v8535, %v9978
        %v9980 = vlaneseq
        %v9981 = vshrl.u32 %v9980, 7
        %v9982 = vsub.s32 %v8680, %v9981
        %v9983 = vrot.slane %v8538, %v9982
        %v9984 = vlaneseq
        %v9985 = vshrl.u32 %v9984, 7
        %v9986 = vsub.s32 %v8680, %v9985
        %v9987 = vrot.slane %v8541, %v9986
        %v9988 = vlaneseq
        %v9989 = vshrl.u32 %v9988, 7
        %v9990 = vsub.s32 %v8680, %v9989
        %v9991 = vrot.slane %v8544, %v9990
        %v9992 = vlaneseq
        %v9993 = vshrl.u32 %v9992, 7
        %v9994 = vsub.s32 %v8680, %v9993
        %v9995 = vrot.slane %v8547, %v9994
        %v9996 = vlaneseq
        %v9997 = vshrl.u32 %v9996, 7
        %v9998 = vsub.s32 %v8680, %v9997
        %v9999 = vrot.slane %v8550, %v9998
        %v10000 = vsel %vm9193, %v9495, %v9491
        %v10001 = vsel %vm9195, %v9499, %v10000
        %v10002 = vsel %vm9197, %v9503, %v10001
        %v10003 = vsel %vm9199, %v9507, %v10002
        %v10004 = vsel %vm9201, %v9511, %v10003
        %v10005 = vsel %vm9203, %v9515, %v10004
        %v10006 = vsel %vm9205, %v9519, %v10005
        %v10007 = vsel %vm9193, %v9527, %v9523
        %v10008 = vsel %vm9195, %v9531, %v10007
        %v10009 = vsel %vm9197, %v9535, %v10008
        %v10010 = vsel %vm9199, %v9539, %v10009
        %v10011 = vsel %vm9201, %v9543, %v10010
        %v10012 = vsel %vm9203, %v9547, %v10011
        %v10013 = vsel %vm9205, %v9551, %v10012
        %v10014 = vsel %vm9193, %v9559, %v9555
        %v10015 = vsel %vm9195, %v9563, %v10014
        %v10016 = vsel %vm9197, %v9567, %v10015
        %v10017 = vsel %vm9199, %v9571, %v10016
        %v10018 = vsel %vm9201, %v9575, %v10017
        %v10019 = vsel %vm9203, %v9579, %v10018
        %v10020 = vsel %vm9205, %v9583, %v10019
        %v10021 = vsel %vm9193, %v9591, %v9587
        %v10022 = vsel %vm9195, %v9595, %v10021
        %v10023 = vsel %vm9197, %v9599, %v10022
        %v10024 = vsel %vm9199, %v9603, %v10023
        %v10025 = vsel %vm9201, %v9607, %v10024
        %v10026 = vsel %vm9203, %v9611, %v10025
        %v10027 = vsel %vm9205, %v9615, %v10026
        %v10028 = vsel %vm9193, %v9623, %v9619
        %v10029 = vsel %vm9195, %v9627, %v10028
        %v10030 = vsel %vm9197, %v9631, %v10029
        %v10031 = vsel %vm9199, %v9635, %v10030
        %v10032 = vsel %vm9201, %v9639, %v10031
        %v10033 = vsel %vm9203, %v9643, %v10032
        %v10034 = vsel %vm9205, %v9647, %v10033
        %v10035 = vsel %vm9193, %v9655, %v9651
        %v10036 = vsel %vm9195, %v9659, %v10035
        %v10037 = vsel %vm9197, %v9663, %v10036
        %v10038 = vsel %vm9199, %v9667, %v10037
        %v10039 = vsel %vm9201, %v9671, %v10038
        %v10040 = vsel %vm9203, %v9675, %v10039
        %v10041 = vsel %vm9205, %v9679, %v10040
        %v10042 = vsel %vm9193, %v9687, %v9683
        %v10043 = vsel %vm9195, %v9691, %v10042
        %v10044 = vsel %vm9197, %v9695, %v10043
        %v10045 = vsel %vm9199, %v9699, %v10044
        %v10046 = vsel %vm9201, %v9703, %v10045
        %v10047 = vsel %vm9203, %v9707, %v10046
        %v10048 = vsel %vm9205, %v9711, %v10047
        %v10049 = vsel %vm9193, %v9719, %v9715
        %v10050 = vsel %vm9195, %v9723, %v10049
        %v10051 = vsel %vm9197, %v9727, %v10050
        %v10052 = vsel %vm9199, %v9731, %v10051
        %v10053 = vsel %vm9201, %v9735, %v10052
        %v10054 = vsel %vm9203, %v9739, %v10053
        %v10055 = vsel %vm9205, %v9743, %v10054
        %v10056 = vsel %vm9193, %v9751, %v9747
        %v10057 = vsel %vm9195, %v9755, %v10056
        %v10058 = vsel %vm9197, %v9759, %v10057
        %v10059 = vsel %vm9199, %v9763, %v10058
        %v10060 = vsel %vm9201, %v9767, %v10059
        %v10061 = vsel %vm9203, %v9771, %v10060
        %v10062 = vsel %vm9205, %v9775, %v10061
        %v10063 = vsel %vm9193, %v9783, %v9779
        %v10064 = vsel %vm9195, %v9787, %v10063
        %v10065 = vsel %vm9197, %v9791, %v10064
        %v10066 = vsel %vm9199, %v9795, %v10065
        %v10067 = vsel %vm9201, %v9799, %v10066
        %v10068 = vsel %vm9203, %v9803, %v10067
        %v10069 = vsel %vm9205, %v9807, %v10068
        %v10070 = vsel %vm9193, %v9815, %v9811
        %v10071 = vsel %vm9195, %v9819, %v10070
        %v10072 = vsel %vm9197, %v9823, %v10071
        %v10073 = vsel %vm9199, %v9827, %v10072
        %v10074 = vsel %vm9201, %v9831, %v10073
        %v10075 = vsel %vm9203, %v9835, %v10074
        %v10076 = vsel %vm9205, %v9839, %v10075
        %v10077 = vsel %vm9193, %v9847, %v9843
        %v10078 = vsel %vm9195, %v9851, %v10077
        %v10079 = vsel %vm9197, %v9855, %v10078
        %v10080 = vsel %vm9199, %v9859, %v10079
        %v10081 = vsel %vm9201, %v9863, %v10080
        %v10082 = vsel %vm9203, %v9867, %v10081
        %v10083 = vsel %vm9205, %v9871, %v10082
        %v10084 = vsel %vm9193, %v9879, %v9875
        %v10085 = vsel %vm9195, %v9883, %v10084
        %v10086 = vsel %vm9197, %v9887, %v10085
        %v10087 = vsel %vm9199, %v9891, %v10086
        %v10088 = vsel %vm9201, %v9895, %v10087
        %v10089 = vsel %vm9203, %v9899, %v10088
        %v10090 = vsel %vm9205, %v9903, %v10089
        %v10091 = vsel %vm9193, %v9911, %v9907
        %v10092 = vsel %vm9195, %v9915, %v10091
        %v10093 = vsel %vm9197, %v9919, %v10092
        %v10094 = vsel %vm9199, %v9923, %v10093
        %v10095 = vsel %vm9201, %v9927, %v10094
        %v10096 = vsel %vm9203, %v9931, %v10095
        %v10097 = vsel %vm9205, %v9935, %v10096
        %v10098 = vsel %vm9193, %v9943, %v9939
        %v10099 = vsel %vm9195, %v9947, %v10098
        %v10100 = vsel %vm9197, %v9951, %v10099
        %v10101 = vsel %vm9199, %v9955, %v10100
        %v10102 = vsel %vm9201, %v9959, %v10101
        %v10103 = vsel %vm9203, %v9963, %v10102
        %v10104 = vsel %vm9205, %v9967, %v10103
        %v10105 = vsel %vm9193, %v9975, %v9971
        %v10106 = vsel %vm9195, %v9979, %v10105
        %v10107 = vsel %vm9197, %v9983, %v10106
        %v10108 = vsel %vm9199, %v9987, %v10107
        %v10109 = vsel %vm9201, %v9991, %v10108
        %v10110 = vsel %vm9203, %v9995, %v10109
        %v10111 = vsel %vm9205, %v9999, %v10110
        %10128 = vxpose.xlu0.b32.start [1/16] %v10006, 128
        %10129 = vxpose.xlu0.b32.cont [2/16] %v10013, 128
        %10130 = vxpose.xlu0.b32.cont [3/16] %v10020, 128
        %10131 = vxpose.xlu0.b32.cont [4/16] %v10027, 128
        %10132 = vxpose.xlu0.b32.cont [5/16] %v10034, 128
        %10133 = vxpose.xlu0.b32.cont [6/16] %v10041, 128
        %10134 = vxpose.xlu0.b32.cont [7/16] %v10048, 128
        %10135 = vxpose.xlu0.b32.cont [8/16] %v10055, 128
        %10136 = vxpose.xlu0.b32.cont [9/16] %v10062, 128
        %10137 = vxpose.xlu0.b32.cont [10/16] %v10069, 128
        %10138 = vxpose.xlu0.b32.cont [11/16] %v10076, 128
        %10139 = vxpose.xlu0.b32.cont [12/16] %v10083, 128
        %10140 = vxpose.xlu0.b32.cont [13/16] %v10090, 128
        %10141 = vxpose.xlu0.b32.cont [14/16] %v10097, 128
        %10142 = vxpose.xlu0.b32.cont [15/16] %v10104, 128
        %10143 = vxpose.xlu0.b32.end [16/16] %v10111, 128
        %v10144 = vpop.trf.xlu0
        %v10145 = vpop.trf.xlu0
        %v10146 = vpop.trf.xlu0
        %v10147 = vpop.trf.xlu0
        %v10148 = vpop.trf.xlu0
        %v10149 = vpop.trf.xlu0
        %v10150 = vpop.trf.xlu0
        %v10151 = vpop.trf.xlu0
        %v10152 = vpop.trf.xlu0
        %v10153 = vpop.trf.xlu0
        %v10154 = vpop.trf.xlu0
        %v10155 = vpop.trf.xlu0
        %v10156 = vpop.trf.xlu0
        %v10157 = vpop.trf.xlu0
        %v10158 = vpop.trf.xlu0
        %v10159 = vpop.trf.xlu0
        %v10160 = vmul.f32 %v9344, 1.442695
        %v10161 = vpow.pop %v10160
        %v10162 = vmul.f32 %v10144, 1.442695
        %v10163 = vpow.pop %v10162
        %v10164 = vrot.slane %v10161, 4
        %v10165 = vadd.f32 %v10161, %v10164
        %v10166 = vrot.slane %v10165, 2
        %v10167 = vadd.f32 %v10165, %v10166
        %v10168 = vrot.slane %v10167, 1
        %v10169 = vadd.f32 %v10167, %v10168
        %v10170 = vrot.slane %v10163, 4
        %v10171 = vadd.f32 %v10163, %v10170
        %v10172 = vrot.slane %v10171, 2
        %v10173 = vadd.f32 %v10171, %v10172
        %v10174 = vrot.slane %v10173, 1
        %v10175 = vadd.f32 %v10173, %v10174
        %v10176 = vadd.f32 %v10169, %v10175
        %v10177 = vsub.f32 %v10176, %v10161
        %v10178 = vlog2.pop %v10177
        %v10179 = vmul.f32 %v10178, 0.6931472
        %v10180 = vsub.f32 %v10179, %v10144
        %s10181 = smul.u32 %s18, 128
        %v10182 = vstv %s10181
        %v10183 = vadd.s32 %v8680, %v10182
        %vm10184 = vcmp.lt.s32.totalorder %v10183, 2
        %v10185 = vsel %vm10184, %v10180, 0.0
        %v10186 = vlaneseq
        %v10187 = vshrl.u32 %v10186, 7
        %vm10188 = vcmp.eq.s32.totalorder %v10187, 0
        %v10189 = vlaneseq
        %v10190 = vshrl.u32 %v10189, 7
        %v10191 = vsub.s32 0, %v10190
        %v10192 = vrot.slane %v10185, %v10191
        %v10193 = vsel %vm10188, %v10192, 0.0
        %10194 = vst [vmem:[%s207] sm:$0xff] %v10193
        %s10195 = sand.u32 %s120, 1
        %s10196 = scalar_lea.sflag [#allocation3], %s10195
        %s10197 = sand.u32 %s120, 1
        %s10198 = smul.addr %s10197, 8
        %s10199 = scalar_lea.vmem [#allocation2], %s10198
        // Predicated region
        $region37: #{tpu_custom_call.1} parent=35 // pred_check
          %p10200 = pneg %p130
        $region38: #{tpu_custom_call.1} parent=35 // pred_check_branch
          %10202 = sbr.rel (%p10200) target = $region40
        $region39: #{tpu_custom_call.1} parent=35 // pred_region
          %s10204 = ssub.s32 128, 128
          %10205 = vsyncadd %s10196, %s10204
          %s10206 = smul.addr %s18, 128
          %s10207 = scalar_lea.hbm %s4, %s10206
          %s10209 = sshll.u32 %s10199, 4
          %s10210 = int_to_ptr.vmem [resolvable:$true] %s10209
          %10212 = dma.vmem_to_hbm [thread:$0]  %s10210, 128, %s10207, %s10196
        $region40: #{tpu_custom_call.1} parent=35 // pred_fallthru
          _
      $region36: #{tpu_custom_call.1} parent=5 // pred_fallthru
        _
      %p10213 = scmp.le.s32.totalorder 2, %s13
      // Predicated region
      $region41: #{tpu_custom_call.1} parent=5 // pred_check
        %p10214 = pneg %p10213
      $region42: #{tpu_custom_call.1} parent=5 // pred_check_branch
        %10216 = sbr.rel (%p10214) target = $region44
      $region43: #{tpu_custom_call.1} parent=5 // pred_region
        %s10217 = ssub.s32 %s13, 2
        // Predicated region
        $region45: #{tpu_custom_call.1} parent=43 // pred_check
          %p10218 = pneg %p136
        $region46: #{tpu_custom_call.1} parent=43 // pred_check_branch
          %10220 = sbr.rel (%p10218) target = $region48
        $region47: #{tpu_custom_call.1} parent=43 // pred_region
          %s10221 = sand.u32 %s121, 1
          %s10222 = scalar_lea.sflag [#allocation3], %s10221
          %s10223 = sand.u32 %s121, 1
          %s10224 = smul.addr %s10223, 8
          %s10225 = scalar_lea.vmem [#allocation2], %s10224
          %10226 = dma.done %s10222, 128
        $region48: #{tpu_custom_call.1} parent=43 // pred_fallthru
          _
      $region44: #{tpu_custom_call.1} parent=5 // pred_fallthru
        _
    $region6: #{tpu_custom_call.1} parent=1 // loop_footer
      %s17 = sadd.s32 1, %s13
    $region7: #{tpu_custom_call.1} parent=1 // loop_footer_branch
      %12 = sbr.rel target = $region3
    $region8: #{tpu_custom_call.1} parent=1 // loop_exit
      _
    %10227 = vsyncpa [#allocation3], 1
    %s10228 = scalar_lea.sflag [#allocation3], 1
    %10229 = vsyncpa %s10228, 1

</llo_original>
